<compile_context>
chip_gen: v7x
topology: tpu7x:2x2x1
jax: 0.10.0
libtpu: 0.0.40
codegen_flags: <defaults>
</compile_context>

<pallas_src>
import functools

import jax
import jax.numpy as jnp
import numpy as np
from jax.experimental import pallas as pl
from jax.experimental.pallas import tpu as pltpu


def _round_up(x, m):
    return ((x + m - 1) // m) * m


# --------------------- fused 2-layer LSTM + fc kernel ------------------------
def _rnn_fused_kernel(x_ref, hc0_ref, wih0_ref, b0_ref, whh0_ref,
                      wih1_ref, whh1_ref, b1_ref, fcw_ref, fcb_ref,
                      out_ref, hc_ref,
                      state, gx, hblk,
                      *, tt_block, seq_len, hp, bp):
    tb = pl.program_id(0)

    @pl.when(tb == 0)
    def _():
        state[...] = hc0_ref[...]              # (4*Bp, Hp): h0 | c0 | h1 | c1

    # Layer-0 input projection for the whole T-block: one MXU-shaped matmul
    # (tt_block*bp rows) instead of tt_block tiny per-step matmuls.
    xb = x_ref[...].astype(jnp.bfloat16)                       # (Tt*Bp, I)
    gx[...] = (jnp.dot(xb, wih0_ref[...],
                       preferred_element_type=jnp.float32)
               + b0_ref[...])                                  # (Tt*Bp, 4Hp)

    def _cell(gates, c_prev):
        # Packed gate order (i, f, o | g): one sigmoid pass over 3*hp lanes,
        # all slice offsets 128-aligned.
        sg = jax.nn.sigmoid(gates[:, :3 * hp])
        i_g = sg[:, 0 * hp:1 * hp]
        f_g = sg[:, 1 * hp:2 * hp]
        o_g = sg[:, 2 * hp:3 * hp]
        g_g = jnp.tanh(gates[:, 3 * hp:4 * hp])
        c_new = f_g * c_prev + i_g * g_g
        h_new = o_g * jnp.tanh(c_new)
        return h_new, c_new

    need_mask = (seq_len % tt_block) != 0                      # static Python bool

    for tt in range(tt_block):                                 # unrolled recurrence
        row = tt * bp
        h0_p = state[0 * bp:1 * bp, :]
        c0_p = state[1 * bp:2 * bp, :]
        h1_p = state[2 * bp:3 * bp, :]
        c1_p = state[3 * bp:4 * bp, :]

        g0 = gx[row:row + bp, :] + jnp.dot(
            h0_p.astype(jnp.bfloat16), whh0_ref[...],
            preferred_element_type=jnp.float32)
        h0_n, c0_n = _cell(g0, c0_p)

        g1 = (jnp.dot(h0_n.astype(jnp.bfloat16), wih1_ref[...],
                      preferred_element_type=jnp.float32)
              + jnp.dot(h1_p.astype(jnp.bfloat16), whh1_ref[...],
                        preferred_element_type=jnp.float32)
              + b1_ref[...])
        h1_n, c1_n = _cell(g1, c1_p)

        if need_mask:  # only generated when T is not a multiple of tt_block
            valid = (tb * tt_block + tt) < seq_len
            h0_n = jnp.where(valid, h0_n, h0_p)
            c0_n = jnp.where(valid, c0_n, c0_p)
            h1_n = jnp.where(valid, h1_n, h1_p)
            c1_n = jnp.where(valid, c1_n, c1_p)

        state[0 * bp:1 * bp, :] = h0_n
        state[1 * bp:2 * bp, :] = c0_n
        state[2 * bp:3 * bp, :] = h1_n
        state[3 * bp:4 * bp, :] = c1_n
        hblk[row:row + bp, :] = h1_n

    # fc over the whole block: one matmul, one lane-dense (Tt*Bp, Cp) store.
    fc = (jnp.dot(hblk[...].astype(jnp.bfloat16), fcw_ref[...],
                  preferred_element_type=jnp.float32) + fcb_ref[...])
    out_ref[...] = fc.astype(out_ref.dtype)

    @pl.when(tb == pl.num_programs(0) - 1)
    def _():
        hc_ref[...] = state[...]


# ------------------------------ weight packing --------------------------------
def _pack_lstm_weights(w_ih, w_hh, b_ih, b_hh, in_dim, in_pad, h, hp,
                       dtype=jnp.bfloat16):
    """PyTorch-layout LSTM params -> padded, transposed, gate-reordered mats.

    Torch gate row order is (i, f, g, o); packed column order is (i, f, o, g)
    so sigmoid gates form one contiguous, 128-aligned slab.
    Zero padding keeps padded hidden units exactly zero through the recurrence.
    """
    order = (0, 1, 3, 2)
    wih_t = jnp.zeros((in_pad, 4 * hp), dtype)
    whh_t = jnp.zeros((hp, 4 * hp), dtype)
    bias = jnp.zeros((1, 4 * hp), jnp.float32)
    b_sum = (b_ih + b_hh).astype(jnp.float32)
    for k, g in enumerate(order):
        wih_t = wih_t.at[:in_dim, k * hp:k * hp + h].set(
            w_ih[g * h:(g + 1) * h, :].T.astype(dtype))
        whh_t = whh_t.at[:h, k * hp:k * hp + h].set(
            w_hh[g * h:(g + 1) * h, :].T.astype(dtype))
        bias = bias.at[0, k * hp:k * hp + h].set(b_sum[g * h:(g + 1) * h])
    return wih_t, whh_t, bias


# ------------------------------ model forward ---------------------------------
def rnn_forward(x, params, hc=None, *, t_block=16):
    """x: (B, T, input_size) batch_first.  Returns (out, ht, ct)."""
    B, T, I = x.shape
    H = params["w_hh0"].shape[1]
    C = params["fc_w"].shape[0]
    Hp = _round_up(H, 128)
    Cp = _round_up(C, 128)
    Bp = _round_up(max(B, 8), 8)
    Tt = min(T, t_block)
    Tp = _round_up(T, Tt)

    # Time-major, batch/time padded input, flattened to a lane-friendly 2D slab.
    x_tm = jnp.zeros((Tp, Bp, I), jnp.float32)
    x_tm = x_tm.at[:T, :B].set(jnp.transpose(x, (1, 0, 2)).astype(jnp.float32))
    x2d = x_tm.reshape(Tp * Bp, I)

    # Initial state (zeros when hc is None, matching nn.LSTM).
    hc_init = jnp.zeros((4 * Bp, Hp), jnp.float32)
    if hc is not None:
        ht0, ct0 = hc
        hc_init = hc_init.at[0 * Bp:0 * Bp + B, :H].set(ht0[0].astype(jnp.float32))
        hc_init = hc_init.at[1 * Bp:1 * Bp + B, :H].set(ct0[0].astype(jnp.float32))
        hc_init = hc_init.at[2 * Bp:2 * Bp + B, :H].set(ht0[1].astype(jnp.float32))
        hc_init = hc_init.at[3 * Bp:3 * Bp + B, :H].set(ct0[1].astype(jnp.float32))

    wih0, whh0, b0 = _pack_lstm_weights(params["w_ih0"], params["w_hh0"],
                                        params["b_ih0"], params["b_hh0"],
                                        I, I, H, Hp)
    wih1, whh1, b1 = _pack_lstm_weights(params["w_ih1"], params["w_hh1"],
                                        params["b_ih1"], params["b_hh1"],
                                        H, Hp, H, Hp)
    fcw = jnp.zeros((Hp, Cp), jnp.bfloat16).at[:H, :C].set(
        params["fc_w"].T.astype(jnp.bfloat16))
    fcb = jnp.zeros((1, Cp), jnp.float32).at[0, :C].set(
        params["fc_b"].astype(jnp.float32))

    kernel = functools.partial(_rnn_fused_kernel,
                               tt_block=Tt, seq_len=T, hp=Hp, bp=Bp)

    grid_spec = pltpu.PrefetchScalarGridSpec(
        num_scalar_prefetch=0,
        grid=(Tp // Tt,),
        in_specs=[
            pl.BlockSpec((Tt * Bp, I), lambda tb: (tb, 0)),        # x block
            pl.BlockSpec((4 * Bp, Hp), lambda tb: (0, 0)),         # initial h/c
            pl.BlockSpec((I, 4 * Hp), lambda tb: (0, 0)),          # W_ih0^T
            pl.BlockSpec((1, 4 * Hp), lambda tb: (0, 0)),          # bias 0
            pl.BlockSpec((Hp, 4 * Hp), lambda tb: (0, 0)),         # W_hh0^T
            pl.BlockSpec((Hp, 4 * Hp), lambda tb: (0, 0)),         # W_ih1^T
            pl.BlockSpec((Hp, 4 * Hp), lambda tb: (0, 0)),         # W_hh1^T
            pl.BlockSpec((1, 4 * Hp), lambda tb: (0, 0)),          # bias 1
            pl.BlockSpec((Hp, Cp), lambda tb: (0, 0)),             # fc W^T
            pl.BlockSpec((1, Cp), lambda tb: (0, 0)),              # fc bias
        ],
        out_specs=[
            pl.BlockSpec((Tt * Bp, Cp), lambda tb: (tb, 0)),       # fc(out) block
            pl.BlockSpec((4 * Bp, Hp), lambda tb: (0, 0)),         # final h/c
        ],
        scratch_shapes=[
            pltpu.VMEM((4 * Bp, Hp), jnp.float32),                 # h0|c0|h1|c1 carry
            pltpu.VMEM((Tt * Bp, 4 * Hp), jnp.float32),            # layer-0 gx block
            pltpu.VMEM((Tt * Bp, Hp), jnp.float32),                # layer-1 h block
        ],
    )

    out2d, hc_p = pl.pallas_call(
        kernel,
        out_shape=(jax.ShapeDtypeStruct((Tp * Bp, Cp), jnp.float32),
                   jax.ShapeDtypeStruct((4 * Bp, Hp), jnp.float32)),
        grid_spec=grid_spec,
        compiler_params=pltpu.CompilerParams(
            dimension_semantics=("arbitrary",)),                   # recurrent axis
    )(x2d, hc_init, wih0, b0, whh0, wih1, whh1, b1, fcw, fcb)

    out = jnp.transpose(out2d.reshape(Tp, Bp, Cp)[:T, :B, :C], (1, 0, 2))
    ht = jnp.stack([hc_p[0 * Bp:0 * Bp + B, :H],
                    hc_p[2 * Bp:2 * Bp + B, :H]], axis=0)
    ct = jnp.stack([hc_p[1 * Bp:1 * Bp + B, :H],
                    hc_p[3 * Bp:3 * Bp + B, :H]], axis=0)
    return out, ht, ct


# ------------------------------ params / reference ----------------------------
def init_params(key, input_size, hidden_size, num_classes):
    stdv = 1.0 / jnp.sqrt(hidden_size)
    ks = jax.random.split(key, 10)
    u = lambda k, shp: jax.random.uniform(k, shp, jnp.float32, -stdv, stdv)
    return {
        "w_ih0": u(ks[0], (4 * hidden_size, input_size)),
        "w_hh0": u(ks[1], (4 * hidden_size, hidden_size)),
        "b_ih0": u(ks[2], (4 * hidden_size,)),
        "b_hh0": u(ks[3], (4 * hidden_size,)),
        "w_ih1": u(ks[4], (4 * hidden_size, hidden_size)),
        "w_hh1": u(ks[5], (4 * hidden_size, hidden_size)),
        "b_ih1": u(ks[6], (4 * hidden_size,)),
        "b_hh1": u(ks[7], (4 * hidden_size,)),
        "fc_w": u(ks[8], (num_classes, hidden_size)),
        "fc_b": u(ks[9], (num_classes,)),
    }


def _lstm_cell_ref(x_t, h, c, w_ih, w_hh, b_ih, b_hh):
    gates = x_t @ w_ih.T + h @ w_hh.T + b_ih + b_hh
    i, f, g, o = jnp.split(gates, 4, axis=-1)
    c = jax.nn.sigmoid(f) * c + jax.nn.sigmoid(i) * jnp.tanh(g)
    h = jax.nn.sigmoid(o) * jnp.tanh(c)
    return h, c


def rnn_forward_ref(x, params):
    B, T, _ = x.shape
    H = params["w_hh0"].shape[1]
    h0 = c0 = h1 = c1 = jnp.zeros((B, H), jnp.float32)
    outs = []
    for t in range(T):
        h0, c0 = _lstm_cell_ref(x[:, t], h0, c0, params["w_ih0"],
                                params["w_hh0"], params["b_ih0"], params["b_hh0"])
        h1, c1 = _lstm_cell_ref(h0, h1, c1, params["w_ih1"],
                                params["w_hh1"], params["b_ih1"], params["b_hh1"])
        outs.append(h1 @ params["fc_w"].T + params["fc_b"])
    return jnp.stack(outs, axis=1), jnp.stack([h0, h1]), jnp.stack([c0, c1])


if __name__ == "__main__":
    B, T, I, H, C = 2, 8, 16, 32, 4
    key = jax.random.PRNGKey(0)
    kx, kp = jax.random.split(key)
    x = jax.random.normal(kx, (B, T, I), jnp.float32)
    params = init_params(kp, I, H, C)

    out, ht, ct = jax.jit(rnn_forward)(x, params)
    jax.block_until_ready((out, ht, ct))

    assert out.shape == (B, T, C)
    assert ht.shape == (2, B, H)
    assert ct.shape == (2, B, H)

    # Numerical check vs. pure-JAX f32 reference (kernel uses bf16 matmul
    # operands with f32 accumulation, so allow a small tolerance).
    out_r, ht_r, ct_r = rnn_forward_ref(x, params)
    np.testing.assert_allclose(np.asarray(out), np.asarray(out_r),
                               rtol=5e-2, atol=5e-2)
    np.testing.assert_allclose(np.asarray(ht), np.asarray(ht_r),
                               rtol=5e-2, atol=5e-2)
    np.testing.assert_allclose(np.asarray(ct), np.asarray(ct_r),
                               rtol=5e-2, atol=5e-2)

    print("KERNEL_OK")
</pallas_src>

<mosaic_0001>
module attributes {stable_mosaic.version = 11 : i64} {
  func.func @_rnn_fused_kernel(%arg0: i32, %arg1: memref<64x16xf32, #tpu.memory_space<vmem>>, %arg2: memref<32x128xf32, #tpu.memory_space<vmem>>, %arg3: memref<16x512xbf16, #tpu.memory_space<vmem>>, %arg4: memref<1x512xf32, #tpu.memory_space<vmem>>, %arg5: memref<128x512xbf16, #tpu.memory_space<vmem>>, %arg6: memref<128x512xbf16, #tpu.memory_space<vmem>>, %arg7: memref<128x512xbf16, #tpu.memory_space<vmem>>, %arg8: memref<1x512xf32, #tpu.memory_space<vmem>>, %arg9: memref<128x128xbf16, #tpu.memory_space<vmem>>, %arg10: memref<1x128xf32, #tpu.memory_space<vmem>>, %arg11: memref<64x128xf32, #tpu.memory_space<vmem>>, %arg12: memref<32x128xf32, #tpu.memory_space<vmem>>, %arg13: memref<32x128xf32, #tpu.memory_space<vmem>>, %arg14: memref<64x512xf32, #tpu.memory_space<vmem>>, %arg15: memref<64x128xf32, #tpu.memory_space<vmem>>) attributes {dimension_semantics = [#tpu.dimension_semantics<arbitrary>], iteration_bounds = array<i64: 1>, scalar_prefetch = 0 : i64, scratch_operands = 3 : i64, tpu.core_type = #tpu.core_type<tc>, window_params = [{transform_indices = @transform_0, window_bounds = array<i64: 64, 16>}, {pipeline_mode = #tpu.pipeline_mode<synchronous>, transform_indices = @transform_1, window_bounds = array<i64: 32, 128>}, {pipeline_mode = #tpu.pipeline_mode<synchronous>, transform_indices = @transform_2, window_bounds = array<i64: 16, 512>}, {pipeline_mode = #tpu.pipeline_mode<synchronous>, transform_indices = @transform_3, window_bounds = array<i64: 1, 512>}, {pipeline_mode = #tpu.pipeline_mode<synchronous>, transform_indices = @transform_4, window_bounds = array<i64: 128, 512>}, {pipeline_mode = #tpu.pipeline_mode<synchronous>, transform_indices = @transform_5, window_bounds = array<i64: 128, 512>}, {pipeline_mode = #tpu.pipeline_mode<synchronous>, transform_indices = @transform_6, window_bounds = array<i64: 128, 512>}, {pipeline_mode = #tpu.pipeline_mode<synchronous>, transform_indices = @transform_7, window_bounds = array<i64: 1, 512>}, {pipeline_mode = #tpu.pipeline_mode<synchronous>, transform_indices = @transform_8, window_bounds = array<i64: 128, 128>}, {pipeline_mode = #tpu.pipeline_mode<synchronous>, transform_indices = @transform_9, window_bounds = array<i64: 1, 128>}, {transform_indices = @transform_10, window_bounds = array<i64: 64, 128>}, {pipeline_mode = #tpu.pipeline_mode<synchronous>, transform_indices = @transform_11, window_bounds = array<i64: 32, 128>}]} {
    %c0_i32 = arith.constant 0 : i32
    %0 = arith.cmpi eq, %arg0, %c0_i32 : i32
    %1 = arith.extui %0 : i1 to i32
    %c0_i32_0 = arith.constant 0 : i32
    %2 = arith.cmpi ne, %1, %c0_i32_0 : i32
    scf.if %2 {
      %c0_276 = arith.constant 0 : index
      %c0_277 = arith.constant 0 : index
      %470 = vector.load %arg2[%c0_276, %c0_277] : memref<32x128xf32, #tpu.memory_space<vmem>>, vector<32x128xf32>
      %c0_278 = arith.constant 0 : index
      %c0_279 = arith.constant 0 : index
      %471 = vector.load %arg13[%c0_278, %c0_279] : memref<32x128xf32, #tpu.memory_space<vmem>>, vector<32x128xf32>
      tpu.vector_store %arg13[%c0_278, %c0_279], %470 {strides = array<i32>} : memref<32x128xf32, #tpu.memory_space<vmem>>, vector<32x128xf32>,
    } else {
    }
    %c0 = arith.constant 0 : index
    %c0_1 = arith.constant 0 : index
    %3 = vector.load %arg1[%c0, %c0_1] : memref<64x16xf32, #tpu.memory_space<vmem>>, vector<64x16xf32>
    %4 = arith.truncf %3 : vector<64x16xf32> to vector<64x16xbf16>
    %c0_2 = arith.constant 0 : index
    %c0_3 = arith.constant 0 : index
    %5 = vector.load %arg3[%c0_2, %c0_3] : memref<16x512xbf16, #tpu.memory_space<vmem>>, vector<16x512xbf16>
    %cst = arith.constant dense<0.000000e+00> : vector<64x512xf32>
    %6 = tpu.matmul %4, %5, %cst {dimension_numbers = #tpu.dot_dimension_numbers<[1], [0], [0], [1], [0, 0, 1, 1], [], []>} : vector<64x16xbf16>, vector<16x512xbf16>, vector<64x512xf32> -> vector<64x512xf32>
    %c0_4 = arith.constant 0 : index
    %c0_5 = arith.constant 0 : index
    %7 = vector.load %arg4[%c0_4, %c0_5] : memref<1x512xf32, #tpu.memory_space<vmem>>, vector<1x512xf32>
    %8 = vector.broadcast %7 : vector<1x512xf32> to vector<64x512xf32>
    %9 = arith.addf %6, %8 : vector<64x512xf32>
    %c0_6 = arith.constant 0 : index
    %c0_7 = arith.constant 0 : index
    %10 = vector.load %arg14[%c0_6, %c0_7] : memref<64x512xf32, #tpu.memory_space<vmem>>, vector<64x512xf32>
    tpu.vector_store %arg14[%c0_6, %c0_7], %9 {strides = array<i32>} : memref<64x512xf32, #tpu.memory_space<vmem>>, vector<64x512xf32>,
    %c0_8 = arith.constant 0 : index
    %c0_9 = arith.constant 0 : index
    %11 = vector.load %arg13[%c0_8, %c0_9] : memref<32x128xf32, #tpu.memory_space<vmem>>, vector<8x128xf32>
    %c8 = arith.constant 8 : index
    %c0_10 = arith.constant 0 : index
    %12 = vector.load %arg13[%c8, %c0_10] : memref<32x128xf32, #tpu.memory_space<vmem>>, vector<8x128xf32>
    %c16 = arith.constant 16 : index
    %c0_11 = arith.constant 0 : index
    %13 = vector.load %arg13[%c16, %c0_11] : memref<32x128xf32, #tpu.memory_space<vmem>>, vector<8x128xf32>
    %c24 = arith.constant 24 : index
    %c0_12 = arith.constant 0 : index
    %14 = vector.load %arg13[%c24, %c0_12] : memref<32x128xf32, #tpu.memory_space<vmem>>, vector<8x128xf32>
    %c0_13 = arith.constant 0 : index
    %c0_14 = arith.constant 0 : index
    %15 = vector.load %arg14[%c0_13, %c0_14] : memref<64x512xf32, #tpu.memory_space<vmem>>, vector<8x512xf32>
    %16 = arith.truncf %11 : vector<8x128xf32> to vector<8x128xbf16>
    %c0_15 = arith.constant 0 : index
    %c0_16 = arith.constant 0 : index
    %17 = vector.load %arg5[%c0_15, %c0_16] : memref<128x512xbf16, #tpu.memory_space<vmem>>, vector<128x512xbf16>
    %cst_17 = arith.constant dense<0.000000e+00> : vector<8x512xf32>
    %18 = tpu.matmul %16, %17, %cst_17 {dimension_numbers = #tpu.dot_dimension_numbers<[1], [0], [0], [1], [0, 0, 1, 1], [], []>} : vector<8x128xbf16>, vector<128x512xbf16>, vector<8x512xf32> -> vector<8x512xf32>
    %19 = arith.addf %15, %18 : vector<8x512xf32>
    %20 = vector.extract_strided_slice %19 {offsets = [0, 0], sizes = [8, 384], strides = [1, 1]} : vector<8x512xf32> to vector<8x384xf32>
    %21 = arith.negf %20 : vector<8x384xf32>
    %22 = math.exp %21 : vector<8x384xf32>
    %cst_18 = arith.constant 1.000000e+00 : f32
    %23 = vector.broadcast %cst_18 : f32 to vector<8x384xf32>
    %24 = arith.addf %23, %22 : vector<8x384xf32>
    %25 = arith.divf %23, %24 : vector<8x384xf32>
    %26 = vector.extract_strided_slice %25 {offsets = [0, 0], sizes = [8, 128], strides = [1, 1]} : vector<8x384xf32> to vector<8x128xf32>
    %27 = vector.extract_strided_slice %25 {offsets = [0, 128], sizes = [8, 128], strides = [1, 1]} : vector<8x384xf32> to vector<8x128xf32>
    %28 = vector.extract_strided_slice %25 {offsets = [0, 256], sizes = [8, 128], strides = [1, 1]} : vector<8x384xf32> to vector<8x128xf32>
    %29 = vector.extract_strided_slice %19 {offsets = [0, 384], sizes = [8, 128], strides = [1, 1]} : vector<8x512xf32> to vector<8x128xf32>
    %30 = math.tanh %29 : vector<8x128xf32>
    %31 = arith.mulf %27, %12 : vector<8x128xf32>
    %32 = arith.mulf %26, %30 : vector<8x128xf32>
    %33 = arith.addf %31, %32 : vector<8x128xf32>
    %34 = math.tanh %33 : vector<8x128xf32>
    %35 = arith.mulf %28, %34 : vector<8x128xf32>
    %36 = arith.truncf %35 : vector<8x128xf32> to vector<8x128xbf16>
    %c0_19 = arith.constant 0 : index
    %c0_20 = arith.constant 0 : index
    %37 = vector.load %arg6[%c0_19, %c0_20] : memref<128x512xbf16, #tpu.memory_space<vmem>>, vector<128x512xbf16>
    %cst_21 = arith.constant dense<0.000000e+00> : vector<8x512xf32>
    %38 = tpu.matmul %36, %37, %cst_21 {dimension_numbers = #tpu.dot_dimension_numbers<[1], [0], [0], [1], [0, 0, 1, 1], [], []>} : vector<8x128xbf16>, vector<128x512xbf16>, vector<8x512xf32> -> vector<8x512xf32>
    %39 = arith.truncf %13 : vector<8x128xf32> to vector<8x128xbf16>
    %c0_22 = arith.constant 0 : index
    %c0_23 = arith.constant 0 : index
    %40 = vector.load %arg7[%c0_22, %c0_23] : memref<128x512xbf16, #tpu.memory_space<vmem>>, vector<128x512xbf16>
    %cst_24 = arith.constant dense<0.000000e+00> : vector<8x512xf32>
    %41 = tpu.matmul %39, %40, %cst_24 {dimension_numbers = #tpu.dot_dimension_numbers<[1], [0], [0], [1], [0, 0, 1, 1], [], []>} : vector<8x128xbf16>, vector<128x512xbf16>, vector<8x512xf32> -> vector<8x512xf32>
    %42 = arith.addf %38, %41 : vector<8x512xf32>
    %c0_25 = arith.constant 0 : index
    %c0_26 = arith.constant 0 : index
    %43 = vector.load %arg8[%c0_25, %c0_26] : memref<1x512xf32, #tpu.memory_space<vmem>>, vector<1x512xf32>
    %44 = vector.broadcast %43 : vector<1x512xf32> to vector<8x512xf32>
    %45 = arith.addf %42, %44 : vector<8x512xf32>
    %46 = vector.extract_strided_slice %45 {offsets = [0, 0], sizes = [8, 384], strides = [1, 1]} : vector<8x512xf32> to vector<8x384xf32>
    %47 = arith.negf %46 : vector<8x384xf32>
    %48 = math.exp %47 : vector<8x384xf32>
    %cst_27 = arith.constant 1.000000e+00 : f32
    %49 = vector.broadcast %cst_27 : f32 to vector<8x384xf32>
    %50 = arith.addf %49, %48 : vector<8x384xf32>
    %51 = arith.divf %49, %50 : vector<8x384xf32>
    %52 = vector.extract_strided_slice %51 {offsets = [0, 0], sizes = [8, 128], strides = [1, 1]} : vector<8x384xf32> to vector<8x128xf32>
    %53 = vector.extract_strided_slice %51 {offsets = [0, 128], sizes = [8, 128], strides = [1, 1]} : vector<8x384xf32> to vector<8x128xf32>
    %54 = vector.extract_strided_slice %51 {offsets = [0, 256], sizes = [8, 128], strides = [1, 1]} : vector<8x384xf32> to vector<8x128xf32>
    %55 = vector.extract_strided_slice %45 {offsets = [0, 384], sizes = [8, 128], strides = [1, 1]} : vector<8x512xf32> to vector<8x128xf32>
    %56 = math.tanh %55 : vector<8x128xf32>
    %57 = arith.mulf %53, %14 : vector<8x128xf32>
    %58 = arith.mulf %52, %56 : vector<8x128xf32>
    %59 = arith.addf %57, %58 : vector<8x128xf32>
    %60 = math.tanh %59 : vector<8x128xf32>
    %61 = arith.mulf %54, %60 : vector<8x128xf32>
    %c0_28 = arith.constant 0 : index
    %c0_29 = arith.constant 0 : index
    %62 = vector.load %arg13[%c0_28, %c0_29] : memref<32x128xf32, #tpu.memory_space<vmem>>, vector<8x128xf32>
    tpu.vector_store %arg13[%c0_28, %c0_29], %35 {strides = array<i32>} : memref<32x128xf32, #tpu.memory_space<vmem>>, vector<8x128xf32>,
    %c8_30 = arith.constant 8 : index
    %c0_31 = arith.constant 0 : index
    %63 = vector.load %arg13[%c8_30, %c0_31] : memref<32x128xf32, #tpu.memory_space<vmem>>, vector<8x128xf32>
    tpu.vector_store %arg13[%c8_30, %c0_31], %33 {strides = array<i32>} : memref<32x128xf32, #tpu.memory_space<vmem>>, vector<8x128xf32>,
    %c16_32 = arith.constant 16 : index
    %c0_33 = arith.constant 0 : index
    %64 = vector.load %arg13[%c16_32, %c0_33] : memref<32x128xf32, #tpu.memory_space<vmem>>, vector<8x128xf32>
    tpu.vector_store %arg13[%c16_32, %c0_33], %61 {strides = array<i32>} : memref<32x128xf32, #tpu.memory_space<vmem>>, vector<8x128xf32>,
    %c24_34 = arith.constant 24 : index
    %c0_35 = arith.constant 0 : index
    %65 = vector.load %arg13[%c24_34, %c0_35] : memref<32x128xf32, #tpu.memory_space<vmem>>, vector<8x128xf32>
    tpu.vector_store %arg13[%c24_34, %c0_35], %59 {strides = array<i32>} : memref<32x128xf32, #tpu.memory_space<vmem>>, vector<8x128xf32>,
    %c0_36 = arith.constant 0 : index
    %c0_37 = arith.constant 0 : index
    %66 = vector.load %arg15[%c0_36, %c0_37] : memref<64x128xf32, #tpu.memory_space<vmem>>, vector<8x128xf32>
    tpu.vector_store %arg15[%c0_36, %c0_37], %61 {strides = array<i32>} : memref<64x128xf32, #tpu.memory_space<vmem>>, vector<8x128xf32>,
    %c0_38 = arith.constant 0 : index
    %c0_39 = arith.constant 0 : index
    %67 = vector.load %arg13[%c0_38, %c0_39] : memref<32x128xf32, #tpu.memory_space<vmem>>, vector<8x128xf32>
    %c8_40 = arith.constant 8 : index
    %c0_41 = arith.constant 0 : index
    %68 = vector.load %arg13[%c8_40, %c0_41] : memref<32x128xf32, #tpu.memory_space<vmem>>, vector<8x128xf32>
    %c16_42 = arith.constant 16 : index
    %c0_43 = arith.constant 0 : index
    %69 = vector.load %arg13[%c16_42, %c0_43] : memref<32x128xf32, #tpu.memory_space<vmem>>, vector<8x128xf32>
    %c24_44 = arith.constant 24 : index
    %c0_45 = arith.constant 0 : index
    %70 = vector.load %arg13[%c24_44, %c0_45] : memref<32x128xf32, #tpu.memory_space<vmem>>, vector<8x128xf32>
    %c8_46 = arith.constant 8 : index
    %c0_47 = arith.constant 0 : index
    %71 = vector.load %arg14[%c8_46, %c0_47] : memref<64x512xf32, #tpu.memory_space<vmem>>, vector<8x512xf32>
    %72 = arith.truncf %67 : vector<8x128xf32> to vector<8x128xbf16>
    %c0_48 = arith.constant 0 : index
    %c0_49 = arith.constant 0 : index
    %73 = vector.load %arg5[%c0_48, %c0_49] : memref<128x512xbf16, #tpu.memory_space<vmem>>, vector<128x512xbf16>
    %cst_50 = arith.constant dense<0.000000e+00> : vector<8x512xf32>
    %74 = tpu.matmul %72, %73, %cst_50 {dimension_numbers = #tpu.dot_dimension_numbers<[1], [0], [0], [1], [0, 0, 1, 1], [], []>} : vector<8x128xbf16>, vector<128x512xbf16>, vector<8x512xf32> -> vector<8x512xf32>
    %75 = arith.addf %71, %74 : vector<8x512xf32>
    %76 = vector.extract_strided_slice %75 {offsets = [0, 0], sizes = [8, 384], strides = [1, 1]} : vector<8x512xf32> to vector<8x384xf32>
    %77 = arith.negf %76 : vector<8x384xf32>
    %78 = math.exp %77 : vector<8x384xf32>
    %cst_51 = arith.constant 1.000000e+00 : f32
    %79 = vector.broadcast %cst_51 : f32 to vector<8x384xf32>
    %80 = arith.addf %79, %78 : vector<8x384xf32>
    %81 = arith.divf %79, %80 : vector<8x384xf32>
    %82 = vector.extract_strided_slice %81 {offsets = [0, 0], sizes = [8, 128], strides = [1, 1]} : vector<8x384xf32> to vector<8x128xf32>
    %83 = vector.extract_strided_slice %81 {offsets = [0, 128], sizes = [8, 128], strides = [1, 1]} : vector<8x384xf32> to vector<8x128xf32>
    %84 = vector.extract_strided_slice %81 {offsets = [0, 256], sizes = [8, 128], strides = [1, 1]} : vector<8x384xf32> to vector<8x128xf32>
    %85 = vector.extract_strided_slice %75 {offsets = [0, 384], sizes = [8, 128], strides = [1, 1]} : vector<8x512xf32> to vector<8x128xf32>
    %86 = math.tanh %85 : vector<8x128xf32>
    %87 = arith.mulf %83, %68 : vector<8x128xf32>
    %88 = arith.mulf %82, %86 : vector<8x128xf32>
    %89 = arith.addf %87, %88 : vector<8x128xf32>
    %90 = math.tanh %89 : vector<8x128xf32>
    %91 = arith.mulf %84, %90 : vector<8x128xf32>
    %92 = arith.truncf %91 : vector<8x128xf32> to vector<8x128xbf16>
    %c0_52 = arith.constant 0 : index
    %c0_53 = arith.constant 0 : index
    %93 = vector.load %arg6[%c0_52, %c0_53] : memref<128x512xbf16, #tpu.memory_space<vmem>>, vector<128x512xbf16>
    %cst_54 = arith.constant dense<0.000000e+00> : vector<8x512xf32>
    %94 = tpu.matmul %92, %93, %cst_54 {dimension_numbers = #tpu.dot_dimension_numbers<[1], [0], [0], [1], [0, 0, 1, 1], [], []>} : vector<8x128xbf16>, vector<128x512xbf16>, vector<8x512xf32> -> vector<8x512xf32>
    %95 = arith.truncf %69 : vector<8x128xf32> to vector<8x128xbf16>
    %c0_55 = arith.constant 0 : index
    %c0_56 = arith.constant 0 : index
    %96 = vector.load %arg7[%c0_55, %c0_56] : memref<128x512xbf16, #tpu.memory_space<vmem>>, vector<128x512xbf16>
    %cst_57 = arith.constant dense<0.000000e+00> : vector<8x512xf32>
    %97 = tpu.matmul %95, %96, %cst_57 {dimension_numbers = #tpu.dot_dimension_numbers<[1], [0], [0], [1], [0, 0, 1, 1], [], []>} : vector<8x128xbf16>, vector<128x512xbf16>, vector<8x512xf32> -> vector<8x512xf32>
    %98 = arith.addf %94, %97 : vector<8x512xf32>
    %c0_58 = arith.constant 0 : index
    %c0_59 = arith.constant 0 : index
    %99 = vector.load %arg8[%c0_58, %c0_59] : memref<1x512xf32, #tpu.memory_space<vmem>>, vector<1x512xf32>
    %100 = vector.broadcast %99 : vector<1x512xf32> to vector<8x512xf32>
    %101 = arith.addf %98, %100 : vector<8x512xf32>
    %102 = vector.extract_strided_slice %101 {offsets = [0, 0], sizes = [8, 384], strides = [1, 1]} : vector<8x512xf32> to vector<8x384xf32>
    %103 = arith.negf %102 : vector<8x384xf32>
    %104 = math.exp %103 : vector<8x384xf32>
    %cst_60 = arith.constant 1.000000e+00 : f32
    %105 = vector.broadcast %cst_60 : f32 to vector<8x384xf32>
    %106 = arith.addf %105, %104 : vector<8x384xf32>
    %107 = arith.divf %105, %106 : vector<8x384xf32>
    %108 = vector.extract_strided_slice %107 {offsets = [0, 0], sizes = [8, 128], strides = [1, 1]} : vector<8x384xf32> to vector<8x128xf32>
    %109 = vector.extract_strided_slice %107 {offsets = [0, 128], sizes = [8, 128], strides = [1, 1]} : vector<8x384xf32> to vector<8x128xf32>
    %110 = vector.extract_strided_slice %107 {offsets = [0, 256], sizes = [8, 128], strides = [1, 1]} : vector<8x384xf32> to vector<8x128xf32>
    %111 = vector.extract_strided_slice %101 {offsets = [0, 384], sizes = [8, 128], strides = [1, 1]} : vector<8x512xf32> to vector<8x128xf32>
    %112 = math.tanh %111 : vector<8x128xf32>
    %113 = arith.mulf %109, %70 : vector<8x128xf32>
    %114 = arith.mulf %108, %112 : vector<8x128xf32>
    %115 = arith.addf %113, %114 : vector<8x128xf32>
    %116 = math.tanh %115 : vector<8x128xf32>
    %117 = arith.mulf %110, %116 : vector<8x128xf32>
    %c0_61 = arith.constant 0 : index
    %c0_62 = arith.constant 0 : index
    %118 = vector.load %arg13[%c0_61, %c0_62] : memref<32x128xf32, #tpu.memory_space<vmem>>, vector<8x128xf32>
    tpu.vector_store %arg13[%c0_61, %c0_62], %91 {strides = array<i32>} : memref<32x128xf32, #tpu.memory_space<vmem>>, vector<8x128xf32>,
    %c8_63 = arith.constant 8 : index
    %c0_64 = arith.constant 0 : index
    %119 = vector.load %arg13[%c8_63, %c0_64] : memref<32x128xf32, #tpu.memory_space<vmem>>, vector<8x128xf32>
    tpu.vector_store %arg13[%c8_63, %c0_64], %89 {strides = array<i32>} : memref<32x128xf32, #tpu.memory_space<vmem>>, vector<8x128xf32>,
    %c16_65 = arith.constant 16 : index
    %c0_66 = arith.constant 0 : index
    %120 = vector.load %arg13[%c16_65, %c0_66] : memref<32x128xf32, #tpu.memory_space<vmem>>, vector<8x128xf32>
    tpu.vector_store %arg13[%c16_65, %c0_66], %117 {strides = array<i32>} : memref<32x128xf32, #tpu.memory_space<vmem>>, vector<8x128xf32>,
    %c24_67 = arith.constant 24 : index
    %c0_68 = arith.constant 0 : index
    %121 = vector.load %arg13[%c24_67, %c0_68] : memref<32x128xf32, #tpu.memory_space<vmem>>, vector<8x128xf32>
    tpu.vector_store %arg13[%c24_67, %c0_68], %115 {strides = array<i32>} : memref<32x128xf32, #tpu.memory_space<vmem>>, vector<8x128xf32>,
    %c8_69 = arith.constant 8 : index
    %c0_70 = arith.constant 0 : index
    %122 = vector.load %arg15[%c8_69, %c0_70] : memref<64x128xf32, #tpu.memory_space<vmem>>, vector<8x128xf32>
    tpu.vector_store %arg15[%c8_69, %c0_70], %117 {strides = array<i32>} : memref<64x128xf32, #tpu.memory_space<vmem>>, vector<8x128xf32>,
    %c0_71 = arith.constant 0 : index
    %c0_72 = arith.constant 0 : index
    %123 = vector.load %arg13[%c0_71, %c0_72] : memref<32x128xf32, #tpu.memory_space<vmem>>, vector<8x128xf32>
    %c8_73 = arith.constant 8 : index
    %c0_74 = arith.constant 0 : index
    %124 = vector.load %arg13[%c8_73, %c0_74] : memref<32x128xf32, #tpu.memory_space<vmem>>, vector<8x128xf32>
    %c16_75 = arith.constant 16 : index
    %c0_76 = arith.constant 0 : index
    %125 = vector.load %arg13[%c16_75, %c0_76] : memref<32x128xf32, #tpu.memory_space<vmem>>, vector<8x128xf32>
    %c24_77 = arith.constant 24 : index
    %c0_78 = arith.constant 0 : index
    %126 = vector.load %arg13[%c24_77, %c0_78] : memref<32x128xf32, #tpu.memory_space<vmem>>, vector<8x128xf32>
    %c16_79 = arith.constant 16 : index
    %c0_80 = arith.constant 0 : index
    %127 = vector.load %arg14[%c16_79, %c0_80] : memref<64x512xf32, #tpu.memory_space<vmem>>, vector<8x512xf32>
    %128 = arith.truncf %123 : vector<8x128xf32> to vector<8x128xbf16>
    %c0_81 = arith.constant 0 : index
    %c0_82 = arith.constant 0 : index
    %129 = vector.load %arg5[%c0_81, %c0_82] : memref<128x512xbf16, #tpu.memory_space<vmem>>, vector<128x512xbf16>
    %cst_83 = arith.constant dense<0.000000e+00> : vector<8x512xf32>
    %130 = tpu.matmul %128, %129, %cst_83 {dimension_numbers = #tpu.dot_dimension_numbers<[1], [0], [0], [1], [0, 0, 1, 1], [], []>} : vector<8x128xbf16>, vector<128x512xbf16>, vector<8x512xf32> -> vector<8x512xf32>
    %131 = arith.addf %127, %130 : vector<8x512xf32>
    %132 = vector.extract_strided_slice %131 {offsets = [0, 0], sizes = [8, 384], strides = [1, 1]} : vector<8x512xf32> to vector<8x384xf32>
    %133 = arith.negf %132 : vector<8x384xf32>
    %134 = math.exp %133 : vector<8x384xf32>
    %cst_84 = arith.constant 1.000000e+00 : f32
    %135 = vector.broadcast %cst_84 : f32 to vector<8x384xf32>
    %136 = arith.addf %135, %134 : vector<8x384xf32>
    %137 = arith.divf %135, %136 : vector<8x384xf32>
    %138 = vector.extract_strided_slice %137 {offsets = [0, 0], sizes = [8, 128], strides = [1, 1]} : vector<8x384xf32> to vector<8x128xf32>
    %139 = vector.extract_strided_slice %137 {offsets = [0, 128], sizes = [8, 128], strides = [1, 1]} : vector<8x384xf32> to vector<8x128xf32>
    %140 = vector.extract_strided_slice %137 {offsets = [0, 256], sizes = [8, 128], strides = [1, 1]} : vector<8x384xf32> to vector<8x128xf32>
    %141 = vector.extract_strided_slice %131 {offsets = [0, 384], sizes = [8, 128], strides = [1, 1]} : vector<8x512xf32> to vector<8x128xf32>
    %142 = math.tanh %141 : vector<8x128xf32>
    %143 = arith.mulf %139, %124 : vector<8x128xf32>
    %144 = arith.mulf %138, %142 : vector<8x128xf32>
    %145 = arith.addf %143, %144 : vector<8x128xf32>
    %146 = math.tanh %145 : vector<8x128xf32>
    %147 = arith.mulf %140, %146 : vector<8x128xf32>
    %148 = arith.truncf %147 : vector<8x128xf32> to vector<8x128xbf16>
    %c0_85 = arith.constant 0 : index
    %c0_86 = arith.constant 0 : index
    %149 = vector.load %arg6[%c0_85, %c0_86] : memref<128x512xbf16, #tpu.memory_space<vmem>>, vector<128x512xbf16>
    %cst_87 = arith.constant dense<0.000000e+00> : vector<8x512xf32>
    %150 = tpu.matmul %148, %149, %cst_87 {dimension_numbers = #tpu.dot_dimension_numbers<[1], [0], [0], [1], [0, 0, 1, 1], [], []>} : vector<8x128xbf16>, vector<128x512xbf16>, vector<8x512xf32> -> vector<8x512xf32>
    %151 = arith.truncf %125 : vector<8x128xf32> to vector<8x128xbf16>
    %c0_88 = arith.constant 0 : index
    %c0_89 = arith.constant 0 : index
    %152 = vector.load %arg7[%c0_88, %c0_89] : memref<128x512xbf16, #tpu.memory_space<vmem>>, vector<128x512xbf16>
    %cst_90 = arith.constant dense<0.000000e+00> : vector<8x512xf32>
    %153 = tpu.matmul %151, %152, %cst_90 {dimension_numbers = #tpu.dot_dimension_numbers<[1], [0], [0], [1], [0, 0, 1, 1], [], []>} : vector<8x128xbf16>, vector<128x512xbf16>, vector<8x512xf32> -> vector<8x512xf32>
    %154 = arith.addf %150, %153 : vector<8x512xf32>
    %c0_91 = arith.constant 0 : index
    %c0_92 = arith.constant 0 : index
    %155 = vector.load %arg8[%c0_91, %c0_92] : memref<1x512xf32, #tpu.memory_space<vmem>>, vector<1x512xf32>
    %156 = vector.broadcast %155 : vector<1x512xf32> to vector<8x512xf32>
    %157 = arith.addf %154, %156 : vector<8x512xf32>
    %158 = vector.extract_strided_slice %157 {offsets = [0, 0], sizes = [8, 384], strides = [1, 1]} : vector<8x512xf32> to vector<8x384xf32>
    %159 = arith.negf %158 : vector<8x384xf32>
    %160 = math.exp %159 : vector<8x384xf32>
    %cst_93 = arith.constant 1.000000e+00 : f32
    %161 = vector.broadcast %cst_93 : f32 to vector<8x384xf32>
    %162 = arith.addf %161, %160 : vector<8x384xf32>
    %163 = arith.divf %161, %162 : vector<8x384xf32>
    %164 = vector.extract_strided_slice %163 {offsets = [0, 0], sizes = [8, 128], strides = [1, 1]} : vector<8x384xf32> to vector<8x128xf32>
    %165 = vector.extract_strided_slice %163 {offsets = [0, 128], sizes = [8, 128], strides = [1, 1]} : vector<8x384xf32> to vector<8x128xf32>
    %166 = vector.extract_strided_slice %163 {offsets = [0, 256], sizes = [8, 128], strides = [1, 1]} : vector<8x384xf32> to vector<8x128xf32>
    %167 = vector.extract_strided_slice %157 {offsets = [0, 384], sizes = [8, 128], strides = [1, 1]} : vector<8x512xf32> to vector<8x128xf32>
    %168 = math.tanh %167 : vector<8x128xf32>
    %169 = arith.mulf %165, %126 : vector<8x128xf32>
    %170 = arith.mulf %164, %168 : vector<8x128xf32>
    %171 = arith.addf %169, %170 : vector<8x128xf32>
    %172 = math.tanh %171 : vector<8x128xf32>
    %173 = arith.mulf %166, %172 : vector<8x128xf32>
    %c0_94 = arith.constant 0 : index
    %c0_95 = arith.constant 0 : index
    %174 = vector.load %arg13[%c0_94, %c0_95] : memref<32x128xf32, #tpu.memory_space<vmem>>, vector<8x128xf32>
    tpu.vector_store %arg13[%c0_94, %c0_95], %147 {strides = array<i32>} : memref<32x128xf32, #tpu.memory_space<vmem>>, vector<8x128xf32>,
    %c8_96 = arith.constant 8 : index
    %c0_97 = arith.constant 0 : index
    %175 = vector.load %arg13[%c8_96, %c0_97] : memref<32x128xf32, #tpu.memory_space<vmem>>, vector<8x128xf32>
    tpu.vector_store %arg13[%c8_96, %c0_97], %145 {strides = array<i32>} : memref<32x128xf32, #tpu.memory_space<vmem>>, vector<8x128xf32>,
    %c16_98 = arith.constant 16 : index
    %c0_99 = arith.constant 0 : index
    %176 = vector.load %arg13[%c16_98, %c0_99] : memref<32x128xf32, #tpu.memory_space<vmem>>, vector<8x128xf32>
    tpu.vector_store %arg13[%c16_98, %c0_99], %173 {strides = array<i32>} : memref<32x128xf32, #tpu.memory_space<vmem>>, vector<8x128xf32>,
    %c24_100 = arith.constant 24 : index
    %c0_101 = arith.constant 0 : index
    %177 = vector.load %arg13[%c24_100, %c0_101] : memref<32x128xf32, #tpu.memory_space<vmem>>, vector<8x128xf32>
    tpu.vector_store %arg13[%c24_100, %c0_101], %171 {strides = array<i32>} : memref<32x128xf32, #tpu.memory_space<vmem>>, vector<8x128xf32>,
    %c16_102 = arith.constant 16 : index
    %c0_103 = arith.constant 0 : index
    %178 = vector.load %arg15[%c16_102, %c0_103] : memref<64x128xf32, #tpu.memory_space<vmem>>, vector<8x128xf32>
    tpu.vector_store %arg15[%c16_102, %c0_103], %173 {strides = array<i32>} : memref<64x128xf32, #tpu.memory_space<vmem>>, vector<8x128xf32>,
    %c0_104 = arith.constant 0 : index
    %c0_105 = arith.constant 0 : index
    %179 = vector.load %arg13[%c0_104, %c0_105] : memref<32x128xf32, #tpu.memory_space<vmem>>, vector<8x128xf32>
    %c8_106 = arith.constant 8 : index
    %c0_107 = arith.constant 0 : index
    %180 = vector.load %arg13[%c8_106, %c0_107] : memref<32x128xf32, #tpu.memory_space<vmem>>, vector<8x128xf32>
    %c16_108 = arith.constant 16 : index
    %c0_109 = arith.constant 0 : index
    %181 = vector.load %arg13[%c16_108, %c0_109] : memref<32x128xf32, #tpu.memory_space<vmem>>, vector<8x128xf32>
    %c24_110 = arith.constant 24 : index
    %c0_111 = arith.constant 0 : index
    %182 = vector.load %arg13[%c24_110, %c0_111] : memref<32x128xf32, #tpu.memory_space<vmem>>, vector<8x128xf32>
    %c24_112 = arith.constant 24 : index
    %c0_113 = arith.constant 0 : index
    %183 = vector.load %arg14[%c24_112, %c0_113] : memref<64x512xf32, #tpu.memory_space<vmem>>, vector<8x512xf32>
    %184 = arith.truncf %179 : vector<8x128xf32> to vector<8x128xbf16>
    %c0_114 = arith.constant 0 : index
    %c0_115 = arith.constant 0 : index
    %185 = vector.load %arg5[%c0_114, %c0_115] : memref<128x512xbf16, #tpu.memory_space<vmem>>, vector<128x512xbf16>
    %cst_116 = arith.constant dense<0.000000e+00> : vector<8x512xf32>
    %186 = tpu.matmul %184, %185, %cst_116 {dimension_numbers = #tpu.dot_dimension_numbers<[1], [0], [0], [1], [0, 0, 1, 1], [], []>} : vector<8x128xbf16>, vector<128x512xbf16>, vector<8x512xf32> -> vector<8x512xf32>
    %187 = arith.addf %183, %186 : vector<8x512xf32>
    %188 = vector.extract_strided_slice %187 {offsets = [0, 0], sizes = [8, 384], strides = [1, 1]} : vector<8x512xf32> to vector<8x384xf32>
    %189 = arith.negf %188 : vector<8x384xf32>
    %190 = math.exp %189 : vector<8x384xf32>
    %cst_117 = arith.constant 1.000000e+00 : f32
    %191 = vector.broadcast %cst_117 : f32 to vector<8x384xf32>
    %192 = arith.addf %191, %190 : vector<8x384xf32>
    %193 = arith.divf %191, %192 : vector<8x384xf32>
    %194 = vector.extract_strided_slice %193 {offsets = [0, 0], sizes = [8, 128], strides = [1, 1]} : vector<8x384xf32> to vector<8x128xf32>
    %195 = vector.extract_strided_slice %193 {offsets = [0, 128], sizes = [8, 128], strides = [1, 1]} : vector<8x384xf32> to vector<8x128xf32>
    %196 = vector.extract_strided_slice %193 {offsets = [0, 256], sizes = [8, 128], strides = [1, 1]} : vector<8x384xf32> to vector<8x128xf32>
    %197 = vector.extract_strided_slice %187 {offsets = [0, 384], sizes = [8, 128], strides = [1, 1]} : vector<8x512xf32> to vector<8x128xf32>
    %198 = math.tanh %197 : vector<8x128xf32>
    %199 = arith.mulf %195, %180 : vector<8x128xf32>
    %200 = arith.mulf %194, %198 : vector<8x128xf32>
    %201 = arith.addf %199, %200 : vector<8x128xf32>
    %202 = math.tanh %201 : vector<8x128xf32>
    %203 = arith.mulf %196, %202 : vector<8x128xf32>
    %204 = arith.truncf %203 : vector<8x128xf32> to vector<8x128xbf16>
    %c0_118 = arith.constant 0 : index
    %c0_119 = arith.constant 0 : index
    %205 = vector.load %arg6[%c0_118, %c0_119] : memref<128x512xbf16, #tpu.memory_space<vmem>>, vector<128x512xbf16>
    %cst_120 = arith.constant dense<0.000000e+00> : vector<8x512xf32>
    %206 = tpu.matmul %204, %205, %cst_120 {dimension_numbers = #tpu.dot_dimension_numbers<[1], [0], [0], [1], [0, 0, 1, 1], [], []>} : vector<8x128xbf16>, vector<128x512xbf16>, vector<8x512xf32> -> vector<8x512xf32>
    %207 = arith.truncf %181 : vector<8x128xf32> to vector<8x128xbf16>
    %c0_121 = arith.constant 0 : index
    %c0_122 = arith.constant 0 : index
    %208 = vector.load %arg7[%c0_121, %c0_122] : memref<128x512xbf16, #tpu.memory_space<vmem>>, vector<128x512xbf16>
    %cst_123 = arith.constant dense<0.000000e+00> : vector<8x512xf32>
    %209 = tpu.matmul %207, %208, %cst_123 {dimension_numbers = #tpu.dot_dimension_numbers<[1], [0], [0], [1], [0, 0, 1, 1], [], []>} : vector<8x128xbf16>, vector<128x512xbf16>, vector<8x512xf32> -> vector<8x512xf32>
    %210 = arith.addf %206, %209 : vector<8x512xf32>
    %c0_124 = arith.constant 0 : index
    %c0_125 = arith.constant 0 : index
    %211 = vector.load %arg8[%c0_124, %c0_125] : memref<1x512xf32, #tpu.memory_space<vmem>>, vector<1x512xf32>
    %212 = vector.broadcast %211 : vector<1x512xf32> to vector<8x512xf32>
    %213 = arith.addf %210, %212 : vector<8x512xf32>
    %214 = vector.extract_strided_slice %213 {offsets = [0, 0], sizes = [8, 384], strides = [1, 1]} : vector<8x512xf32> to vector<8x384xf32>
    %215 = arith.negf %214 : vector<8x384xf32>
    %216 = math.exp %215 : vector<8x384xf32>
    %cst_126 = arith.constant 1.000000e+00 : f32
    %217 = vector.broadcast %cst_126 : f32 to vector<8x384xf32>
    %218 = arith.addf %217, %216 : vector<8x384xf32>
    %219 = arith.divf %217, %218 : vector<8x384xf32>
    %220 = vector.extract_strided_slice %219 {offsets = [0, 0], sizes = [8, 128], strides = [1, 1]} : vector<8x384xf32> to vector<8x128xf32>
    %221 = vector.extract_strided_slice %219 {offsets = [0, 128], sizes = [8, 128], strides = [1, 1]} : vector<8x384xf32> to vector<8x128xf32>
    %222 = vector.extract_strided_slice %219 {offsets = [0, 256], sizes = [8, 128], strides = [1, 1]} : vector<8x384xf32> to vector<8x128xf32>
    %223 = vector.extract_strided_slice %213 {offsets = [0, 384], sizes = [8, 128], strides = [1, 1]} : vector<8x512xf32> to vector<8x128xf32>
    %224 = math.tanh %223 : vector<8x128xf32>
    %225 = arith.mulf %221, %182 : vector<8x128xf32>
    %226 = arith.mulf %220, %224 : vector<8x128xf32>
    %227 = arith.addf %225, %226 : vector<8x128xf32>
    %228 = math.tanh %227 : vector<8x128xf32>
    %229 = arith.mulf %222, %228 : vector<8x128xf32>
    %c0_127 = arith.constant 0 : index
    %c0_128 = arith.constant 0 : index
    %230 = vector.load %arg13[%c0_127, %c0_128] : memref<32x128xf32, #tpu.memory_space<vmem>>, vector<8x128xf32>
    tpu.vector_store %arg13[%c0_127, %c0_128], %203 {strides = array<i32>} : memref<32x128xf32, #tpu.memory_space<vmem>>, vector<8x128xf32>,
    %c8_129 = arith.constant 8 : index
    %c0_130 = arith.constant 0 : index
    %231 = vector.load %arg13[%c8_129, %c0_130] : memref<32x128xf32, #tpu.memory_space<vmem>>, vector<8x128xf32>
    tpu.vector_store %arg13[%c8_129, %c0_130], %201 {strides = array<i32>} : memref<32x128xf32, #tpu.memory_space<vmem>>, vector<8x128xf32>,
    %c16_131 = arith.constant 16 : index
    %c0_132 = arith.constant 0 : index
    %232 = vector.load %arg13[%c16_131, %c0_132] : memref<32x128xf32, #tpu.memory_space<vmem>>, vector<8x128xf32>
    tpu.vector_store %arg13[%c16_131, %c0_132], %229 {strides = array<i32>} : memref<32x128xf32, #tpu.memory_space<vmem>>, vector<8x128xf32>,
    %c24_133 = arith.constant 24 : index
    %c0_134 = arith.constant 0 : index
    %233 = vector.load %arg13[%c24_133, %c0_134] : memref<32x128xf32, #tpu.memory_space<vmem>>, vector<8x128xf32>
    tpu.vector_store %arg13[%c24_133, %c0_134], %227 {strides = array<i32>} : memref<32x128xf32, #tpu.memory_space<vmem>>, vector<8x128xf32>,
    %c24_135 = arith.constant 24 : index
    %c0_136 = arith.constant 0 : index
    %234 = vector.load %arg15[%c24_135, %c0_136] : memref<64x128xf32, #tpu.memory_space<vmem>>, vector<8x128xf32>
    tpu.vector_store %arg15[%c24_135, %c0_136], %229 {strides = array<i32>} : memref<64x128xf32, #tpu.memory_space<vmem>>, vector<8x128xf32>,
    %c0_137 = arith.constant 0 : index
    %c0_138 = arith.constant 0 : index
    %235 = vector.load %arg13[%c0_137, %c0_138] : memref<32x128xf32, #tpu.memory_space<vmem>>, vector<8x128xf32>
    %c8_139 = arith.constant 8 : index
    %c0_140 = arith.constant 0 : index
    %236 = vector.load %arg13[%c8_139, %c0_140] : memref<32x128xf32, #tpu.memory_space<vmem>>, vector<8x128xf32>
    %c16_141 = arith.constant 16 : index
    %c0_142 = arith.constant 0 : index
    %237 = vector.load %arg13[%c16_141, %c0_142] : memref<32x128xf32, #tpu.memory_space<vmem>>, vector<8x128xf32>
    %c24_143 = arith.constant 24 : index
    %c0_144 = arith.constant 0 : index
    %238 = vector.load %arg13[%c24_143, %c0_144] : memref<32x128xf32, #tpu.memory_space<vmem>>, vector<8x128xf32>
    %c32 = arith.constant 32 : index
    %c0_145 = arith.constant 0 : index
    %239 = vector.load %arg14[%c32, %c0_145] : memref<64x512xf32, #tpu.memory_space<vmem>>, vector<8x512xf32>
    %240 = arith.truncf %235 : vector<8x128xf32> to vector<8x128xbf16>
    %c0_146 = arith.constant 0 : index
    %c0_147 = arith.constant 0 : index
    %241 = vector.load %arg5[%c0_146, %c0_147] : memref<128x512xbf16, #tpu.memory_space<vmem>>, vector<128x512xbf16>
    %cst_148 = arith.constant dense<0.000000e+00> : vector<8x512xf32>
    %242 = tpu.matmul %240, %241, %cst_148 {dimension_numbers = #tpu.dot_dimension_numbers<[1], [0], [0], [1], [0, 0, 1, 1], [], []>} : vector<8x128xbf16>, vector<128x512xbf16>, vector<8x512xf32> -> vector<8x512xf32>
    %243 = arith.addf %239, %242 : vector<8x512xf32>
    %244 = vector.extract_strided_slice %243 {offsets = [0, 0], sizes = [8, 384], strides = [1, 1]} : vector<8x512xf32> to vector<8x384xf32>
    %245 = arith.negf %244 : vector<8x384xf32>
    %246 = math.exp %245 : vector<8x384xf32>
    %cst_149 = arith.constant 1.000000e+00 : f32
    %247 = vector.broadcast %cst_149 : f32 to vector<8x384xf32>
    %248 = arith.addf %247, %246 : vector<8x384xf32>
    %249 = arith.divf %247, %248 : vector<8x384xf32>
    %250 = vector.extract_strided_slice %249 {offsets = [0, 0], sizes = [8, 128], strides = [1, 1]} : vector<8x384xf32> to vector<8x128xf32>
    %251 = vector.extract_strided_slice %249 {offsets = [0, 128], sizes = [8, 128], strides = [1, 1]} : vector<8x384xf32> to vector<8x128xf32>
    %252 = vector.extract_strided_slice %249 {offsets = [0, 256], sizes = [8, 128], strides = [1, 1]} : vector<8x384xf32> to vector<8x128xf32>
    %253 = vector.extract_strided_slice %243 {offsets = [0, 384], sizes = [8, 128], strides = [1, 1]} : vector<8x512xf32> to vector<8x128xf32>
    %254 = math.tanh %253 : vector<8x128xf32>
    %255 = arith.mulf %251, %236 : vector<8x128xf32>
    %256 = arith.mulf %250, %254 : vector<8x128xf32>
    %257 = arith.addf %255, %256 : vector<8x128xf32>
    %258 = math.tanh %257 : vector<8x128xf32>
    %259 = arith.mulf %252, %258 : vector<8x128xf32>
    %260 = arith.truncf %259 : vector<8x128xf32> to vector<8x128xbf16>
    %c0_150 = arith.constant 0 : index
    %c0_151 = arith.constant 0 : index
    %261 = vector.load %arg6[%c0_150, %c0_151] : memref<128x512xbf16, #tpu.memory_space<vmem>>, vector<128x512xbf16>
    %cst_152 = arith.constant dense<0.000000e+00> : vector<8x512xf32>
    %262 = tpu.matmul %260, %261, %cst_152 {dimension_numbers = #tpu.dot_dimension_numbers<[1], [0], [0], [1], [0, 0, 1, 1], [], []>} : vector<8x128xbf16>, vector<128x512xbf16>, vector<8x512xf32> -> vector<8x512xf32>
    %263 = arith.truncf %237 : vector<8x128xf32> to vector<8x128xbf16>
    %c0_153 = arith.constant 0 : index
    %c0_154 = arith.constant 0 : index
    %264 = vector.load %arg7[%c0_153, %c0_154] : memref<128x512xbf16, #tpu.memory_space<vmem>>, vector<128x512xbf16>
    %cst_155 = arith.constant dense<0.000000e+00> : vector<8x512xf32>
    %265 = tpu.matmul %263, %264, %cst_155 {dimension_numbers = #tpu.dot_dimension_numbers<[1], [0], [0], [1], [0, 0, 1, 1], [], []>} : vector<8x128xbf16>, vector<128x512xbf16>, vector<8x512xf32> -> vector<8x512xf32>
    %266 = arith.addf %262, %265 : vector<8x512xf32>
    %c0_156 = arith.constant 0 : index
    %c0_157 = arith.constant 0 : index
    %267 = vector.load %arg8[%c0_156, %c0_157] : memref<1x512xf32, #tpu.memory_space<vmem>>, vector<1x512xf32>
    %268 = vector.broadcast %267 : vector<1x512xf32> to vector<8x512xf32>
    %269 = arith.addf %266, %268 : vector<8x512xf32>
    %270 = vector.extract_strided_slice %269 {offsets = [0, 0], sizes = [8, 384], strides = [1, 1]} : vector<8x512xf32> to vector<8x384xf32>
    %271 = arith.negf %270 : vector<8x384xf32>
    %272 = math.exp %271 : vector<8x384xf32>
    %cst_158 = arith.constant 1.000000e+00 : f32
    %273 = vector.broadcast %cst_158 : f32 to vector<8x384xf32>
    %274 = arith.addf %273, %272 : vector<8x384xf32>
    %275 = arith.divf %273, %274 : vector<8x384xf32>
    %276 = vector.extract_strided_slice %275 {offsets = [0, 0], sizes = [8, 128], strides = [1, 1]} : vector<8x384xf32> to vector<8x128xf32>
    %277 = vector.extract_strided_slice %275 {offsets = [0, 128], sizes = [8, 128], strides = [1, 1]} : vector<8x384xf32> to vector<8x128xf32>
    %278 = vector.extract_strided_slice %275 {offsets = [0, 256], sizes = [8, 128], strides = [1, 1]} : vector<8x384xf32> to vector<8x128xf32>
    %279 = vector.extract_strided_slice %269 {offsets = [0, 384], sizes = [8, 128], strides = [1, 1]} : vector<8x512xf32> to vector<8x128xf32>
    %280 = math.tanh %279 : vector<8x128xf32>
    %281 = arith.mulf %277, %238 : vector<8x128xf32>
    %282 = arith.mulf %276, %280 : vector<8x128xf32>
    %283 = arith.addf %281, %282 : vector<8x128xf32>
    %284 = math.tanh %283 : vector<8x128xf32>
    %285 = arith.mulf %278, %284 : vector<8x128xf32>
    %c0_159 = arith.constant 0 : index
    %c0_160 = arith.constant 0 : index
    %286 = vector.load %arg13[%c0_159, %c0_160] : memref<32x128xf32, #tpu.memory_space<vmem>>, vector<8x128xf32>
    tpu.vector_store %arg13[%c0_159, %c0_160], %259 {strides = array<i32>} : memref<32x128xf32, #tpu.memory_space<vmem>>, vector<8x128xf32>,
    %c8_161 = arith.constant 8 : index
    %c0_162 = arith.constant 0 : index
    %287 = vector.load %arg13[%c8_161, %c0_162] : memref<32x128xf32, #tpu.memory_space<vmem>>, vector<8x128xf32>
    tpu.vector_store %arg13[%c8_161, %c0_162], %257 {strides = array<i32>} : memref<32x128xf32, #tpu.memory_space<vmem>>, vector<8x128xf32>,
    %c16_163 = arith.constant 16 : index
    %c0_164 = arith.constant 0 : index
    %288 = vector.load %arg13[%c16_163, %c0_164] : memref<32x128xf32, #tpu.memory_space<vmem>>, vector<8x128xf32>
    tpu.vector_store %arg13[%c16_163, %c0_164], %285 {strides = array<i32>} : memref<32x128xf32, #tpu.memory_space<vmem>>, vector<8x128xf32>,
    %c24_165 = arith.constant 24 : index
    %c0_166 = arith.constant 0 : index
    %289 = vector.load %arg13[%c24_165, %c0_166] : memref<32x128xf32, #tpu.memory_space<vmem>>, vector<8x128xf32>
    tpu.vector_store %arg13[%c24_165, %c0_166], %283 {strides = array<i32>} : memref<32x128xf32, #tpu.memory_space<vmem>>, vector<8x128xf32>,
    %c32_167 = arith.constant 32 : index
    %c0_168 = arith.constant 0 : index
    %290 = vector.load %arg15[%c32_167, %c0_168] : memref<64x128xf32, #tpu.memory_space<vmem>>, vector<8x128xf32>
    tpu.vector_store %arg15[%c32_167, %c0_168], %285 {strides = array<i32>} : memref<64x128xf32, #tpu.memory_space<vmem>>, vector<8x128xf32>,
    %c0_169 = arith.constant 0 : index
    %c0_170 = arith.constant 0 : index
    %291 = vector.load %arg13[%c0_169, %c0_170] : memref<32x128xf32, #tpu.memory_space<vmem>>, vector<8x128xf32>
    %c8_171 = arith.constant 8 : index
    %c0_172 = arith.constant 0 : index
    %292 = vector.load %arg13[%c8_171, %c0_172] : memref<32x128xf32, #tpu.memory_space<vmem>>, vector<8x128xf32>
    %c16_173 = arith.constant 16 : index
    %c0_174 = arith.constant 0 : index
    %293 = vector.load %arg13[%c16_173, %c0_174] : memref<32x128xf32, #tpu.memory_space<vmem>>, vector<8x128xf32>
    %c24_175 = arith.constant 24 : index
    %c0_176 = arith.constant 0 : index
    %294 = vector.load %arg13[%c24_175, %c0_176] : memref<32x128xf32, #tpu.memory_space<vmem>>, vector<8x128xf32>
    %c40 = arith.constant 40 : index
    %c0_177 = arith.constant 0 : index
    %295 = vector.load %arg14[%c40, %c0_177] : memref<64x512xf32, #tpu.memory_space<vmem>>, vector<8x512xf32>
    %296 = arith.truncf %291 : vector<8x128xf32> to vector<8x128xbf16>
    %c0_178 = arith.constant 0 : index
    %c0_179 = arith.constant 0 : index
    %297 = vector.load %arg5[%c0_178, %c0_179] : memref<128x512xbf16, #tpu.memory_space<vmem>>, vector<128x512xbf16>
    %cst_180 = arith.constant dense<0.000000e+00> : vector<8x512xf32>
    %298 = tpu.matmul %296, %297, %cst_180 {dimension_numbers = #tpu.dot_dimension_numbers<[1], [0], [0], [1], [0, 0, 1, 1], [], []>} : vector<8x128xbf16>, vector<128x512xbf16>, vector<8x512xf32> -> vector<8x512xf32>
    %299 = arith.addf %295, %298 : vector<8x512xf32>
    %300 = vector.extract_strided_slice %299 {offsets = [0, 0], sizes = [8, 384], strides = [1, 1]} : vector<8x512xf32> to vector<8x384xf32>
    %301 = arith.negf %300 : vector<8x384xf32>
    %302 = math.exp %301 : vector<8x384xf32>
    %cst_181 = arith.constant 1.000000e+00 : f32
    %303 = vector.broadcast %cst_181 : f32 to vector<8x384xf32>
    %304 = arith.addf %303, %302 : vector<8x384xf32>
    %305 = arith.divf %303, %304 : vector<8x384xf32>
    %306 = vector.extract_strided_slice %305 {offsets = [0, 0], sizes = [8, 128], strides = [1, 1]} : vector<8x384xf32> to vector<8x128xf32>
    %307 = vector.extract_strided_slice %305 {offsets = [0, 128], sizes = [8, 128], strides = [1, 1]} : vector<8x384xf32> to vector<8x128xf32>
    %308 = vector.extract_strided_slice %305 {offsets = [0, 256], sizes = [8, 128], strides = [1, 1]} : vector<8x384xf32> to vector<8x128xf32>
    %309 = vector.extract_strided_slice %299 {offsets = [0, 384], sizes = [8, 128], strides = [1, 1]} : vector<8x512xf32> to vector<8x128xf32>
    %310 = math.tanh %309 : vector<8x128xf32>
    %311 = arith.mulf %307, %292 : vector<8x128xf32>
    %312 = arith.mulf %306, %310 : vector<8x128xf32>
    %313 = arith.addf %311, %312 : vector<8x128xf32>
    %314 = math.tanh %313 : vector<8x128xf32>
    %315 = arith.mulf %308, %314 : vector<8x128xf32>
    %316 = arith.truncf %315 : vector<8x128xf32> to vector<8x128xbf16>
    %c0_182 = arith.constant 0 : index
    %c0_183 = arith.constant 0 : index
    %317 = vector.load %arg6[%c0_182, %c0_183] : memref<128x512xbf16, #tpu.memory_space<vmem>>, vector<128x512xbf16>
    %cst_184 = arith.constant dense<0.000000e+00> : vector<8x512xf32>
    %318 = tpu.matmul %316, %317, %cst_184 {dimension_numbers = #tpu.dot_dimension_numbers<[1], [0], [0], [1], [0, 0, 1, 1], [], []>} : vector<8x128xbf16>, vector<128x512xbf16>, vector<8x512xf32> -> vector<8x512xf32>
    %319 = arith.truncf %293 : vector<8x128xf32> to vector<8x128xbf16>
    %c0_185 = arith.constant 0 : index
    %c0_186 = arith.constant 0 : index
    %320 = vector.load %arg7[%c0_185, %c0_186] : memref<128x512xbf16, #tpu.memory_space<vmem>>, vector<128x512xbf16>
    %cst_187 = arith.constant dense<0.000000e+00> : vector<8x512xf32>
    %321 = tpu.matmul %319, %320, %cst_187 {dimension_numbers = #tpu.dot_dimension_numbers<[1], [0], [0], [1], [0, 0, 1, 1], [], []>} : vector<8x128xbf16>, vector<128x512xbf16>, vector<8x512xf32> -> vector<8x512xf32>
    %322 = arith.addf %318, %321 : vector<8x512xf32>
    %c0_188 = arith.constant 0 : index
    %c0_189 = arith.constant 0 : index
    %323 = vector.load %arg8[%c0_188, %c0_189] : memref<1x512xf32, #tpu.memory_space<vmem>>, vector<1x512xf32>
    %324 = vector.broadcast %323 : vector<1x512xf32> to vector<8x512xf32>
    %325 = arith.addf %322, %324 : vector<8x512xf32>
    %326 = vector.extract_strided_slice %325 {offsets = [0, 0], sizes = [8, 384], strides = [1, 1]} : vector<8x512xf32> to vector<8x384xf32>
    %327 = arith.negf %326 : vector<8x384xf32>
    %328 = math.exp %327 : vector<8x384xf32>
    %cst_190 = arith.constant 1.000000e+00 : f32
    %329 = vector.broadcast %cst_190 : f32 to vector<8x384xf32>
    %330 = arith.addf %329, %328 : vector<8x384xf32>
    %331 = arith.divf %329, %330 : vector<8x384xf32>
    %332 = vector.extract_strided_slice %331 {offsets = [0, 0], sizes = [8, 128], strides = [1, 1]} : vector<8x384xf32> to vector<8x128xf32>
    %333 = vector.extract_strided_slice %331 {offsets = [0, 128], sizes = [8, 128], strides = [1, 1]} : vector<8x384xf32> to vector<8x128xf32>
    %334 = vector.extract_strided_slice %331 {offsets = [0, 256], sizes = [8, 128], strides = [1, 1]} : vector<8x384xf32> to vector<8x128xf32>
    %335 = vector.extract_strided_slice %325 {offsets = [0, 384], sizes = [8, 128], strides = [1, 1]} : vector<8x512xf32> to vector<8x128xf32>
    %336 = math.tanh %335 : vector<8x128xf32>
    %337 = arith.mulf %333, %294 : vector<8x128xf32>
    %338 = arith.mulf %332, %336 : vector<8x128xf32>
    %339 = arith.addf %337, %338 : vector<8x128xf32>
    %340 = math.tanh %339 : vector<8x128xf32>
    %341 = arith.mulf %334, %340 : vector<8x128xf32>
    %c0_191 = arith.constant 0 : index
    %c0_192 = arith.constant 0 : index
    %342 = vector.load %arg13[%c0_191, %c0_192] : memref<32x128xf32, #tpu.memory_space<vmem>>, vector<8x128xf32>
    tpu.vector_store %arg13[%c0_191, %c0_192], %315 {strides = array<i32>} : memref<32x128xf32, #tpu.memory_space<vmem>>, vector<8x128xf32>,
    %c8_193 = arith.constant 8 : index
    %c0_194 = arith.constant 0 : index
    %343 = vector.load %arg13[%c8_193, %c0_194] : memref<32x128xf32, #tpu.memory_space<vmem>>, vector<8x128xf32>
    tpu.vector_store %arg13[%c8_193, %c0_194], %313 {strides = array<i32>} : memref<32x128xf32, #tpu.memory_space<vmem>>, vector<8x128xf32>,
    %c16_195 = arith.constant 16 : index
    %c0_196 = arith.constant 0 : index
    %344 = vector.load %arg13[%c16_195, %c0_196] : memref<32x128xf32, #tpu.memory_space<vmem>>, vector<8x128xf32>
    tpu.vector_store %arg13[%c16_195, %c0_196], %341 {strides = array<i32>} : memref<32x128xf32, #tpu.memory_space<vmem>>, vector<8x128xf32>,
    %c24_197 = arith.constant 24 : index
    %c0_198 = arith.constant 0 : index
    %345 = vector.load %arg13[%c24_197, %c0_198] : memref<32x128xf32, #tpu.memory_space<vmem>>, vector<8x128xf32>
    tpu.vector_store %arg13[%c24_197, %c0_198], %339 {strides = array<i32>} : memref<32x128xf32, #tpu.memory_space<vmem>>, vector<8x128xf32>,
    %c40_199 = arith.constant 40 : index
    %c0_200 = arith.constant 0 : index
    %346 = vector.load %arg15[%c40_199, %c0_200] : memref<64x128xf32, #tpu.memory_space<vmem>>, vector<8x128xf32>
    tpu.vector_store %arg15[%c40_199, %c0_200], %341 {strides = array<i32>} : memref<64x128xf32, #tpu.memory_space<vmem>>, vector<8x128xf32>,
    %c0_201 = arith.constant 0 : index
    %c0_202 = arith.constant 0 : index
    %347 = vector.load %arg13[%c0_201, %c0_202] : memref<32x128xf32, #tpu.memory_space<vmem>>, vector<8x128xf32>
    %c8_203 = arith.constant 8 : index
    %c0_204 = arith.constant 0 : index
    %348 = vector.load %arg13[%c8_203, %c0_204] : memref<32x128xf32, #tpu.memory_space<vmem>>, vector<8x128xf32>
    %c16_205 = arith.constant 16 : index
    %c0_206 = arith.constant 0 : index
    %349 = vector.load %arg13[%c16_205, %c0_206] : memref<32x128xf32, #tpu.memory_space<vmem>>, vector<8x128xf32>
    %c24_207 = arith.constant 24 : index
    %c0_208 = arith.constant 0 : index
    %350 = vector.load %arg13[%c24_207, %c0_208] : memref<32x128xf32, #tpu.memory_space<vmem>>, vector<8x128xf32>
    %c48 = arith.constant 48 : index
    %c0_209 = arith.constant 0 : index
    %351 = vector.load %arg14[%c48, %c0_209] : memref<64x512xf32, #tpu.memory_space<vmem>>, vector<8x512xf32>
    %352 = arith.truncf %347 : vector<8x128xf32> to vector<8x128xbf16>
    %c0_210 = arith.constant 0 : index
    %c0_211 = arith.constant 0 : index
    %353 = vector.load %arg5[%c0_210, %c0_211] : memref<128x512xbf16, #tpu.memory_space<vmem>>, vector<128x512xbf16>
    %cst_212 = arith.constant dense<0.000000e+00> : vector<8x512xf32>
    %354 = tpu.matmul %352, %353, %cst_212 {dimension_numbers = #tpu.dot_dimension_numbers<[1], [0], [0], [1], [0, 0, 1, 1], [], []>} : vector<8x128xbf16>, vector<128x512xbf16>, vector<8x512xf32> -> vector<8x512xf32>
    %355 = arith.addf %351, %354 : vector<8x512xf32>
    %356 = vector.extract_strided_slice %355 {offsets = [0, 0], sizes = [8, 384], strides = [1, 1]} : vector<8x512xf32> to vector<8x384xf32>
    %357 = arith.negf %356 : vector<8x384xf32>
    %358 = math.exp %357 : vector<8x384xf32>
    %cst_213 = arith.constant 1.000000e+00 : f32
    %359 = vector.broadcast %cst_213 : f32 to vector<8x384xf32>
    %360 = arith.addf %359, %358 : vector<8x384xf32>
    %361 = arith.divf %359, %360 : vector<8x384xf32>
    %362 = vector.extract_strided_slice %361 {offsets = [0, 0], sizes = [8, 128], strides = [1, 1]} : vector<8x384xf32> to vector<8x128xf32>
    %363 = vector.extract_strided_slice %361 {offsets = [0, 128], sizes = [8, 128], strides = [1, 1]} : vector<8x384xf32> to vector<8x128xf32>
    %364 = vector.extract_strided_slice %361 {offsets = [0, 256], sizes = [8, 128], strides = [1, 1]} : vector<8x384xf32> to vector<8x128xf32>
    %365 = vector.extract_strided_slice %355 {offsets = [0, 384], sizes = [8, 128], strides = [1, 1]} : vector<8x512xf32> to vector<8x128xf32>
    %366 = math.tanh %365 : vector<8x128xf32>
    %367 = arith.mulf %363, %348 : vector<8x128xf32>
    %368 = arith.mulf %362, %366 : vector<8x128xf32>
    %369 = arith.addf %367, %368 : vector<8x128xf32>
    %370 = math.tanh %369 : vector<8x128xf32>
    %371 = arith.mulf %364, %370 : vector<8x128xf32>
    %372 = arith.truncf %371 : vector<8x128xf32> to vector<8x128xbf16>
    %c0_214 = arith.constant 0 : index
    %c0_215 = arith.constant 0 : index
    %373 = vector.load %arg6[%c0_214, %c0_215] : memref<128x512xbf16, #tpu.memory_space<vmem>>, vector<128x512xbf16>
    %cst_216 = arith.constant dense<0.000000e+00> : vector<8x512xf32>
    %374 = tpu.matmul %372, %373, %cst_216 {dimension_numbers = #tpu.dot_dimension_numbers<[1], [0], [0], [1], [0, 0, 1, 1], [], []>} : vector<8x128xbf16>, vector<128x512xbf16>, vector<8x512xf32> -> vector<8x512xf32>
    %375 = arith.truncf %349 : vector<8x128xf32> to vector<8x128xbf16>
    %c0_217 = arith.constant 0 : index
    %c0_218 = arith.constant 0 : index
    %376 = vector.load %arg7[%c0_217, %c0_218] : memref<128x512xbf16, #tpu.memory_space<vmem>>, vector<128x512xbf16>
    %cst_219 = arith.constant dense<0.000000e+00> : vector<8x512xf32>
    %377 = tpu.matmul %375, %376, %cst_219 {dimension_numbers = #tpu.dot_dimension_numbers<[1], [0], [0], [1], [0, 0, 1, 1], [], []>} : vector<8x128xbf16>, vector<128x512xbf16>, vector<8x512xf32> -> vector<8x512xf32>
    %378 = arith.addf %374, %377 : vector<8x512xf32>
    %c0_220 = arith.constant 0 : index
    %c0_221 = arith.constant 0 : index
    %379 = vector.load %arg8[%c0_220, %c0_221] : memref<1x512xf32, #tpu.memory_space<vmem>>, vector<1x512xf32>
    %380 = vector.broadcast %379 : vector<1x512xf32> to vector<8x512xf32>
    %381 = arith.addf %378, %380 : vector<8x512xf32>
    %382 = vector.extract_strided_slice %381 {offsets = [0, 0], sizes = [8, 384], strides = [1, 1]} : vector<8x512xf32> to vector<8x384xf32>
    %383 = arith.negf %382 : vector<8x384xf32>
    %384 = math.exp %383 : vector<8x384xf32>
    %cst_222 = arith.constant 1.000000e+00 : f32
    %385 = vector.broadcast %cst_222 : f32 to vector<8x384xf32>
    %386 = arith.addf %385, %384 : vector<8x384xf32>
    %387 = arith.divf %385, %386 : vector<8x384xf32>
    %388 = vector.extract_strided_slice %387 {offsets = [0, 0], sizes = [8, 128], strides = [1, 1]} : vector<8x384xf32> to vector<8x128xf32>
    %389 = vector.extract_strided_slice %387 {offsets = [0, 128], sizes = [8, 128], strides = [1, 1]} : vector<8x384xf32> to vector<8x128xf32>
    %390 = vector.extract_strided_slice %387 {offsets = [0, 256], sizes = [8, 128], strides = [1, 1]} : vector<8x384xf32> to vector<8x128xf32>
    %391 = vector.extract_strided_slice %381 {offsets = [0, 384], sizes = [8, 128], strides = [1, 1]} : vector<8x512xf32> to vector<8x128xf32>
    %392 = math.tanh %391 : vector<8x128xf32>
    %393 = arith.mulf %389, %350 : vector<8x128xf32>
    %394 = arith.mulf %388, %392 : vector<8x128xf32>
    %395 = arith.addf %393, %394 : vector<8x128xf32>
    %396 = math.tanh %395 : vector<8x128xf32>
    %397 = arith.mulf %390, %396 : vector<8x128xf32>
    %c0_223 = arith.constant 0 : index
    %c0_224 = arith.constant 0 : index
    %398 = vector.load %arg13[%c0_223, %c0_224] : memref<32x128xf32, #tpu.memory_space<vmem>>, vector<8x128xf32>
    tpu.vector_store %arg13[%c0_223, %c0_224], %371 {strides = array<i32>} : memref<32x128xf32, #tpu.memory_space<vmem>>, vector<8x128xf32>,
    %c8_225 = arith.constant 8 : index
    %c0_226 = arith.constant 0 : index
    %399 = vector.load %arg13[%c8_225, %c0_226] : memref<32x128xf32, #tpu.memory_space<vmem>>, vector<8x128xf32>
    tpu.vector_store %arg13[%c8_225, %c0_226], %369 {strides = array<i32>} : memref<32x128xf32, #tpu.memory_space<vmem>>, vector<8x128xf32>,
    %c16_227 = arith.constant 16 : index
    %c0_228 = arith.constant 0 : index
    %400 = vector.load %arg13[%c16_227, %c0_228] : memref<32x128xf32, #tpu.memory_space<vmem>>, vector<8x128xf32>
    tpu.vector_store %arg13[%c16_227, %c0_228], %397 {strides = array<i32>} : memref<32x128xf32, #tpu.memory_space<vmem>>, vector<8x128xf32>,
    %c24_229 = arith.constant 24 : index
    %c0_230 = arith.constant 0 : index
    %401 = vector.load %arg13[%c24_229, %c0_230] : memref<32x128xf32, #tpu.memory_space<vmem>>, vector<8x128xf32>
    tpu.vector_store %arg13[%c24_229, %c0_230], %395 {strides = array<i32>} : memref<32x128xf32, #tpu.memory_space<vmem>>, vector<8x128xf32>,
    %c48_231 = arith.constant 48 : index
    %c0_232 = arith.constant 0 : index
    %402 = vector.load %arg15[%c48_231, %c0_232] : memref<64x128xf32, #tpu.memory_space<vmem>>, vector<8x128xf32>
    tpu.vector_store %arg15[%c48_231, %c0_232], %397 {strides = array<i32>} : memref<64x128xf32, #tpu.memory_space<vmem>>, vector<8x128xf32>,
    %c0_233 = arith.constant 0 : index
    %c0_234 = arith.constant 0 : index
    %403 = vector.load %arg13[%c0_233, %c0_234] : memref<32x128xf32, #tpu.memory_space<vmem>>, vector<8x128xf32>
    %c8_235 = arith.constant 8 : index
    %c0_236 = arith.constant 0 : index
    %404 = vector.load %arg13[%c8_235, %c0_236] : memref<32x128xf32, #tpu.memory_space<vmem>>, vector<8x128xf32>
    %c16_237 = arith.constant 16 : index
    %c0_238 = arith.constant 0 : index
    %405 = vector.load %arg13[%c16_237, %c0_238] : memref<32x128xf32, #tpu.memory_space<vmem>>, vector<8x128xf32>
    %c24_239 = arith.constant 24 : index
    %c0_240 = arith.constant 0 : index
    %406 = vector.load %arg13[%c24_239, %c0_240] : memref<32x128xf32, #tpu.memory_space<vmem>>, vector<8x128xf32>
    %c56 = arith.constant 56 : index
    %c0_241 = arith.constant 0 : index
    %407 = vector.load %arg14[%c56, %c0_241] : memref<64x512xf32, #tpu.memory_space<vmem>>, vector<8x512xf32>
    %408 = arith.truncf %403 : vector<8x128xf32> to vector<8x128xbf16>
    %c0_242 = arith.constant 0 : index
    %c0_243 = arith.constant 0 : index
    %409 = vector.load %arg5[%c0_242, %c0_243] : memref<128x512xbf16, #tpu.memory_space<vmem>>, vector<128x512xbf16>
    %cst_244 = arith.constant dense<0.000000e+00> : vector<8x512xf32>
    %410 = tpu.matmul %408, %409, %cst_244 {dimension_numbers = #tpu.dot_dimension_numbers<[1], [0], [0], [1], [0, 0, 1, 1], [], []>} : vector<8x128xbf16>, vector<128x512xbf16>, vector<8x512xf32> -> vector<8x512xf32>
    %411 = arith.addf %407, %410 : vector<8x512xf32>
    %412 = vector.extract_strided_slice %411 {offsets = [0, 0], sizes = [8, 384], strides = [1, 1]} : vector<8x512xf32> to vector<8x384xf32>
    %413 = arith.negf %412 : vector<8x384xf32>
    %414 = math.exp %413 : vector<8x384xf32>
    %cst_245 = arith.constant 1.000000e+00 : f32
    %415 = vector.broadcast %cst_245 : f32 to vector<8x384xf32>
    %416 = arith.addf %415, %414 : vector<8x384xf32>
    %417 = arith.divf %415, %416 : vector<8x384xf32>
    %418 = vector.extract_strided_slice %417 {offsets = [0, 0], sizes = [8, 128], strides = [1, 1]} : vector<8x384xf32> to vector<8x128xf32>
    %419 = vector.extract_strided_slice %417 {offsets = [0, 128], sizes = [8, 128], strides = [1, 1]} : vector<8x384xf32> to vector<8x128xf32>
    %420 = vector.extract_strided_slice %417 {offsets = [0, 256], sizes = [8, 128], strides = [1, 1]} : vector<8x384xf32> to vector<8x128xf32>
    %421 = vector.extract_strided_slice %411 {offsets = [0, 384], sizes = [8, 128], strides = [1, 1]} : vector<8x512xf32> to vector<8x128xf32>
    %422 = math.tanh %421 : vector<8x128xf32>
    %423 = arith.mulf %419, %404 : vector<8x128xf32>
    %424 = arith.mulf %418, %422 : vector<8x128xf32>
    %425 = arith.addf %423, %424 : vector<8x128xf32>
    %426 = math.tanh %425 : vector<8x128xf32>
    %427 = arith.mulf %420, %426 : vector<8x128xf32>
    %428 = arith.truncf %427 : vector<8x128xf32> to vector<8x128xbf16>
    %c0_246 = arith.constant 0 : index
    %c0_247 = arith.constant 0 : index
    %429 = vector.load %arg6[%c0_246, %c0_247] : memref<128x512xbf16, #tpu.memory_space<vmem>>, vector<128x512xbf16>
    %cst_248 = arith.constant dense<0.000000e+00> : vector<8x512xf32>
    %430 = tpu.matmul %428, %429, %cst_248 {dimension_numbers = #tpu.dot_dimension_numbers<[1], [0], [0], [1], [0, 0, 1, 1], [], []>} : vector<8x128xbf16>, vector<128x512xbf16>, vector<8x512xf32> -> vector<8x512xf32>
    %431 = arith.truncf %405 : vector<8x128xf32> to vector<8x128xbf16>
    %c0_249 = arith.constant 0 : index
    %c0_250 = arith.constant 0 : index
    %432 = vector.load %arg7[%c0_249, %c0_250] : memref<128x512xbf16, #tpu.memory_space<vmem>>, vector<128x512xbf16>
    %cst_251 = arith.constant dense<0.000000e+00> : vector<8x512xf32>
    %433 = tpu.matmul %431, %432, %cst_251 {dimension_numbers = #tpu.dot_dimension_numbers<[1], [0], [0], [1], [0, 0, 1, 1], [], []>} : vector<8x128xbf16>, vector<128x512xbf16>, vector<8x512xf32> -> vector<8x512xf32>
    %434 = arith.addf %430, %433 : vector<8x512xf32>
    %c0_252 = arith.constant 0 : index
    %c0_253 = arith.constant 0 : index
    %435 = vector.load %arg8[%c0_252, %c0_253] : memref<1x512xf32, #tpu.memory_space<vmem>>, vector<1x512xf32>
    %436 = vector.broadcast %435 : vector<1x512xf32> to vector<8x512xf32>
    %437 = arith.addf %434, %436 : vector<8x512xf32>
    %438 = vector.extract_strided_slice %437 {offsets = [0, 0], sizes = [8, 384], strides = [1, 1]} : vector<8x512xf32> to vector<8x384xf32>
    %439 = arith.negf %438 : vector<8x384xf32>
    %440 = math.exp %439 : vector<8x384xf32>
    %cst_254 = arith.constant 1.000000e+00 : f32
    %441 = vector.broadcast %cst_254 : f32 to vector<8x384xf32>
    %442 = arith.addf %441, %440 : vector<8x384xf32>
    %443 = arith.divf %441, %442 : vector<8x384xf32>
    %444 = vector.extract_strided_slice %443 {offsets = [0, 0], sizes = [8, 128], strides = [1, 1]} : vector<8x384xf32> to vector<8x128xf32>
    %445 = vector.extract_strided_slice %443 {offsets = [0, 128], sizes = [8, 128], strides = [1, 1]} : vector<8x384xf32> to vector<8x128xf32>
    %446 = vector.extract_strided_slice %443 {offsets = [0, 256], sizes = [8, 128], strides = [1, 1]} : vector<8x384xf32> to vector<8x128xf32>
    %447 = vector.extract_strided_slice %437 {offsets = [0, 384], sizes = [8, 128], strides = [1, 1]} : vector<8x512xf32> to vector<8x128xf32>
    %448 = math.tanh %447 : vector<8x128xf32>
    %449 = arith.mulf %445, %406 : vector<8x128xf32>
    %450 = arith.mulf %444, %448 : vector<8x128xf32>
    %451 = arith.addf %449, %450 : vector<8x128xf32>
    %452 = math.tanh %451 : vector<8x128xf32>
    %453 = arith.mulf %446, %452 : vector<8x128xf32>
    %c0_255 = arith.constant 0 : index
    %c0_256 = arith.constant 0 : index
    %454 = vector.load %arg13[%c0_255, %c0_256] : memref<32x128xf32, #tpu.memory_space<vmem>>, vector<8x128xf32>
    tpu.vector_store %arg13[%c0_255, %c0_256], %427 {strides = array<i32>} : memref<32x128xf32, #tpu.memory_space<vmem>>, vector<8x128xf32>,
    %c8_257 = arith.constant 8 : index
    %c0_258 = arith.constant 0 : index
    %455 = vector.load %arg13[%c8_257, %c0_258] : memref<32x128xf32, #tpu.memory_space<vmem>>, vector<8x128xf32>
    tpu.vector_store %arg13[%c8_257, %c0_258], %425 {strides = array<i32>} : memref<32x128xf32, #tpu.memory_space<vmem>>, vector<8x128xf32>,
    %c16_259 = arith.constant 16 : index
    %c0_260 = arith.constant 0 : index
    %456 = vector.load %arg13[%c16_259, %c0_260] : memref<32x128xf32, #tpu.memory_space<vmem>>, vector<8x128xf32>
    tpu.vector_store %arg13[%c16_259, %c0_260], %453 {strides = array<i32>} : memref<32x128xf32, #tpu.memory_space<vmem>>, vector<8x128xf32>,
    %c24_261 = arith.constant 24 : index
    %c0_262 = arith.constant 0 : index
    %457 = vector.load %arg13[%c24_261, %c0_262] : memref<32x128xf32, #tpu.memory_space<vmem>>, vector<8x128xf32>
    tpu.vector_store %arg13[%c24_261, %c0_262], %451 {strides = array<i32>} : memref<32x128xf32, #tpu.memory_space<vmem>>, vector<8x128xf32>,
    %c56_263 = arith.constant 56 : index
    %c0_264 = arith.constant 0 : index
    %458 = vector.load %arg15[%c56_263, %c0_264] : memref<64x128xf32, #tpu.memory_space<vmem>>, vector<8x128xf32>
    tpu.vector_store %arg15[%c56_263, %c0_264], %453 {strides = array<i32>} : memref<64x128xf32, #tpu.memory_space<vmem>>, vector<8x128xf32>,
    %c0_265 = arith.constant 0 : index
    %c0_266 = arith.constant 0 : index
    %459 = vector.load %arg15[%c0_265, %c0_266] : memref<64x128xf32, #tpu.memory_space<vmem>>, vector<64x128xf32>
    %460 = arith.truncf %459 : vector<64x128xf32> to vector<64x128xbf16>
    %c0_267 = arith.constant 0 : index
    %c0_268 = arith.constant 0 : index
    %461 = vector.load %arg9[%c0_267, %c0_268] : memref<128x128xbf16, #tpu.memory_space<vmem>>, vector<128x128xbf16>
    %cst_269 = arith.constant dense<0.000000e+00> : vector<64x128xf32>
    %462 = tpu.matmul %460, %461, %cst_269 {dimension_numbers = #tpu.dot_dimension_numbers<[1], [0], [0], [1], [0, 0, 1, 1], [], []>} : vector<64x128xbf16>, vector<128x128xbf16>, vector<64x128xf32> -> vector<64x128xf32>
    %c0_270 = arith.constant 0 : index
    %c0_271 = arith.constant 0 : index
    %463 = vector.load %arg10[%c0_270, %c0_271] : memref<1x128xf32, #tpu.memory_space<vmem>>, vector<1x128xf32>
    %464 = vector.broadcast %463 : vector<1x128xf32> to vector<64x128xf32>
    %465 = arith.addf %462, %464 : vector<64x128xf32>
    %c0_272 = arith.constant 0 : index
    %c0_273 = arith.constant 0 : index
    %466 = vector.load %arg11[%c0_272, %c0_273] : memref<64x128xf32, #tpu.memory_space<vmem>>, vector<64x128xf32>
    tpu.vector_store %arg11[%c0_272, %c0_273], %465 {strides = array<i32>} : memref<64x128xf32, #tpu.memory_space<vmem>>, vector<64x128xf32>,
    %c0_i32_274 = arith.constant 0 : i32
    %467 = arith.cmpi eq, %arg0, %c0_i32_274 : i32
    %468 = arith.extui %467 : i1 to i32
    %c0_i32_275 = arith.constant 0 : i32
    %469 = arith.cmpi ne, %468, %c0_i32_275 : i32
    scf.if %469 {
      %c0_276 = arith.constant 0 : index
      %c0_277 = arith.constant 0 : index
      %470 = vector.load %arg13[%c0_276, %c0_277] : memref<32x128xf32, #tpu.memory_space<vmem>>, vector<32x128xf32>
      %c0_278 = arith.constant 0 : index
      %c0_279 = arith.constant 0 : index
      %471 = vector.load %arg12[%c0_278, %c0_279] : memref<32x128xf32, #tpu.memory_space<vmem>>, vector<32x128xf32>
      tpu.vector_store %arg12[%c0_278, %c0_279], %470 {strides = array<i32>} : memref<32x128xf32, #tpu.memory_space<vmem>>, vector<32x128xf32>,
    } else {
    }
    return
  }
  func.func @transform_0(%arg0: i32) -> (i32, i32) {
    %c0_i32 = arith.constant 0 : i32
    %c0_i32_0 = arith.constant 0 : i32
    return %arg0, %c0_i32 : i32, i32
  }
  func.func @transform_1(%arg0: i32) -> (i32, i32) {
    %c0_i32 = arith.constant 0 : i32
    %c0_i32_0 = arith.constant 0 : i32
    %c0_i32_1 = arith.constant 0 : i32
    return %c0_i32, %c0_i32_0 : i32, i32
  }
  func.func @transform_2(%arg0: i32) -> (i32, i32) {
    %c0_i32 = arith.constant 0 : i32
    %c0_i32_0 = arith.constant 0 : i32
    %c0_i32_1 = arith.constant 0 : i32
    return %c0_i32, %c0_i32_0 : i32, i32
  }
  func.func @transform_3(%arg0: i32) -> (i32, i32) {
    %c0_i32 = arith.constant 0 : i32
    %c0_i32_0 = arith.constant 0 : i32
    %c0_i32_1 = arith.constant 0 : i32
    return %c0_i32, %c0_i32_0 : i32, i32
  }
  func.func @transform_4(%arg0: i32) -> (i32, i32) {
    %c0_i32 = arith.constant 0 : i32
    %c0_i32_0 = arith.constant 0 : i32
    %c0_i32_1 = arith.constant 0 : i32
    return %c0_i32, %c0_i32_0 : i32, i32
  }
  func.func @transform_5(%arg0: i32) -> (i32, i32) {
    %c0_i32 = arith.constant 0 : i32
    %c0_i32_0 = arith.constant 0 : i32
    %c0_i32_1 = arith.constant 0 : i32
    return %c0_i32, %c0_i32_0 : i32, i32
  }
  func.func @transform_6(%arg0: i32) -> (i32, i32) {
    %c0_i32 = arith.constant 0 : i32
    %c0_i32_0 = arith.constant 0 : i32
    %c0_i32_1 = arith.constant 0 : i32
    return %c0_i32, %c0_i32_0 : i32, i32
  }
  func.func @transform_7(%arg0: i32) -> (i32, i32) {
    %c0_i32 = arith.constant 0 : i32
    %c0_i32_0 = arith.constant 0 : i32
    %c0_i32_1 = arith.constant 0 : i32
    return %c0_i32, %c0_i32_0 : i32, i32
  }
  func.func @transform_8(%arg0: i32) -> (i32, i32) {
    %c0_i32 = arith.constant 0 : i32
    %c0_i32_0 = arith.constant 0 : i32
    %c0_i32_1 = arith.constant 0 : i32
    return %c0_i32, %c0_i32_0 : i32, i32
  }
  func.func @transform_9(%arg0: i32) -> (i32, i32) {
    %c0_i32 = arith.constant 0 : i32
    %c0_i32_0 = arith.constant 0 : i32
    %c0_i32_1 = arith.constant 0 : i32
    return %c0_i32, %c0_i32_0 : i32, i32
  }
  func.func @transform_10(%arg0: i32) -> (i32, i32) {
    %c0_i32 = arith.constant 0 : i32
    %c0_i32_0 = arith.constant 0 : i32
    return %arg0, %c0_i32 : i32, i32
  }
  func.func @transform_11(%arg0: i32) -> (i32, i32) {
    %c0_i32 = arith.constant 0 : i32
    %c0_i32_0 = arith.constant 0 : i32
    %c0_i32_1 = arith.constant 0 : i32
    return %c0_i32, %c0_i32_0 : i32, i32
  }
}

</mosaic_0001>

<llo_original>
// kernel: rnn_forward.1
$region0: #{rnn_forward.1}
  #allocation0 [shape = 'u32[]', space=smem, size = 0x4, offset = 0x4, fixed_abs, tag = 'smem constant byte address 0x4 - core index']
  #allocation1 [shape = 'u32[144,128]{1,0:T(1,128)}', space=vmem, size = 0x12000, scoped, tag = 'internal scratch']
  #allocation2 [shape = 'f32[32,128]{1,0:T(8,128)}', space=vmem, size = 0x4000, scoped, tag = 'scratch operand']
  #allocation3 [shape = 'f32[64,512]{1,0:T(8,128)}', space=vmem, size = 0x20000, scoped, tag = 'scratch operand']
  #allocation4 [shape = 'f32[64,128]{1,0:T(8,128)}', space=vmem, size = 0x8000, scoped, tag = 'scratch operand']
  %s0 = inlined_call_operand.vmem [shape: f32[64,16], index: 0, kind: input, shape index: {}]
  %s1 = inlined_call_operand.vmem [shape: f32[32,128], index: 1, kind: input, shape index: {}]
  %s2 = inlined_call_operand.vmem [shape: bf16[16,512], index: 2, kind: input, shape index: {}]
  %s3 = inlined_call_operand.vmem [shape: f32[1,512], index: 3, kind: input, shape index: {}]
  %s4 = inlined_call_operand.vmem [shape: bf16[128,512], index: 4, kind: input, shape index: {}]
  %s5 = inlined_call_operand.vmem [shape: bf16[128,512], index: 5, kind: input, shape index: {}]
  %s6 = inlined_call_operand.vmem [shape: bf16[128,512], index: 6, kind: input, shape index: {}]
  %s7 = inlined_call_operand.vmem [shape: f32[1,512], index: 7, kind: input, shape index: {}]
  %s8 = inlined_call_operand.vmem [shape: bf16[128,128], index: 8, kind: input, shape index: {}]
  %s9 = inlined_call_operand.vmem [shape: f32[1,128], index: 9, kind: input, shape index: {}]
  %s10 = inlined_call_operand.vmem [shape: f32[64,128], index: 10, kind: output, shape index: {0}]
  %s11 = inlined_call_operand.vmem [shape: f32[32,128], index: 11, kind: output, shape index: {1}]
  %12 = xla_tuple %s10, %s11
  %s13 = sld [smem:[#allocation0]]
  $region66: #{rnn_forward.1} parent=0
    _
  %s15 = ssub.s32 1, %s13
  %s16 = scalar_select 0, %s15, %s13
  // Predicated region
  $region2: #{rnn_forward.1} parent=0 // pred_check
    _
  $region3: #{rnn_forward.1} parent=0 // pred_check_branch
    %18 = sbr.rel (0) target = $region5
  $region4: #{rnn_forward.1} parent=0 // pred_region
    _
  $region5: #{rnn_forward.1} parent=0 // pred_fallthru
    _
  // Predicated region
  $region6: #{rnn_forward.1} parent=0 // pred_check
    _
  $region7: #{rnn_forward.1} parent=0 // pred_check_branch
    %20 = sbr.rel (0) target = $region9
  $region8: #{rnn_forward.1} parent=0 // pred_region
    _
  $region9: #{rnn_forward.1} parent=0 // pred_fallthru
    _
  // Predicated region
  $region10: #{rnn_forward.1} parent=0 // pred_check
    _
  $region11: #{rnn_forward.1} parent=0 // pred_check_branch
    %22 = sbr.rel (0) target = $region13
  $region12: #{rnn_forward.1} parent=0 // pred_region
    _
  $region13: #{rnn_forward.1} parent=0 // pred_fallthru
    _
  // Predicated region
  $region14: #{rnn_forward.1} parent=0 // pred_check
    _
  $region15: #{rnn_forward.1} parent=0 // pred_check_branch
    %24 = sbr.rel (0) target = $region17
  $region16: #{rnn_forward.1} parent=0 // pred_region
    _
  $region17: #{rnn_forward.1} parent=0 // pred_fallthru
    _
  // Predicated region
  $region18: #{rnn_forward.1} parent=0 // pred_check
    _
  $region19: #{rnn_forward.1} parent=0 // pred_check_branch
    %26 = sbr.rel (0) target = $region21
  $region20: #{rnn_forward.1} parent=0 // pred_region
    _
  $region21: #{rnn_forward.1} parent=0 // pred_fallthru
    _
  // Predicated region
  $region22: #{rnn_forward.1} parent=0 // pred_check
    _
  $region23: #{rnn_forward.1} parent=0 // pred_check_branch
    %28 = sbr.rel (0) target = $region25
  $region24: #{rnn_forward.1} parent=0 // pred_region
    _
  $region25: #{rnn_forward.1} parent=0 // pred_fallthru
    _
  // Predicated region
  $region26: #{rnn_forward.1} parent=0 // pred_check
    _
  $region27: #{rnn_forward.1} parent=0 // pred_check_branch
    %30 = sbr.rel (0) target = $region29
  $region28: #{rnn_forward.1} parent=0 // pred_region
    _
  $region29: #{rnn_forward.1} parent=0 // pred_fallthru
    _
  // Predicated region
  $region30: #{rnn_forward.1} parent=0 // pred_check
    _
  $region31: #{rnn_forward.1} parent=0 // pred_check_branch
    %32 = sbr.rel (0) target = $region33
  $region32: #{rnn_forward.1} parent=0 // pred_region
    _
  $region33: #{rnn_forward.1} parent=0 // pred_fallthru
    _
  // Predicated region
  $region34: #{rnn_forward.1} parent=0 // pred_check
    _
  $region35: #{rnn_forward.1} parent=0 // pred_check_branch
    %34 = sbr.rel (0) target = $region37
  $region36: #{rnn_forward.1} parent=0 // pred_region
    _
  $region37: #{rnn_forward.1} parent=0 // pred_fallthru
    _
  // Predicated region
  $region38: #{rnn_forward.1} parent=0 // pred_check
    _
  $region39: #{rnn_forward.1} parent=0 // pred_check_branch
    %36 = sbr.rel (0) target = $region41
  $region40: #{rnn_forward.1} parent=0 // pred_region
    _
  $region41: #{rnn_forward.1} parent=0 // pred_fallthru
    _
  %p38 = scmp.eq.s32.totalorder 0, 0
  // Predicated region
  $region42: #{rnn_forward.1} parent=0 // pred_check
    %p39 = pneg %p38
  $region43: #{rnn_forward.1} parent=0 // pred_check_branch
    %41 = sbr.rel (%p39) target = $region45
  $region44: #{rnn_forward.1} parent=0 // pred_region
    %v42 = vld [vmem:[%s1] sm:$0xff]
    %v43 = vld [vmem:[%s1 + $0x8] sm:$0xff]
    %v44 = vld [vmem:[%s1 + $0x10] sm:$0xff]
    %v45 = vld [vmem:[%s1 + $0x18] sm:$0xff]
    %46 = vst [vmem:[#allocation2] sm:$0xff] %v42
    %47 = vst [vmem:[#allocation2 + $0x8] sm:$0xff] %v43
    %48 = vst [vmem:[#allocation2 + $0x10] sm:$0xff] %v44
    %49 = vst [vmem:[#allocation2 + $0x18] sm:$0xff] %v45
  $region45: #{rnn_forward.1} parent=0 // pred_fallthru
    _
  %v50 = vld [vmem:[%s0] sm:$0xff]
  %v51 = vld [vmem:[%s0 + $0x8] sm:$0xff]
  %v52 = vld [vmem:[%s0 + $0x10] sm:$0xff]
  %v53 = vld [vmem:[%s0 + $0x18] sm:$0xff]
  %v54 = vld [vmem:[%s0 + $0x20] sm:$0xff]
  %v55 = vld [vmem:[%s0 + $0x28] sm:$0xff]
  %v56 = vld [vmem:[%s0 + $0x30] sm:$0xff]
  %v57 = vld [vmem:[%s0 + $0x38] sm:$0xff]
  %v58 = vpack.c.bf16 %v51, %v50
  %v59 = vpack.c.bf16 %v53, %v52
  %v60 = vpack.c.bf16 %v55, %v54
  %v61 = vpack.c.bf16 %v57, %v56
  %v62 = vld [vmem:[%s2] sm:$0xff]
  %v63 = vld [vmem:[%s2 + $0x8] sm:$0xff]
  %v64 = vld [vmem:[%s2 + $0x10] sm:$0xff]
  %v65 = vld [vmem:[%s2 + $0x18] sm:$0xff]
  %v66 = vld [vmem:[%s3] sm:$0xf]
  %v68 = vlaneseq
  %v69 = vshrl.u32 %v68, 7
  %v70 = vsub.s32 0, %v69
  %v71 = vrot.slane %v66, %v70
  %v72 = vlaneseq
  %v73 = vshrl.u32 %v72, 7
  %v74 = vsub.s32 1, %v73
  %v75 = vrot.slane %v66, %v74
  %v76 = vlaneseq
  %v77 = vshrl.u32 %v76, 7
  %v78 = vsub.s32 2, %v77
  %v79 = vrot.slane %v66, %v78
  %v80 = vlaneseq
  %v81 = vshrl.u32 %v80, 7
  %v82 = vsub.s32 3, %v81
  %v83 = vrot.slane %v66, %v82
  %v92 = vunpack.c.l.b16 %v62
  %v93 = vunpack.c.h.b16 %v62
  %v94 = vunpack.c.l.b16 %v63
  %v95 = vunpack.c.h.b16 %v63
  %v96 = vunpack.c.l.b16 %v64
  %v97 = vunpack.c.h.b16 %v64
  %v98 = vunpack.c.l.b16 %v65
  %v99 = vunpack.c.h.b16 %v65
  %v100 = vpack.c.b16 %v96, %v92
  %v101 = vpack.c.b16 %v97, %v93
  %v102 = vpack.c.b16 %v98, %v94
  %v103 = vpack.c.b16 %v99, %v95
  %vm108 = vcmask 130048
  %v110 = vsel %vm108, %v58, 0
  %v113 = vsel %vm108, %v59, 0
  %v116 = vsel %vm108, %v60, 0
  %v119 = vsel %vm108, %v61, 0
  %121 = vmatprep.subr.bf16.mxu0 %v101
  %122 = vmatpush1.bf16.msra.mxu0 %v100
  %123 = vmatprep.subr.bf16.mxu0 0
  %124 = vmatpush1.bf16.msra.mxu0 0
  %125 = vmatprep.subr.bf16.mxu0 0
  %126 = vmatpush1.bf16.msra.mxu0 0
  %127 = vmatprep.subr.bf16.mxu0 0
  %128 = vmatpush1.bf16.msra.mxu0 0
  %129 = vmatprep.subr.bf16.mxu0 0
  %130 = vmatpush1.bf16.msra.mxu0 0
  %131 = vmatprep.subr.bf16.mxu0 0
  %132 = vmatpush1.bf16.msra.mxu0 0
  %133 = vmatprep.subr.bf16.mxu0 0
  %134 = vmatpush1.bf16.msra.mxu0 0
  %135 = vmatprep.subr.bf16.mxu0 0
  %136 = vmatpush1.bf16.msra.mxu0 0
  %137 = vmatprep.subr.bf16.mxu0 0
  %138 = vmatpush1.bf16.msra.mxu0 0
  %139 = vmatprep.subr.bf16.mxu0 0
  %140 = vmatpush1.bf16.msra.mxu0 0
  %141 = vmatprep.subr.bf16.mxu0 0
  %142 = vmatpush1.bf16.msra.mxu0 0
  %143 = vmatprep.subr.bf16.mxu0 0
  %144 = vmatpush1.bf16.msra.mxu0 0
  %145 = vmatprep.subr.bf16.mxu0 0
  %146 = vmatpush1.bf16.msra.mxu0 0
  %147 = vmatprep.subr.bf16.mxu0 0
  %148 = vmatpush1.bf16.msra.mxu0 0
  %149 = vmatprep.subr.bf16.mxu0 0
  %150 = vmatpush1.bf16.msra.mxu0 0
  %151 = vmatprep.subr.bf16.mxu0 0
  %152 = vmatpush1.bf16.msra.mxu0 0
  %153 = vmatprep.mubr.bf16.mxu0 0
  %154 = vmatmul.mubr.bf16.gmra.mrb[0].mxu0 %v110
  %v155 = vpop.f32.mrb[0].mxu0
  %v156 = vadd.f32 %v71, %v155
  %v157 = vpop.f32.mrb[0].mxu0
  %v158 = vadd.f32 %v75, %v157
  %v159 = vpop.f32.mrb[0].mxu0
  %v160 = vadd.f32 %v71, %v159
  %v161 = vpop.f32.mrb[0].mxu0
  %v162 = vadd.f32 %v75, %v161
  %163 = vmatprep.mubr.bf16.mxu0 0
  %164 = vmatmul.mubr.bf16.gmra.mrb[0].mxu0 %v113
  %v165 = vpop.f32.mrb[0].mxu0
  %v166 = vadd.f32 %v71, %v165
  %v167 = vpop.f32.mrb[0].mxu0
  %v168 = vadd.f32 %v75, %v167
  %v169 = vpop.f32.mrb[0].mxu0
  %v170 = vadd.f32 %v71, %v169
  %v171 = vpop.f32.mrb[0].mxu0
  %v172 = vadd.f32 %v75, %v171
  %173 = vmatprep.mubr.bf16.mxu0 0
  %174 = vmatmul.mubr.bf16.gmra.mrb[0].mxu0 %v116
  %v175 = vpop.f32.mrb[0].mxu0
  %v176 = vadd.f32 %v71, %v175
  %v177 = vpop.f32.mrb[0].mxu0
  %v178 = vadd.f32 %v75, %v177
  %v179 = vpop.f32.mrb[0].mxu0
  %v180 = vadd.f32 %v71, %v179
  %v181 = vpop.f32.mrb[0].mxu0
  %v182 = vadd.f32 %v75, %v181
  %183 = vmatprep.mubr.bf16.mxu0 0
  %184 = vmatmul.mubr.bf16.gmra.mrb[0].mxu0 %v119
  %v185 = vpop.f32.mrb[0].mxu0
  %v186 = vadd.f32 %v71, %v185
  %v187 = vpop.f32.mrb[0].mxu0
  %v188 = vadd.f32 %v75, %v187
  %v189 = vpop.f32.mrb[0].mxu0
  %v190 = vadd.f32 %v71, %v189
  %v191 = vpop.f32.mrb[0].mxu0
  %v192 = vadd.f32 %v75, %v191
  %193 = vdwg.mxu0
  %194 = vmatprep.subr.bf16.mxu0 %v103
  %195 = vmatpush1.bf16.msra.mxu0 %v102
  %196 = vmatprep.subr.bf16.mxu0 0
  %197 = vmatpush1.bf16.msra.mxu0 0
  %198 = vmatprep.subr.bf16.mxu0 0
  %199 = vmatpush1.bf16.msra.mxu0 0
  %200 = vmatprep.subr.bf16.mxu0 0
  %201 = vmatpush1.bf16.msra.mxu0 0
  %202 = vmatprep.subr.bf16.mxu0 0
  %203 = vmatpush1.bf16.msra.mxu0 0
  %204 = vmatprep.subr.bf16.mxu0 0
  %205 = vmatpush1.bf16.msra.mxu0 0
  %206 = vmatprep.subr.bf16.mxu0 0
  %207 = vmatpush1.bf16.msra.mxu0 0
  %208 = vmatprep.subr.bf16.mxu0 0
  %209 = vmatpush1.bf16.msra.mxu0 0
  %210 = vmatprep.subr.bf16.mxu0 0
  %211 = vmatpush1.bf16.msra.mxu0 0
  %212 = vmatprep.subr.bf16.mxu0 0
  %213 = vmatpush1.bf16.msra.mxu0 0
  %214 = vmatprep.subr.bf16.mxu0 0
  %215 = vmatpush1.bf16.msra.mxu0 0
  %216 = vmatprep.subr.bf16.mxu0 0
  %217 = vmatpush1.bf16.msra.mxu0 0
  %218 = vmatprep.subr.bf16.mxu0 0
  %219 = vmatpush1.bf16.msra.mxu0 0
  %220 = vmatprep.subr.bf16.mxu0 0
  %221 = vmatpush1.bf16.msra.mxu0 0
  %222 = vmatprep.subr.bf16.mxu0 0
  %223 = vmatpush1.bf16.msra.mxu0 0
  %224 = vmatprep.subr.bf16.mxu0 0
  %225 = vmatpush1.bf16.msra.mxu0 0
  %226 = vmatprep.mubr.bf16.mxu0 0
  %227 = vmatmul.mubr.bf16.gmra.mrb[0].mxu0 %v110
  %v228 = vpop.f32.mrb[0].mxu0
  %v229 = vadd.f32 %v79, %v228
  %v230 = vpop.f32.mrb[0].mxu0
  %v231 = vadd.f32 %v83, %v230
  %v232 = vpop.f32.mrb[0].mxu0
  %v233 = vadd.f32 %v79, %v232
  %v234 = vpop.f32.mrb[0].mxu0
  %v235 = vadd.f32 %v83, %v234
  %236 = vmatprep.mubr.bf16.mxu0 0
  %237 = vmatmul.mubr.bf16.gmra.mrb[0].mxu0 %v113
  %v238 = vpop.f32.mrb[0].mxu0
  %v239 = vadd.f32 %v79, %v238
  %v240 = vpop.f32.mrb[0].mxu0
  %v241 = vadd.f32 %v83, %v240
  %v242 = vpop.f32.mrb[0].mxu0
  %v243 = vadd.f32 %v79, %v242
  %v244 = vpop.f32.mrb[0].mxu0
  %v245 = vadd.f32 %v83, %v244
  %246 = vmatprep.mubr.bf16.mxu0 0
  %247 = vmatmul.mubr.bf16.gmra.mrb[0].mxu0 %v116
  %v248 = vpop.f32.mrb[0].mxu0
  %v249 = vadd.f32 %v79, %v248
  %v250 = vpop.f32.mrb[0].mxu0
  %v251 = vadd.f32 %v83, %v250
  %v252 = vpop.f32.mrb[0].mxu0
  %v253 = vadd.f32 %v79, %v252
  %v254 = vpop.f32.mrb[0].mxu0
  %v255 = vadd.f32 %v83, %v254
  %256 = vmatprep.mubr.bf16.mxu0 0
  %257 = vmatmul.mubr.bf16.gmra.mrb[0].mxu0 %v119
  %v258 = vpop.f32.mrb[0].mxu0
  %v259 = vadd.f32 %v79, %v258
  %v260 = vpop.f32.mrb[0].mxu0
  %v261 = vadd.f32 %v83, %v260
  %v262 = vpop.f32.mrb[0].mxu0
  %v263 = vadd.f32 %v79, %v262
  %v264 = vpop.f32.mrb[0].mxu0
  %v265 = vadd.f32 %v83, %v264
  %266 = vdwg.mxu0
  %267 = vst [vmem:[#allocation3] sm:$0xff] %v156
  %268 = vst [vmem:[#allocation3 + $0x8] sm:$0xff] %v158
  %269 = vst [vmem:[#allocation3 + $0x10] sm:$0xff] %v229
  %270 = vst [vmem:[#allocation3 + $0x18] sm:$0xff] %v231
  %271 = vst [vmem:[#allocation3 + $0x20] sm:$0xff] %v160
  %272 = vst [vmem:[#allocation3 + $0x28] sm:$0xff] %v162
  %273 = vst [vmem:[#allocation3 + $0x30] sm:$0xff] %v233
  %274 = vst [vmem:[#allocation3 + $0x38] sm:$0xff] %v235
  %275 = vst [vmem:[#allocation3 + $0x40] sm:$0xff] %v166
  %276 = vst [vmem:[#allocation3 + $0x48] sm:$0xff] %v168
  %277 = vst [vmem:[#allocation3 + $0x50] sm:$0xff] %v239
  %278 = vst [vmem:[#allocation3 + $0x58] sm:$0xff] %v241
  %279 = vst [vmem:[#allocation3 + $0x60] sm:$0xff] %v170
  %280 = vst [vmem:[#allocation3 + $0x68] sm:$0xff] %v172
  %281 = vst [vmem:[#allocation3 + $0x70] sm:$0xff] %v243
  %282 = vst [vmem:[#allocation3 + $0x78] sm:$0xff] %v245
  %283 = vst [vmem:[#allocation3 + $0x80] sm:$0xff] %v176
  %284 = vst [vmem:[#allocation3 + $0x88] sm:$0xff] %v178
  %285 = vst [vmem:[#allocation3 + $0x90] sm:$0xff] %v249
  %286 = vst [vmem:[#allocation3 + $0x98] sm:$0xff] %v251
  %287 = vst [vmem:[#allocation3 + $0xa0] sm:$0xff] %v180
  %288 = vst [vmem:[#allocation3 + $0xa8] sm:$0xff] %v182
  %289 = vst [vmem:[#allocation3 + $0xb0] sm:$0xff] %v253
  %290 = vst [vmem:[#allocation3 + $0xb8] sm:$0xff] %v255
  %291 = vst [vmem:[#allocation3 + $0xc0] sm:$0xff] %v186
  %292 = vst [vmem:[#allocation3 + $0xc8] sm:$0xff] %v188
  %293 = vst [vmem:[#allocation3 + $0xd0] sm:$0xff] %v259
  %294 = vst [vmem:[#allocation3 + $0xd8] sm:$0xff] %v261
  %295 = vst [vmem:[#allocation3 + $0xe0] sm:$0xff] %v190
  %296 = vst [vmem:[#allocation3 + $0xe8] sm:$0xff] %v192
  %297 = vst [vmem:[#allocation3 + $0xf0] sm:$0xff] %v263
  %298 = vst [vmem:[#allocation3 + $0xf8] sm:$0xff] %v265
  %v299 = vld [vmem:[#allocation2] sm:$0xff]
  %v300 = vld [vmem:[#allocation2 + $0x8] sm:$0xff]
  %v301 = vld [vmem:[#allocation2 + $0x10] sm:$0xff]
  %v302 = vld [vmem:[#allocation2 + $0x18] sm:$0xff]
  %v303 = vld [vmem:[#allocation3] sm:$0xff]
  %v304 = vld [vmem:[#allocation3 + $0x8] sm:$0xff]
  %v305 = vld [vmem:[#allocation3 + $0x10] sm:$0xff]
  %v306 = vld [vmem:[#allocation3 + $0x18] sm:$0xff]
  %v307 = vpack.c.bf16 %v299, %v299
  %v308 = vld [vmem:[%s4] sm:$0xff]
  %v309 = vld [vmem:[%s4 + $0x8] sm:$0xff]
  %v310 = vld [vmem:[%s4 + $0x10] sm:$0xff]
  %v311 = vld [vmem:[%s4 + $0x18] sm:$0xff]
  %v312 = vld [vmem:[%s4 + $0x20] sm:$0xff]
  %v313 = vld [vmem:[%s4 + $0x28] sm:$0xff]
  %v314 = vld [vmem:[%s4 + $0x30] sm:$0xff]
  %v315 = vld [vmem:[%s4 + $0x38] sm:$0xff]
  %v316 = vld [vmem:[%s4 + $0x40] sm:$0xff]
  %v317 = vld [vmem:[%s4 + $0x48] sm:$0xff]
  %v318 = vld [vmem:[%s4 + $0x50] sm:$0xff]
  %v319 = vld [vmem:[%s4 + $0x58] sm:$0xff]
  %v320 = vld [vmem:[%s4 + $0x60] sm:$0xff]
  %v321 = vld [vmem:[%s4 + $0x68] sm:$0xff]
  %v322 = vld [vmem:[%s4 + $0x70] sm:$0xff]
  %v323 = vld [vmem:[%s4 + $0x78] sm:$0xff]
  %v324 = vld [vmem:[%s4 + $0x80] sm:$0xff]
  %v325 = vld [vmem:[%s4 + $0x88] sm:$0xff]
  %v326 = vld [vmem:[%s4 + $0x90] sm:$0xff]
  %v327 = vld [vmem:[%s4 + $0x98] sm:$0xff]
  %v328 = vld [vmem:[%s4 + $0xa0] sm:$0xff]
  %v329 = vld [vmem:[%s4 + $0xa8] sm:$0xff]
  %v330 = vld [vmem:[%s4 + $0xb0] sm:$0xff]
  %v331 = vld [vmem:[%s4 + $0xb8] sm:$0xff]
  %v332 = vld [vmem:[%s4 + $0xc0] sm:$0xff]
  %v333 = vld [vmem:[%s4 + $0xc8] sm:$0xff]
  %v334 = vld [vmem:[%s4 + $0xd0] sm:$0xff]
  %v335 = vld [vmem:[%s4 + $0xd8] sm:$0xff]
  %v336 = vld [vmem:[%s4 + $0xe0] sm:$0xff]
  %v337 = vld [vmem:[%s4 + $0xe8] sm:$0xff]
  %v338 = vld [vmem:[%s4 + $0xf0] sm:$0xff]
  %v339 = vld [vmem:[%s4 + $0xf8] sm:$0xff]
  %v372 = vunpack.c.l.b16 %v308
  %v373 = vunpack.c.h.b16 %v308
  %v374 = vunpack.c.l.b16 %v309
  %v375 = vunpack.c.h.b16 %v309
  %v376 = vunpack.c.l.b16 %v310
  %v377 = vunpack.c.h.b16 %v310
  %v378 = vunpack.c.l.b16 %v311
  %v379 = vunpack.c.h.b16 %v311
  %v380 = vunpack.c.l.b16 %v312
  %v381 = vunpack.c.h.b16 %v312
  %v382 = vunpack.c.l.b16 %v313
  %v383 = vunpack.c.h.b16 %v313
  %v384 = vunpack.c.l.b16 %v314
  %v385 = vunpack.c.h.b16 %v314
  %v386 = vunpack.c.l.b16 %v315
  %v387 = vunpack.c.h.b16 %v315
  %v388 = vunpack.c.l.b16 %v316
  %v389 = vunpack.c.h.b16 %v316
  %v390 = vunpack.c.l.b16 %v317
  %v391 = vunpack.c.h.b16 %v317
  %v392 = vunpack.c.l.b16 %v318
  %v393 = vunpack.c.h.b16 %v318
  %v394 = vunpack.c.l.b16 %v319
  %v395 = vunpack.c.h.b16 %v319
  %v396 = vunpack.c.l.b16 %v320
  %v397 = vunpack.c.h.b16 %v320
  %v398 = vunpack.c.l.b16 %v321
  %v399 = vunpack.c.h.b16 %v321
  %v400 = vunpack.c.l.b16 %v322
  %v401 = vunpack.c.h.b16 %v322
  %v402 = vunpack.c.l.b16 %v323
  %v403 = vunpack.c.h.b16 %v323
  %v404 = vunpack.c.l.b16 %v324
  %v405 = vunpack.c.h.b16 %v324
  %v406 = vunpack.c.l.b16 %v325
  %v407 = vunpack.c.h.b16 %v325
  %v408 = vunpack.c.l.b16 %v326
  %v409 = vunpack.c.h.b16 %v326
  %v410 = vunpack.c.l.b16 %v327
  %v411 = vunpack.c.h.b16 %v327
  %v412 = vunpack.c.l.b16 %v328
  %v413 = vunpack.c.h.b16 %v328
  %v414 = vunpack.c.l.b16 %v329
  %v415 = vunpack.c.h.b16 %v329
  %v416 = vunpack.c.l.b16 %v330
  %v417 = vunpack.c.h.b16 %v330
  %v418 = vunpack.c.l.b16 %v331
  %v419 = vunpack.c.h.b16 %v331
  %v420 = vunpack.c.l.b16 %v332
  %v421 = vunpack.c.h.b16 %v332
  %v422 = vunpack.c.l.b16 %v333
  %v423 = vunpack.c.h.b16 %v333
  %v424 = vunpack.c.l.b16 %v334
  %v425 = vunpack.c.h.b16 %v334
  %v426 = vunpack.c.l.b16 %v335
  %v427 = vunpack.c.h.b16 %v335
  %v428 = vunpack.c.l.b16 %v336
  %v429 = vunpack.c.h.b16 %v336
  %v430 = vunpack.c.l.b16 %v337
  %v431 = vunpack.c.h.b16 %v337
  %v432 = vunpack.c.l.b16 %v338
  %v433 = vunpack.c.h.b16 %v338
  %v434 = vunpack.c.l.b16 %v339
  %v435 = vunpack.c.h.b16 %v339
  %v436 = vpack.c.b16 %v376, %v372
  %v437 = vpack.c.b16 %v377, %v373
  %v438 = vpack.c.b16 %v378, %v374
  %v439 = vpack.c.b16 %v379, %v375
  %v440 = vpack.c.b16 %v384, %v380
  %v441 = vpack.c.b16 %v385, %v381
  %v442 = vpack.c.b16 %v386, %v382
  %v443 = vpack.c.b16 %v387, %v383
  %v444 = vpack.c.b16 %v392, %v388
  %v445 = vpack.c.b16 %v393, %v389
  %v446 = vpack.c.b16 %v394, %v390
  %v447 = vpack.c.b16 %v395, %v391
  %v448 = vpack.c.b16 %v400, %v396
  %v449 = vpack.c.b16 %v401, %v397
  %v450 = vpack.c.b16 %v402, %v398
  %v451 = vpack.c.b16 %v403, %v399
  %v452 = vpack.c.b16 %v408, %v404
  %v453 = vpack.c.b16 %v409, %v405
  %v454 = vpack.c.b16 %v410, %v406
  %v455 = vpack.c.b16 %v411, %v407
  %v456 = vpack.c.b16 %v416, %v412
  %v457 = vpack.c.b16 %v417, %v413
  %v458 = vpack.c.b16 %v418, %v414
  %v459 = vpack.c.b16 %v419, %v415
  %v460 = vpack.c.b16 %v424, %v420
  %v461 = vpack.c.b16 %v425, %v421
  %v462 = vpack.c.b16 %v426, %v422
  %v463 = vpack.c.b16 %v427, %v423
  %v464 = vpack.c.b16 %v432, %v428
  %v465 = vpack.c.b16 %v433, %v429
  %v466 = vpack.c.b16 %v434, %v430
  %v467 = vpack.c.b16 %v435, %v431
  %500 = vmatprep.subr.bf16.mxu0 %v437
  %501 = vmatpush1.bf16.msra.mxu0 %v436
  %502 = vmatprep.subr.bf16.mxu0 %v441
  %503 = vmatpush1.bf16.msra.mxu0 %v440
  %504 = vmatprep.subr.bf16.mxu0 %v445
  %505 = vmatpush1.bf16.msra.mxu0 %v444
  %506 = vmatprep.subr.bf16.mxu0 %v449
  %507 = vmatpush1.bf16.msra.mxu0 %v448
  %508 = vmatprep.subr.bf16.mxu0 %v453
  %509 = vmatpush1.bf16.msra.mxu0 %v452
  %510 = vmatprep.subr.bf16.mxu0 %v457
  %511 = vmatpush1.bf16.msra.mxu0 %v456
  %512 = vmatprep.subr.bf16.mxu0 %v461
  %513 = vmatpush1.bf16.msra.mxu0 %v460
  %514 = vmatprep.subr.bf16.mxu0 %v465
  %515 = vmatpush1.bf16.msra.mxu0 %v464
  %516 = vmatprep.subr.bf16.mxu0 0
  %517 = vmatpush1.bf16.msra.mxu0 0
  %518 = vmatprep.subr.bf16.mxu0 0
  %519 = vmatpush1.bf16.msra.mxu0 0
  %520 = vmatprep.subr.bf16.mxu0 0
  %521 = vmatpush1.bf16.msra.mxu0 0
  %522 = vmatprep.subr.bf16.mxu0 0
  %523 = vmatpush1.bf16.msra.mxu0 0
  %524 = vmatprep.subr.bf16.mxu0 0
  %525 = vmatpush1.bf16.msra.mxu0 0
  %526 = vmatprep.subr.bf16.mxu0 0
  %527 = vmatpush1.bf16.msra.mxu0 0
  %528 = vmatprep.subr.bf16.mxu0 0
  %529 = vmatpush1.bf16.msra.mxu0 0
  %530 = vmatprep.subr.bf16.mxu0 0
  %531 = vmatpush1.bf16.msra.mxu0 0
  %532 = vmatprep.mubr.bf16.mxu0 0
  %533 = vmatmul.mubr.bf16.gmra.mrb[0].mxu0 %v307
  %v534 = vpop.f32.mrb[0].mxu0
  %v535 = vadd.f32 0.0, %v534
  %v536 = vpop.f32.mrb[0].mxu0
  %v537 = vadd.f32 0.0, %v536
  %v538 = vpop.f32.mrb[0].mxu0
  %v539 = vpop.f32.mrb[0].mxu0
  %540 = vdwg.mxu0
  %541 = vmatprep.subr.bf16.mxu0 %v439
  %542 = vmatpush1.bf16.msra.mxu0 %v438
  %543 = vmatprep.subr.bf16.mxu0 %v443
  %544 = vmatpush1.bf16.msra.mxu0 %v442
  %545 = vmatprep.subr.bf16.mxu0 %v447
  %546 = vmatpush1.bf16.msra.mxu0 %v446
  %547 = vmatprep.subr.bf16.mxu0 %v451
  %548 = vmatpush1.bf16.msra.mxu0 %v450
  %549 = vmatprep.subr.bf16.mxu0 %v455
  %550 = vmatpush1.bf16.msra.mxu0 %v454
  %551 = vmatprep.subr.bf16.mxu0 %v459
  %552 = vmatpush1.bf16.msra.mxu0 %v458
  %553 = vmatprep.subr.bf16.mxu0 %v463
  %554 = vmatpush1.bf16.msra.mxu0 %v462
  %555 = vmatprep.subr.bf16.mxu0 %v467
  %556 = vmatpush1.bf16.msra.mxu0 %v466
  %557 = vmatprep.subr.bf16.mxu0 0
  %558 = vmatpush1.bf16.msra.mxu0 0
  %559 = vmatprep.subr.bf16.mxu0 0
  %560 = vmatpush1.bf16.msra.mxu0 0
  %561 = vmatprep.subr.bf16.mxu0 0
  %562 = vmatpush1.bf16.msra.mxu0 0
  %563 = vmatprep.subr.bf16.mxu0 0
  %564 = vmatpush1.bf16.msra.mxu0 0
  %565 = vmatprep.subr.bf16.mxu0 0
  %566 = vmatpush1.bf16.msra.mxu0 0
  %567 = vmatprep.subr.bf16.mxu0 0
  %568 = vmatpush1.bf16.msra.mxu0 0
  %569 = vmatprep.subr.bf16.mxu0 0
  %570 = vmatpush1.bf16.msra.mxu0 0
  %571 = vmatprep.subr.bf16.mxu0 0
  %572 = vmatpush1.bf16.msra.mxu0 0
  %573 = vmatprep.mubr.bf16.mxu0 0
  %574 = vmatmul.mubr.bf16.gmra.mrb[0].mxu0 %v307
  %v575 = vpop.f32.mrb[0].mxu0
  %v576 = vadd.f32 0.0, %v575
  %v577 = vpop.f32.mrb[0].mxu0
  %v578 = vadd.f32 0.0, %v577
  %v579 = vpop.f32.mrb[0].mxu0
  %v580 = vpop.f32.mrb[0].mxu0
  %581 = vdwg.mxu0
  %v582 = vadd.f32 %v303, %v535
  %v583 = vadd.f32 %v304, %v537
  %v584 = vadd.f32 %v305, %v576
  %v585 = vadd.f32 %v306, %v578
  %v586 = vxor.u32 %v582, 2147483648
  %v587 = vxor.u32 %v583, 2147483648
  %v588 = vxor.u32 %v584, 2147483648
  %v589 = vmul.f32 %v586, 1.442695
  %v590 = vpow.pop %v589
  %v591 = vmul.f32 %v587, 1.442695
  %v592 = vpow.pop %v591
  %v593 = vmul.f32 %v588, 1.442695
  %v594 = vpow.pop %v593
  %v595 = vadd.f32 %v590, 1.0
  %v596 = vadd.f32 %v592, 1.0
  %v597 = vadd.f32 %v594, 1.0
  %v598 = vrcp.pop %v595
  %v599 = vmul.f32 1.0, %v598
  %v600 = vrcp.pop %v596
  %v601 = vmul.f32 1.0, %v600
  %v602 = vrcp.pop %v597
  %v603 = vmul.f32 1.0, %v602
  %v604 = vtanh.pop %v585
  %v605 = vmul.f32 %v601, %v300
  %v606 = vmul.f32 %v599, %v604
  %v607 = vadd.f32 %v605, %v606
  %v608 = vtanh.pop %v607
  %v609 = vmul.f32 %v603, %v608
  %v610 = vpack.c.bf16 %v609, %v609
  %v611 = vld [vmem:[%s5] sm:$0xff]
  %v612 = vld [vmem:[%s5 + $0x8] sm:$0xff]
  %v613 = vld [vmem:[%s5 + $0x10] sm:$0xff]
  %v614 = vld [vmem:[%s5 + $0x18] sm:$0xff]
  %v615 = vld [vmem:[%s5 + $0x20] sm:$0xff]
  %v616 = vld [vmem:[%s5 + $0x28] sm:$0xff]
  %v617 = vld [vmem:[%s5 + $0x30] sm:$0xff]
  %v618 = vld [vmem:[%s5 + $0x38] sm:$0xff]
  %v619 = vld [vmem:[%s5 + $0x40] sm:$0xff]
  %v620 = vld [vmem:[%s5 + $0x48] sm:$0xff]
  %v621 = vld [vmem:[%s5 + $0x50] sm:$0xff]
  %v622 = vld [vmem:[%s5 + $0x58] sm:$0xff]
  %v623 = vld [vmem:[%s5 + $0x60] sm:$0xff]
  %v624 = vld [vmem:[%s5 + $0x68] sm:$0xff]
  %v625 = vld [vmem:[%s5 + $0x70] sm:$0xff]
  %v626 = vld [vmem:[%s5 + $0x78] sm:$0xff]
  %v627 = vld [vmem:[%s5 + $0x80] sm:$0xff]
  %v628 = vld [vmem:[%s5 + $0x88] sm:$0xff]
  %v629 = vld [vmem:[%s5 + $0x90] sm:$0xff]
  %v630 = vld [vmem:[%s5 + $0x98] sm:$0xff]
  %v631 = vld [vmem:[%s5 + $0xa0] sm:$0xff]
  %v632 = vld [vmem:[%s5 + $0xa8] sm:$0xff]
  %v633 = vld [vmem:[%s5 + $0xb0] sm:$0xff]
  %v634 = vld [vmem:[%s5 + $0xb8] sm:$0xff]
  %v635 = vld [vmem:[%s5 + $0xc0] sm:$0xff]
  %v636 = vld [vmem:[%s5 + $0xc8] sm:$0xff]
  %v637 = vld [vmem:[%s5 + $0xd0] sm:$0xff]
  %v638 = vld [vmem:[%s5 + $0xd8] sm:$0xff]
  %v639 = vld [vmem:[%s5 + $0xe0] sm:$0xff]
  %v640 = vld [vmem:[%s5 + $0xe8] sm:$0xff]
  %v641 = vld [vmem:[%s5 + $0xf0] sm:$0xff]
  %v642 = vld [vmem:[%s5 + $0xf8] sm:$0xff]
  %v643 = vpack.c.bf16 %v301, %v301
  %v644 = vld [vmem:[%s6] sm:$0xff]
  %v645 = vld [vmem:[%s6 + $0x8] sm:$0xff]
  %v646 = vld [vmem:[%s6 + $0x10] sm:$0xff]
  %v647 = vld [vmem:[%s6 + $0x18] sm:$0xff]
  %v648 = vld [vmem:[%s6 + $0x20] sm:$0xff]
  %v649 = vld [vmem:[%s6 + $0x28] sm:$0xff]
  %v650 = vld [vmem:[%s6 + $0x30] sm:$0xff]
  %v651 = vld [vmem:[%s6 + $0x38] sm:$0xff]
  %v652 = vld [vmem:[%s6 + $0x40] sm:$0xff]
  %v653 = vld [vmem:[%s6 + $0x48] sm:$0xff]
  %v654 = vld [vmem:[%s6 + $0x50] sm:$0xff]
  %v655 = vld [vmem:[%s6 + $0x58] sm:$0xff]
  %v656 = vld [vmem:[%s6 + $0x60] sm:$0xff]
  %v657 = vld [vmem:[%s6 + $0x68] sm:$0xff]
  %v658 = vld [vmem:[%s6 + $0x70] sm:$0xff]
  %v659 = vld [vmem:[%s6 + $0x78] sm:$0xff]
  %v660 = vld [vmem:[%s6 + $0x80] sm:$0xff]
  %v661 = vld [vmem:[%s6 + $0x88] sm:$0xff]
  %v662 = vld [vmem:[%s6 + $0x90] sm:$0xff]
  %v663 = vld [vmem:[%s6 + $0x98] sm:$0xff]
  %v664 = vld [vmem:[%s6 + $0xa0] sm:$0xff]
  %v665 = vld [vmem:[%s6 + $0xa8] sm:$0xff]
  %v666 = vld [vmem:[%s6 + $0xb0] sm:$0xff]
  %v667 = vld [vmem:[%s6 + $0xb8] sm:$0xff]
  %v668 = vld [vmem:[%s6 + $0xc0] sm:$0xff]
  %v669 = vld [vmem:[%s6 + $0xc8] sm:$0xff]
  %v670 = vld [vmem:[%s6 + $0xd0] sm:$0xff]
  %v671 = vld [vmem:[%s6 + $0xd8] sm:$0xff]
  %v672 = vld [vmem:[%s6 + $0xe0] sm:$0xff]
  %v673 = vld [vmem:[%s6 + $0xe8] sm:$0xff]
  %v674 = vld [vmem:[%s6 + $0xf0] sm:$0xff]
  %v675 = vld [vmem:[%s6 + $0xf8] sm:$0xff]
  %v708 = vunpack.c.l.b16 %v644
  %v709 = vunpack.c.h.b16 %v644
  %v710 = vunpack.c.l.b16 %v645
  %v711 = vunpack.c.h.b16 %v645
  %v712 = vunpack.c.l.b16 %v646
  %v713 = vunpack.c.h.b16 %v646
  %v714 = vunpack.c.l.b16 %v647
  %v715 = vunpack.c.h.b16 %v647
  %v716 = vunpack.c.l.b16 %v648
  %v717 = vunpack.c.h.b16 %v648
  %v718 = vunpack.c.l.b16 %v649
  %v719 = vunpack.c.h.b16 %v649
  %v720 = vunpack.c.l.b16 %v650
  %v721 = vunpack.c.h.b16 %v650
  %v722 = vunpack.c.l.b16 %v651
  %v723 = vunpack.c.h.b16 %v651
  %v724 = vunpack.c.l.b16 %v652
  %v725 = vunpack.c.h.b16 %v652
  %v726 = vunpack.c.l.b16 %v653
  %v727 = vunpack.c.h.b16 %v653
  %v728 = vunpack.c.l.b16 %v654
  %v729 = vunpack.c.h.b16 %v654
  %v730 = vunpack.c.l.b16 %v655
  %v731 = vunpack.c.h.b16 %v655
  %v732 = vunpack.c.l.b16 %v656
  %v733 = vunpack.c.h.b16 %v656
  %v734 = vunpack.c.l.b16 %v657
  %v735 = vunpack.c.h.b16 %v657
  %v736 = vunpack.c.l.b16 %v658
  %v737 = vunpack.c.h.b16 %v658
  %v738 = vunpack.c.l.b16 %v659
  %v739 = vunpack.c.h.b16 %v659
  %v740 = vunpack.c.l.b16 %v660
  %v741 = vunpack.c.h.b16 %v660
  %v742 = vunpack.c.l.b16 %v661
  %v743 = vunpack.c.h.b16 %v661
  %v744 = vunpack.c.l.b16 %v662
  %v745 = vunpack.c.h.b16 %v662
  %v746 = vunpack.c.l.b16 %v663
  %v747 = vunpack.c.h.b16 %v663
  %v748 = vunpack.c.l.b16 %v664
  %v749 = vunpack.c.h.b16 %v664
  %v750 = vunpack.c.l.b16 %v665
  %v751 = vunpack.c.h.b16 %v665
  %v752 = vunpack.c.l.b16 %v666
  %v753 = vunpack.c.h.b16 %v666
  %v754 = vunpack.c.l.b16 %v667
  %v755 = vunpack.c.h.b16 %v667
  %v756 = vunpack.c.l.b16 %v668
  %v757 = vunpack.c.h.b16 %v668
  %v758 = vunpack.c.l.b16 %v669
  %v759 = vunpack.c.h.b16 %v669
  %v760 = vunpack.c.l.b16 %v670
  %v761 = vunpack.c.h.b16 %v670
  %v762 = vunpack.c.l.b16 %v671
  %v763 = vunpack.c.h.b16 %v671
  %v764 = vunpack.c.l.b16 %v672
  %v765 = vunpack.c.h.b16 %v672
  %v766 = vunpack.c.l.b16 %v673
  %v767 = vunpack.c.h.b16 %v673
  %v768 = vunpack.c.l.b16 %v674
  %v769 = vunpack.c.h.b16 %v674
  %v770 = vunpack.c.l.b16 %v675
  %v771 = vunpack.c.h.b16 %v675
  %v772 = vpack.c.b16 %v712, %v708
  %v773 = vpack.c.b16 %v713, %v709
  %v774 = vpack.c.b16 %v714, %v710
  %v775 = vpack.c.b16 %v715, %v711
  %v776 = vpack.c.b16 %v720, %v716
  %v777 = vpack.c.b16 %v721, %v717
  %v778 = vpack.c.b16 %v722, %v718
  %v779 = vpack.c.b16 %v723, %v719
  %v780 = vpack.c.b16 %v728, %v724
  %v781 = vpack.c.b16 %v729, %v725
  %v782 = vpack.c.b16 %v730, %v726
  %v783 = vpack.c.b16 %v731, %v727
  %v784 = vpack.c.b16 %v736, %v732
  %v785 = vpack.c.b16 %v737, %v733
  %v786 = vpack.c.b16 %v738, %v734
  %v787 = vpack.c.b16 %v739, %v735
  %v788 = vpack.c.b16 %v744, %v740
  %v789 = vpack.c.b16 %v745, %v741
  %v790 = vpack.c.b16 %v746, %v742
  %v791 = vpack.c.b16 %v747, %v743
  %v792 = vpack.c.b16 %v752, %v748
  %v793 = vpack.c.b16 %v753, %v749
  %v794 = vpack.c.b16 %v754, %v750
  %v795 = vpack.c.b16 %v755, %v751
  %v796 = vpack.c.b16 %v760, %v756
  %v797 = vpack.c.b16 %v761, %v757
  %v798 = vpack.c.b16 %v762, %v758
  %v799 = vpack.c.b16 %v763, %v759
  %v800 = vpack.c.b16 %v768, %v764
  %v801 = vpack.c.b16 %v769, %v765
  %v802 = vpack.c.b16 %v770, %v766
  %v803 = vpack.c.b16 %v771, %v767
  %836 = vmatprep.subr.bf16.mxu0 %v773
  %837 = vmatpush1.bf16.msra.mxu0 %v772
  %838 = vmatprep.subr.bf16.mxu0 %v777
  %839 = vmatpush1.bf16.msra.mxu0 %v776
  %840 = vmatprep.subr.bf16.mxu0 %v781
  %841 = vmatpush1.bf16.msra.mxu0 %v780
  %842 = vmatprep.subr.bf16.mxu0 %v785
  %843 = vmatpush1.bf16.msra.mxu0 %v784
  %844 = vmatprep.subr.bf16.mxu0 %v789
  %845 = vmatpush1.bf16.msra.mxu0 %v788
  %846 = vmatprep.subr.bf16.mxu0 %v793
  %847 = vmatpush1.bf16.msra.mxu0 %v792
  %848 = vmatprep.subr.bf16.mxu0 %v797
  %849 = vmatpush1.bf16.msra.mxu0 %v796
  %850 = vmatprep.subr.bf16.mxu0 %v801
  %851 = vmatpush1.bf16.msra.mxu0 %v800
  %852 = vmatprep.subr.bf16.mxu0 0
  %853 = vmatpush1.bf16.msra.mxu0 0
  %854 = vmatprep.subr.bf16.mxu0 0
  %855 = vmatpush1.bf16.msra.mxu0 0
  %856 = vmatprep.subr.bf16.mxu0 0
  %857 = vmatpush1.bf16.msra.mxu0 0
  %858 = vmatprep.subr.bf16.mxu0 0
  %859 = vmatpush1.bf16.msra.mxu0 0
  %860 = vmatprep.subr.bf16.mxu0 0
  %861 = vmatpush1.bf16.msra.mxu0 0
  %862 = vmatprep.subr.bf16.mxu0 0
  %863 = vmatpush1.bf16.msra.mxu0 0
  %864 = vmatprep.subr.bf16.mxu0 0
  %865 = vmatpush1.bf16.msra.mxu0 0
  %866 = vmatprep.subr.bf16.mxu0 0
  %867 = vmatpush1.bf16.msra.mxu0 0
  %868 = vmatprep.mubr.bf16.mxu0 0
  %869 = vmatmul.mubr.bf16.gmra.mrb[0].mxu0 %v643
  %v870 = vpop.f32.mrb[0].mxu0
  %v871 = vadd.f32 0.0, %v870
  %v872 = vpop.f32.mrb[0].mxu0
  %v873 = vadd.f32 0.0, %v872
  %v874 = vpop.f32.mrb[0].mxu0
  %v875 = vpop.f32.mrb[0].mxu0
  %876 = vdwg.mxu0
  %877 = vmatprep.subr.bf16.mxu0 %v775
  %878 = vmatpush1.bf16.msra.mxu0 %v774
  %879 = vmatprep.subr.bf16.mxu0 %v779
  %880 = vmatpush1.bf16.msra.mxu0 %v778
  %881 = vmatprep.subr.bf16.mxu0 %v783
  %882 = vmatpush1.bf16.msra.mxu0 %v782
  %883 = vmatprep.subr.bf16.mxu0 %v787
  %884 = vmatpush1.bf16.msra.mxu0 %v786
  %885 = vmatprep.subr.bf16.mxu0 %v791
  %886 = vmatpush1.bf16.msra.mxu0 %v790
  %887 = vmatprep.subr.bf16.mxu0 %v795
  %888 = vmatpush1.bf16.msra.mxu0 %v794
  %889 = vmatprep.subr.bf16.mxu0 %v799
  %890 = vmatpush1.bf16.msra.mxu0 %v798
  %891 = vmatprep.subr.bf16.mxu0 %v803
  %892 = vmatpush1.bf16.msra.mxu0 %v802
  %893 = vmatprep.subr.bf16.mxu0 0
  %894 = vmatpush1.bf16.msra.mxu0 0
  %895 = vmatprep.subr.bf16.mxu0 0
  %896 = vmatpush1.bf16.msra.mxu0 0
  %897 = vmatprep.subr.bf16.mxu0 0
  %898 = vmatpush1.bf16.msra.mxu0 0
  %899 = vmatprep.subr.bf16.mxu0 0
  %900 = vmatpush1.bf16.msra.mxu0 0
  %901 = vmatprep.subr.bf16.mxu0 0
  %902 = vmatpush1.bf16.msra.mxu0 0
  %903 = vmatprep.subr.bf16.mxu0 0
  %904 = vmatpush1.bf16.msra.mxu0 0
  %905 = vmatprep.subr.bf16.mxu0 0
  %906 = vmatpush1.bf16.msra.mxu0 0
  %907 = vmatprep.subr.bf16.mxu0 0
  %908 = vmatpush1.bf16.msra.mxu0 0
  %909 = vmatprep.mubr.bf16.mxu0 0
  %910 = vmatmul.mubr.bf16.gmra.mrb[0].mxu0 %v643
  %v911 = vpop.f32.mrb[0].mxu0
  %v912 = vadd.f32 0.0, %v911
  %v913 = vpop.f32.mrb[0].mxu0
  %v914 = vadd.f32 0.0, %v913
  %v915 = vpop.f32.mrb[0].mxu0
  %v916 = vpop.f32.mrb[0].mxu0
  %917 = vdwg.mxu0
  %v950 = vunpack.c.l.b16 %v611
  %v951 = vunpack.c.h.b16 %v611
  %v952 = vunpack.c.l.b16 %v612
  %v953 = vunpack.c.h.b16 %v612
  %v954 = vunpack.c.l.b16 %v613
  %v955 = vunpack.c.h.b16 %v613
  %v956 = vunpack.c.l.b16 %v614
  %v957 = vunpack.c.h.b16 %v614
  %v958 = vunpack.c.l.b16 %v615
  %v959 = vunpack.c.h.b16 %v615
  %v960 = vunpack.c.l.b16 %v616
  %v961 = vunpack.c.h.b16 %v616
  %v962 = vunpack.c.l.b16 %v617
  %v963 = vunpack.c.h.b16 %v617
  %v964 = vunpack.c.l.b16 %v618
  %v965 = vunpack.c.h.b16 %v618
  %v966 = vunpack.c.l.b16 %v619
  %v967 = vunpack.c.h.b16 %v619
  %v968 = vunpack.c.l.b16 %v620
  %v969 = vunpack.c.h.b16 %v620
  %v970 = vunpack.c.l.b16 %v621
  %v971 = vunpack.c.h.b16 %v621
  %v972 = vunpack.c.l.b16 %v622
  %v973 = vunpack.c.h.b16 %v622
  %v974 = vunpack.c.l.b16 %v623
  %v975 = vunpack.c.h.b16 %v623
  %v976 = vunpack.c.l.b16 %v624
  %v977 = vunpack.c.h.b16 %v624
  %v978 = vunpack.c.l.b16 %v625
  %v979 = vunpack.c.h.b16 %v625
  %v980 = vunpack.c.l.b16 %v626
  %v981 = vunpack.c.h.b16 %v626
  %v982 = vunpack.c.l.b16 %v627
  %v983 = vunpack.c.h.b16 %v627
  %v984 = vunpack.c.l.b16 %v628
  %v985 = vunpack.c.h.b16 %v628
  %v986 = vunpack.c.l.b16 %v629
  %v987 = vunpack.c.h.b16 %v629
  %v988 = vunpack.c.l.b16 %v630
  %v989 = vunpack.c.h.b16 %v630
  %v990 = vunpack.c.l.b16 %v631
  %v991 = vunpack.c.h.b16 %v631
  %v992 = vunpack.c.l.b16 %v632
  %v993 = vunpack.c.h.b16 %v632
  %v994 = vunpack.c.l.b16 %v633
  %v995 = vunpack.c.h.b16 %v633
  %v996 = vunpack.c.l.b16 %v634
  %v997 = vunpack.c.h.b16 %v634
  %v998 = vunpack.c.l.b16 %v635
  %v999 = vunpack.c.h.b16 %v635
  %v1000 = vunpack.c.l.b16 %v636
  %v1001 = vunpack.c.h.b16 %v636
  %v1002 = vunpack.c.l.b16 %v637
  %v1003 = vunpack.c.h.b16 %v637
  %v1004 = vunpack.c.l.b16 %v638
  %v1005 = vunpack.c.h.b16 %v638
  %v1006 = vunpack.c.l.b16 %v639
  %v1007 = vunpack.c.h.b16 %v639
  %v1008 = vunpack.c.l.b16 %v640
  %v1009 = vunpack.c.h.b16 %v640
  %v1010 = vunpack.c.l.b16 %v641
  %v1011 = vunpack.c.h.b16 %v641
  %v1012 = vunpack.c.l.b16 %v642
  %v1013 = vunpack.c.h.b16 %v642
  %v1014 = vpack.c.b16 %v954, %v950
  %v1015 = vpack.c.b16 %v955, %v951
  %v1016 = vpack.c.b16 %v956, %v952
  %v1017 = vpack.c.b16 %v957, %v953
  %v1018 = vpack.c.b16 %v962, %v958
  %v1019 = vpack.c.b16 %v963, %v959
  %v1020 = vpack.c.b16 %v964, %v960
  %v1021 = vpack.c.b16 %v965, %v961
  %v1022 = vpack.c.b16 %v970, %v966
  %v1023 = vpack.c.b16 %v971, %v967
  %v1024 = vpack.c.b16 %v972, %v968
  %v1025 = vpack.c.b16 %v973, %v969
  %v1026 = vpack.c.b16 %v978, %v974
  %v1027 = vpack.c.b16 %v979, %v975
  %v1028 = vpack.c.b16 %v980, %v976
  %v1029 = vpack.c.b16 %v981, %v977
  %v1030 = vpack.c.b16 %v986, %v982
  %v1031 = vpack.c.b16 %v987, %v983
  %v1032 = vpack.c.b16 %v988, %v984
  %v1033 = vpack.c.b16 %v989, %v985
  %v1034 = vpack.c.b16 %v994, %v990
  %v1035 = vpack.c.b16 %v995, %v991
  %v1036 = vpack.c.b16 %v996, %v992
  %v1037 = vpack.c.b16 %v997, %v993
  %v1038 = vpack.c.b16 %v1002, %v998
  %v1039 = vpack.c.b16 %v1003, %v999
  %v1040 = vpack.c.b16 %v1004, %v1000
  %v1041 = vpack.c.b16 %v1005, %v1001
  %v1042 = vpack.c.b16 %v1010, %v1006
  %v1043 = vpack.c.b16 %v1011, %v1007
  %v1044 = vpack.c.b16 %v1012, %v1008
  %v1045 = vpack.c.b16 %v1013, %v1009
  %1078 = vmatprep.subr.bf16.mxu0 %v1015
  %1079 = vmatpush1.bf16.msra.mxu0 %v1014
  %1080 = vmatprep.subr.bf16.mxu0 %v1019
  %1081 = vmatpush1.bf16.msra.mxu0 %v1018
  %1082 = vmatprep.subr.bf16.mxu0 %v1023
  %1083 = vmatpush1.bf16.msra.mxu0 %v1022
  %1084 = vmatprep.subr.bf16.mxu0 %v1027
  %1085 = vmatpush1.bf16.msra.mxu0 %v1026
  %1086 = vmatprep.subr.bf16.mxu0 %v1031
  %1087 = vmatpush1.bf16.msra.mxu0 %v1030
  %1088 = vmatprep.subr.bf16.mxu0 %v1035
  %1089 = vmatpush1.bf16.msra.mxu0 %v1034
  %1090 = vmatprep.subr.bf16.mxu0 %v1039
  %1091 = vmatpush1.bf16.msra.mxu0 %v1038
  %1092 = vmatprep.subr.bf16.mxu0 %v1043
  %1093 = vmatpush1.bf16.msra.mxu0 %v1042
  %1094 = vmatprep.subr.bf16.mxu0 0
  %1095 = vmatpush1.bf16.msra.mxu0 0
  %1096 = vmatprep.subr.bf16.mxu0 0
  %1097 = vmatpush1.bf16.msra.mxu0 0
  %1098 = vmatprep.subr.bf16.mxu0 0
  %1099 = vmatpush1.bf16.msra.mxu0 0
  %1100 = vmatprep.subr.bf16.mxu0 0
  %1101 = vmatpush1.bf16.msra.mxu0 0
  %1102 = vmatprep.subr.bf16.mxu0 0
  %1103 = vmatpush1.bf16.msra.mxu0 0
  %1104 = vmatprep.subr.bf16.mxu0 0
  %1105 = vmatpush1.bf16.msra.mxu0 0
  %1106 = vmatprep.subr.bf16.mxu0 0
  %1107 = vmatpush1.bf16.msra.mxu0 0
  %1108 = vmatprep.subr.bf16.mxu0 0
  %1109 = vmatpush1.bf16.msra.mxu0 0
  %1110 = vmatprep.mubr.bf16.mxu0 0
  %1111 = vmatmul.mubr.bf16.gmra.mrb[0].mxu0 %v610
  %v1112 = vpop.f32.mrb[0].mxu0
  %v1113 = vadd.f32 %v871, %v1112
  %v1114 = vpop.f32.mrb[0].mxu0
  %v1115 = vadd.f32 %v873, %v1114
  %v1116 = vpop.f32.mrb[0].mxu0
  %v1117 = vpop.f32.mrb[0].mxu0
  %1118 = vdwg.mxu0
  %1119 = vmatprep.subr.bf16.mxu0 %v1017
  %1120 = vmatpush1.bf16.msra.mxu0 %v1016
  %1121 = vmatprep.subr.bf16.mxu0 %v1021
  %1122 = vmatpush1.bf16.msra.mxu0 %v1020
  %1123 = vmatprep.subr.bf16.mxu0 %v1025
  %1124 = vmatpush1.bf16.msra.mxu0 %v1024
  %1125 = vmatprep.subr.bf16.mxu0 %v1029
  %1126 = vmatpush1.bf16.msra.mxu0 %v1028
  %1127 = vmatprep.subr.bf16.mxu0 %v1033
  %1128 = vmatpush1.bf16.msra.mxu0 %v1032
  %1129 = vmatprep.subr.bf16.mxu0 %v1037
  %1130 = vmatpush1.bf16.msra.mxu0 %v1036
  %1131 = vmatprep.subr.bf16.mxu0 %v1041
  %1132 = vmatpush1.bf16.msra.mxu0 %v1040
  %1133 = vmatprep.subr.bf16.mxu0 %v1045
  %1134 = vmatpush1.bf16.msra.mxu0 %v1044
  %1135 = vmatprep.subr.bf16.mxu0 0
  %1136 = vmatpush1.bf16.msra.mxu0 0
  %1137 = vmatprep.subr.bf16.mxu0 0
  %1138 = vmatpush1.bf16.msra.mxu0 0
  %1139 = vmatprep.subr.bf16.mxu0 0
  %1140 = vmatpush1.bf16.msra.mxu0 0
  %1141 = vmatprep.subr.bf16.mxu0 0
  %1142 = vmatpush1.bf16.msra.mxu0 0
  %1143 = vmatprep.subr.bf16.mxu0 0
  %1144 = vmatpush1.bf16.msra.mxu0 0
  %1145 = vmatprep.subr.bf16.mxu0 0
  %1146 = vmatpush1.bf16.msra.mxu0 0
  %1147 = vmatprep.subr.bf16.mxu0 0
  %1148 = vmatpush1.bf16.msra.mxu0 0
  %1149 = vmatprep.subr.bf16.mxu0 0
  %1150 = vmatpush1.bf16.msra.mxu0 0
  %1151 = vmatprep.mubr.bf16.mxu0 0
  %1152 = vmatmul.mubr.bf16.gmra.mrb[0].mxu0 %v610
  %v1153 = vpop.f32.mrb[0].mxu0
  %v1154 = vadd.f32 %v912, %v1153
  %v1155 = vpop.f32.mrb[0].mxu0
  %v1156 = vadd.f32 %v914, %v1155
  %v1157 = vpop.f32.mrb[0].mxu0
  %v1158 = vpop.f32.mrb[0].mxu0
  %1159 = vdwg.mxu0
  %v1160 = vld [vmem:[%s7] sm:$0xf]
  %v1162 = vlaneseq
  %v1163 = vshrl.u32 %v1162, 7
  %v1164 = vsub.s32 0, %v1163
  %v1165 = vrot.slane %v1160, %v1164
  %v1166 = vlaneseq
  %v1167 = vshrl.u32 %v1166, 7
  %v1168 = vsub.s32 1, %v1167
  %v1169 = vrot.slane %v1160, %v1168
  %v1170 = vlaneseq
  %v1171 = vshrl.u32 %v1170, 7
  %v1172 = vsub.s32 2, %v1171
  %v1173 = vrot.slane %v1160, %v1172
  %v1174 = vlaneseq
  %v1175 = vshrl.u32 %v1174, 7
  %v1176 = vsub.s32 3, %v1175
  %v1177 = vrot.slane %v1160, %v1176
  %v1182 = vadd.f32 %v1113, %v1165
  %v1183 = vadd.f32 %v1115, %v1169
  %v1184 = vadd.f32 %v1154, %v1173
  %v1185 = vadd.f32 %v1156, %v1177
  %v1186 = vxor.u32 %v1182, 2147483648
  %v1187 = vxor.u32 %v1183, 2147483648
  %v1188 = vxor.u32 %v1184, 2147483648
  %v1189 = vmul.f32 %v1186, 1.442695
  %v1190 = vpow.pop %v1189
  %v1191 = vmul.f32 %v1187, 1.442695
  %v1192 = vpow.pop %v1191
  %v1193 = vmul.f32 %v1188, 1.442695
  %v1194 = vpow.pop %v1193
  %v1195 = vadd.f32 %v1190, 1.0
  %v1196 = vadd.f32 %v1192, 1.0
  %v1197 = vadd.f32 %v1194, 1.0
  %v1198 = vrcp.pop %v1195
  %v1199 = vmul.f32 1.0, %v1198
  %v1200 = vrcp.pop %v1196
  %v1201 = vmul.f32 1.0, %v1200
  %v1202 = vrcp.pop %v1197
  %v1203 = vmul.f32 1.0, %v1202
  %v1204 = vtanh.pop %v1185
  %v1205 = vmul.f32 %v1201, %v302
  %v1206 = vmul.f32 %v1199, %v1204
  %v1207 = vadd.f32 %v1205, %v1206
  %v1208 = vtanh.pop %v1207
  %v1209 = vmul.f32 %v1203, %v1208
  %1210 = vst [vmem:[#allocation2] sm:$0xff] %v609
  %1211 = vst [vmem:[#allocation2 + $0x8] sm:$0xff] %v607
  %1212 = vst [vmem:[#allocation2 + $0x10] sm:$0xff] %v1209
  %1213 = vst [vmem:[#allocation2 + $0x18] sm:$0xff] %v1207
  %1214 = vst [vmem:[#allocation4] sm:$0xff] %v1209
  %v1215 = vld [vmem:[#allocation2] sm:$0xff]
  %v1216 = vld [vmem:[#allocation2 + $0x8] sm:$0xff]
  %v1217 = vld [vmem:[#allocation2 + $0x10] sm:$0xff]
  %v1218 = vld [vmem:[#allocation2 + $0x18] sm:$0xff]
  %v1219 = vld [vmem:[#allocation3 + $0x20] sm:$0xff]
  %v1220 = vld [vmem:[#allocation3 + $0x28] sm:$0xff]
  %v1221 = vld [vmem:[#allocation3 + $0x30] sm:$0xff]
  %v1222 = vld [vmem:[#allocation3 + $0x38] sm:$0xff]
  %v1223 = vpack.c.bf16 %v1215, %v1215
  %v1224 = vld [vmem:[%s4] sm:$0xff]
  %v1225 = vld [vmem:[%s4 + $0x8] sm:$0xff]
  %v1226 = vld [vmem:[%s4 + $0x10] sm:$0xff]
  %v1227 = vld [vmem:[%s4 + $0x18] sm:$0xff]
  %v1228 = vld [vmem:[%s4 + $0x20] sm:$0xff]
  %v1229 = vld [vmem:[%s4 + $0x28] sm:$0xff]
  %v1230 = vld [vmem:[%s4 + $0x30] sm:$0xff]
  %v1231 = vld [vmem:[%s4 + $0x38] sm:$0xff]
  %v1232 = vld [vmem:[%s4 + $0x40] sm:$0xff]
  %v1233 = vld [vmem:[%s4 + $0x48] sm:$0xff]
  %v1234 = vld [vmem:[%s4 + $0x50] sm:$0xff]
  %v1235 = vld [vmem:[%s4 + $0x58] sm:$0xff]
  %v1236 = vld [vmem:[%s4 + $0x60] sm:$0xff]
  %v1237 = vld [vmem:[%s4 + $0x68] sm:$0xff]
  %v1238 = vld [vmem:[%s4 + $0x70] sm:$0xff]
  %v1239 = vld [vmem:[%s4 + $0x78] sm:$0xff]
  %v1240 = vld [vmem:[%s4 + $0x80] sm:$0xff]
  %v1241 = vld [vmem:[%s4 + $0x88] sm:$0xff]
  %v1242 = vld [vmem:[%s4 + $0x90] sm:$0xff]
  %v1243 = vld [vmem:[%s4 + $0x98] sm:$0xff]
  %v1244 = vld [vmem:[%s4 + $0xa0] sm:$0xff]
  %v1245 = vld [vmem:[%s4 + $0xa8] sm:$0xff]
  %v1246 = vld [vmem:[%s4 + $0xb0] sm:$0xff]
  %v1247 = vld [vmem:[%s4 + $0xb8] sm:$0xff]
  %v1248 = vld [vmem:[%s4 + $0xc0] sm:$0xff]
  %v1249 = vld [vmem:[%s4 + $0xc8] sm:$0xff]
  %v1250 = vld [vmem:[%s4 + $0xd0] sm:$0xff]
  %v1251 = vld [vmem:[%s4 + $0xd8] sm:$0xff]
  %v1252 = vld [vmem:[%s4 + $0xe0] sm:$0xff]
  %v1253 = vld [vmem:[%s4 + $0xe8] sm:$0xff]
  %v1254 = vld [vmem:[%s4 + $0xf0] sm:$0xff]
  %v1255 = vld [vmem:[%s4 + $0xf8] sm:$0xff]
  %v1288 = vunpack.c.l.b16 %v1224
  %v1289 = vunpack.c.h.b16 %v1224
  %v1290 = vunpack.c.l.b16 %v1225
  %v1291 = vunpack.c.h.b16 %v1225
  %v1292 = vunpack.c.l.b16 %v1226
  %v1293 = vunpack.c.h.b16 %v1226
  %v1294 = vunpack.c.l.b16 %v1227
  %v1295 = vunpack.c.h.b16 %v1227
  %v1296 = vunpack.c.l.b16 %v1228
  %v1297 = vunpack.c.h.b16 %v1228
  %v1298 = vunpack.c.l.b16 %v1229
  %v1299 = vunpack.c.h.b16 %v1229
  %v1300 = vunpack.c.l.b16 %v1230
  %v1301 = vunpack.c.h.b16 %v1230
  %v1302 = vunpack.c.l.b16 %v1231
  %v1303 = vunpack.c.h.b16 %v1231
  %v1304 = vunpack.c.l.b16 %v1232
  %v1305 = vunpack.c.h.b16 %v1232
  %v1306 = vunpack.c.l.b16 %v1233
  %v1307 = vunpack.c.h.b16 %v1233
  %v1308 = vunpack.c.l.b16 %v1234
  %v1309 = vunpack.c.h.b16 %v1234
  %v1310 = vunpack.c.l.b16 %v1235
  %v1311 = vunpack.c.h.b16 %v1235
  %v1312 = vunpack.c.l.b16 %v1236
  %v1313 = vunpack.c.h.b16 %v1236
  %v1314 = vunpack.c.l.b16 %v1237
  %v1315 = vunpack.c.h.b16 %v1237
  %v1316 = vunpack.c.l.b16 %v1238
  %v1317 = vunpack.c.h.b16 %v1238
  %v1318 = vunpack.c.l.b16 %v1239
  %v1319 = vunpack.c.h.b16 %v1239
  %v1320 = vunpack.c.l.b16 %v1240
  %v1321 = vunpack.c.h.b16 %v1240
  %v1322 = vunpack.c.l.b16 %v1241
  %v1323 = vunpack.c.h.b16 %v1241
  %v1324 = vunpack.c.l.b16 %v1242
  %v1325 = vunpack.c.h.b16 %v1242
  %v1326 = vunpack.c.l.b16 %v1243
  %v1327 = vunpack.c.h.b16 %v1243
  %v1328 = vunpack.c.l.b16 %v1244
  %v1329 = vunpack.c.h.b16 %v1244
  %v1330 = vunpack.c.l.b16 %v1245
  %v1331 = vunpack.c.h.b16 %v1245
  %v1332 = vunpack.c.l.b16 %v1246
  %v1333 = vunpack.c.h.b16 %v1246
  %v1334 = vunpack.c.l.b16 %v1247
  %v1335 = vunpack.c.h.b16 %v1247
  %v1336 = vunpack.c.l.b16 %v1248
  %v1337 = vunpack.c.h.b16 %v1248
  %v1338 = vunpack.c.l.b16 %v1249
  %v1339 = vunpack.c.h.b16 %v1249
  %v1340 = vunpack.c.l.b16 %v1250
  %v1341 = vunpack.c.h.b16 %v1250
  %v1342 = vunpack.c.l.b16 %v1251
  %v1343 = vunpack.c.h.b16 %v1251
  %v1344 = vunpack.c.l.b16 %v1252
  %v1345 = vunpack.c.h.b16 %v1252
  %v1346 = vunpack.c.l.b16 %v1253
  %v1347 = vunpack.c.h.b16 %v1253
  %v1348 = vunpack.c.l.b16 %v1254
  %v1349 = vunpack.c.h.b16 %v1254
  %v1350 = vunpack.c.l.b16 %v1255
  %v1351 = vunpack.c.h.b16 %v1255
  %v1352 = vpack.c.b16 %v1292, %v1288
  %v1353 = vpack.c.b16 %v1293, %v1289
  %v1354 = vpack.c.b16 %v1294, %v1290
  %v1355 = vpack.c.b16 %v1295, %v1291
  %v1356 = vpack.c.b16 %v1300, %v1296
  %v1357 = vpack.c.b16 %v1301, %v1297
  %v1358 = vpack.c.b16 %v1302, %v1298
  %v1359 = vpack.c.b16 %v1303, %v1299
  %v1360 = vpack.c.b16 %v1308, %v1304
  %v1361 = vpack.c.b16 %v1309, %v1305
  %v1362 = vpack.c.b16 %v1310, %v1306
  %v1363 = vpack.c.b16 %v1311, %v1307
  %v1364 = vpack.c.b16 %v1316, %v1312
  %v1365 = vpack.c.b16 %v1317, %v1313
  %v1366 = vpack.c.b16 %v1318, %v1314
  %v1367 = vpack.c.b16 %v1319, %v1315
  %v1368 = vpack.c.b16 %v1324, %v1320
  %v1369 = vpack.c.b16 %v1325, %v1321
  %v1370 = vpack.c.b16 %v1326, %v1322
  %v1371 = vpack.c.b16 %v1327, %v1323
  %v1372 = vpack.c.b16 %v1332, %v1328
  %v1373 = vpack.c.b16 %v1333, %v1329
  %v1374 = vpack.c.b16 %v1334, %v1330
  %v1375 = vpack.c.b16 %v1335, %v1331
  %v1376 = vpack.c.b16 %v1340, %v1336
  %v1377 = vpack.c.b16 %v1341, %v1337
  %v1378 = vpack.c.b16 %v1342, %v1338
  %v1379 = vpack.c.b16 %v1343, %v1339
  %v1380 = vpack.c.b16 %v1348, %v1344
  %v1381 = vpack.c.b16 %v1349, %v1345
  %v1382 = vpack.c.b16 %v1350, %v1346
  %v1383 = vpack.c.b16 %v1351, %v1347
  %1416 = vmatprep.subr.bf16.mxu0 %v1353
  %1417 = vmatpush1.bf16.msra.mxu0 %v1352
  %1418 = vmatprep.subr.bf16.mxu0 %v1357
  %1419 = vmatpush1.bf16.msra.mxu0 %v1356
  %1420 = vmatprep.subr.bf16.mxu0 %v1361
  %1421 = vmatpush1.bf16.msra.mxu0 %v1360
  %1422 = vmatprep.subr.bf16.mxu0 %v1365
  %1423 = vmatpush1.bf16.msra.mxu0 %v1364
  %1424 = vmatprep.subr.bf16.mxu0 %v1369
  %1425 = vmatpush1.bf16.msra.mxu0 %v1368
  %1426 = vmatprep.subr.bf16.mxu0 %v1373
  %1427 = vmatpush1.bf16.msra.mxu0 %v1372
  %1428 = vmatprep.subr.bf16.mxu0 %v1377
  %1429 = vmatpush1.bf16.msra.mxu0 %v1376
  %1430 = vmatprep.subr.bf16.mxu0 %v1381
  %1431 = vmatpush1.bf16.msra.mxu0 %v1380
  %1432 = vmatprep.subr.bf16.mxu0 0
  %1433 = vmatpush1.bf16.msra.mxu0 0
  %1434 = vmatprep.subr.bf16.mxu0 0
  %1435 = vmatpush1.bf16.msra.mxu0 0
  %1436 = vmatprep.subr.bf16.mxu0 0
  %1437 = vmatpush1.bf16.msra.mxu0 0
  %1438 = vmatprep.subr.bf16.mxu0 0
  %1439 = vmatpush1.bf16.msra.mxu0 0
  %1440 = vmatprep.subr.bf16.mxu0 0
  %1441 = vmatpush1.bf16.msra.mxu0 0
  %1442 = vmatprep.subr.bf16.mxu0 0
  %1443 = vmatpush1.bf16.msra.mxu0 0
  %1444 = vmatprep.subr.bf16.mxu0 0
  %1445 = vmatpush1.bf16.msra.mxu0 0
  %1446 = vmatprep.subr.bf16.mxu0 0
  %1447 = vmatpush1.bf16.msra.mxu0 0
  %1448 = vmatprep.mubr.bf16.mxu0 0
  %1449 = vmatmul.mubr.bf16.gmra.mrb[0].mxu0 %v1223
  %v1450 = vpop.f32.mrb[0].mxu0
  %v1451 = vadd.f32 0.0, %v1450
  %v1452 = vpop.f32.mrb[0].mxu0
  %v1453 = vadd.f32 0.0, %v1452
  %v1454 = vpop.f32.mrb[0].mxu0
  %v1455 = vpop.f32.mrb[0].mxu0
  %1456 = vdwg.mxu0
  %1457 = vmatprep.subr.bf16.mxu0 %v1355
  %1458 = vmatpush1.bf16.msra.mxu0 %v1354
  %1459 = vmatprep.subr.bf16.mxu0 %v1359
  %1460 = vmatpush1.bf16.msra.mxu0 %v1358
  %1461 = vmatprep.subr.bf16.mxu0 %v1363
  %1462 = vmatpush1.bf16.msra.mxu0 %v1362
  %1463 = vmatprep.subr.bf16.mxu0 %v1367
  %1464 = vmatpush1.bf16.msra.mxu0 %v1366
  %1465 = vmatprep.subr.bf16.mxu0 %v1371
  %1466 = vmatpush1.bf16.msra.mxu0 %v1370
  %1467 = vmatprep.subr.bf16.mxu0 %v1375
  %1468 = vmatpush1.bf16.msra.mxu0 %v1374
  %1469 = vmatprep.subr.bf16.mxu0 %v1379
  %1470 = vmatpush1.bf16.msra.mxu0 %v1378
  %1471 = vmatprep.subr.bf16.mxu0 %v1383
  %1472 = vmatpush1.bf16.msra.mxu0 %v1382
  %1473 = vmatprep.subr.bf16.mxu0 0
  %1474 = vmatpush1.bf16.msra.mxu0 0
  %1475 = vmatprep.subr.bf16.mxu0 0
  %1476 = vmatpush1.bf16.msra.mxu0 0
  %1477 = vmatprep.subr.bf16.mxu0 0
  %1478 = vmatpush1.bf16.msra.mxu0 0
  %1479 = vmatprep.subr.bf16.mxu0 0
  %1480 = vmatpush1.bf16.msra.mxu0 0
  %1481 = vmatprep.subr.bf16.mxu0 0
  %1482 = vmatpush1.bf16.msra.mxu0 0
  %1483 = vmatprep.subr.bf16.mxu0 0
  %1484 = vmatpush1.bf16.msra.mxu0 0
  %1485 = vmatprep.subr.bf16.mxu0 0
  %1486 = vmatpush1.bf16.msra.mxu0 0
  %1487 = vmatprep.subr.bf16.mxu0 0
  %1488 = vmatpush1.bf16.msra.mxu0 0
  %1489 = vmatprep.mubr.bf16.mxu0 0
  %1490 = vmatmul.mubr.bf16.gmra.mrb[0].mxu0 %v1223
  %v1491 = vpop.f32.mrb[0].mxu0
  %v1492 = vadd.f32 0.0, %v1491
  %v1493 = vpop.f32.mrb[0].mxu0
  %v1494 = vadd.f32 0.0, %v1493
  %v1495 = vpop.f32.mrb[0].mxu0
  %v1496 = vpop.f32.mrb[0].mxu0
  %1497 = vdwg.mxu0
  %v1498 = vadd.f32 %v1219, %v1451
  %v1499 = vadd.f32 %v1220, %v1453
  %v1500 = vadd.f32 %v1221, %v1492
  %v1501 = vadd.f32 %v1222, %v1494
  %v1502 = vxor.u32 %v1498, 2147483648
  %v1503 = vxor.u32 %v1499, 2147483648
  %v1504 = vxor.u32 %v1500, 2147483648
  %v1505 = vmul.f32 %v1502, 1.442695
  %v1506 = vpow.pop %v1505
  %v1507 = vmul.f32 %v1503, 1.442695
  %v1508 = vpow.pop %v1507
  %v1509 = vmul.f32 %v1504, 1.442695
  %v1510 = vpow.pop %v1509
  %v1511 = vadd.f32 %v1506, 1.0
  %v1512 = vadd.f32 %v1508, 1.0
  %v1513 = vadd.f32 %v1510, 1.0
  %v1514 = vrcp.pop %v1511
  %v1515 = vmul.f32 1.0, %v1514
  %v1516 = vrcp.pop %v1512
  %v1517 = vmul.f32 1.0, %v1516
  %v1518 = vrcp.pop %v1513
  %v1519 = vmul.f32 1.0, %v1518
  %v1520 = vtanh.pop %v1501
  %v1521 = vmul.f32 %v1517, %v1216
  %v1522 = vmul.f32 %v1515, %v1520
  %v1523 = vadd.f32 %v1521, %v1522
  %v1524 = vtanh.pop %v1523
  %v1525 = vmul.f32 %v1519, %v1524
  %v1526 = vpack.c.bf16 %v1525, %v1525
  %v1527 = vld [vmem:[%s5] sm:$0xff]
  %v1528 = vld [vmem:[%s5 + $0x8] sm:$0xff]
  %v1529 = vld [vmem:[%s5 + $0x10] sm:$0xff]
  %v1530 = vld [vmem:[%s5 + $0x18] sm:$0xff]
  %v1531 = vld [vmem:[%s5 + $0x20] sm:$0xff]
  %v1532 = vld [vmem:[%s5 + $0x28] sm:$0xff]
  %v1533 = vld [vmem:[%s5 + $0x30] sm:$0xff]
  %v1534 = vld [vmem:[%s5 + $0x38] sm:$0xff]
  %v1535 = vld [vmem:[%s5 + $0x40] sm:$0xff]
  %v1536 = vld [vmem:[%s5 + $0x48] sm:$0xff]
  %v1537 = vld [vmem:[%s5 + $0x50] sm:$0xff]
  %v1538 = vld [vmem:[%s5 + $0x58] sm:$0xff]
  %v1539 = vld [vmem:[%s5 + $0x60] sm:$0xff]
  %v1540 = vld [vmem:[%s5 + $0x68] sm:$0xff]
  %v1541 = vld [vmem:[%s5 + $0x70] sm:$0xff]
  %v1542 = vld [vmem:[%s5 + $0x78] sm:$0xff]
  %v1543 = vld [vmem:[%s5 + $0x80] sm:$0xff]
  %v1544 = vld [vmem:[%s5 + $0x88] sm:$0xff]
  %v1545 = vld [vmem:[%s5 + $0x90] sm:$0xff]
  %v1546 = vld [vmem:[%s5 + $0x98] sm:$0xff]
  %v1547 = vld [vmem:[%s5 + $0xa0] sm:$0xff]
  %v1548 = vld [vmem:[%s5 + $0xa8] sm:$0xff]
  %v1549 = vld [vmem:[%s5 + $0xb0] sm:$0xff]
  %v1550 = vld [vmem:[%s5 + $0xb8] sm:$0xff]
  %v1551 = vld [vmem:[%s5 + $0xc0] sm:$0xff]
  %v1552 = vld [vmem:[%s5 + $0xc8] sm:$0xff]
  %v1553 = vld [vmem:[%s5 + $0xd0] sm:$0xff]
  %v1554 = vld [vmem:[%s5 + $0xd8] sm:$0xff]
  %v1555 = vld [vmem:[%s5 + $0xe0] sm:$0xff]
  %v1556 = vld [vmem:[%s5 + $0xe8] sm:$0xff]
  %v1557 = vld [vmem:[%s5 + $0xf0] sm:$0xff]
  %v1558 = vld [vmem:[%s5 + $0xf8] sm:$0xff]
  %v1559 = vpack.c.bf16 %v1217, %v1217
  %v1560 = vld [vmem:[%s6] sm:$0xff]
  %v1561 = vld [vmem:[%s6 + $0x8] sm:$0xff]
  %v1562 = vld [vmem:[%s6 + $0x10] sm:$0xff]
  %v1563 = vld [vmem:[%s6 + $0x18] sm:$0xff]
  %v1564 = vld [vmem:[%s6 + $0x20] sm:$0xff]
  %v1565 = vld [vmem:[%s6 + $0x28] sm:$0xff]
  %v1566 = vld [vmem:[%s6 + $0x30] sm:$0xff]
  %v1567 = vld [vmem:[%s6 + $0x38] sm:$0xff]
  %v1568 = vld [vmem:[%s6 + $0x40] sm:$0xff]
  %v1569 = vld [vmem:[%s6 + $0x48] sm:$0xff]
  %v1570 = vld [vmem:[%s6 + $0x50] sm:$0xff]
  %v1571 = vld [vmem:[%s6 + $0x58] sm:$0xff]
  %v1572 = vld [vmem:[%s6 + $0x60] sm:$0xff]
  %v1573 = vld [vmem:[%s6 + $0x68] sm:$0xff]
  %v1574 = vld [vmem:[%s6 + $0x70] sm:$0xff]
  %v1575 = vld [vmem:[%s6 + $0x78] sm:$0xff]
  %v1576 = vld [vmem:[%s6 + $0x80] sm:$0xff]
  %v1577 = vld [vmem:[%s6 + $0x88] sm:$0xff]
  %v1578 = vld [vmem:[%s6 + $0x90] sm:$0xff]
  %v1579 = vld [vmem:[%s6 + $0x98] sm:$0xff]
  %v1580 = vld [vmem:[%s6 + $0xa0] sm:$0xff]
  %v1581 = vld [vmem:[%s6 + $0xa8] sm:$0xff]
  %v1582 = vld [vmem:[%s6 + $0xb0] sm:$0xff]
  %v1583 = vld [vmem:[%s6 + $0xb8] sm:$0xff]
  %v1584 = vld [vmem:[%s6 + $0xc0] sm:$0xff]
  %v1585 = vld [vmem:[%s6 + $0xc8] sm:$0xff]
  %v1586 = vld [vmem:[%s6 + $0xd0] sm:$0xff]
  %v1587 = vld [vmem:[%s6 + $0xd8] sm:$0xff]
  %v1588 = vld [vmem:[%s6 + $0xe0] sm:$0xff]
  %v1589 = vld [vmem:[%s6 + $0xe8] sm:$0xff]
  %v1590 = vld [vmem:[%s6 + $0xf0] sm:$0xff]
  %v1591 = vld [vmem:[%s6 + $0xf8] sm:$0xff]
  %v1624 = vunpack.c.l.b16 %v1560
  %v1625 = vunpack.c.h.b16 %v1560
  %v1626 = vunpack.c.l.b16 %v1561
  %v1627 = vunpack.c.h.b16 %v1561
  %v1628 = vunpack.c.l.b16 %v1562
  %v1629 = vunpack.c.h.b16 %v1562
  %v1630 = vunpack.c.l.b16 %v1563
  %v1631 = vunpack.c.h.b16 %v1563
  %v1632 = vunpack.c.l.b16 %v1564
  %v1633 = vunpack.c.h.b16 %v1564
  %v1634 = vunpack.c.l.b16 %v1565
  %v1635 = vunpack.c.h.b16 %v1565
  %v1636 = vunpack.c.l.b16 %v1566
  %v1637 = vunpack.c.h.b16 %v1566
  %v1638 = vunpack.c.l.b16 %v1567
  %v1639 = vunpack.c.h.b16 %v1567
  %v1640 = vunpack.c.l.b16 %v1568
  %v1641 = vunpack.c.h.b16 %v1568
  %v1642 = vunpack.c.l.b16 %v1569
  %v1643 = vunpack.c.h.b16 %v1569
  %v1644 = vunpack.c.l.b16 %v1570
  %v1645 = vunpack.c.h.b16 %v1570
  %v1646 = vunpack.c.l.b16 %v1571
  %v1647 = vunpack.c.h.b16 %v1571
  %v1648 = vunpack.c.l.b16 %v1572
  %v1649 = vunpack.c.h.b16 %v1572
  %v1650 = vunpack.c.l.b16 %v1573
  %v1651 = vunpack.c.h.b16 %v1573
  %v1652 = vunpack.c.l.b16 %v1574
  %v1653 = vunpack.c.h.b16 %v1574
  %v1654 = vunpack.c.l.b16 %v1575
  %v1655 = vunpack.c.h.b16 %v1575
  %v1656 = vunpack.c.l.b16 %v1576
  %v1657 = vunpack.c.h.b16 %v1576
  %v1658 = vunpack.c.l.b16 %v1577
  %v1659 = vunpack.c.h.b16 %v1577
  %v1660 = vunpack.c.l.b16 %v1578
  %v1661 = vunpack.c.h.b16 %v1578
  %v1662 = vunpack.c.l.b16 %v1579
  %v1663 = vunpack.c.h.b16 %v1579
  %v1664 = vunpack.c.l.b16 %v1580
  %v1665 = vunpack.c.h.b16 %v1580
  %v1666 = vunpack.c.l.b16 %v1581
  %v1667 = vunpack.c.h.b16 %v1581
  %v1668 = vunpack.c.l.b16 %v1582
  %v1669 = vunpack.c.h.b16 %v1582
  %v1670 = vunpack.c.l.b16 %v1583
  %v1671 = vunpack.c.h.b16 %v1583
  %v1672 = vunpack.c.l.b16 %v1584
  %v1673 = vunpack.c.h.b16 %v1584
  %v1674 = vunpack.c.l.b16 %v1585
  %v1675 = vunpack.c.h.b16 %v1585
  %v1676 = vunpack.c.l.b16 %v1586
  %v1677 = vunpack.c.h.b16 %v1586
  %v1678 = vunpack.c.l.b16 %v1587
  %v1679 = vunpack.c.h.b16 %v1587
  %v1680 = vunpack.c.l.b16 %v1588
  %v1681 = vunpack.c.h.b16 %v1588
  %v1682 = vunpack.c.l.b16 %v1589
  %v1683 = vunpack.c.h.b16 %v1589
  %v1684 = vunpack.c.l.b16 %v1590
  %v1685 = vunpack.c.h.b16 %v1590
  %v1686 = vunpack.c.l.b16 %v1591
  %v1687 = vunpack.c.h.b16 %v1591
  %v1688 = vpack.c.b16 %v1628, %v1624
  %v1689 = vpack.c.b16 %v1629, %v1625
  %v1690 = vpack.c.b16 %v1630, %v1626
  %v1691 = vpack.c.b16 %v1631, %v1627
  %v1692 = vpack.c.b16 %v1636, %v1632
  %v1693 = vpack.c.b16 %v1637, %v1633
  %v1694 = vpack.c.b16 %v1638, %v1634
  %v1695 = vpack.c.b16 %v1639, %v1635
  %v1696 = vpack.c.b16 %v1644, %v1640
  %v1697 = vpack.c.b16 %v1645, %v1641
  %v1698 = vpack.c.b16 %v1646, %v1642
  %v1699 = vpack.c.b16 %v1647, %v1643
  %v1700 = vpack.c.b16 %v1652, %v1648
  %v1701 = vpack.c.b16 %v1653, %v1649
  %v1702 = vpack.c.b16 %v1654, %v1650
  %v1703 = vpack.c.b16 %v1655, %v1651
  %v1704 = vpack.c.b16 %v1660, %v1656
  %v1705 = vpack.c.b16 %v1661, %v1657
  %v1706 = vpack.c.b16 %v1662, %v1658
  %v1707 = vpack.c.b16 %v1663, %v1659
  %v1708 = vpack.c.b16 %v1668, %v1664
  %v1709 = vpack.c.b16 %v1669, %v1665
  %v1710 = vpack.c.b16 %v1670, %v1666
  %v1711 = vpack.c.b16 %v1671, %v1667
  %v1712 = vpack.c.b16 %v1676, %v1672
  %v1713 = vpack.c.b16 %v1677, %v1673
  %v1714 = vpack.c.b16 %v1678, %v1674
  %v1715 = vpack.c.b16 %v1679, %v1675
  %v1716 = vpack.c.b16 %v1684, %v1680
  %v1717 = vpack.c.b16 %v1685, %v1681
  %v1718 = vpack.c.b16 %v1686, %v1682
  %v1719 = vpack.c.b16 %v1687, %v1683
  %1752 = vmatprep.subr.bf16.mxu0 %v1689
  %1753 = vmatpush1.bf16.msra.mxu0 %v1688
  %1754 = vmatprep.subr.bf16.mxu0 %v1693
  %1755 = vmatpush1.bf16.msra.mxu0 %v1692
  %1756 = vmatprep.subr.bf16.mxu0 %v1697
  %1757 = vmatpush1.bf16.msra.mxu0 %v1696
  %1758 = vmatprep.subr.bf16.mxu0 %v1701
  %1759 = vmatpush1.bf16.msra.mxu0 %v1700
  %1760 = vmatprep.subr.bf16.mxu0 %v1705
  %1761 = vmatpush1.bf16.msra.mxu0 %v1704
  %1762 = vmatprep.subr.bf16.mxu0 %v1709
  %1763 = vmatpush1.bf16.msra.mxu0 %v1708
  %1764 = vmatprep.subr.bf16.mxu0 %v1713
  %1765 = vmatpush1.bf16.msra.mxu0 %v1712
  %1766 = vmatprep.subr.bf16.mxu0 %v1717
  %1767 = vmatpush1.bf16.msra.mxu0 %v1716
  %1768 = vmatprep.subr.bf16.mxu0 0
  %1769 = vmatpush1.bf16.msra.mxu0 0
  %1770 = vmatprep.subr.bf16.mxu0 0
  %1771 = vmatpush1.bf16.msra.mxu0 0
  %1772 = vmatprep.subr.bf16.mxu0 0
  %1773 = vmatpush1.bf16.msra.mxu0 0
  %1774 = vmatprep.subr.bf16.mxu0 0
  %1775 = vmatpush1.bf16.msra.mxu0 0
  %1776 = vmatprep.subr.bf16.mxu0 0
  %1777 = vmatpush1.bf16.msra.mxu0 0
  %1778 = vmatprep.subr.bf16.mxu0 0
  %1779 = vmatpush1.bf16.msra.mxu0 0
  %1780 = vmatprep.subr.bf16.mxu0 0
  %1781 = vmatpush1.bf16.msra.mxu0 0
  %1782 = vmatprep.subr.bf16.mxu0 0
  %1783 = vmatpush1.bf16.msra.mxu0 0
  %1784 = vmatprep.mubr.bf16.mxu0 0
  %1785 = vmatmul.mubr.bf16.gmra.mrb[0].mxu0 %v1559
  %v1786 = vpop.f32.mrb[0].mxu0
  %v1787 = vadd.f32 0.0, %v1786
  %v1788 = vpop.f32.mrb[0].mxu0
  %v1789 = vadd.f32 0.0, %v1788
  %v1790 = vpop.f32.mrb[0].mxu0
  %v1791 = vpop.f32.mrb[0].mxu0
  %1792 = vdwg.mxu0
  %1793 = vmatprep.subr.bf16.mxu0 %v1691
  %1794 = vmatpush1.bf16.msra.mxu0 %v1690
  %1795 = vmatprep.subr.bf16.mxu0 %v1695
  %1796 = vmatpush1.bf16.msra.mxu0 %v1694
  %1797 = vmatprep.subr.bf16.mxu0 %v1699
  %1798 = vmatpush1.bf16.msra.mxu0 %v1698
  %1799 = vmatprep.subr.bf16.mxu0 %v1703
  %1800 = vmatpush1.bf16.msra.mxu0 %v1702
  %1801 = vmatprep.subr.bf16.mxu0 %v1707
  %1802 = vmatpush1.bf16.msra.mxu0 %v1706
  %1803 = vmatprep.subr.bf16.mxu0 %v1711
  %1804 = vmatpush1.bf16.msra.mxu0 %v1710
  %1805 = vmatprep.subr.bf16.mxu0 %v1715
  %1806 = vmatpush1.bf16.msra.mxu0 %v1714
  %1807 = vmatprep.subr.bf16.mxu0 %v1719
  %1808 = vmatpush1.bf16.msra.mxu0 %v1718
  %1809 = vmatprep.subr.bf16.mxu0 0
  %1810 = vmatpush1.bf16.msra.mxu0 0
  %1811 = vmatprep.subr.bf16.mxu0 0
  %1812 = vmatpush1.bf16.msra.mxu0 0
  %1813 = vmatprep.subr.bf16.mxu0 0
  %1814 = vmatpush1.bf16.msra.mxu0 0
  %1815 = vmatprep.subr.bf16.mxu0 0
  %1816 = vmatpush1.bf16.msra.mxu0 0
  %1817 = vmatprep.subr.bf16.mxu0 0
  %1818 = vmatpush1.bf16.msra.mxu0 0
  %1819 = vmatprep.subr.bf16.mxu0 0
  %1820 = vmatpush1.bf16.msra.mxu0 0
  %1821 = vmatprep.subr.bf16.mxu0 0
  %1822 = vmatpush1.bf16.msra.mxu0 0
  %1823 = vmatprep.subr.bf16.mxu0 0
  %1824 = vmatpush1.bf16.msra.mxu0 0
  %1825 = vmatprep.mubr.bf16.mxu0 0
  %1826 = vmatmul.mubr.bf16.gmra.mrb[0].mxu0 %v1559
  %v1827 = vpop.f32.mrb[0].mxu0
  %v1828 = vadd.f32 0.0, %v1827
  %v1829 = vpop.f32.mrb[0].mxu0
  %v1830 = vadd.f32 0.0, %v1829
  %v1831 = vpop.f32.mrb[0].mxu0
  %v1832 = vpop.f32.mrb[0].mxu0
  %1833 = vdwg.mxu0
  %v1866 = vunpack.c.l.b16 %v1527
  %v1867 = vunpack.c.h.b16 %v1527
  %v1868 = vunpack.c.l.b16 %v1528
  %v1869 = vunpack.c.h.b16 %v1528
  %v1870 = vunpack.c.l.b16 %v1529
  %v1871 = vunpack.c.h.b16 %v1529
  %v1872 = vunpack.c.l.b16 %v1530
  %v1873 = vunpack.c.h.b16 %v1530
  %v1874 = vunpack.c.l.b16 %v1531
  %v1875 = vunpack.c.h.b16 %v1531
  %v1876 = vunpack.c.l.b16 %v1532
  %v1877 = vunpack.c.h.b16 %v1532
  %v1878 = vunpack.c.l.b16 %v1533
  %v1879 = vunpack.c.h.b16 %v1533
  %v1880 = vunpack.c.l.b16 %v1534
  %v1881 = vunpack.c.h.b16 %v1534
  %v1882 = vunpack.c.l.b16 %v1535
  %v1883 = vunpack.c.h.b16 %v1535
  %v1884 = vunpack.c.l.b16 %v1536
  %v1885 = vunpack.c.h.b16 %v1536
  %v1886 = vunpack.c.l.b16 %v1537
  %v1887 = vunpack.c.h.b16 %v1537
  %v1888 = vunpack.c.l.b16 %v1538
  %v1889 = vunpack.c.h.b16 %v1538
  %v1890 = vunpack.c.l.b16 %v1539
  %v1891 = vunpack.c.h.b16 %v1539
  %v1892 = vunpack.c.l.b16 %v1540
  %v1893 = vunpack.c.h.b16 %v1540
  %v1894 = vunpack.c.l.b16 %v1541
  %v1895 = vunpack.c.h.b16 %v1541
  %v1896 = vunpack.c.l.b16 %v1542
  %v1897 = vunpack.c.h.b16 %v1542
  %v1898 = vunpack.c.l.b16 %v1543
  %v1899 = vunpack.c.h.b16 %v1543
  %v1900 = vunpack.c.l.b16 %v1544
  %v1901 = vunpack.c.h.b16 %v1544
  %v1902 = vunpack.c.l.b16 %v1545
  %v1903 = vunpack.c.h.b16 %v1545
  %v1904 = vunpack.c.l.b16 %v1546
  %v1905 = vunpack.c.h.b16 %v1546
  %v1906 = vunpack.c.l.b16 %v1547
  %v1907 = vunpack.c.h.b16 %v1547
  %v1908 = vunpack.c.l.b16 %v1548
  %v1909 = vunpack.c.h.b16 %v1548
  %v1910 = vunpack.c.l.b16 %v1549
  %v1911 = vunpack.c.h.b16 %v1549
  %v1912 = vunpack.c.l.b16 %v1550
  %v1913 = vunpack.c.h.b16 %v1550
  %v1914 = vunpack.c.l.b16 %v1551
  %v1915 = vunpack.c.h.b16 %v1551
  %v1916 = vunpack.c.l.b16 %v1552
  %v1917 = vunpack.c.h.b16 %v1552
  %v1918 = vunpack.c.l.b16 %v1553
  %v1919 = vunpack.c.h.b16 %v1553
  %v1920 = vunpack.c.l.b16 %v1554
  %v1921 = vunpack.c.h.b16 %v1554
  %v1922 = vunpack.c.l.b16 %v1555
  %v1923 = vunpack.c.h.b16 %v1555
  %v1924 = vunpack.c.l.b16 %v1556
  %v1925 = vunpack.c.h.b16 %v1556
  %v1926 = vunpack.c.l.b16 %v1557
  %v1927 = vunpack.c.h.b16 %v1557
  %v1928 = vunpack.c.l.b16 %v1558
  %v1929 = vunpack.c.h.b16 %v1558
  %v1930 = vpack.c.b16 %v1870, %v1866
  %v1931 = vpack.c.b16 %v1871, %v1867
  %v1932 = vpack.c.b16 %v1872, %v1868
  %v1933 = vpack.c.b16 %v1873, %v1869
  %v1934 = vpack.c.b16 %v1878, %v1874
  %v1935 = vpack.c.b16 %v1879, %v1875
  %v1936 = vpack.c.b16 %v1880, %v1876
  %v1937 = vpack.c.b16 %v1881, %v1877
  %v1938 = vpack.c.b16 %v1886, %v1882
  %v1939 = vpack.c.b16 %v1887, %v1883
  %v1940 = vpack.c.b16 %v1888, %v1884
  %v1941 = vpack.c.b16 %v1889, %v1885
  %v1942 = vpack.c.b16 %v1894, %v1890
  %v1943 = vpack.c.b16 %v1895, %v1891
  %v1944 = vpack.c.b16 %v1896, %v1892
  %v1945 = vpack.c.b16 %v1897, %v1893
  %v1946 = vpack.c.b16 %v1902, %v1898
  %v1947 = vpack.c.b16 %v1903, %v1899
  %v1948 = vpack.c.b16 %v1904, %v1900
  %v1949 = vpack.c.b16 %v1905, %v1901
  %v1950 = vpack.c.b16 %v1910, %v1906
  %v1951 = vpack.c.b16 %v1911, %v1907
  %v1952 = vpack.c.b16 %v1912, %v1908
  %v1953 = vpack.c.b16 %v1913, %v1909
  %v1954 = vpack.c.b16 %v1918, %v1914
  %v1955 = vpack.c.b16 %v1919, %v1915
  %v1956 = vpack.c.b16 %v1920, %v1916
  %v1957 = vpack.c.b16 %v1921, %v1917
  %v1958 = vpack.c.b16 %v1926, %v1922
  %v1959 = vpack.c.b16 %v1927, %v1923
  %v1960 = vpack.c.b16 %v1928, %v1924
  %v1961 = vpack.c.b16 %v1929, %v1925
  %1994 = vmatprep.subr.bf16.mxu0 %v1931
  %1995 = vmatpush1.bf16.msra.mxu0 %v1930
  %1996 = vmatprep.subr.bf16.mxu0 %v1935
  %1997 = vmatpush1.bf16.msra.mxu0 %v1934
  %1998 = vmatprep.subr.bf16.mxu0 %v1939
  %1999 = vmatpush1.bf16.msra.mxu0 %v1938
  %2000 = vmatprep.subr.bf16.mxu0 %v1943
  %2001 = vmatpush1.bf16.msra.mxu0 %v1942
  %2002 = vmatprep.subr.bf16.mxu0 %v1947
  %2003 = vmatpush1.bf16.msra.mxu0 %v1946
  %2004 = vmatprep.subr.bf16.mxu0 %v1951
  %2005 = vmatpush1.bf16.msra.mxu0 %v1950
  %2006 = vmatprep.subr.bf16.mxu0 %v1955
  %2007 = vmatpush1.bf16.msra.mxu0 %v1954
  %2008 = vmatprep.subr.bf16.mxu0 %v1959
  %2009 = vmatpush1.bf16.msra.mxu0 %v1958
  %2010 = vmatprep.subr.bf16.mxu0 0
  %2011 = vmatpush1.bf16.msra.mxu0 0
  %2012 = vmatprep.subr.bf16.mxu0 0
  %2013 = vmatpush1.bf16.msra.mxu0 0
  %2014 = vmatprep.subr.bf16.mxu0 0
  %2015 = vmatpush1.bf16.msra.mxu0 0
  %2016 = vmatprep.subr.bf16.mxu0 0
  %2017 = vmatpush1.bf16.msra.mxu0 0
  %2018 = vmatprep.subr.bf16.mxu0 0
  %2019 = vmatpush1.bf16.msra.mxu0 0
  %2020 = vmatprep.subr.bf16.mxu0 0
  %2021 = vmatpush1.bf16.msra.mxu0 0
  %2022 = vmatprep.subr.bf16.mxu0 0
  %2023 = vmatpush1.bf16.msra.mxu0 0
  %2024 = vmatprep.subr.bf16.mxu0 0
  %2025 = vmatpush1.bf16.msra.mxu0 0
  %2026 = vmatprep.mubr.bf16.mxu0 0
  %2027 = vmatmul.mubr.bf16.gmra.mrb[0].mxu0 %v1526
  %v2028 = vpop.f32.mrb[0].mxu0
  %v2029 = vadd.f32 %v1787, %v2028
  %v2030 = vpop.f32.mrb[0].mxu0
  %v2031 = vadd.f32 %v1789, %v2030
  %v2032 = vpop.f32.mrb[0].mxu0
  %v2033 = vpop.f32.mrb[0].mxu0
  %2034 = vdwg.mxu0
  %2035 = vmatprep.subr.bf16.mxu0 %v1933
  %2036 = vmatpush1.bf16.msra.mxu0 %v1932
  %2037 = vmatprep.subr.bf16.mxu0 %v1937
  %2038 = vmatpush1.bf16.msra.mxu0 %v1936
  %2039 = vmatprep.subr.bf16.mxu0 %v1941
  %2040 = vmatpush1.bf16.msra.mxu0 %v1940
  %2041 = vmatprep.subr.bf16.mxu0 %v1945
  %2042 = vmatpush1.bf16.msra.mxu0 %v1944
  %2043 = vmatprep.subr.bf16.mxu0 %v1949
  %2044 = vmatpush1.bf16.msra.mxu0 %v1948
  %2045 = vmatprep.subr.bf16.mxu0 %v1953
  %2046 = vmatpush1.bf16.msra.mxu0 %v1952
  %2047 = vmatprep.subr.bf16.mxu0 %v1957
  %2048 = vmatpush1.bf16.msra.mxu0 %v1956
  %2049 = vmatprep.subr.bf16.mxu0 %v1961
  %2050 = vmatpush1.bf16.msra.mxu0 %v1960
  %2051 = vmatprep.subr.bf16.mxu0 0
  %2052 = vmatpush1.bf16.msra.mxu0 0
  %2053 = vmatprep.subr.bf16.mxu0 0
  %2054 = vmatpush1.bf16.msra.mxu0 0
  %2055 = vmatprep.subr.bf16.mxu0 0
  %2056 = vmatpush1.bf16.msra.mxu0 0
  %2057 = vmatprep.subr.bf16.mxu0 0
  %2058 = vmatpush1.bf16.msra.mxu0 0
  %2059 = vmatprep.subr.bf16.mxu0 0
  %2060 = vmatpush1.bf16.msra.mxu0 0
  %2061 = vmatprep.subr.bf16.mxu0 0
  %2062 = vmatpush1.bf16.msra.mxu0 0
  %2063 = vmatprep.subr.bf16.mxu0 0
  %2064 = vmatpush1.bf16.msra.mxu0 0
  %2065 = vmatprep.subr.bf16.mxu0 0
  %2066 = vmatpush1.bf16.msra.mxu0 0
  %2067 = vmatprep.mubr.bf16.mxu0 0
  %2068 = vmatmul.mubr.bf16.gmra.mrb[0].mxu0 %v1526
  %v2069 = vpop.f32.mrb[0].mxu0
  %v2070 = vadd.f32 %v1828, %v2069
  %v2071 = vpop.f32.mrb[0].mxu0
  %v2072 = vadd.f32 %v1830, %v2071
  %v2073 = vpop.f32.mrb[0].mxu0
  %v2074 = vpop.f32.mrb[0].mxu0
  %2075 = vdwg.mxu0
  %v2076 = vld [vmem:[%s7] sm:$0xf]
  %v2078 = vlaneseq
  %v2079 = vshrl.u32 %v2078, 7
  %v2080 = vsub.s32 0, %v2079
  %v2081 = vrot.slane %v2076, %v2080
  %v2082 = vlaneseq
  %v2083 = vshrl.u32 %v2082, 7
  %v2084 = vsub.s32 1, %v2083
  %v2085 = vrot.slane %v2076, %v2084
  %v2086 = vlaneseq
  %v2087 = vshrl.u32 %v2086, 7
  %v2088 = vsub.s32 2, %v2087
  %v2089 = vrot.slane %v2076, %v2088
  %v2090 = vlaneseq
  %v2091 = vshrl.u32 %v2090, 7
  %v2092 = vsub.s32 3, %v2091
  %v2093 = vrot.slane %v2076, %v2092
  %v2098 = vadd.f32 %v2029, %v2081
  %v2099 = vadd.f32 %v2031, %v2085
  %v2100 = vadd.f32 %v2070, %v2089
  %v2101 = vadd.f32 %v2072, %v2093
  %v2102 = vxor.u32 %v2098, 2147483648
  %v2103 = vxor.u32 %v2099, 2147483648
  %v2104 = vxor.u32 %v2100, 2147483648
  %v2105 = vmul.f32 %v2102, 1.442695
  %v2106 = vpow.pop %v2105
  %v2107 = vmul.f32 %v2103, 1.442695
  %v2108 = vpow.pop %v2107
  %v2109 = vmul.f32 %v2104, 1.442695
  %v2110 = vpow.pop %v2109
  %v2111 = vadd.f32 %v2106, 1.0
  %v2112 = vadd.f32 %v2108, 1.0
  %v2113 = vadd.f32 %v2110, 1.0
  %v2114 = vrcp.pop %v2111
  %v2115 = vmul.f32 1.0, %v2114
  %v2116 = vrcp.pop %v2112
  %v2117 = vmul.f32 1.0, %v2116
  %v2118 = vrcp.pop %v2113
  %v2119 = vmul.f32 1.0, %v2118
  %v2120 = vtanh.pop %v2101
  %v2121 = vmul.f32 %v2117, %v1218
  %v2122 = vmul.f32 %v2115, %v2120
  %v2123 = vadd.f32 %v2121, %v2122
  %v2124 = vtanh.pop %v2123
  %v2125 = vmul.f32 %v2119, %v2124
  %2126 = vst [vmem:[#allocation2] sm:$0xff] %v1525
  %2127 = vst [vmem:[#allocation2 + $0x8] sm:$0xff] %v1523
  %2128 = vst [vmem:[#allocation2 + $0x10] sm:$0xff] %v2125
  %2129 = vst [vmem:[#allocation2 + $0x18] sm:$0xff] %v2123
  %2130 = vst [vmem:[#allocation4 + $0x8] sm:$0xff] %v2125
  %v2131 = vld [vmem:[#allocation2] sm:$0xff]
  %v2132 = vld [vmem:[#allocation2 + $0x8] sm:$0xff]
  %v2133 = vld [vmem:[#allocation2 + $0x10] sm:$0xff]
  %v2134 = vld [vmem:[#allocation2 + $0x18] sm:$0xff]
  %v2135 = vld [vmem:[#allocation3 + $0x40] sm:$0xff]
  %v2136 = vld [vmem:[#allocation3 + $0x48] sm:$0xff]
  %v2137 = vld [vmem:[#allocation3 + $0x50] sm:$0xff]
  %v2138 = vld [vmem:[#allocation3 + $0x58] sm:$0xff]
  %v2139 = vpack.c.bf16 %v2131, %v2131
  %v2140 = vld [vmem:[%s4] sm:$0xff]
  %v2141 = vld [vmem:[%s4 + $0x8] sm:$0xff]
  %v2142 = vld [vmem:[%s4 + $0x10] sm:$0xff]
  %v2143 = vld [vmem:[%s4 + $0x18] sm:$0xff]
  %v2144 = vld [vmem:[%s4 + $0x20] sm:$0xff]
  %v2145 = vld [vmem:[%s4 + $0x28] sm:$0xff]
  %v2146 = vld [vmem:[%s4 + $0x30] sm:$0xff]
  %v2147 = vld [vmem:[%s4 + $0x38] sm:$0xff]
  %v2148 = vld [vmem:[%s4 + $0x40] sm:$0xff]
  %v2149 = vld [vmem:[%s4 + $0x48] sm:$0xff]
  %v2150 = vld [vmem:[%s4 + $0x50] sm:$0xff]
  %v2151 = vld [vmem:[%s4 + $0x58] sm:$0xff]
  %v2152 = vld [vmem:[%s4 + $0x60] sm:$0xff]
  %v2153 = vld [vmem:[%s4 + $0x68] sm:$0xff]
  %v2154 = vld [vmem:[%s4 + $0x70] sm:$0xff]
  %v2155 = vld [vmem:[%s4 + $0x78] sm:$0xff]
  %v2156 = vld [vmem:[%s4 + $0x80] sm:$0xff]
  %v2157 = vld [vmem:[%s4 + $0x88] sm:$0xff]
  %v2158 = vld [vmem:[%s4 + $0x90] sm:$0xff]
  %v2159 = vld [vmem:[%s4 + $0x98] sm:$0xff]
  %v2160 = vld [vmem:[%s4 + $0xa0] sm:$0xff]
  %v2161 = vld [vmem:[%s4 + $0xa8] sm:$0xff]
  %v2162 = vld [vmem:[%s4 + $0xb0] sm:$0xff]
  %v2163 = vld [vmem:[%s4 + $0xb8] sm:$0xff]
  %v2164 = vld [vmem:[%s4 + $0xc0] sm:$0xff]
  %v2165 = vld [vmem:[%s4 + $0xc8] sm:$0xff]
  %v2166 = vld [vmem:[%s4 + $0xd0] sm:$0xff]
  %v2167 = vld [vmem:[%s4 + $0xd8] sm:$0xff]
  %v2168 = vld [vmem:[%s4 + $0xe0] sm:$0xff]
  %v2169 = vld [vmem:[%s4 + $0xe8] sm:$0xff]
  %v2170 = vld [vmem:[%s4 + $0xf0] sm:$0xff]
  %v2171 = vld [vmem:[%s4 + $0xf8] sm:$0xff]
  %v2204 = vunpack.c.l.b16 %v2140
  %v2205 = vunpack.c.h.b16 %v2140
  %v2206 = vunpack.c.l.b16 %v2141
  %v2207 = vunpack.c.h.b16 %v2141
  %v2208 = vunpack.c.l.b16 %v2142
  %v2209 = vunpack.c.h.b16 %v2142
  %v2210 = vunpack.c.l.b16 %v2143
  %v2211 = vunpack.c.h.b16 %v2143
  %v2212 = vunpack.c.l.b16 %v2144
  %v2213 = vunpack.c.h.b16 %v2144
  %v2214 = vunpack.c.l.b16 %v2145
  %v2215 = vunpack.c.h.b16 %v2145
  %v2216 = vunpack.c.l.b16 %v2146
  %v2217 = vunpack.c.h.b16 %v2146
  %v2218 = vunpack.c.l.b16 %v2147
  %v2219 = vunpack.c.h.b16 %v2147
  %v2220 = vunpack.c.l.b16 %v2148
  %v2221 = vunpack.c.h.b16 %v2148
  %v2222 = vunpack.c.l.b16 %v2149
  %v2223 = vunpack.c.h.b16 %v2149
  %v2224 = vunpack.c.l.b16 %v2150
  %v2225 = vunpack.c.h.b16 %v2150
  %v2226 = vunpack.c.l.b16 %v2151
  %v2227 = vunpack.c.h.b16 %v2151
  %v2228 = vunpack.c.l.b16 %v2152
  %v2229 = vunpack.c.h.b16 %v2152
  %v2230 = vunpack.c.l.b16 %v2153
  %v2231 = vunpack.c.h.b16 %v2153
  %v2232 = vunpack.c.l.b16 %v2154
  %v2233 = vunpack.c.h.b16 %v2154
  %v2234 = vunpack.c.l.b16 %v2155
  %v2235 = vunpack.c.h.b16 %v2155
  %v2236 = vunpack.c.l.b16 %v2156
  %v2237 = vunpack.c.h.b16 %v2156
  %v2238 = vunpack.c.l.b16 %v2157
  %v2239 = vunpack.c.h.b16 %v2157
  %v2240 = vunpack.c.l.b16 %v2158
  %v2241 = vunpack.c.h.b16 %v2158
  %v2242 = vunpack.c.l.b16 %v2159
  %v2243 = vunpack.c.h.b16 %v2159
  %v2244 = vunpack.c.l.b16 %v2160
  %v2245 = vunpack.c.h.b16 %v2160
  %v2246 = vunpack.c.l.b16 %v2161
  %v2247 = vunpack.c.h.b16 %v2161
  %v2248 = vunpack.c.l.b16 %v2162
  %v2249 = vunpack.c.h.b16 %v2162
  %v2250 = vunpack.c.l.b16 %v2163
  %v2251 = vunpack.c.h.b16 %v2163
  %v2252 = vunpack.c.l.b16 %v2164
  %v2253 = vunpack.c.h.b16 %v2164
  %v2254 = vunpack.c.l.b16 %v2165
  %v2255 = vunpack.c.h.b16 %v2165
  %v2256 = vunpack.c.l.b16 %v2166
  %v2257 = vunpack.c.h.b16 %v2166
  %v2258 = vunpack.c.l.b16 %v2167
  %v2259 = vunpack.c.h.b16 %v2167
  %v2260 = vunpack.c.l.b16 %v2168
  %v2261 = vunpack.c.h.b16 %v2168
  %v2262 = vunpack.c.l.b16 %v2169
  %v2263 = vunpack.c.h.b16 %v2169
  %v2264 = vunpack.c.l.b16 %v2170
  %v2265 = vunpack.c.h.b16 %v2170
  %v2266 = vunpack.c.l.b16 %v2171
  %v2267 = vunpack.c.h.b16 %v2171
  %v2268 = vpack.c.b16 %v2208, %v2204
  %v2269 = vpack.c.b16 %v2209, %v2205
  %v2270 = vpack.c.b16 %v2210, %v2206
  %v2271 = vpack.c.b16 %v2211, %v2207
  %v2272 = vpack.c.b16 %v2216, %v2212
  %v2273 = vpack.c.b16 %v2217, %v2213
  %v2274 = vpack.c.b16 %v2218, %v2214
  %v2275 = vpack.c.b16 %v2219, %v2215
  %v2276 = vpack.c.b16 %v2224, %v2220
  %v2277 = vpack.c.b16 %v2225, %v2221
  %v2278 = vpack.c.b16 %v2226, %v2222
  %v2279 = vpack.c.b16 %v2227, %v2223
  %v2280 = vpack.c.b16 %v2232, %v2228
  %v2281 = vpack.c.b16 %v2233, %v2229
  %v2282 = vpack.c.b16 %v2234, %v2230
  %v2283 = vpack.c.b16 %v2235, %v2231
  %v2284 = vpack.c.b16 %v2240, %v2236
  %v2285 = vpack.c.b16 %v2241, %v2237
  %v2286 = vpack.c.b16 %v2242, %v2238
  %v2287 = vpack.c.b16 %v2243, %v2239
  %v2288 = vpack.c.b16 %v2248, %v2244
  %v2289 = vpack.c.b16 %v2249, %v2245
  %v2290 = vpack.c.b16 %v2250, %v2246
  %v2291 = vpack.c.b16 %v2251, %v2247
  %v2292 = vpack.c.b16 %v2256, %v2252
  %v2293 = vpack.c.b16 %v2257, %v2253
  %v2294 = vpack.c.b16 %v2258, %v2254
  %v2295 = vpack.c.b16 %v2259, %v2255
  %v2296 = vpack.c.b16 %v2264, %v2260
  %v2297 = vpack.c.b16 %v2265, %v2261
  %v2298 = vpack.c.b16 %v2266, %v2262
  %v2299 = vpack.c.b16 %v2267, %v2263
  %2332 = vmatprep.subr.bf16.mxu0 %v2269
  %2333 = vmatpush1.bf16.msra.mxu0 %v2268
  %2334 = vmatprep.subr.bf16.mxu0 %v2273
  %2335 = vmatpush1.bf16.msra.mxu0 %v2272
  %2336 = vmatprep.subr.bf16.mxu0 %v2277
  %2337 = vmatpush1.bf16.msra.mxu0 %v2276
  %2338 = vmatprep.subr.bf16.mxu0 %v2281
  %2339 = vmatpush1.bf16.msra.mxu0 %v2280
  %2340 = vmatprep.subr.bf16.mxu0 %v2285
  %2341 = vmatpush1.bf16.msra.mxu0 %v2284
  %2342 = vmatprep.subr.bf16.mxu0 %v2289
  %2343 = vmatpush1.bf16.msra.mxu0 %v2288
  %2344 = vmatprep.subr.bf16.mxu0 %v2293
  %2345 = vmatpush1.bf16.msra.mxu0 %v2292
  %2346 = vmatprep.subr.bf16.mxu0 %v2297
  %2347 = vmatpush1.bf16.msra.mxu0 %v2296
  %2348 = vmatprep.subr.bf16.mxu0 0
  %2349 = vmatpush1.bf16.msra.mxu0 0
  %2350 = vmatprep.subr.bf16.mxu0 0
  %2351 = vmatpush1.bf16.msra.mxu0 0
  %2352 = vmatprep.subr.bf16.mxu0 0
  %2353 = vmatpush1.bf16.msra.mxu0 0
  %2354 = vmatprep.subr.bf16.mxu0 0
  %2355 = vmatpush1.bf16.msra.mxu0 0
  %2356 = vmatprep.subr.bf16.mxu0 0
  %2357 = vmatpush1.bf16.msra.mxu0 0
  %2358 = vmatprep.subr.bf16.mxu0 0
  %2359 = vmatpush1.bf16.msra.mxu0 0
  %2360 = vmatprep.subr.bf16.mxu0 0
  %2361 = vmatpush1.bf16.msra.mxu0 0
  %2362 = vmatprep.subr.bf16.mxu0 0
  %2363 = vmatpush1.bf16.msra.mxu0 0
  %2364 = vmatprep.mubr.bf16.mxu0 0
  %2365 = vmatmul.mubr.bf16.gmra.mrb[0].mxu0 %v2139
  %v2366 = vpop.f32.mrb[0].mxu0
  %v2367 = vadd.f32 0.0, %v2366
  %v2368 = vpop.f32.mrb[0].mxu0
  %v2369 = vadd.f32 0.0, %v2368
  %v2370 = vpop.f32.mrb[0].mxu0
  %v2371 = vpop.f32.mrb[0].mxu0
  %2372 = vdwg.mxu0
  %2373 = vmatprep.subr.bf16.mxu0 %v2271
  %2374 = vmatpush1.bf16.msra.mxu0 %v2270
  %2375 = vmatprep.subr.bf16.mxu0 %v2275
  %2376 = vmatpush1.bf16.msra.mxu0 %v2274
  %2377 = vmatprep.subr.bf16.mxu0 %v2279
  %2378 = vmatpush1.bf16.msra.mxu0 %v2278
  %2379 = vmatprep.subr.bf16.mxu0 %v2283
  %2380 = vmatpush1.bf16.msra.mxu0 %v2282
  %2381 = vmatprep.subr.bf16.mxu0 %v2287
  %2382 = vmatpush1.bf16.msra.mxu0 %v2286
  %2383 = vmatprep.subr.bf16.mxu0 %v2291
  %2384 = vmatpush1.bf16.msra.mxu0 %v2290
  %2385 = vmatprep.subr.bf16.mxu0 %v2295
  %2386 = vmatpush1.bf16.msra.mxu0 %v2294
  %2387 = vmatprep.subr.bf16.mxu0 %v2299
  %2388 = vmatpush1.bf16.msra.mxu0 %v2298
  %2389 = vmatprep.subr.bf16.mxu0 0
  %2390 = vmatpush1.bf16.msra.mxu0 0
  %2391 = vmatprep.subr.bf16.mxu0 0
  %2392 = vmatpush1.bf16.msra.mxu0 0
  %2393 = vmatprep.subr.bf16.mxu0 0
  %2394 = vmatpush1.bf16.msra.mxu0 0
  %2395 = vmatprep.subr.bf16.mxu0 0
  %2396 = vmatpush1.bf16.msra.mxu0 0
  %2397 = vmatprep.subr.bf16.mxu0 0
  %2398 = vmatpush1.bf16.msra.mxu0 0
  %2399 = vmatprep.subr.bf16.mxu0 0
  %2400 = vmatpush1.bf16.msra.mxu0 0
  %2401 = vmatprep.subr.bf16.mxu0 0
  %2402 = vmatpush1.bf16.msra.mxu0 0
  %2403 = vmatprep.subr.bf16.mxu0 0
  %2404 = vmatpush1.bf16.msra.mxu0 0
  %2405 = vmatprep.mubr.bf16.mxu0 0
  %2406 = vmatmul.mubr.bf16.gmra.mrb[0].mxu0 %v2139
  %v2407 = vpop.f32.mrb[0].mxu0
  %v2408 = vadd.f32 0.0, %v2407
  %v2409 = vpop.f32.mrb[0].mxu0
  %v2410 = vadd.f32 0.0, %v2409
  %v2411 = vpop.f32.mrb[0].mxu0
  %v2412 = vpop.f32.mrb[0].mxu0
  %2413 = vdwg.mxu0
  %v2414 = vadd.f32 %v2135, %v2367
  %v2415 = vadd.f32 %v2136, %v2369
  %v2416 = vadd.f32 %v2137, %v2408
  %v2417 = vadd.f32 %v2138, %v2410
  %v2418 = vxor.u32 %v2414, 2147483648
  %v2419 = vxor.u32 %v2415, 2147483648
  %v2420 = vxor.u32 %v2416, 2147483648
  %v2421 = vmul.f32 %v2418, 1.442695
  %v2422 = vpow.pop %v2421
  %v2423 = vmul.f32 %v2419, 1.442695
  %v2424 = vpow.pop %v2423
  %v2425 = vmul.f32 %v2420, 1.442695
  %v2426 = vpow.pop %v2425
  %v2427 = vadd.f32 %v2422, 1.0
  %v2428 = vadd.f32 %v2424, 1.0
  %v2429 = vadd.f32 %v2426, 1.0
  %v2430 = vrcp.pop %v2427
  %v2431 = vmul.f32 1.0, %v2430
  %v2432 = vrcp.pop %v2428
  %v2433 = vmul.f32 1.0, %v2432
  %v2434 = vrcp.pop %v2429
  %v2435 = vmul.f32 1.0, %v2434
  %v2436 = vtanh.pop %v2417
  %v2437 = vmul.f32 %v2433, %v2132
  %v2438 = vmul.f32 %v2431, %v2436
  %v2439 = vadd.f32 %v2437, %v2438
  %v2440 = vtanh.pop %v2439
  %v2441 = vmul.f32 %v2435, %v2440
  %v2442 = vpack.c.bf16 %v2441, %v2441
  %v2443 = vld [vmem:[%s5] sm:$0xff]
  %v2444 = vld [vmem:[%s5 + $0x8] sm:$0xff]
  %v2445 = vld [vmem:[%s5 + $0x10] sm:$0xff]
  %v2446 = vld [vmem:[%s5 + $0x18] sm:$0xff]
  %v2447 = vld [vmem:[%s5 + $0x20] sm:$0xff]
  %v2448 = vld [vmem:[%s5 + $0x28] sm:$0xff]
  %v2449 = vld [vmem:[%s5 + $0x30] sm:$0xff]
  %v2450 = vld [vmem:[%s5 + $0x38] sm:$0xff]
  %v2451 = vld [vmem:[%s5 + $0x40] sm:$0xff]
  %v2452 = vld [vmem:[%s5 + $0x48] sm:$0xff]
  %v2453 = vld [vmem:[%s5 + $0x50] sm:$0xff]
  %v2454 = vld [vmem:[%s5 + $0x58] sm:$0xff]
  %v2455 = vld [vmem:[%s5 + $0x60] sm:$0xff]
  %v2456 = vld [vmem:[%s5 + $0x68] sm:$0xff]
  %v2457 = vld [vmem:[%s5 + $0x70] sm:$0xff]
  %v2458 = vld [vmem:[%s5 + $0x78] sm:$0xff]
  %v2459 = vld [vmem:[%s5 + $0x80] sm:$0xff]
  %v2460 = vld [vmem:[%s5 + $0x88] sm:$0xff]
  %v2461 = vld [vmem:[%s5 + $0x90] sm:$0xff]
  %v2462 = vld [vmem:[%s5 + $0x98] sm:$0xff]
  %v2463 = vld [vmem:[%s5 + $0xa0] sm:$0xff]
  %v2464 = vld [vmem:[%s5 + $0xa8] sm:$0xff]
  %v2465 = vld [vmem:[%s5 + $0xb0] sm:$0xff]
  %v2466 = vld [vmem:[%s5 + $0xb8] sm:$0xff]
  %v2467 = vld [vmem:[%s5 + $0xc0] sm:$0xff]
  %v2468 = vld [vmem:[%s5 + $0xc8] sm:$0xff]
  %v2469 = vld [vmem:[%s5 + $0xd0] sm:$0xff]
  %v2470 = vld [vmem:[%s5 + $0xd8] sm:$0xff]
  %v2471 = vld [vmem:[%s5 + $0xe0] sm:$0xff]
  %v2472 = vld [vmem:[%s5 + $0xe8] sm:$0xff]
  %v2473 = vld [vmem:[%s5 + $0xf0] sm:$0xff]
  %v2474 = vld [vmem:[%s5 + $0xf8] sm:$0xff]
  %v2475 = vpack.c.bf16 %v2133, %v2133
  %v2476 = vld [vmem:[%s6] sm:$0xff]
  %v2477 = vld [vmem:[%s6 + $0x8] sm:$0xff]
  %v2478 = vld [vmem:[%s6 + $0x10] sm:$0xff]
  %v2479 = vld [vmem:[%s6 + $0x18] sm:$0xff]
  %v2480 = vld [vmem:[%s6 + $0x20] sm:$0xff]
  %v2481 = vld [vmem:[%s6 + $0x28] sm:$0xff]
  %v2482 = vld [vmem:[%s6 + $0x30] sm:$0xff]
  %v2483 = vld [vmem:[%s6 + $0x38] sm:$0xff]
  %v2484 = vld [vmem:[%s6 + $0x40] sm:$0xff]
  %v2485 = vld [vmem:[%s6 + $0x48] sm:$0xff]
  %v2486 = vld [vmem:[%s6 + $0x50] sm:$0xff]
  %v2487 = vld [vmem:[%s6 + $0x58] sm:$0xff]
  %v2488 = vld [vmem:[%s6 + $0x60] sm:$0xff]
  %v2489 = vld [vmem:[%s6 + $0x68] sm:$0xff]
  %v2490 = vld [vmem:[%s6 + $0x70] sm:$0xff]
  %v2491 = vld [vmem:[%s6 + $0x78] sm:$0xff]
  %v2492 = vld [vmem:[%s6 + $0x80] sm:$0xff]
  %v2493 = vld [vmem:[%s6 + $0x88] sm:$0xff]
  %v2494 = vld [vmem:[%s6 + $0x90] sm:$0xff]
  %v2495 = vld [vmem:[%s6 + $0x98] sm:$0xff]
  %v2496 = vld [vmem:[%s6 + $0xa0] sm:$0xff]
  %v2497 = vld [vmem:[%s6 + $0xa8] sm:$0xff]
  %v2498 = vld [vmem:[%s6 + $0xb0] sm:$0xff]
  %v2499 = vld [vmem:[%s6 + $0xb8] sm:$0xff]
  %v2500 = vld [vmem:[%s6 + $0xc0] sm:$0xff]
  %v2501 = vld [vmem:[%s6 + $0xc8] sm:$0xff]
  %v2502 = vld [vmem:[%s6 + $0xd0] sm:$0xff]
  %v2503 = vld [vmem:[%s6 + $0xd8] sm:$0xff]
  %v2504 = vld [vmem:[%s6 + $0xe0] sm:$0xff]
  %v2505 = vld [vmem:[%s6 + $0xe8] sm:$0xff]
  %v2506 = vld [vmem:[%s6 + $0xf0] sm:$0xff]
  %v2507 = vld [vmem:[%s6 + $0xf8] sm:$0xff]
  %v2540 = vunpack.c.l.b16 %v2476
  %v2541 = vunpack.c.h.b16 %v2476
  %v2542 = vunpack.c.l.b16 %v2477
  %v2543 = vunpack.c.h.b16 %v2477
  %v2544 = vunpack.c.l.b16 %v2478
  %v2545 = vunpack.c.h.b16 %v2478
  %v2546 = vunpack.c.l.b16 %v2479
  %v2547 = vunpack.c.h.b16 %v2479
  %v2548 = vunpack.c.l.b16 %v2480
  %v2549 = vunpack.c.h.b16 %v2480
  %v2550 = vunpack.c.l.b16 %v2481
  %v2551 = vunpack.c.h.b16 %v2481
  %v2552 = vunpack.c.l.b16 %v2482
  %v2553 = vunpack.c.h.b16 %v2482
  %v2554 = vunpack.c.l.b16 %v2483
  %v2555 = vunpack.c.h.b16 %v2483
  %v2556 = vunpack.c.l.b16 %v2484
  %v2557 = vunpack.c.h.b16 %v2484
  %v2558 = vunpack.c.l.b16 %v2485
  %v2559 = vunpack.c.h.b16 %v2485
  %v2560 = vunpack.c.l.b16 %v2486
  %v2561 = vunpack.c.h.b16 %v2486
  %v2562 = vunpack.c.l.b16 %v2487
  %v2563 = vunpack.c.h.b16 %v2487
  %v2564 = vunpack.c.l.b16 %v2488
  %v2565 = vunpack.c.h.b16 %v2488
  %v2566 = vunpack.c.l.b16 %v2489
  %v2567 = vunpack.c.h.b16 %v2489
  %v2568 = vunpack.c.l.b16 %v2490
  %v2569 = vunpack.c.h.b16 %v2490
  %v2570 = vunpack.c.l.b16 %v2491
  %v2571 = vunpack.c.h.b16 %v2491
  %v2572 = vunpack.c.l.b16 %v2492
  %v2573 = vunpack.c.h.b16 %v2492
  %v2574 = vunpack.c.l.b16 %v2493
  %v2575 = vunpack.c.h.b16 %v2493
  %v2576 = vunpack.c.l.b16 %v2494
  %v2577 = vunpack.c.h.b16 %v2494
  %v2578 = vunpack.c.l.b16 %v2495
  %v2579 = vunpack.c.h.b16 %v2495
  %v2580 = vunpack.c.l.b16 %v2496
  %v2581 = vunpack.c.h.b16 %v2496
  %v2582 = vunpack.c.l.b16 %v2497
  %v2583 = vunpack.c.h.b16 %v2497
  %v2584 = vunpack.c.l.b16 %v2498
  %v2585 = vunpack.c.h.b16 %v2498
  %v2586 = vunpack.c.l.b16 %v2499
  %v2587 = vunpack.c.h.b16 %v2499
  %v2588 = vunpack.c.l.b16 %v2500
  %v2589 = vunpack.c.h.b16 %v2500
  %v2590 = vunpack.c.l.b16 %v2501
  %v2591 = vunpack.c.h.b16 %v2501
  %v2592 = vunpack.c.l.b16 %v2502
  %v2593 = vunpack.c.h.b16 %v2502
  %v2594 = vunpack.c.l.b16 %v2503
  %v2595 = vunpack.c.h.b16 %v2503
  %v2596 = vunpack.c.l.b16 %v2504
  %v2597 = vunpack.c.h.b16 %v2504
  %v2598 = vunpack.c.l.b16 %v2505
  %v2599 = vunpack.c.h.b16 %v2505
  %v2600 = vunpack.c.l.b16 %v2506
  %v2601 = vunpack.c.h.b16 %v2506
  %v2602 = vunpack.c.l.b16 %v2507
  %v2603 = vunpack.c.h.b16 %v2507
  %v2604 = vpack.c.b16 %v2544, %v2540
  %v2605 = vpack.c.b16 %v2545, %v2541
  %v2606 = vpack.c.b16 %v2546, %v2542
  %v2607 = vpack.c.b16 %v2547, %v2543
  %v2608 = vpack.c.b16 %v2552, %v2548
  %v2609 = vpack.c.b16 %v2553, %v2549
  %v2610 = vpack.c.b16 %v2554, %v2550
  %v2611 = vpack.c.b16 %v2555, %v2551
  %v2612 = vpack.c.b16 %v2560, %v2556
  %v2613 = vpack.c.b16 %v2561, %v2557
  %v2614 = vpack.c.b16 %v2562, %v2558
  %v2615 = vpack.c.b16 %v2563, %v2559
  %v2616 = vpack.c.b16 %v2568, %v2564
  %v2617 = vpack.c.b16 %v2569, %v2565
  %v2618 = vpack.c.b16 %v2570, %v2566
  %v2619 = vpack.c.b16 %v2571, %v2567
  %v2620 = vpack.c.b16 %v2576, %v2572
  %v2621 = vpack.c.b16 %v2577, %v2573
  %v2622 = vpack.c.b16 %v2578, %v2574
  %v2623 = vpack.c.b16 %v2579, %v2575
  %v2624 = vpack.c.b16 %v2584, %v2580
  %v2625 = vpack.c.b16 %v2585, %v2581
  %v2626 = vpack.c.b16 %v2586, %v2582
  %v2627 = vpack.c.b16 %v2587, %v2583
  %v2628 = vpack.c.b16 %v2592, %v2588
  %v2629 = vpack.c.b16 %v2593, %v2589
  %v2630 = vpack.c.b16 %v2594, %v2590
  %v2631 = vpack.c.b16 %v2595, %v2591
  %v2632 = vpack.c.b16 %v2600, %v2596
  %v2633 = vpack.c.b16 %v2601, %v2597
  %v2634 = vpack.c.b16 %v2602, %v2598
  %v2635 = vpack.c.b16 %v2603, %v2599
  %2668 = vmatprep.subr.bf16.mxu0 %v2605
  %2669 = vmatpush1.bf16.msra.mxu0 %v2604
  %2670 = vmatprep.subr.bf16.mxu0 %v2609
  %2671 = vmatpush1.bf16.msra.mxu0 %v2608
  %2672 = vmatprep.subr.bf16.mxu0 %v2613
  %2673 = vmatpush1.bf16.msra.mxu0 %v2612
  %2674 = vmatprep.subr.bf16.mxu0 %v2617
  %2675 = vmatpush1.bf16.msra.mxu0 %v2616
  %2676 = vmatprep.subr.bf16.mxu0 %v2621
  %2677 = vmatpush1.bf16.msra.mxu0 %v2620
  %2678 = vmatprep.subr.bf16.mxu0 %v2625
  %2679 = vmatpush1.bf16.msra.mxu0 %v2624
  %2680 = vmatprep.subr.bf16.mxu0 %v2629
  %2681 = vmatpush1.bf16.msra.mxu0 %v2628
  %2682 = vmatprep.subr.bf16.mxu0 %v2633
  %2683 = vmatpush1.bf16.msra.mxu0 %v2632
  %2684 = vmatprep.subr.bf16.mxu0 0
  %2685 = vmatpush1.bf16.msra.mxu0 0
  %2686 = vmatprep.subr.bf16.mxu0 0
  %2687 = vmatpush1.bf16.msra.mxu0 0
  %2688 = vmatprep.subr.bf16.mxu0 0
  %2689 = vmatpush1.bf16.msra.mxu0 0
  %2690 = vmatprep.subr.bf16.mxu0 0
  %2691 = vmatpush1.bf16.msra.mxu0 0
  %2692 = vmatprep.subr.bf16.mxu0 0
  %2693 = vmatpush1.bf16.msra.mxu0 0
  %2694 = vmatprep.subr.bf16.mxu0 0
  %2695 = vmatpush1.bf16.msra.mxu0 0
  %2696 = vmatprep.subr.bf16.mxu0 0
  %2697 = vmatpush1.bf16.msra.mxu0 0
  %2698 = vmatprep.subr.bf16.mxu0 0
  %2699 = vmatpush1.bf16.msra.mxu0 0
  %2700 = vmatprep.mubr.bf16.mxu0 0
  %2701 = vmatmul.mubr.bf16.gmra.mrb[0].mxu0 %v2475
  %v2702 = vpop.f32.mrb[0].mxu0
  %v2703 = vadd.f32 0.0, %v2702
  %v2704 = vpop.f32.mrb[0].mxu0
  %v2705 = vadd.f32 0.0, %v2704
  %v2706 = vpop.f32.mrb[0].mxu0
  %v2707 = vpop.f32.mrb[0].mxu0
  %2708 = vdwg.mxu0
  %2709 = vmatprep.subr.bf16.mxu0 %v2607
  %2710 = vmatpush1.bf16.msra.mxu0 %v2606
  %2711 = vmatprep.subr.bf16.mxu0 %v2611
  %2712 = vmatpush1.bf16.msra.mxu0 %v2610
  %2713 = vmatprep.subr.bf16.mxu0 %v2615
  %2714 = vmatpush1.bf16.msra.mxu0 %v2614
  %2715 = vmatprep.subr.bf16.mxu0 %v2619
  %2716 = vmatpush1.bf16.msra.mxu0 %v2618
  %2717 = vmatprep.subr.bf16.mxu0 %v2623
  %2718 = vmatpush1.bf16.msra.mxu0 %v2622
  %2719 = vmatprep.subr.bf16.mxu0 %v2627
  %2720 = vmatpush1.bf16.msra.mxu0 %v2626
  %2721 = vmatprep.subr.bf16.mxu0 %v2631
  %2722 = vmatpush1.bf16.msra.mxu0 %v2630
  %2723 = vmatprep.subr.bf16.mxu0 %v2635
  %2724 = vmatpush1.bf16.msra.mxu0 %v2634
  %2725 = vmatprep.subr.bf16.mxu0 0
  %2726 = vmatpush1.bf16.msra.mxu0 0
  %2727 = vmatprep.subr.bf16.mxu0 0
  %2728 = vmatpush1.bf16.msra.mxu0 0
  %2729 = vmatprep.subr.bf16.mxu0 0
  %2730 = vmatpush1.bf16.msra.mxu0 0
  %2731 = vmatprep.subr.bf16.mxu0 0
  %2732 = vmatpush1.bf16.msra.mxu0 0
  %2733 = vmatprep.subr.bf16.mxu0 0
  %2734 = vmatpush1.bf16.msra.mxu0 0
  %2735 = vmatprep.subr.bf16.mxu0 0
  %2736 = vmatpush1.bf16.msra.mxu0 0
  %2737 = vmatprep.subr.bf16.mxu0 0
  %2738 = vmatpush1.bf16.msra.mxu0 0
  %2739 = vmatprep.subr.bf16.mxu0 0
  %2740 = vmatpush1.bf16.msra.mxu0 0
  %2741 = vmatprep.mubr.bf16.mxu0 0
  %2742 = vmatmul.mubr.bf16.gmra.mrb[0].mxu0 %v2475
  %v2743 = vpop.f32.mrb[0].mxu0
  %v2744 = vadd.f32 0.0, %v2743
  %v2745 = vpop.f32.mrb[0].mxu0
  %v2746 = vadd.f32 0.0, %v2745
  %v2747 = vpop.f32.mrb[0].mxu0
  %v2748 = vpop.f32.mrb[0].mxu0
  %2749 = vdwg.mxu0
  %v2782 = vunpack.c.l.b16 %v2443
  %v2783 = vunpack.c.h.b16 %v2443
  %v2784 = vunpack.c.l.b16 %v2444
  %v2785 = vunpack.c.h.b16 %v2444
  %v2786 = vunpack.c.l.b16 %v2445
  %v2787 = vunpack.c.h.b16 %v2445
  %v2788 = vunpack.c.l.b16 %v2446
  %v2789 = vunpack.c.h.b16 %v2446
  %v2790 = vunpack.c.l.b16 %v2447
  %v2791 = vunpack.c.h.b16 %v2447
  %v2792 = vunpack.c.l.b16 %v2448
  %v2793 = vunpack.c.h.b16 %v2448
  %v2794 = vunpack.c.l.b16 %v2449
  %v2795 = vunpack.c.h.b16 %v2449
  %v2796 = vunpack.c.l.b16 %v2450
  %v2797 = vunpack.c.h.b16 %v2450
  %v2798 = vunpack.c.l.b16 %v2451
  %v2799 = vunpack.c.h.b16 %v2451
  %v2800 = vunpack.c.l.b16 %v2452
  %v2801 = vunpack.c.h.b16 %v2452
  %v2802 = vunpack.c.l.b16 %v2453
  %v2803 = vunpack.c.h.b16 %v2453
  %v2804 = vunpack.c.l.b16 %v2454
  %v2805 = vunpack.c.h.b16 %v2454
  %v2806 = vunpack.c.l.b16 %v2455
  %v2807 = vunpack.c.h.b16 %v2455
  %v2808 = vunpack.c.l.b16 %v2456
  %v2809 = vunpack.c.h.b16 %v2456
  %v2810 = vunpack.c.l.b16 %v2457
  %v2811 = vunpack.c.h.b16 %v2457
  %v2812 = vunpack.c.l.b16 %v2458
  %v2813 = vunpack.c.h.b16 %v2458
  %v2814 = vunpack.c.l.b16 %v2459
  %v2815 = vunpack.c.h.b16 %v2459
  %v2816 = vunpack.c.l.b16 %v2460
  %v2817 = vunpack.c.h.b16 %v2460
  %v2818 = vunpack.c.l.b16 %v2461
  %v2819 = vunpack.c.h.b16 %v2461
  %v2820 = vunpack.c.l.b16 %v2462
  %v2821 = vunpack.c.h.b16 %v2462
  %v2822 = vunpack.c.l.b16 %v2463
  %v2823 = vunpack.c.h.b16 %v2463
  %v2824 = vunpack.c.l.b16 %v2464
  %v2825 = vunpack.c.h.b16 %v2464
  %v2826 = vunpack.c.l.b16 %v2465
  %v2827 = vunpack.c.h.b16 %v2465
  %v2828 = vunpack.c.l.b16 %v2466
  %v2829 = vunpack.c.h.b16 %v2466
  %v2830 = vunpack.c.l.b16 %v2467
  %v2831 = vunpack.c.h.b16 %v2467
  %v2832 = vunpack.c.l.b16 %v2468
  %v2833 = vunpack.c.h.b16 %v2468
  %v2834 = vunpack.c.l.b16 %v2469
  %v2835 = vunpack.c.h.b16 %v2469
  %v2836 = vunpack.c.l.b16 %v2470
  %v2837 = vunpack.c.h.b16 %v2470
  %v2838 = vunpack.c.l.b16 %v2471
  %v2839 = vunpack.c.h.b16 %v2471
  %v2840 = vunpack.c.l.b16 %v2472
  %v2841 = vunpack.c.h.b16 %v2472
  %v2842 = vunpack.c.l.b16 %v2473
  %v2843 = vunpack.c.h.b16 %v2473
  %v2844 = vunpack.c.l.b16 %v2474
  %v2845 = vunpack.c.h.b16 %v2474
  %v2846 = vpack.c.b16 %v2786, %v2782
  %v2847 = vpack.c.b16 %v2787, %v2783
  %v2848 = vpack.c.b16 %v2788, %v2784
  %v2849 = vpack.c.b16 %v2789, %v2785
  %v2850 = vpack.c.b16 %v2794, %v2790
  %v2851 = vpack.c.b16 %v2795, %v2791
  %v2852 = vpack.c.b16 %v2796, %v2792
  %v2853 = vpack.c.b16 %v2797, %v2793
  %v2854 = vpack.c.b16 %v2802, %v2798
  %v2855 = vpack.c.b16 %v2803, %v2799
  %v2856 = vpack.c.b16 %v2804, %v2800
  %v2857 = vpack.c.b16 %v2805, %v2801
  %v2858 = vpack.c.b16 %v2810, %v2806
  %v2859 = vpack.c.b16 %v2811, %v2807
  %v2860 = vpack.c.b16 %v2812, %v2808
  %v2861 = vpack.c.b16 %v2813, %v2809
  %v2862 = vpack.c.b16 %v2818, %v2814
  %v2863 = vpack.c.b16 %v2819, %v2815
  %v2864 = vpack.c.b16 %v2820, %v2816
  %v2865 = vpack.c.b16 %v2821, %v2817
  %v2866 = vpack.c.b16 %v2826, %v2822
  %v2867 = vpack.c.b16 %v2827, %v2823
  %v2868 = vpack.c.b16 %v2828, %v2824
  %v2869 = vpack.c.b16 %v2829, %v2825
  %v2870 = vpack.c.b16 %v2834, %v2830
  %v2871 = vpack.c.b16 %v2835, %v2831
  %v2872 = vpack.c.b16 %v2836, %v2832
  %v2873 = vpack.c.b16 %v2837, %v2833
  %v2874 = vpack.c.b16 %v2842, %v2838
  %v2875 = vpack.c.b16 %v2843, %v2839
  %v2876 = vpack.c.b16 %v2844, %v2840
  %v2877 = vpack.c.b16 %v2845, %v2841
  %2910 = vmatprep.subr.bf16.mxu0 %v2847
  %2911 = vmatpush1.bf16.msra.mxu0 %v2846
  %2912 = vmatprep.subr.bf16.mxu0 %v2851
  %2913 = vmatpush1.bf16.msra.mxu0 %v2850
  %2914 = vmatprep.subr.bf16.mxu0 %v2855
  %2915 = vmatpush1.bf16.msra.mxu0 %v2854
  %2916 = vmatprep.subr.bf16.mxu0 %v2859
  %2917 = vmatpush1.bf16.msra.mxu0 %v2858
  %2918 = vmatprep.subr.bf16.mxu0 %v2863
  %2919 = vmatpush1.bf16.msra.mxu0 %v2862
  %2920 = vmatprep.subr.bf16.mxu0 %v2867
  %2921 = vmatpush1.bf16.msra.mxu0 %v2866
  %2922 = vmatprep.subr.bf16.mxu0 %v2871
  %2923 = vmatpush1.bf16.msra.mxu0 %v2870
  %2924 = vmatprep.subr.bf16.mxu0 %v2875
  %2925 = vmatpush1.bf16.msra.mxu0 %v2874
  %2926 = vmatprep.subr.bf16.mxu0 0
  %2927 = vmatpush1.bf16.msra.mxu0 0
  %2928 = vmatprep.subr.bf16.mxu0 0
  %2929 = vmatpush1.bf16.msra.mxu0 0
  %2930 = vmatprep.subr.bf16.mxu0 0
  %2931 = vmatpush1.bf16.msra.mxu0 0
  %2932 = vmatprep.subr.bf16.mxu0 0
  %2933 = vmatpush1.bf16.msra.mxu0 0
  %2934 = vmatprep.subr.bf16.mxu0 0
  %2935 = vmatpush1.bf16.msra.mxu0 0
  %2936 = vmatprep.subr.bf16.mxu0 0
  %2937 = vmatpush1.bf16.msra.mxu0 0
  %2938 = vmatprep.subr.bf16.mxu0 0
  %2939 = vmatpush1.bf16.msra.mxu0 0
  %2940 = vmatprep.subr.bf16.mxu0 0
  %2941 = vmatpush1.bf16.msra.mxu0 0
  %2942 = vmatprep.mubr.bf16.mxu0 0
  %2943 = vmatmul.mubr.bf16.gmra.mrb[0].mxu0 %v2442
  %v2944 = vpop.f32.mrb[0].mxu0
  %v2945 = vadd.f32 %v2703, %v2944
  %v2946 = vpop.f32.mrb[0].mxu0
  %v2947 = vadd.f32 %v2705, %v2946
  %v2948 = vpop.f32.mrb[0].mxu0
  %v2949 = vpop.f32.mrb[0].mxu0
  %2950 = vdwg.mxu0
  %2951 = vmatprep.subr.bf16.mxu0 %v2849
  %2952 = vmatpush1.bf16.msra.mxu0 %v2848
  %2953 = vmatprep.subr.bf16.mxu0 %v2853
  %2954 = vmatpush1.bf16.msra.mxu0 %v2852
  %2955 = vmatprep.subr.bf16.mxu0 %v2857
  %2956 = vmatpush1.bf16.msra.mxu0 %v2856
  %2957 = vmatprep.subr.bf16.mxu0 %v2861
  %2958 = vmatpush1.bf16.msra.mxu0 %v2860
  %2959 = vmatprep.subr.bf16.mxu0 %v2865
  %2960 = vmatpush1.bf16.msra.mxu0 %v2864
  %2961 = vmatprep.subr.bf16.mxu0 %v2869
  %2962 = vmatpush1.bf16.msra.mxu0 %v2868
  %2963 = vmatprep.subr.bf16.mxu0 %v2873
  %2964 = vmatpush1.bf16.msra.mxu0 %v2872
  %2965 = vmatprep.subr.bf16.mxu0 %v2877
  %2966 = vmatpush1.bf16.msra.mxu0 %v2876
  %2967 = vmatprep.subr.bf16.mxu0 0
  %2968 = vmatpush1.bf16.msra.mxu0 0
  %2969 = vmatprep.subr.bf16.mxu0 0
  %2970 = vmatpush1.bf16.msra.mxu0 0
  %2971 = vmatprep.subr.bf16.mxu0 0
  %2972 = vmatpush1.bf16.msra.mxu0 0
  %2973 = vmatprep.subr.bf16.mxu0 0
  %2974 = vmatpush1.bf16.msra.mxu0 0
  %2975 = vmatprep.subr.bf16.mxu0 0
  %2976 = vmatpush1.bf16.msra.mxu0 0
  %2977 = vmatprep.subr.bf16.mxu0 0
  %2978 = vmatpush1.bf16.msra.mxu0 0
  %2979 = vmatprep.subr.bf16.mxu0 0
  %2980 = vmatpush1.bf16.msra.mxu0 0
  %2981 = vmatprep.subr.bf16.mxu0 0
  %2982 = vmatpush1.bf16.msra.mxu0 0
  %2983 = vmatprep.mubr.bf16.mxu0 0
  %2984 = vmatmul.mubr.bf16.gmra.mrb[0].mxu0 %v2442
  %v2985 = vpop.f32.mrb[0].mxu0
  %v2986 = vadd.f32 %v2744, %v2985
  %v2987 = vpop.f32.mrb[0].mxu0
  %v2988 = vadd.f32 %v2746, %v2987
  %v2989 = vpop.f32.mrb[0].mxu0
  %v2990 = vpop.f32.mrb[0].mxu0
  %2991 = vdwg.mxu0
  %v2992 = vld [vmem:[%s7] sm:$0xf]
  %v2994 = vlaneseq
  %v2995 = vshrl.u32 %v2994, 7
  %v2996 = vsub.s32 0, %v2995
  %v2997 = vrot.slane %v2992, %v2996
  %v2998 = vlaneseq
  %v2999 = vshrl.u32 %v2998, 7
  %v3000 = vsub.s32 1, %v2999
  %v3001 = vrot.slane %v2992, %v3000
  %v3002 = vlaneseq
  %v3003 = vshrl.u32 %v3002, 7
  %v3004 = vsub.s32 2, %v3003
  %v3005 = vrot.slane %v2992, %v3004
  %v3006 = vlaneseq
  %v3007 = vshrl.u32 %v3006, 7
  %v3008 = vsub.s32 3, %v3007
  %v3009 = vrot.slane %v2992, %v3008
  %v3014 = vadd.f32 %v2945, %v2997
  %v3015 = vadd.f32 %v2947, %v3001
  %v3016 = vadd.f32 %v2986, %v3005
  %v3017 = vadd.f32 %v2988, %v3009
  %v3018 = vxor.u32 %v3014, 2147483648
  %v3019 = vxor.u32 %v3015, 2147483648
  %v3020 = vxor.u32 %v3016, 2147483648
  %v3021 = vmul.f32 %v3018, 1.442695
  %v3022 = vpow.pop %v3021
  %v3023 = vmul.f32 %v3019, 1.442695
  %v3024 = vpow.pop %v3023
  %v3025 = vmul.f32 %v3020, 1.442695
  %v3026 = vpow.pop %v3025
  %v3027 = vadd.f32 %v3022, 1.0
  %v3028 = vadd.f32 %v3024, 1.0
  %v3029 = vadd.f32 %v3026, 1.0
  %v3030 = vrcp.pop %v3027
  %v3031 = vmul.f32 1.0, %v3030
  %v3032 = vrcp.pop %v3028
  %v3033 = vmul.f32 1.0, %v3032
  %v3034 = vrcp.pop %v3029
  %v3035 = vmul.f32 1.0, %v3034
  %v3036 = vtanh.pop %v3017
  %v3037 = vmul.f32 %v3033, %v2134
  %v3038 = vmul.f32 %v3031, %v3036
  %v3039 = vadd.f32 %v3037, %v3038
  %v3040 = vtanh.pop %v3039
  %v3041 = vmul.f32 %v3035, %v3040
  %3042 = vst [vmem:[#allocation2] sm:$0xff] %v2441
  %3043 = vst [vmem:[#allocation2 + $0x8] sm:$0xff] %v2439
  %3044 = vst [vmem:[#allocation2 + $0x10] sm:$0xff] %v3041
  %3045 = vst [vmem:[#allocation2 + $0x18] sm:$0xff] %v3039
  %3046 = vst [vmem:[#allocation4 + $0x10] sm:$0xff] %v3041
  %v3047 = vld [vmem:[#allocation2] sm:$0xff]
  %v3048 = vld [vmem:[#allocation2 + $0x8] sm:$0xff]
  %v3049 = vld [vmem:[#allocation2 + $0x10] sm:$0xff]
  %v3050 = vld [vmem:[#allocation2 + $0x18] sm:$0xff]
  %v3051 = vld [vmem:[#allocation3 + $0x60] sm:$0xff]
  %v3052 = vld [vmem:[#allocation3 + $0x68] sm:$0xff]
  %v3053 = vld [vmem:[#allocation3 + $0x70] sm:$0xff]
  %v3054 = vld [vmem:[#allocation3 + $0x78] sm:$0xff]
  %v3055 = vpack.c.bf16 %v3047, %v3047
  %v3056 = vld [vmem:[%s4] sm:$0xff]
  %v3057 = vld [vmem:[%s4 + $0x8] sm:$0xff]
  %v3058 = vld [vmem:[%s4 + $0x10] sm:$0xff]
  %v3059 = vld [vmem:[%s4 + $0x18] sm:$0xff]
  %v3060 = vld [vmem:[%s4 + $0x20] sm:$0xff]
  %v3061 = vld [vmem:[%s4 + $0x28] sm:$0xff]
  %v3062 = vld [vmem:[%s4 + $0x30] sm:$0xff]
  %v3063 = vld [vmem:[%s4 + $0x38] sm:$0xff]
  %v3064 = vld [vmem:[%s4 + $0x40] sm:$0xff]
  %v3065 = vld [vmem:[%s4 + $0x48] sm:$0xff]
  %v3066 = vld [vmem:[%s4 + $0x50] sm:$0xff]
  %v3067 = vld [vmem:[%s4 + $0x58] sm:$0xff]
  %v3068 = vld [vmem:[%s4 + $0x60] sm:$0xff]
  %v3069 = vld [vmem:[%s4 + $0x68] sm:$0xff]
  %v3070 = vld [vmem:[%s4 + $0x70] sm:$0xff]
  %v3071 = vld [vmem:[%s4 + $0x78] sm:$0xff]
  %v3072 = vld [vmem:[%s4 + $0x80] sm:$0xff]
  %v3073 = vld [vmem:[%s4 + $0x88] sm:$0xff]
  %v3074 = vld [vmem:[%s4 + $0x90] sm:$0xff]
  %v3075 = vld [vmem:[%s4 + $0x98] sm:$0xff]
  %v3076 = vld [vmem:[%s4 + $0xa0] sm:$0xff]
  %v3077 = vld [vmem:[%s4 + $0xa8] sm:$0xff]
  %v3078 = vld [vmem:[%s4 + $0xb0] sm:$0xff]
  %v3079 = vld [vmem:[%s4 + $0xb8] sm:$0xff]
  %v3080 = vld [vmem:[%s4 + $0xc0] sm:$0xff]
  %v3081 = vld [vmem:[%s4 + $0xc8] sm:$0xff]
  %v3082 = vld [vmem:[%s4 + $0xd0] sm:$0xff]
  %v3083 = vld [vmem:[%s4 + $0xd8] sm:$0xff]
  %v3084 = vld [vmem:[%s4 + $0xe0] sm:$0xff]
  %v3085 = vld [vmem:[%s4 + $0xe8] sm:$0xff]
  %v3086 = vld [vmem:[%s4 + $0xf0] sm:$0xff]
  %v3087 = vld [vmem:[%s4 + $0xf8] sm:$0xff]
  %v3120 = vunpack.c.l.b16 %v3056
  %v3121 = vunpack.c.h.b16 %v3056
  %v3122 = vunpack.c.l.b16 %v3057
  %v3123 = vunpack.c.h.b16 %v3057
  %v3124 = vunpack.c.l.b16 %v3058
  %v3125 = vunpack.c.h.b16 %v3058
  %v3126 = vunpack.c.l.b16 %v3059
  %v3127 = vunpack.c.h.b16 %v3059
  %v3128 = vunpack.c.l.b16 %v3060
  %v3129 = vunpack.c.h.b16 %v3060
  %v3130 = vunpack.c.l.b16 %v3061
  %v3131 = vunpack.c.h.b16 %v3061
  %v3132 = vunpack.c.l.b16 %v3062
  %v3133 = vunpack.c.h.b16 %v3062
  %v3134 = vunpack.c.l.b16 %v3063
  %v3135 = vunpack.c.h.b16 %v3063
  %v3136 = vunpack.c.l.b16 %v3064
  %v3137 = vunpack.c.h.b16 %v3064
  %v3138 = vunpack.c.l.b16 %v3065
  %v3139 = vunpack.c.h.b16 %v3065
  %v3140 = vunpack.c.l.b16 %v3066
  %v3141 = vunpack.c.h.b16 %v3066
  %v3142 = vunpack.c.l.b16 %v3067
  %v3143 = vunpack.c.h.b16 %v3067
  %v3144 = vunpack.c.l.b16 %v3068
  %v3145 = vunpack.c.h.b16 %v3068
  %v3146 = vunpack.c.l.b16 %v3069
  %v3147 = vunpack.c.h.b16 %v3069
  %v3148 = vunpack.c.l.b16 %v3070
  %v3149 = vunpack.c.h.b16 %v3070
  %v3150 = vunpack.c.l.b16 %v3071
  %v3151 = vunpack.c.h.b16 %v3071
  %v3152 = vunpack.c.l.b16 %v3072
  %v3153 = vunpack.c.h.b16 %v3072
  %v3154 = vunpack.c.l.b16 %v3073
  %v3155 = vunpack.c.h.b16 %v3073
  %v3156 = vunpack.c.l.b16 %v3074
  %v3157 = vunpack.c.h.b16 %v3074
  %v3158 = vunpack.c.l.b16 %v3075
  %v3159 = vunpack.c.h.b16 %v3075
  %v3160 = vunpack.c.l.b16 %v3076
  %v3161 = vunpack.c.h.b16 %v3076
  %v3162 = vunpack.c.l.b16 %v3077
  %v3163 = vunpack.c.h.b16 %v3077
  %v3164 = vunpack.c.l.b16 %v3078
  %v3165 = vunpack.c.h.b16 %v3078
  %v3166 = vunpack.c.l.b16 %v3079
  %v3167 = vunpack.c.h.b16 %v3079
  %v3168 = vunpack.c.l.b16 %v3080
  %v3169 = vunpack.c.h.b16 %v3080
  %v3170 = vunpack.c.l.b16 %v3081
  %v3171 = vunpack.c.h.b16 %v3081
  %v3172 = vunpack.c.l.b16 %v3082
  %v3173 = vunpack.c.h.b16 %v3082
  %v3174 = vunpack.c.l.b16 %v3083
  %v3175 = vunpack.c.h.b16 %v3083
  %v3176 = vunpack.c.l.b16 %v3084
  %v3177 = vunpack.c.h.b16 %v3084
  %v3178 = vunpack.c.l.b16 %v3085
  %v3179 = vunpack.c.h.b16 %v3085
  %v3180 = vunpack.c.l.b16 %v3086
  %v3181 = vunpack.c.h.b16 %v3086
  %v3182 = vunpack.c.l.b16 %v3087
  %v3183 = vunpack.c.h.b16 %v3087
  %v3184 = vpack.c.b16 %v3124, %v3120
  %v3185 = vpack.c.b16 %v3125, %v3121
  %v3186 = vpack.c.b16 %v3126, %v3122
  %v3187 = vpack.c.b16 %v3127, %v3123
  %v3188 = vpack.c.b16 %v3132, %v3128
  %v3189 = vpack.c.b16 %v3133, %v3129
  %v3190 = vpack.c.b16 %v3134, %v3130
  %v3191 = vpack.c.b16 %v3135, %v3131
  %v3192 = vpack.c.b16 %v3140, %v3136
  %v3193 = vpack.c.b16 %v3141, %v3137
  %v3194 = vpack.c.b16 %v3142, %v3138
  %v3195 = vpack.c.b16 %v3143, %v3139
  %v3196 = vpack.c.b16 %v3148, %v3144
  %v3197 = vpack.c.b16 %v3149, %v3145
  %v3198 = vpack.c.b16 %v3150, %v3146
  %v3199 = vpack.c.b16 %v3151, %v3147
  %v3200 = vpack.c.b16 %v3156, %v3152
  %v3201 = vpack.c.b16 %v3157, %v3153
  %v3202 = vpack.c.b16 %v3158, %v3154
  %v3203 = vpack.c.b16 %v3159, %v3155
  %v3204 = vpack.c.b16 %v3164, %v3160
  %v3205 = vpack.c.b16 %v3165, %v3161
  %v3206 = vpack.c.b16 %v3166, %v3162
  %v3207 = vpack.c.b16 %v3167, %v3163
  %v3208 = vpack.c.b16 %v3172, %v3168
  %v3209 = vpack.c.b16 %v3173, %v3169
  %v3210 = vpack.c.b16 %v3174, %v3170
  %v3211 = vpack.c.b16 %v3175, %v3171
  %v3212 = vpack.c.b16 %v3180, %v3176
  %v3213 = vpack.c.b16 %v3181, %v3177
  %v3214 = vpack.c.b16 %v3182, %v3178
  %v3215 = vpack.c.b16 %v3183, %v3179
  %3248 = vmatprep.subr.bf16.mxu0 %v3185
  %3249 = vmatpush1.bf16.msra.mxu0 %v3184
  %3250 = vmatprep.subr.bf16.mxu0 %v3189
  %3251 = vmatpush1.bf16.msra.mxu0 %v3188
  %3252 = vmatprep.subr.bf16.mxu0 %v3193
  %3253 = vmatpush1.bf16.msra.mxu0 %v3192
  %3254 = vmatprep.subr.bf16.mxu0 %v3197
  %3255 = vmatpush1.bf16.msra.mxu0 %v3196
  %3256 = vmatprep.subr.bf16.mxu0 %v3201
  %3257 = vmatpush1.bf16.msra.mxu0 %v3200
  %3258 = vmatprep.subr.bf16.mxu0 %v3205
  %3259 = vmatpush1.bf16.msra.mxu0 %v3204
  %3260 = vmatprep.subr.bf16.mxu0 %v3209
  %3261 = vmatpush1.bf16.msra.mxu0 %v3208
  %3262 = vmatprep.subr.bf16.mxu0 %v3213
  %3263 = vmatpush1.bf16.msra.mxu0 %v3212
  %3264 = vmatprep.subr.bf16.mxu0 0
  %3265 = vmatpush1.bf16.msra.mxu0 0
  %3266 = vmatprep.subr.bf16.mxu0 0
  %3267 = vmatpush1.bf16.msra.mxu0 0
  %3268 = vmatprep.subr.bf16.mxu0 0
  %3269 = vmatpush1.bf16.msra.mxu0 0
  %3270 = vmatprep.subr.bf16.mxu0 0
  %3271 = vmatpush1.bf16.msra.mxu0 0
  %3272 = vmatprep.subr.bf16.mxu0 0
  %3273 = vmatpush1.bf16.msra.mxu0 0
  %3274 = vmatprep.subr.bf16.mxu0 0
  %3275 = vmatpush1.bf16.msra.mxu0 0
  %3276 = vmatprep.subr.bf16.mxu0 0
  %3277 = vmatpush1.bf16.msra.mxu0 0
  %3278 = vmatprep.subr.bf16.mxu0 0
  %3279 = vmatpush1.bf16.msra.mxu0 0
  %3280 = vmatprep.mubr.bf16.mxu0 0
  %3281 = vmatmul.mubr.bf16.gmra.mrb[0].mxu0 %v3055
  %v3282 = vpop.f32.mrb[0].mxu0
  %v3283 = vadd.f32 0.0, %v3282
  %v3284 = vpop.f32.mrb[0].mxu0
  %v3285 = vadd.f32 0.0, %v3284
  %v3286 = vpop.f32.mrb[0].mxu0
  %v3287 = vpop.f32.mrb[0].mxu0
  %3288 = vdwg.mxu0
  %3289 = vmatprep.subr.bf16.mxu0 %v3187
  %3290 = vmatpush1.bf16.msra.mxu0 %v3186
  %3291 = vmatprep.subr.bf16.mxu0 %v3191
  %3292 = vmatpush1.bf16.msra.mxu0 %v3190
  %3293 = vmatprep.subr.bf16.mxu0 %v3195
  %3294 = vmatpush1.bf16.msra.mxu0 %v3194
  %3295 = vmatprep.subr.bf16.mxu0 %v3199
  %3296 = vmatpush1.bf16.msra.mxu0 %v3198
  %3297 = vmatprep.subr.bf16.mxu0 %v3203
  %3298 = vmatpush1.bf16.msra.mxu0 %v3202
  %3299 = vmatprep.subr.bf16.mxu0 %v3207
  %3300 = vmatpush1.bf16.msra.mxu0 %v3206
  %3301 = vmatprep.subr.bf16.mxu0 %v3211
  %3302 = vmatpush1.bf16.msra.mxu0 %v3210
  %3303 = vmatprep.subr.bf16.mxu0 %v3215
  %3304 = vmatpush1.bf16.msra.mxu0 %v3214
  %3305 = vmatprep.subr.bf16.mxu0 0
  %3306 = vmatpush1.bf16.msra.mxu0 0
  %3307 = vmatprep.subr.bf16.mxu0 0
  %3308 = vmatpush1.bf16.msra.mxu0 0
  %3309 = vmatprep.subr.bf16.mxu0 0
  %3310 = vmatpush1.bf16.msra.mxu0 0
  %3311 = vmatprep.subr.bf16.mxu0 0
  %3312 = vmatpush1.bf16.msra.mxu0 0
  %3313 = vmatprep.subr.bf16.mxu0 0
  %3314 = vmatpush1.bf16.msra.mxu0 0
  %3315 = vmatprep.subr.bf16.mxu0 0
  %3316 = vmatpush1.bf16.msra.mxu0 0
  %3317 = vmatprep.subr.bf16.mxu0 0
  %3318 = vmatpush1.bf16.msra.mxu0 0
  %3319 = vmatprep.subr.bf16.mxu0 0
  %3320 = vmatpush1.bf16.msra.mxu0 0
  %3321 = vmatprep.mubr.bf16.mxu0 0
  %3322 = vmatmul.mubr.bf16.gmra.mrb[0].mxu0 %v3055
  %v3323 = vpop.f32.mrb[0].mxu0
  %v3324 = vadd.f32 0.0, %v3323
  %v3325 = vpop.f32.mrb[0].mxu0
  %v3326 = vadd.f32 0.0, %v3325
  %v3327 = vpop.f32.mrb[0].mxu0
  %v3328 = vpop.f32.mrb[0].mxu0
  %3329 = vdwg.mxu0
  %v3330 = vadd.f32 %v3051, %v3283
  %v3331 = vadd.f32 %v3052, %v3285
  %v3332 = vadd.f32 %v3053, %v3324
  %v3333 = vadd.f32 %v3054, %v3326
  %v3334 = vxor.u32 %v3330, 2147483648
  %v3335 = vxor.u32 %v3331, 2147483648
  %v3336 = vxor.u32 %v3332, 2147483648
  %v3337 = vmul.f32 %v3334, 1.442695
  %v3338 = vpow.pop %v3337
  %v3339 = vmul.f32 %v3335, 1.442695
  %v3340 = vpow.pop %v3339
  %v3341 = vmul.f32 %v3336, 1.442695
  %v3342 = vpow.pop %v3341
  %v3343 = vadd.f32 %v3338, 1.0
  %v3344 = vadd.f32 %v3340, 1.0
  %v3345 = vadd.f32 %v3342, 1.0
  %v3346 = vrcp.pop %v3343
  %v3347 = vmul.f32 1.0, %v3346
  %v3348 = vrcp.pop %v3344
  %v3349 = vmul.f32 1.0, %v3348
  %v3350 = vrcp.pop %v3345
  %v3351 = vmul.f32 1.0, %v3350
  %v3352 = vtanh.pop %v3333
  %v3353 = vmul.f32 %v3349, %v3048
  %v3354 = vmul.f32 %v3347, %v3352
  %v3355 = vadd.f32 %v3353, %v3354
  %v3356 = vtanh.pop %v3355
  %v3357 = vmul.f32 %v3351, %v3356
  %v3358 = vpack.c.bf16 %v3357, %v3357
  %v3359 = vld [vmem:[%s5] sm:$0xff]
  %v3360 = vld [vmem:[%s5 + $0x8] sm:$0xff]
  %v3361 = vld [vmem:[%s5 + $0x10] sm:$0xff]
  %v3362 = vld [vmem:[%s5 + $0x18] sm:$0xff]
  %v3363 = vld [vmem:[%s5 + $0x20] sm:$0xff]
  %v3364 = vld [vmem:[%s5 + $0x28] sm:$0xff]
  %v3365 = vld [vmem:[%s5 + $0x30] sm:$0xff]
  %v3366 = vld [vmem:[%s5 + $0x38] sm:$0xff]
  %v3367 = vld [vmem:[%s5 + $0x40] sm:$0xff]
  %v3368 = vld [vmem:[%s5 + $0x48] sm:$0xff]
  %v3369 = vld [vmem:[%s5 + $0x50] sm:$0xff]
  %v3370 = vld [vmem:[%s5 + $0x58] sm:$0xff]
  %v3371 = vld [vmem:[%s5 + $0x60] sm:$0xff]
  %v3372 = vld [vmem:[%s5 + $0x68] sm:$0xff]
  %v3373 = vld [vmem:[%s5 + $0x70] sm:$0xff]
  %v3374 = vld [vmem:[%s5 + $0x78] sm:$0xff]
  %v3375 = vld [vmem:[%s5 + $0x80] sm:$0xff]
  %v3376 = vld [vmem:[%s5 + $0x88] sm:$0xff]
  %v3377 = vld [vmem:[%s5 + $0x90] sm:$0xff]
  %v3378 = vld [vmem:[%s5 + $0x98] sm:$0xff]
  %v3379 = vld [vmem:[%s5 + $0xa0] sm:$0xff]
  %v3380 = vld [vmem:[%s5 + $0xa8] sm:$0xff]
  %v3381 = vld [vmem:[%s5 + $0xb0] sm:$0xff]
  %v3382 = vld [vmem:[%s5 + $0xb8] sm:$0xff]
  %v3383 = vld [vmem:[%s5 + $0xc0] sm:$0xff]
  %v3384 = vld [vmem:[%s5 + $0xc8] sm:$0xff]
  %v3385 = vld [vmem:[%s5 + $0xd0] sm:$0xff]
  %v3386 = vld [vmem:[%s5 + $0xd8] sm:$0xff]
  %v3387 = vld [vmem:[%s5 + $0xe0] sm:$0xff]
  %v3388 = vld [vmem:[%s5 + $0xe8] sm:$0xff]
  %v3389 = vld [vmem:[%s5 + $0xf0] sm:$0xff]
  %v3390 = vld [vmem:[%s5 + $0xf8] sm:$0xff]
  %v3391 = vpack.c.bf16 %v3049, %v3049
  %v3392 = vld [vmem:[%s6] sm:$0xff]
  %v3393 = vld [vmem:[%s6 + $0x8] sm:$0xff]
  %v3394 = vld [vmem:[%s6 + $0x10] sm:$0xff]
  %v3395 = vld [vmem:[%s6 + $0x18] sm:$0xff]
  %v3396 = vld [vmem:[%s6 + $0x20] sm:$0xff]
  %v3397 = vld [vmem:[%s6 + $0x28] sm:$0xff]
  %v3398 = vld [vmem:[%s6 + $0x30] sm:$0xff]
  %v3399 = vld [vmem:[%s6 + $0x38] sm:$0xff]
  %v3400 = vld [vmem:[%s6 + $0x40] sm:$0xff]
  %v3401 = vld [vmem:[%s6 + $0x48] sm:$0xff]
  %v3402 = vld [vmem:[%s6 + $0x50] sm:$0xff]
  %v3403 = vld [vmem:[%s6 + $0x58] sm:$0xff]
  %v3404 = vld [vmem:[%s6 + $0x60] sm:$0xff]
  %v3405 = vld [vmem:[%s6 + $0x68] sm:$0xff]
  %v3406 = vld [vmem:[%s6 + $0x70] sm:$0xff]
  %v3407 = vld [vmem:[%s6 + $0x78] sm:$0xff]
  %v3408 = vld [vmem:[%s6 + $0x80] sm:$0xff]
  %v3409 = vld [vmem:[%s6 + $0x88] sm:$0xff]
  %v3410 = vld [vmem:[%s6 + $0x90] sm:$0xff]
  %v3411 = vld [vmem:[%s6 + $0x98] sm:$0xff]
  %v3412 = vld [vmem:[%s6 + $0xa0] sm:$0xff]
  %v3413 = vld [vmem:[%s6 + $0xa8] sm:$0xff]
  %v3414 = vld [vmem:[%s6 + $0xb0] sm:$0xff]
  %v3415 = vld [vmem:[%s6 + $0xb8] sm:$0xff]
  %v3416 = vld [vmem:[%s6 + $0xc0] sm:$0xff]
  %v3417 = vld [vmem:[%s6 + $0xc8] sm:$0xff]
  %v3418 = vld [vmem:[%s6 + $0xd0] sm:$0xff]
  %v3419 = vld [vmem:[%s6 + $0xd8] sm:$0xff]
  %v3420 = vld [vmem:[%s6 + $0xe0] sm:$0xff]
  %v3421 = vld [vmem:[%s6 + $0xe8] sm:$0xff]
  %v3422 = vld [vmem:[%s6 + $0xf0] sm:$0xff]
  %v3423 = vld [vmem:[%s6 + $0xf8] sm:$0xff]
  %v3456 = vunpack.c.l.b16 %v3392
  %v3457 = vunpack.c.h.b16 %v3392
  %v3458 = vunpack.c.l.b16 %v3393
  %v3459 = vunpack.c.h.b16 %v3393
  %v3460 = vunpack.c.l.b16 %v3394
  %v3461 = vunpack.c.h.b16 %v3394
  %v3462 = vunpack.c.l.b16 %v3395
  %v3463 = vunpack.c.h.b16 %v3395
  %v3464 = vunpack.c.l.b16 %v3396
  %v3465 = vunpack.c.h.b16 %v3396
  %v3466 = vunpack.c.l.b16 %v3397
  %v3467 = vunpack.c.h.b16 %v3397
  %v3468 = vunpack.c.l.b16 %v3398
  %v3469 = vunpack.c.h.b16 %v3398
  %v3470 = vunpack.c.l.b16 %v3399
  %v3471 = vunpack.c.h.b16 %v3399
  %v3472 = vunpack.c.l.b16 %v3400
  %v3473 = vunpack.c.h.b16 %v3400
  %v3474 = vunpack.c.l.b16 %v3401
  %v3475 = vunpack.c.h.b16 %v3401
  %v3476 = vunpack.c.l.b16 %v3402
  %v3477 = vunpack.c.h.b16 %v3402
  %v3478 = vunpack.c.l.b16 %v3403
  %v3479 = vunpack.c.h.b16 %v3403
  %v3480 = vunpack.c.l.b16 %v3404
  %v3481 = vunpack.c.h.b16 %v3404
  %v3482 = vunpack.c.l.b16 %v3405
  %v3483 = vunpack.c.h.b16 %v3405
  %v3484 = vunpack.c.l.b16 %v3406
  %v3485 = vunpack.c.h.b16 %v3406
  %v3486 = vunpack.c.l.b16 %v3407
  %v3487 = vunpack.c.h.b16 %v3407
  %v3488 = vunpack.c.l.b16 %v3408
  %v3489 = vunpack.c.h.b16 %v3408
  %v3490 = vunpack.c.l.b16 %v3409
  %v3491 = vunpack.c.h.b16 %v3409
  %v3492 = vunpack.c.l.b16 %v3410
  %v3493 = vunpack.c.h.b16 %v3410
  %v3494 = vunpack.c.l.b16 %v3411
  %v3495 = vunpack.c.h.b16 %v3411
  %v3496 = vunpack.c.l.b16 %v3412
  %v3497 = vunpack.c.h.b16 %v3412
  %v3498 = vunpack.c.l.b16 %v3413
  %v3499 = vunpack.c.h.b16 %v3413
  %v3500 = vunpack.c.l.b16 %v3414
  %v3501 = vunpack.c.h.b16 %v3414
  %v3502 = vunpack.c.l.b16 %v3415
  %v3503 = vunpack.c.h.b16 %v3415
  %v3504 = vunpack.c.l.b16 %v3416
  %v3505 = vunpack.c.h.b16 %v3416
  %v3506 = vunpack.c.l.b16 %v3417
  %v3507 = vunpack.c.h.b16 %v3417
  %v3508 = vunpack.c.l.b16 %v3418
  %v3509 = vunpack.c.h.b16 %v3418
  %v3510 = vunpack.c.l.b16 %v3419
  %v3511 = vunpack.c.h.b16 %v3419
  %v3512 = vunpack.c.l.b16 %v3420
  %v3513 = vunpack.c.h.b16 %v3420
  %v3514 = vunpack.c.l.b16 %v3421
  %v3515 = vunpack.c.h.b16 %v3421
  %v3516 = vunpack.c.l.b16 %v3422
  %v3517 = vunpack.c.h.b16 %v3422
  %v3518 = vunpack.c.l.b16 %v3423
  %v3519 = vunpack.c.h.b16 %v3423
  %v3520 = vpack.c.b16 %v3460, %v3456
  %v3521 = vpack.c.b16 %v3461, %v3457
  %v3522 = vpack.c.b16 %v3462, %v3458
  %v3523 = vpack.c.b16 %v3463, %v3459
  %v3524 = vpack.c.b16 %v3468, %v3464
  %v3525 = vpack.c.b16 %v3469, %v3465
  %v3526 = vpack.c.b16 %v3470, %v3466
  %v3527 = vpack.c.b16 %v3471, %v3467
  %v3528 = vpack.c.b16 %v3476, %v3472
  %v3529 = vpack.c.b16 %v3477, %v3473
  %v3530 = vpack.c.b16 %v3478, %v3474
  %v3531 = vpack.c.b16 %v3479, %v3475
  %v3532 = vpack.c.b16 %v3484, %v3480
  %v3533 = vpack.c.b16 %v3485, %v3481
  %v3534 = vpack.c.b16 %v3486, %v3482
  %v3535 = vpack.c.b16 %v3487, %v3483
  %v3536 = vpack.c.b16 %v3492, %v3488
  %v3537 = vpack.c.b16 %v3493, %v3489
  %v3538 = vpack.c.b16 %v3494, %v3490
  %v3539 = vpack.c.b16 %v3495, %v3491
  %v3540 = vpack.c.b16 %v3500, %v3496
  %v3541 = vpack.c.b16 %v3501, %v3497
  %v3542 = vpack.c.b16 %v3502, %v3498
  %v3543 = vpack.c.b16 %v3503, %v3499
  %v3544 = vpack.c.b16 %v3508, %v3504
  %v3545 = vpack.c.b16 %v3509, %v3505
  %v3546 = vpack.c.b16 %v3510, %v3506
  %v3547 = vpack.c.b16 %v3511, %v3507
  %v3548 = vpack.c.b16 %v3516, %v3512
  %v3549 = vpack.c.b16 %v3517, %v3513
  %v3550 = vpack.c.b16 %v3518, %v3514
  %v3551 = vpack.c.b16 %v3519, %v3515
  %3584 = vmatprep.subr.bf16.mxu0 %v3521
  %3585 = vmatpush1.bf16.msra.mxu0 %v3520
  %3586 = vmatprep.subr.bf16.mxu0 %v3525
  %3587 = vmatpush1.bf16.msra.mxu0 %v3524
  %3588 = vmatprep.subr.bf16.mxu0 %v3529
  %3589 = vmatpush1.bf16.msra.mxu0 %v3528
  %3590 = vmatprep.subr.bf16.mxu0 %v3533
  %3591 = vmatpush1.bf16.msra.mxu0 %v3532
  %3592 = vmatprep.subr.bf16.mxu0 %v3537
  %3593 = vmatpush1.bf16.msra.mxu0 %v3536
  %3594 = vmatprep.subr.bf16.mxu0 %v3541
  %3595 = vmatpush1.bf16.msra.mxu0 %v3540
  %3596 = vmatprep.subr.bf16.mxu0 %v3545
  %3597 = vmatpush1.bf16.msra.mxu0 %v3544
  %3598 = vmatprep.subr.bf16.mxu0 %v3549
  %3599 = vmatpush1.bf16.msra.mxu0 %v3548
  %3600 = vmatprep.subr.bf16.mxu0 0
  %3601 = vmatpush1.bf16.msra.mxu0 0
  %3602 = vmatprep.subr.bf16.mxu0 0
  %3603 = vmatpush1.bf16.msra.mxu0 0
  %3604 = vmatprep.subr.bf16.mxu0 0
  %3605 = vmatpush1.bf16.msra.mxu0 0
  %3606 = vmatprep.subr.bf16.mxu0 0
  %3607 = vmatpush1.bf16.msra.mxu0 0
  %3608 = vmatprep.subr.bf16.mxu0 0
  %3609 = vmatpush1.bf16.msra.mxu0 0
  %3610 = vmatprep.subr.bf16.mxu0 0
  %3611 = vmatpush1.bf16.msra.mxu0 0
  %3612 = vmatprep.subr.bf16.mxu0 0
  %3613 = vmatpush1.bf16.msra.mxu0 0
  %3614 = vmatprep.subr.bf16.mxu0 0
  %3615 = vmatpush1.bf16.msra.mxu0 0
  %3616 = vmatprep.mubr.bf16.mxu0 0
  %3617 = vmatmul.mubr.bf16.gmra.mrb[0].mxu0 %v3391
  %v3618 = vpop.f32.mrb[0].mxu0
  %v3619 = vadd.f32 0.0, %v3618
  %v3620 = vpop.f32.mrb[0].mxu0
  %v3621 = vadd.f32 0.0, %v3620
  %v3622 = vpop.f32.mrb[0].mxu0
  %v3623 = vpop.f32.mrb[0].mxu0
  %3624 = vdwg.mxu0
  %3625 = vmatprep.subr.bf16.mxu0 %v3523
  %3626 = vmatpush1.bf16.msra.mxu0 %v3522
  %3627 = vmatprep.subr.bf16.mxu0 %v3527
  %3628 = vmatpush1.bf16.msra.mxu0 %v3526
  %3629 = vmatprep.subr.bf16.mxu0 %v3531
  %3630 = vmatpush1.bf16.msra.mxu0 %v3530
  %3631 = vmatprep.subr.bf16.mxu0 %v3535
  %3632 = vmatpush1.bf16.msra.mxu0 %v3534
  %3633 = vmatprep.subr.bf16.mxu0 %v3539
  %3634 = vmatpush1.bf16.msra.mxu0 %v3538
  %3635 = vmatprep.subr.bf16.mxu0 %v3543
  %3636 = vmatpush1.bf16.msra.mxu0 %v3542
  %3637 = vmatprep.subr.bf16.mxu0 %v3547
  %3638 = vmatpush1.bf16.msra.mxu0 %v3546
  %3639 = vmatprep.subr.bf16.mxu0 %v3551
  %3640 = vmatpush1.bf16.msra.mxu0 %v3550
  %3641 = vmatprep.subr.bf16.mxu0 0
  %3642 = vmatpush1.bf16.msra.mxu0 0
  %3643 = vmatprep.subr.bf16.mxu0 0
  %3644 = vmatpush1.bf16.msra.mxu0 0
  %3645 = vmatprep.subr.bf16.mxu0 0
  %3646 = vmatpush1.bf16.msra.mxu0 0
  %3647 = vmatprep.subr.bf16.mxu0 0
  %3648 = vmatpush1.bf16.msra.mxu0 0
  %3649 = vmatprep.subr.bf16.mxu0 0
  %3650 = vmatpush1.bf16.msra.mxu0 0
  %3651 = vmatprep.subr.bf16.mxu0 0
  %3652 = vmatpush1.bf16.msra.mxu0 0
  %3653 = vmatprep.subr.bf16.mxu0 0
  %3654 = vmatpush1.bf16.msra.mxu0 0
  %3655 = vmatprep.subr.bf16.mxu0 0
  %3656 = vmatpush1.bf16.msra.mxu0 0
  %3657 = vmatprep.mubr.bf16.mxu0 0
  %3658 = vmatmul.mubr.bf16.gmra.mrb[0].mxu0 %v3391
  %v3659 = vpop.f32.mrb[0].mxu0
  %v3660 = vadd.f32 0.0, %v3659
  %v3661 = vpop.f32.mrb[0].mxu0
  %v3662 = vadd.f32 0.0, %v3661
  %v3663 = vpop.f32.mrb[0].mxu0
  %v3664 = vpop.f32.mrb[0].mxu0
  %3665 = vdwg.mxu0
  %v3698 = vunpack.c.l.b16 %v3359
  %v3699 = vunpack.c.h.b16 %v3359
  %v3700 = vunpack.c.l.b16 %v3360
  %v3701 = vunpack.c.h.b16 %v3360
  %v3702 = vunpack.c.l.b16 %v3361
  %v3703 = vunpack.c.h.b16 %v3361
  %v3704 = vunpack.c.l.b16 %v3362
  %v3705 = vunpack.c.h.b16 %v3362
  %v3706 = vunpack.c.l.b16 %v3363
  %v3707 = vunpack.c.h.b16 %v3363
  %v3708 = vunpack.c.l.b16 %v3364
  %v3709 = vunpack.c.h.b16 %v3364
  %v3710 = vunpack.c.l.b16 %v3365
  %v3711 = vunpack.c.h.b16 %v3365
  %v3712 = vunpack.c.l.b16 %v3366
  %v3713 = vunpack.c.h.b16 %v3366
  %v3714 = vunpack.c.l.b16 %v3367
  %v3715 = vunpack.c.h.b16 %v3367
  %v3716 = vunpack.c.l.b16 %v3368
  %v3717 = vunpack.c.h.b16 %v3368
  %v3718 = vunpack.c.l.b16 %v3369
  %v3719 = vunpack.c.h.b16 %v3369
  %v3720 = vunpack.c.l.b16 %v3370
  %v3721 = vunpack.c.h.b16 %v3370
  %v3722 = vunpack.c.l.b16 %v3371
  %v3723 = vunpack.c.h.b16 %v3371
  %v3724 = vunpack.c.l.b16 %v3372
  %v3725 = vunpack.c.h.b16 %v3372
  %v3726 = vunpack.c.l.b16 %v3373
  %v3727 = vunpack.c.h.b16 %v3373
  %v3728 = vunpack.c.l.b16 %v3374
  %v3729 = vunpack.c.h.b16 %v3374
  %v3730 = vunpack.c.l.b16 %v3375
  %v3731 = vunpack.c.h.b16 %v3375
  %v3732 = vunpack.c.l.b16 %v3376
  %v3733 = vunpack.c.h.b16 %v3376
  %v3734 = vunpack.c.l.b16 %v3377
  %v3735 = vunpack.c.h.b16 %v3377
  %v3736 = vunpack.c.l.b16 %v3378
  %v3737 = vunpack.c.h.b16 %v3378
  %v3738 = vunpack.c.l.b16 %v3379
  %v3739 = vunpack.c.h.b16 %v3379
  %v3740 = vunpack.c.l.b16 %v3380
  %v3741 = vunpack.c.h.b16 %v3380
  %v3742 = vunpack.c.l.b16 %v3381
  %v3743 = vunpack.c.h.b16 %v3381
  %v3744 = vunpack.c.l.b16 %v3382
  %v3745 = vunpack.c.h.b16 %v3382
  %v3746 = vunpack.c.l.b16 %v3383
  %v3747 = vunpack.c.h.b16 %v3383
  %v3748 = vunpack.c.l.b16 %v3384
  %v3749 = vunpack.c.h.b16 %v3384
  %v3750 = vunpack.c.l.b16 %v3385
  %v3751 = vunpack.c.h.b16 %v3385
  %v3752 = vunpack.c.l.b16 %v3386
  %v3753 = vunpack.c.h.b16 %v3386
  %v3754 = vunpack.c.l.b16 %v3387
  %v3755 = vunpack.c.h.b16 %v3387
  %v3756 = vunpack.c.l.b16 %v3388
  %v3757 = vunpack.c.h.b16 %v3388
  %v3758 = vunpack.c.l.b16 %v3389
  %v3759 = vunpack.c.h.b16 %v3389
  %v3760 = vunpack.c.l.b16 %v3390
  %v3761 = vunpack.c.h.b16 %v3390
  %v3762 = vpack.c.b16 %v3702, %v3698
  %v3763 = vpack.c.b16 %v3703, %v3699
  %v3764 = vpack.c.b16 %v3704, %v3700
  %v3765 = vpack.c.b16 %v3705, %v3701
  %v3766 = vpack.c.b16 %v3710, %v3706
  %v3767 = vpack.c.b16 %v3711, %v3707
  %v3768 = vpack.c.b16 %v3712, %v3708
  %v3769 = vpack.c.b16 %v3713, %v3709
  %v3770 = vpack.c.b16 %v3718, %v3714
  %v3771 = vpack.c.b16 %v3719, %v3715
  %v3772 = vpack.c.b16 %v3720, %v3716
  %v3773 = vpack.c.b16 %v3721, %v3717
  %v3774 = vpack.c.b16 %v3726, %v3722
  %v3775 = vpack.c.b16 %v3727, %v3723
  %v3776 = vpack.c.b16 %v3728, %v3724
  %v3777 = vpack.c.b16 %v3729, %v3725
  %v3778 = vpack.c.b16 %v3734, %v3730
  %v3779 = vpack.c.b16 %v3735, %v3731
  %v3780 = vpack.c.b16 %v3736, %v3732
  %v3781 = vpack.c.b16 %v3737, %v3733
  %v3782 = vpack.c.b16 %v3742, %v3738
  %v3783 = vpack.c.b16 %v3743, %v3739
  %v3784 = vpack.c.b16 %v3744, %v3740
  %v3785 = vpack.c.b16 %v3745, %v3741
  %v3786 = vpack.c.b16 %v3750, %v3746
  %v3787 = vpack.c.b16 %v3751, %v3747
  %v3788 = vpack.c.b16 %v3752, %v3748
  %v3789 = vpack.c.b16 %v3753, %v3749
  %v3790 = vpack.c.b16 %v3758, %v3754
  %v3791 = vpack.c.b16 %v3759, %v3755
  %v3792 = vpack.c.b16 %v3760, %v3756
  %v3793 = vpack.c.b16 %v3761, %v3757
  %3826 = vmatprep.subr.bf16.mxu0 %v3763
  %3827 = vmatpush1.bf16.msra.mxu0 %v3762
  %3828 = vmatprep.subr.bf16.mxu0 %v3767
  %3829 = vmatpush1.bf16.msra.mxu0 %v3766
  %3830 = vmatprep.subr.bf16.mxu0 %v3771
  %3831 = vmatpush1.bf16.msra.mxu0 %v3770
  %3832 = vmatprep.subr.bf16.mxu0 %v3775
  %3833 = vmatpush1.bf16.msra.mxu0 %v3774
  %3834 = vmatprep.subr.bf16.mxu0 %v3779
  %3835 = vmatpush1.bf16.msra.mxu0 %v3778
  %3836 = vmatprep.subr.bf16.mxu0 %v3783
  %3837 = vmatpush1.bf16.msra.mxu0 %v3782
  %3838 = vmatprep.subr.bf16.mxu0 %v3787
  %3839 = vmatpush1.bf16.msra.mxu0 %v3786
  %3840 = vmatprep.subr.bf16.mxu0 %v3791
  %3841 = vmatpush1.bf16.msra.mxu0 %v3790
  %3842 = vmatprep.subr.bf16.mxu0 0
  %3843 = vmatpush1.bf16.msra.mxu0 0
  %3844 = vmatprep.subr.bf16.mxu0 0
  %3845 = vmatpush1.bf16.msra.mxu0 0
  %3846 = vmatprep.subr.bf16.mxu0 0
  %3847 = vmatpush1.bf16.msra.mxu0 0
  %3848 = vmatprep.subr.bf16.mxu0 0
  %3849 = vmatpush1.bf16.msra.mxu0 0
  %3850 = vmatprep.subr.bf16.mxu0 0
  %3851 = vmatpush1.bf16.msra.mxu0 0
  %3852 = vmatprep.subr.bf16.mxu0 0
  %3853 = vmatpush1.bf16.msra.mxu0 0
  %3854 = vmatprep.subr.bf16.mxu0 0
  %3855 = vmatpush1.bf16.msra.mxu0 0
  %3856 = vmatprep.subr.bf16.mxu0 0
  %3857 = vmatpush1.bf16.msra.mxu0 0
  %3858 = vmatprep.mubr.bf16.mxu0 0
  %3859 = vmatmul.mubr.bf16.gmra.mrb[0].mxu0 %v3358
  %v3860 = vpop.f32.mrb[0].mxu0
  %v3861 = vadd.f32 %v3619, %v3860
  %v3862 = vpop.f32.mrb[0].mxu0
  %v3863 = vadd.f32 %v3621, %v3862
  %v3864 = vpop.f32.mrb[0].mxu0
  %v3865 = vpop.f32.mrb[0].mxu0
  %3866 = vdwg.mxu0
  %3867 = vmatprep.subr.bf16.mxu0 %v3765
  %3868 = vmatpush1.bf16.msra.mxu0 %v3764
  %3869 = vmatprep.subr.bf16.mxu0 %v3769
  %3870 = vmatpush1.bf16.msra.mxu0 %v3768
  %3871 = vmatprep.subr.bf16.mxu0 %v3773
  %3872 = vmatpush1.bf16.msra.mxu0 %v3772
  %3873 = vmatprep.subr.bf16.mxu0 %v3777
  %3874 = vmatpush1.bf16.msra.mxu0 %v3776
  %3875 = vmatprep.subr.bf16.mxu0 %v3781
  %3876 = vmatpush1.bf16.msra.mxu0 %v3780
  %3877 = vmatprep.subr.bf16.mxu0 %v3785
  %3878 = vmatpush1.bf16.msra.mxu0 %v3784
  %3879 = vmatprep.subr.bf16.mxu0 %v3789
  %3880 = vmatpush1.bf16.msra.mxu0 %v3788
  %3881 = vmatprep.subr.bf16.mxu0 %v3793
  %3882 = vmatpush1.bf16.msra.mxu0 %v3792
  %3883 = vmatprep.subr.bf16.mxu0 0
  %3884 = vmatpush1.bf16.msra.mxu0 0
  %3885 = vmatprep.subr.bf16.mxu0 0
  %3886 = vmatpush1.bf16.msra.mxu0 0
  %3887 = vmatprep.subr.bf16.mxu0 0
  %3888 = vmatpush1.bf16.msra.mxu0 0
  %3889 = vmatprep.subr.bf16.mxu0 0
  %3890 = vmatpush1.bf16.msra.mxu0 0
  %3891 = vmatprep.subr.bf16.mxu0 0
  %3892 = vmatpush1.bf16.msra.mxu0 0
  %3893 = vmatprep.subr.bf16.mxu0 0
  %3894 = vmatpush1.bf16.msra.mxu0 0
  %3895 = vmatprep.subr.bf16.mxu0 0
  %3896 = vmatpush1.bf16.msra.mxu0 0
  %3897 = vmatprep.subr.bf16.mxu0 0
  %3898 = vmatpush1.bf16.msra.mxu0 0
  %3899 = vmatprep.mubr.bf16.mxu0 0
  %3900 = vmatmul.mubr.bf16.gmra.mrb[0].mxu0 %v3358
  %v3901 = vpop.f32.mrb[0].mxu0
  %v3902 = vadd.f32 %v3660, %v3901
  %v3903 = vpop.f32.mrb[0].mxu0
  %v3904 = vadd.f32 %v3662, %v3903
  %v3905 = vpop.f32.mrb[0].mxu0
  %v3906 = vpop.f32.mrb[0].mxu0
  %3907 = vdwg.mxu0
  %v3908 = vld [vmem:[%s7] sm:$0xf]
  %v3910 = vlaneseq
  %v3911 = vshrl.u32 %v3910, 7
  %v3912 = vsub.s32 0, %v3911
  %v3913 = vrot.slane %v3908, %v3912
  %v3914 = vlaneseq
  %v3915 = vshrl.u32 %v3914, 7
  %v3916 = vsub.s32 1, %v3915
  %v3917 = vrot.slane %v3908, %v3916
  %v3918 = vlaneseq
  %v3919 = vshrl.u32 %v3918, 7
  %v3920 = vsub.s32 2, %v3919
  %v3921 = vrot.slane %v3908, %v3920
  %v3922 = vlaneseq
  %v3923 = vshrl.u32 %v3922, 7
  %v3924 = vsub.s32 3, %v3923
  %v3925 = vrot.slane %v3908, %v3924
  %v3930 = vadd.f32 %v3861, %v3913
  %v3931 = vadd.f32 %v3863, %v3917
  %v3932 = vadd.f32 %v3902, %v3921
  %v3933 = vadd.f32 %v3904, %v3925
  %v3934 = vxor.u32 %v3930, 2147483648
  %v3935 = vxor.u32 %v3931, 2147483648
  %v3936 = vxor.u32 %v3932, 2147483648
  %v3937 = vmul.f32 %v3934, 1.442695
  %v3938 = vpow.pop %v3937
  %v3939 = vmul.f32 %v3935, 1.442695
  %v3940 = vpow.pop %v3939
  %v3941 = vmul.f32 %v3936, 1.442695
  %v3942 = vpow.pop %v3941
  %v3943 = vadd.f32 %v3938, 1.0
  %v3944 = vadd.f32 %v3940, 1.0
  %v3945 = vadd.f32 %v3942, 1.0
  %v3946 = vrcp.pop %v3943
  %v3947 = vmul.f32 1.0, %v3946
  %v3948 = vrcp.pop %v3944
  %v3949 = vmul.f32 1.0, %v3948
  %v3950 = vrcp.pop %v3945
  %v3951 = vmul.f32 1.0, %v3950
  %v3952 = vtanh.pop %v3933
  %v3953 = vmul.f32 %v3949, %v3050
  %v3954 = vmul.f32 %v3947, %v3952
  %v3955 = vadd.f32 %v3953, %v3954
  %v3956 = vtanh.pop %v3955
  %v3957 = vmul.f32 %v3951, %v3956
  %3958 = vst [vmem:[#allocation2] sm:$0xff] %v3357
  %3959 = vst [vmem:[#allocation2 + $0x8] sm:$0xff] %v3355
  %3960 = vst [vmem:[#allocation2 + $0x10] sm:$0xff] %v3957
  %3961 = vst [vmem:[#allocation2 + $0x18] sm:$0xff] %v3955
  %3962 = vst [vmem:[#allocation4 + $0x18] sm:$0xff] %v3957
  %v3963 = vld [vmem:[#allocation2] sm:$0xff]
  %v3964 = vld [vmem:[#allocation2 + $0x8] sm:$0xff]
  %v3965 = vld [vmem:[#allocation2 + $0x10] sm:$0xff]
  %v3966 = vld [vmem:[#allocation2 + $0x18] sm:$0xff]
  %v3967 = vld [vmem:[#allocation3 + $0x80] sm:$0xff]
  %v3968 = vld [vmem:[#allocation3 + $0x88] sm:$0xff]
  %v3969 = vld [vmem:[#allocation3 + $0x90] sm:$0xff]
  %v3970 = vld [vmem:[#allocation3 + $0x98] sm:$0xff]
  %v3971 = vpack.c.bf16 %v3963, %v3963
  %v3972 = vld [vmem:[%s4] sm:$0xff]
  %v3973 = vld [vmem:[%s4 + $0x8] sm:$0xff]
  %v3974 = vld [vmem:[%s4 + $0x10] sm:$0xff]
  %v3975 = vld [vmem:[%s4 + $0x18] sm:$0xff]
  %v3976 = vld [vmem:[%s4 + $0x20] sm:$0xff]
  %v3977 = vld [vmem:[%s4 + $0x28] sm:$0xff]
  %v3978 = vld [vmem:[%s4 + $0x30] sm:$0xff]
  %v3979 = vld [vmem:[%s4 + $0x38] sm:$0xff]
  %v3980 = vld [vmem:[%s4 + $0x40] sm:$0xff]
  %v3981 = vld [vmem:[%s4 + $0x48] sm:$0xff]
  %v3982 = vld [vmem:[%s4 + $0x50] sm:$0xff]
  %v3983 = vld [vmem:[%s4 + $0x58] sm:$0xff]
  %v3984 = vld [vmem:[%s4 + $0x60] sm:$0xff]
  %v3985 = vld [vmem:[%s4 + $0x68] sm:$0xff]
  %v3986 = vld [vmem:[%s4 + $0x70] sm:$0xff]
  %v3987 = vld [vmem:[%s4 + $0x78] sm:$0xff]
  %v3988 = vld [vmem:[%s4 + $0x80] sm:$0xff]
  %v3989 = vld [vmem:[%s4 + $0x88] sm:$0xff]
  %v3990 = vld [vmem:[%s4 + $0x90] sm:$0xff]
  %v3991 = vld [vmem:[%s4 + $0x98] sm:$0xff]
  %v3992 = vld [vmem:[%s4 + $0xa0] sm:$0xff]
  %v3993 = vld [vmem:[%s4 + $0xa8] sm:$0xff]
  %v3994 = vld [vmem:[%s4 + $0xb0] sm:$0xff]
  %v3995 = vld [vmem:[%s4 + $0xb8] sm:$0xff]
  %v3996 = vld [vmem:[%s4 + $0xc0] sm:$0xff]
  %v3997 = vld [vmem:[%s4 + $0xc8] sm:$0xff]
  %v3998 = vld [vmem:[%s4 + $0xd0] sm:$0xff]
  %v3999 = vld [vmem:[%s4 + $0xd8] sm:$0xff]
  %v4000 = vld [vmem:[%s4 + $0xe0] sm:$0xff]
  %v4001 = vld [vmem:[%s4 + $0xe8] sm:$0xff]
  %v4002 = vld [vmem:[%s4 + $0xf0] sm:$0xff]
  %v4003 = vld [vmem:[%s4 + $0xf8] sm:$0xff]
  %v4036 = vunpack.c.l.b16 %v3972
  %v4037 = vunpack.c.h.b16 %v3972
  %v4038 = vunpack.c.l.b16 %v3973
  %v4039 = vunpack.c.h.b16 %v3973
  %v4040 = vunpack.c.l.b16 %v3974
  %v4041 = vunpack.c.h.b16 %v3974
  %v4042 = vunpack.c.l.b16 %v3975
  %v4043 = vunpack.c.h.b16 %v3975
  %v4044 = vunpack.c.l.b16 %v3976
  %v4045 = vunpack.c.h.b16 %v3976
  %v4046 = vunpack.c.l.b16 %v3977
  %v4047 = vunpack.c.h.b16 %v3977
  %v4048 = vunpack.c.l.b16 %v3978
  %v4049 = vunpack.c.h.b16 %v3978
  %v4050 = vunpack.c.l.b16 %v3979
  %v4051 = vunpack.c.h.b16 %v3979
  %v4052 = vunpack.c.l.b16 %v3980
  %v4053 = vunpack.c.h.b16 %v3980
  %v4054 = vunpack.c.l.b16 %v3981
  %v4055 = vunpack.c.h.b16 %v3981
  %v4056 = vunpack.c.l.b16 %v3982
  %v4057 = vunpack.c.h.b16 %v3982
  %v4058 = vunpack.c.l.b16 %v3983
  %v4059 = vunpack.c.h.b16 %v3983
  %v4060 = vunpack.c.l.b16 %v3984
  %v4061 = vunpack.c.h.b16 %v3984
  %v4062 = vunpack.c.l.b16 %v3985
  %v4063 = vunpack.c.h.b16 %v3985
  %v4064 = vunpack.c.l.b16 %v3986
  %v4065 = vunpack.c.h.b16 %v3986
  %v4066 = vunpack.c.l.b16 %v3987
  %v4067 = vunpack.c.h.b16 %v3987
  %v4068 = vunpack.c.l.b16 %v3988
  %v4069 = vunpack.c.h.b16 %v3988
  %v4070 = vunpack.c.l.b16 %v3989
  %v4071 = vunpack.c.h.b16 %v3989
  %v4072 = vunpack.c.l.b16 %v3990
  %v4073 = vunpack.c.h.b16 %v3990
  %v4074 = vunpack.c.l.b16 %v3991
  %v4075 = vunpack.c.h.b16 %v3991
  %v4076 = vunpack.c.l.b16 %v3992
  %v4077 = vunpack.c.h.b16 %v3992
  %v4078 = vunpack.c.l.b16 %v3993
  %v4079 = vunpack.c.h.b16 %v3993
  %v4080 = vunpack.c.l.b16 %v3994
  %v4081 = vunpack.c.h.b16 %v3994
  %v4082 = vunpack.c.l.b16 %v3995
  %v4083 = vunpack.c.h.b16 %v3995
  %v4084 = vunpack.c.l.b16 %v3996
  %v4085 = vunpack.c.h.b16 %v3996
  %v4086 = vunpack.c.l.b16 %v3997
  %v4087 = vunpack.c.h.b16 %v3997
  %v4088 = vunpack.c.l.b16 %v3998
  %v4089 = vunpack.c.h.b16 %v3998
  %v4090 = vunpack.c.l.b16 %v3999
  %v4091 = vunpack.c.h.b16 %v3999
  %v4092 = vunpack.c.l.b16 %v4000
  %v4093 = vunpack.c.h.b16 %v4000
  %v4094 = vunpack.c.l.b16 %v4001
  %v4095 = vunpack.c.h.b16 %v4001
  %v4096 = vunpack.c.l.b16 %v4002
  %v4097 = vunpack.c.h.b16 %v4002
  %v4098 = vunpack.c.l.b16 %v4003
  %v4099 = vunpack.c.h.b16 %v4003
  %v4100 = vpack.c.b16 %v4040, %v4036
  %v4101 = vpack.c.b16 %v4041, %v4037
  %v4102 = vpack.c.b16 %v4042, %v4038
  %v4103 = vpack.c.b16 %v4043, %v4039
  %v4104 = vpack.c.b16 %v4048, %v4044
  %v4105 = vpack.c.b16 %v4049, %v4045
  %v4106 = vpack.c.b16 %v4050, %v4046
  %v4107 = vpack.c.b16 %v4051, %v4047
  %v4108 = vpack.c.b16 %v4056, %v4052
  %v4109 = vpack.c.b16 %v4057, %v4053
  %v4110 = vpack.c.b16 %v4058, %v4054
  %v4111 = vpack.c.b16 %v4059, %v4055
  %v4112 = vpack.c.b16 %v4064, %v4060
  %v4113 = vpack.c.b16 %v4065, %v4061
  %v4114 = vpack.c.b16 %v4066, %v4062
  %v4115 = vpack.c.b16 %v4067, %v4063
  %v4116 = vpack.c.b16 %v4072, %v4068
  %v4117 = vpack.c.b16 %v4073, %v4069
  %v4118 = vpack.c.b16 %v4074, %v4070
  %v4119 = vpack.c.b16 %v4075, %v4071
  %v4120 = vpack.c.b16 %v4080, %v4076
  %v4121 = vpack.c.b16 %v4081, %v4077
  %v4122 = vpack.c.b16 %v4082, %v4078
  %v4123 = vpack.c.b16 %v4083, %v4079
  %v4124 = vpack.c.b16 %v4088, %v4084
  %v4125 = vpack.c.b16 %v4089, %v4085
  %v4126 = vpack.c.b16 %v4090, %v4086
  %v4127 = vpack.c.b16 %v4091, %v4087
  %v4128 = vpack.c.b16 %v4096, %v4092
  %v4129 = vpack.c.b16 %v4097, %v4093
  %v4130 = vpack.c.b16 %v4098, %v4094
  %v4131 = vpack.c.b16 %v4099, %v4095
  %4164 = vmatprep.subr.bf16.mxu0 %v4101
  %4165 = vmatpush1.bf16.msra.mxu0 %v4100
  %4166 = vmatprep.subr.bf16.mxu0 %v4105
  %4167 = vmatpush1.bf16.msra.mxu0 %v4104
  %4168 = vmatprep.subr.bf16.mxu0 %v4109
  %4169 = vmatpush1.bf16.msra.mxu0 %v4108
  %4170 = vmatprep.subr.bf16.mxu0 %v4113
  %4171 = vmatpush1.bf16.msra.mxu0 %v4112
  %4172 = vmatprep.subr.bf16.mxu0 %v4117
  %4173 = vmatpush1.bf16.msra.mxu0 %v4116
  %4174 = vmatprep.subr.bf16.mxu0 %v4121
  %4175 = vmatpush1.bf16.msra.mxu0 %v4120
  %4176 = vmatprep.subr.bf16.mxu0 %v4125
  %4177 = vmatpush1.bf16.msra.mxu0 %v4124
  %4178 = vmatprep.subr.bf16.mxu0 %v4129
  %4179 = vmatpush1.bf16.msra.mxu0 %v4128
  %4180 = vmatprep.subr.bf16.mxu0 0
  %4181 = vmatpush1.bf16.msra.mxu0 0
  %4182 = vmatprep.subr.bf16.mxu0 0
  %4183 = vmatpush1.bf16.msra.mxu0 0
  %4184 = vmatprep.subr.bf16.mxu0 0
  %4185 = vmatpush1.bf16.msra.mxu0 0
  %4186 = vmatprep.subr.bf16.mxu0 0
  %4187 = vmatpush1.bf16.msra.mxu0 0
  %4188 = vmatprep.subr.bf16.mxu0 0
  %4189 = vmatpush1.bf16.msra.mxu0 0
  %4190 = vmatprep.subr.bf16.mxu0 0
  %4191 = vmatpush1.bf16.msra.mxu0 0
  %4192 = vmatprep.subr.bf16.mxu0 0
  %4193 = vmatpush1.bf16.msra.mxu0 0
  %4194 = vmatprep.subr.bf16.mxu0 0
  %4195 = vmatpush1.bf16.msra.mxu0 0
  %4196 = vmatprep.mubr.bf16.mxu0 0
  %4197 = vmatmul.mubr.bf16.gmra.mrb[0].mxu0 %v3971
  %v4198 = vpop.f32.mrb[0].mxu0
  %v4199 = vadd.f32 0.0, %v4198
  %v4200 = vpop.f32.mrb[0].mxu0
  %v4201 = vadd.f32 0.0, %v4200
  %v4202 = vpop.f32.mrb[0].mxu0
  %v4203 = vpop.f32.mrb[0].mxu0
  %4204 = vdwg.mxu0
  %4205 = vmatprep.subr.bf16.mxu0 %v4103
  %4206 = vmatpush1.bf16.msra.mxu0 %v4102
  %4207 = vmatprep.subr.bf16.mxu0 %v4107
  %4208 = vmatpush1.bf16.msra.mxu0 %v4106
  %4209 = vmatprep.subr.bf16.mxu0 %v4111
  %4210 = vmatpush1.bf16.msra.mxu0 %v4110
  %4211 = vmatprep.subr.bf16.mxu0 %v4115
  %4212 = vmatpush1.bf16.msra.mxu0 %v4114
  %4213 = vmatprep.subr.bf16.mxu0 %v4119
  %4214 = vmatpush1.bf16.msra.mxu0 %v4118
  %4215 = vmatprep.subr.bf16.mxu0 %v4123
  %4216 = vmatpush1.bf16.msra.mxu0 %v4122
  %4217 = vmatprep.subr.bf16.mxu0 %v4127
  %4218 = vmatpush1.bf16.msra.mxu0 %v4126
  %4219 = vmatprep.subr.bf16.mxu0 %v4131
  %4220 = vmatpush1.bf16.msra.mxu0 %v4130
  %4221 = vmatprep.subr.bf16.mxu0 0
  %4222 = vmatpush1.bf16.msra.mxu0 0
  %4223 = vmatprep.subr.bf16.mxu0 0
  %4224 = vmatpush1.bf16.msra.mxu0 0
  %4225 = vmatprep.subr.bf16.mxu0 0
  %4226 = vmatpush1.bf16.msra.mxu0 0
  %4227 = vmatprep.subr.bf16.mxu0 0
  %4228 = vmatpush1.bf16.msra.mxu0 0
  %4229 = vmatprep.subr.bf16.mxu0 0
  %4230 = vmatpush1.bf16.msra.mxu0 0
  %4231 = vmatprep.subr.bf16.mxu0 0
  %4232 = vmatpush1.bf16.msra.mxu0 0
  %4233 = vmatprep.subr.bf16.mxu0 0
  %4234 = vmatpush1.bf16.msra.mxu0 0
  %4235 = vmatprep.subr.bf16.mxu0 0
  %4236 = vmatpush1.bf16.msra.mxu0 0
  %4237 = vmatprep.mubr.bf16.mxu0 0
  %4238 = vmatmul.mubr.bf16.gmra.mrb[0].mxu0 %v3971
  %v4239 = vpop.f32.mrb[0].mxu0
  %v4240 = vadd.f32 0.0, %v4239
  %v4241 = vpop.f32.mrb[0].mxu0
  %v4242 = vadd.f32 0.0, %v4241
  %v4243 = vpop.f32.mrb[0].mxu0
  %v4244 = vpop.f32.mrb[0].mxu0
  %4245 = vdwg.mxu0
  %v4246 = vadd.f32 %v3967, %v4199
  %v4247 = vadd.f32 %v3968, %v4201
  %v4248 = vadd.f32 %v3969, %v4240
  %v4249 = vadd.f32 %v3970, %v4242
  %v4250 = vxor.u32 %v4246, 2147483648
  %v4251 = vxor.u32 %v4247, 2147483648
  %v4252 = vxor.u32 %v4248, 2147483648
  %v4253 = vmul.f32 %v4250, 1.442695
  %v4254 = vpow.pop %v4253
  %v4255 = vmul.f32 %v4251, 1.442695
  %v4256 = vpow.pop %v4255
  %v4257 = vmul.f32 %v4252, 1.442695
  %v4258 = vpow.pop %v4257
  %v4259 = vadd.f32 %v4254, 1.0
  %v4260 = vadd.f32 %v4256, 1.0
  %v4261 = vadd.f32 %v4258, 1.0
  %v4262 = vrcp.pop %v4259
  %v4263 = vmul.f32 1.0, %v4262
  %v4264 = vrcp.pop %v4260
  %v4265 = vmul.f32 1.0, %v4264
  %v4266 = vrcp.pop %v4261
  %v4267 = vmul.f32 1.0, %v4266
  %v4268 = vtanh.pop %v4249
  %v4269 = vmul.f32 %v4265, %v3964
  %v4270 = vmul.f32 %v4263, %v4268
  %v4271 = vadd.f32 %v4269, %v4270
  %v4272 = vtanh.pop %v4271
  %v4273 = vmul.f32 %v4267, %v4272
  %v4274 = vpack.c.bf16 %v4273, %v4273
  %v4275 = vld [vmem:[%s5] sm:$0xff]
  %v4276 = vld [vmem:[%s5 + $0x8] sm:$0xff]
  %v4277 = vld [vmem:[%s5 + $0x10] sm:$0xff]
  %v4278 = vld [vmem:[%s5 + $0x18] sm:$0xff]
  %v4279 = vld [vmem:[%s5 + $0x20] sm:$0xff]
  %v4280 = vld [vmem:[%s5 + $0x28] sm:$0xff]
  %v4281 = vld [vmem:[%s5 + $0x30] sm:$0xff]
  %v4282 = vld [vmem:[%s5 + $0x38] sm:$0xff]
  %v4283 = vld [vmem:[%s5 + $0x40] sm:$0xff]
  %v4284 = vld [vmem:[%s5 + $0x48] sm:$0xff]
  %v4285 = vld [vmem:[%s5 + $0x50] sm:$0xff]
  %v4286 = vld [vmem:[%s5 + $0x58] sm:$0xff]
  %v4287 = vld [vmem:[%s5 + $0x60] sm:$0xff]
  %v4288 = vld [vmem:[%s5 + $0x68] sm:$0xff]
  %v4289 = vld [vmem:[%s5 + $0x70] sm:$0xff]
  %v4290 = vld [vmem:[%s5 + $0x78] sm:$0xff]
  %v4291 = vld [vmem:[%s5 + $0x80] sm:$0xff]
  %v4292 = vld [vmem:[%s5 + $0x88] sm:$0xff]
  %v4293 = vld [vmem:[%s5 + $0x90] sm:$0xff]
  %v4294 = vld [vmem:[%s5 + $0x98] sm:$0xff]
  %v4295 = vld [vmem:[%s5 + $0xa0] sm:$0xff]
  %v4296 = vld [vmem:[%s5 + $0xa8] sm:$0xff]
  %v4297 = vld [vmem:[%s5 + $0xb0] sm:$0xff]
  %v4298 = vld [vmem:[%s5 + $0xb8] sm:$0xff]
  %v4299 = vld [vmem:[%s5 + $0xc0] sm:$0xff]
  %v4300 = vld [vmem:[%s5 + $0xc8] sm:$0xff]
  %v4301 = vld [vmem:[%s5 + $0xd0] sm:$0xff]
  %v4302 = vld [vmem:[%s5 + $0xd8] sm:$0xff]
  %v4303 = vld [vmem:[%s5 + $0xe0] sm:$0xff]
  %v4304 = vld [vmem:[%s5 + $0xe8] sm:$0xff]
  %v4305 = vld [vmem:[%s5 + $0xf0] sm:$0xff]
  %v4306 = vld [vmem:[%s5 + $0xf8] sm:$0xff]
  %v4307 = vpack.c.bf16 %v3965, %v3965
  %v4308 = vld [vmem:[%s6] sm:$0xff]
  %v4309 = vld [vmem:[%s6 + $0x8] sm:$0xff]
  %v4310 = vld [vmem:[%s6 + $0x10] sm:$0xff]
  %v4311 = vld [vmem:[%s6 + $0x18] sm:$0xff]
  %v4312 = vld [vmem:[%s6 + $0x20] sm:$0xff]
  %v4313 = vld [vmem:[%s6 + $0x28] sm:$0xff]
  %v4314 = vld [vmem:[%s6 + $0x30] sm:$0xff]
  %v4315 = vld [vmem:[%s6 + $0x38] sm:$0xff]
  %v4316 = vld [vmem:[%s6 + $0x40] sm:$0xff]
  %v4317 = vld [vmem:[%s6 + $0x48] sm:$0xff]
  %v4318 = vld [vmem:[%s6 + $0x50] sm:$0xff]
  %v4319 = vld [vmem:[%s6 + $0x58] sm:$0xff]
  %v4320 = vld [vmem:[%s6 + $0x60] sm:$0xff]
  %v4321 = vld [vmem:[%s6 + $0x68] sm:$0xff]
  %v4322 = vld [vmem:[%s6 + $0x70] sm:$0xff]
  %v4323 = vld [vmem:[%s6 + $0x78] sm:$0xff]
  %v4324 = vld [vmem:[%s6 + $0x80] sm:$0xff]
  %v4325 = vld [vmem:[%s6 + $0x88] sm:$0xff]
  %v4326 = vld [vmem:[%s6 + $0x90] sm:$0xff]
  %v4327 = vld [vmem:[%s6 + $0x98] sm:$0xff]
  %v4328 = vld [vmem:[%s6 + $0xa0] sm:$0xff]
  %v4329 = vld [vmem:[%s6 + $0xa8] sm:$0xff]
  %v4330 = vld [vmem:[%s6 + $0xb0] sm:$0xff]
  %v4331 = vld [vmem:[%s6 + $0xb8] sm:$0xff]
  %v4332 = vld [vmem:[%s6 + $0xc0] sm:$0xff]
  %v4333 = vld [vmem:[%s6 + $0xc8] sm:$0xff]
  %v4334 = vld [vmem:[%s6 + $0xd0] sm:$0xff]
  %v4335 = vld [vmem:[%s6 + $0xd8] sm:$0xff]
  %v4336 = vld [vmem:[%s6 + $0xe0] sm:$0xff]
  %v4337 = vld [vmem:[%s6 + $0xe8] sm:$0xff]
  %v4338 = vld [vmem:[%s6 + $0xf0] sm:$0xff]
  %v4339 = vld [vmem:[%s6 + $0xf8] sm:$0xff]
  %v4372 = vunpack.c.l.b16 %v4308
  %v4373 = vunpack.c.h.b16 %v4308
  %v4374 = vunpack.c.l.b16 %v4309
  %v4375 = vunpack.c.h.b16 %v4309
  %v4376 = vunpack.c.l.b16 %v4310
  %v4377 = vunpack.c.h.b16 %v4310
  %v4378 = vunpack.c.l.b16 %v4311
  %v4379 = vunpack.c.h.b16 %v4311
  %v4380 = vunpack.c.l.b16 %v4312
  %v4381 = vunpack.c.h.b16 %v4312
  %v4382 = vunpack.c.l.b16 %v4313
  %v4383 = vunpack.c.h.b16 %v4313
  %v4384 = vunpack.c.l.b16 %v4314
  %v4385 = vunpack.c.h.b16 %v4314
  %v4386 = vunpack.c.l.b16 %v4315
  %v4387 = vunpack.c.h.b16 %v4315
  %v4388 = vunpack.c.l.b16 %v4316
  %v4389 = vunpack.c.h.b16 %v4316
  %v4390 = vunpack.c.l.b16 %v4317
  %v4391 = vunpack.c.h.b16 %v4317
  %v4392 = vunpack.c.l.b16 %v4318
  %v4393 = vunpack.c.h.b16 %v4318
  %v4394 = vunpack.c.l.b16 %v4319
  %v4395 = vunpack.c.h.b16 %v4319
  %v4396 = vunpack.c.l.b16 %v4320
  %v4397 = vunpack.c.h.b16 %v4320
  %v4398 = vunpack.c.l.b16 %v4321
  %v4399 = vunpack.c.h.b16 %v4321
  %v4400 = vunpack.c.l.b16 %v4322
  %v4401 = vunpack.c.h.b16 %v4322
  %v4402 = vunpack.c.l.b16 %v4323
  %v4403 = vunpack.c.h.b16 %v4323
  %v4404 = vunpack.c.l.b16 %v4324
  %v4405 = vunpack.c.h.b16 %v4324
  %v4406 = vunpack.c.l.b16 %v4325
  %v4407 = vunpack.c.h.b16 %v4325
  %v4408 = vunpack.c.l.b16 %v4326
  %v4409 = vunpack.c.h.b16 %v4326
  %v4410 = vunpack.c.l.b16 %v4327
  %v4411 = vunpack.c.h.b16 %v4327
  %v4412 = vunpack.c.l.b16 %v4328
  %v4413 = vunpack.c.h.b16 %v4328
  %v4414 = vunpack.c.l.b16 %v4329
  %v4415 = vunpack.c.h.b16 %v4329
  %v4416 = vunpack.c.l.b16 %v4330
  %v4417 = vunpack.c.h.b16 %v4330
  %v4418 = vunpack.c.l.b16 %v4331
  %v4419 = vunpack.c.h.b16 %v4331
  %v4420 = vunpack.c.l.b16 %v4332
  %v4421 = vunpack.c.h.b16 %v4332
  %v4422 = vunpack.c.l.b16 %v4333
  %v4423 = vunpack.c.h.b16 %v4333
  %v4424 = vunpack.c.l.b16 %v4334
  %v4425 = vunpack.c.h.b16 %v4334
  %v4426 = vunpack.c.l.b16 %v4335
  %v4427 = vunpack.c.h.b16 %v4335
  %v4428 = vunpack.c.l.b16 %v4336
  %v4429 = vunpack.c.h.b16 %v4336
  %v4430 = vunpack.c.l.b16 %v4337
  %v4431 = vunpack.c.h.b16 %v4337
  %v4432 = vunpack.c.l.b16 %v4338
  %v4433 = vunpack.c.h.b16 %v4338
  %v4434 = vunpack.c.l.b16 %v4339
  %v4435 = vunpack.c.h.b16 %v4339
  %v4436 = vpack.c.b16 %v4376, %v4372
  %v4437 = vpack.c.b16 %v4377, %v4373
  %v4438 = vpack.c.b16 %v4378, %v4374
  %v4439 = vpack.c.b16 %v4379, %v4375
  %v4440 = vpack.c.b16 %v4384, %v4380
  %v4441 = vpack.c.b16 %v4385, %v4381
  %v4442 = vpack.c.b16 %v4386, %v4382
  %v4443 = vpack.c.b16 %v4387, %v4383
  %v4444 = vpack.c.b16 %v4392, %v4388
  %v4445 = vpack.c.b16 %v4393, %v4389
  %v4446 = vpack.c.b16 %v4394, %v4390
  %v4447 = vpack.c.b16 %v4395, %v4391
  %v4448 = vpack.c.b16 %v4400, %v4396
  %v4449 = vpack.c.b16 %v4401, %v4397
  %v4450 = vpack.c.b16 %v4402, %v4398
  %v4451 = vpack.c.b16 %v4403, %v4399
  %v4452 = vpack.c.b16 %v4408, %v4404
  %v4453 = vpack.c.b16 %v4409, %v4405
  %v4454 = vpack.c.b16 %v4410, %v4406
  %v4455 = vpack.c.b16 %v4411, %v4407
  %v4456 = vpack.c.b16 %v4416, %v4412
  %v4457 = vpack.c.b16 %v4417, %v4413
  %v4458 = vpack.c.b16 %v4418, %v4414
  %v4459 = vpack.c.b16 %v4419, %v4415
  %v4460 = vpack.c.b16 %v4424, %v4420
  %v4461 = vpack.c.b16 %v4425, %v4421
  %v4462 = vpack.c.b16 %v4426, %v4422
  %v4463 = vpack.c.b16 %v4427, %v4423
  %v4464 = vpack.c.b16 %v4432, %v4428
  %v4465 = vpack.c.b16 %v4433, %v4429
  %v4466 = vpack.c.b16 %v4434, %v4430
  %v4467 = vpack.c.b16 %v4435, %v4431
  %4500 = vmatprep.subr.bf16.mxu0 %v4437
  %4501 = vmatpush1.bf16.msra.mxu0 %v4436
  %4502 = vmatprep.subr.bf16.mxu0 %v4441
  %4503 = vmatpush1.bf16.msra.mxu0 %v4440
  %4504 = vmatprep.subr.bf16.mxu0 %v4445
  %4505 = vmatpush1.bf16.msra.mxu0 %v4444
  %4506 = vmatprep.subr.bf16.mxu0 %v4449
  %4507 = vmatpush1.bf16.msra.mxu0 %v4448
  %4508 = vmatprep.subr.bf16.mxu0 %v4453
  %4509 = vmatpush1.bf16.msra.mxu0 %v4452
  %4510 = vmatprep.subr.bf16.mxu0 %v4457
  %4511 = vmatpush1.bf16.msra.mxu0 %v4456
  %4512 = vmatprep.subr.bf16.mxu0 %v4461
  %4513 = vmatpush1.bf16.msra.mxu0 %v4460
  %4514 = vmatprep.subr.bf16.mxu0 %v4465
  %4515 = vmatpush1.bf16.msra.mxu0 %v4464
  %4516 = vmatprep.subr.bf16.mxu0 0
  %4517 = vmatpush1.bf16.msra.mxu0 0
  %4518 = vmatprep.subr.bf16.mxu0 0
  %4519 = vmatpush1.bf16.msra.mxu0 0
  %4520 = vmatprep.subr.bf16.mxu0 0
  %4521 = vmatpush1.bf16.msra.mxu0 0
  %4522 = vmatprep.subr.bf16.mxu0 0
  %4523 = vmatpush1.bf16.msra.mxu0 0
  %4524 = vmatprep.subr.bf16.mxu0 0
  %4525 = vmatpush1.bf16.msra.mxu0 0
  %4526 = vmatprep.subr.bf16.mxu0 0
  %4527 = vmatpush1.bf16.msra.mxu0 0
  %4528 = vmatprep.subr.bf16.mxu0 0
  %4529 = vmatpush1.bf16.msra.mxu0 0
  %4530 = vmatprep.subr.bf16.mxu0 0
  %4531 = vmatpush1.bf16.msra.mxu0 0
  %4532 = vmatprep.mubr.bf16.mxu0 0
  %4533 = vmatmul.mubr.bf16.gmra.mrb[0].mxu0 %v4307
  %v4534 = vpop.f32.mrb[0].mxu0
  %v4535 = vadd.f32 0.0, %v4534
  %v4536 = vpop.f32.mrb[0].mxu0
  %v4537 = vadd.f32 0.0, %v4536
  %v4538 = vpop.f32.mrb[0].mxu0
  %v4539 = vpop.f32.mrb[0].mxu0
  %4540 = vdwg.mxu0
  %4541 = vmatprep.subr.bf16.mxu0 %v4439
  %4542 = vmatpush1.bf16.msra.mxu0 %v4438
  %4543 = vmatprep.subr.bf16.mxu0 %v4443
  %4544 = vmatpush1.bf16.msra.mxu0 %v4442
  %4545 = vmatprep.subr.bf16.mxu0 %v4447
  %4546 = vmatpush1.bf16.msra.mxu0 %v4446
  %4547 = vmatprep.subr.bf16.mxu0 %v4451
  %4548 = vmatpush1.bf16.msra.mxu0 %v4450
  %4549 = vmatprep.subr.bf16.mxu0 %v4455
  %4550 = vmatpush1.bf16.msra.mxu0 %v4454
  %4551 = vmatprep.subr.bf16.mxu0 %v4459
  %4552 = vmatpush1.bf16.msra.mxu0 %v4458
  %4553 = vmatprep.subr.bf16.mxu0 %v4463
  %4554 = vmatpush1.bf16.msra.mxu0 %v4462
  %4555 = vmatprep.subr.bf16.mxu0 %v4467
  %4556 = vmatpush1.bf16.msra.mxu0 %v4466
  %4557 = vmatprep.subr.bf16.mxu0 0
  %4558 = vmatpush1.bf16.msra.mxu0 0
  %4559 = vmatprep.subr.bf16.mxu0 0
  %4560 = vmatpush1.bf16.msra.mxu0 0
  %4561 = vmatprep.subr.bf16.mxu0 0
  %4562 = vmatpush1.bf16.msra.mxu0 0
  %4563 = vmatprep.subr.bf16.mxu0 0
  %4564 = vmatpush1.bf16.msra.mxu0 0
  %4565 = vmatprep.subr.bf16.mxu0 0
  %4566 = vmatpush1.bf16.msra.mxu0 0
  %4567 = vmatprep.subr.bf16.mxu0 0
  %4568 = vmatpush1.bf16.msra.mxu0 0
  %4569 = vmatprep.subr.bf16.mxu0 0
  %4570 = vmatpush1.bf16.msra.mxu0 0
  %4571 = vmatprep.subr.bf16.mxu0 0
  %4572 = vmatpush1.bf16.msra.mxu0 0
  %4573 = vmatprep.mubr.bf16.mxu0 0
  %4574 = vmatmul.mubr.bf16.gmra.mrb[0].mxu0 %v4307
  %v4575 = vpop.f32.mrb[0].mxu0
  %v4576 = vadd.f32 0.0, %v4575
  %v4577 = vpop.f32.mrb[0].mxu0
  %v4578 = vadd.f32 0.0, %v4577
  %v4579 = vpop.f32.mrb[0].mxu0
  %v4580 = vpop.f32.mrb[0].mxu0
  %4581 = vdwg.mxu0
  %v4614 = vunpack.c.l.b16 %v4275
  %v4615 = vunpack.c.h.b16 %v4275
  %v4616 = vunpack.c.l.b16 %v4276
  %v4617 = vunpack.c.h.b16 %v4276
  %v4618 = vunpack.c.l.b16 %v4277
  %v4619 = vunpack.c.h.b16 %v4277
  %v4620 = vunpack.c.l.b16 %v4278
  %v4621 = vunpack.c.h.b16 %v4278
  %v4622 = vunpack.c.l.b16 %v4279
  %v4623 = vunpack.c.h.b16 %v4279
  %v4624 = vunpack.c.l.b16 %v4280
  %v4625 = vunpack.c.h.b16 %v4280
  %v4626 = vunpack.c.l.b16 %v4281
  %v4627 = vunpack.c.h.b16 %v4281
  %v4628 = vunpack.c.l.b16 %v4282
  %v4629 = vunpack.c.h.b16 %v4282
  %v4630 = vunpack.c.l.b16 %v4283
  %v4631 = vunpack.c.h.b16 %v4283
  %v4632 = vunpack.c.l.b16 %v4284
  %v4633 = vunpack.c.h.b16 %v4284
  %v4634 = vunpack.c.l.b16 %v4285
  %v4635 = vunpack.c.h.b16 %v4285
  %v4636 = vunpack.c.l.b16 %v4286
  %v4637 = vunpack.c.h.b16 %v4286
  %v4638 = vunpack.c.l.b16 %v4287
  %v4639 = vunpack.c.h.b16 %v4287
  %v4640 = vunpack.c.l.b16 %v4288
  %v4641 = vunpack.c.h.b16 %v4288
  %v4642 = vunpack.c.l.b16 %v4289
  %v4643 = vunpack.c.h.b16 %v4289
  %v4644 = vunpack.c.l.b16 %v4290
  %v4645 = vunpack.c.h.b16 %v4290
  %v4646 = vunpack.c.l.b16 %v4291
  %v4647 = vunpack.c.h.b16 %v4291
  %v4648 = vunpack.c.l.b16 %v4292
  %v4649 = vunpack.c.h.b16 %v4292
  %v4650 = vunpack.c.l.b16 %v4293
  %v4651 = vunpack.c.h.b16 %v4293
  %v4652 = vunpack.c.l.b16 %v4294
  %v4653 = vunpack.c.h.b16 %v4294
  %v4654 = vunpack.c.l.b16 %v4295
  %v4655 = vunpack.c.h.b16 %v4295
  %v4656 = vunpack.c.l.b16 %v4296
  %v4657 = vunpack.c.h.b16 %v4296
  %v4658 = vunpack.c.l.b16 %v4297
  %v4659 = vunpack.c.h.b16 %v4297
  %v4660 = vunpack.c.l.b16 %v4298
  %v4661 = vunpack.c.h.b16 %v4298
  %v4662 = vunpack.c.l.b16 %v4299
  %v4663 = vunpack.c.h.b16 %v4299
  %v4664 = vunpack.c.l.b16 %v4300
  %v4665 = vunpack.c.h.b16 %v4300
  %v4666 = vunpack.c.l.b16 %v4301
  %v4667 = vunpack.c.h.b16 %v4301
  %v4668 = vunpack.c.l.b16 %v4302
  %v4669 = vunpack.c.h.b16 %v4302
  %v4670 = vunpack.c.l.b16 %v4303
  %v4671 = vunpack.c.h.b16 %v4303
  %v4672 = vunpack.c.l.b16 %v4304
  %v4673 = vunpack.c.h.b16 %v4304
  %v4674 = vunpack.c.l.b16 %v4305
  %v4675 = vunpack.c.h.b16 %v4305
  %v4676 = vunpack.c.l.b16 %v4306
  %v4677 = vunpack.c.h.b16 %v4306
  %v4678 = vpack.c.b16 %v4618, %v4614
  %v4679 = vpack.c.b16 %v4619, %v4615
  %v4680 = vpack.c.b16 %v4620, %v4616
  %v4681 = vpack.c.b16 %v4621, %v4617
  %v4682 = vpack.c.b16 %v4626, %v4622
  %v4683 = vpack.c.b16 %v4627, %v4623
  %v4684 = vpack.c.b16 %v4628, %v4624
  %v4685 = vpack.c.b16 %v4629, %v4625
  %v4686 = vpack.c.b16 %v4634, %v4630
  %v4687 = vpack.c.b16 %v4635, %v4631
  %v4688 = vpack.c.b16 %v4636, %v4632
  %v4689 = vpack.c.b16 %v4637, %v4633
  %v4690 = vpack.c.b16 %v4642, %v4638
  %v4691 = vpack.c.b16 %v4643, %v4639
  %v4692 = vpack.c.b16 %v4644, %v4640
  %v4693 = vpack.c.b16 %v4645, %v4641
  %v4694 = vpack.c.b16 %v4650, %v4646
  %v4695 = vpack.c.b16 %v4651, %v4647
  %v4696 = vpack.c.b16 %v4652, %v4648
  %v4697 = vpack.c.b16 %v4653, %v4649
  %v4698 = vpack.c.b16 %v4658, %v4654
  %v4699 = vpack.c.b16 %v4659, %v4655
  %v4700 = vpack.c.b16 %v4660, %v4656
  %v4701 = vpack.c.b16 %v4661, %v4657
  %v4702 = vpack.c.b16 %v4666, %v4662
  %v4703 = vpack.c.b16 %v4667, %v4663
  %v4704 = vpack.c.b16 %v4668, %v4664
  %v4705 = vpack.c.b16 %v4669, %v4665
  %v4706 = vpack.c.b16 %v4674, %v4670
  %v4707 = vpack.c.b16 %v4675, %v4671
  %v4708 = vpack.c.b16 %v4676, %v4672
  %v4709 = vpack.c.b16 %v4677, %v4673
  %4742 = vmatprep.subr.bf16.mxu0 %v4679
  %4743 = vmatpush1.bf16.msra.mxu0 %v4678
  %4744 = vmatprep.subr.bf16.mxu0 %v4683
  %4745 = vmatpush1.bf16.msra.mxu0 %v4682
  %4746 = vmatprep.subr.bf16.mxu0 %v4687
  %4747 = vmatpush1.bf16.msra.mxu0 %v4686
  %4748 = vmatprep.subr.bf16.mxu0 %v4691
  %4749 = vmatpush1.bf16.msra.mxu0 %v4690
  %4750 = vmatprep.subr.bf16.mxu0 %v4695
  %4751 = vmatpush1.bf16.msra.mxu0 %v4694
  %4752 = vmatprep.subr.bf16.mxu0 %v4699
  %4753 = vmatpush1.bf16.msra.mxu0 %v4698
  %4754 = vmatprep.subr.bf16.mxu0 %v4703
  %4755 = vmatpush1.bf16.msra.mxu0 %v4702
  %4756 = vmatprep.subr.bf16.mxu0 %v4707
  %4757 = vmatpush1.bf16.msra.mxu0 %v4706
  %4758 = vmatprep.subr.bf16.mxu0 0
  %4759 = vmatpush1.bf16.msra.mxu0 0
  %4760 = vmatprep.subr.bf16.mxu0 0
  %4761 = vmatpush1.bf16.msra.mxu0 0
  %4762 = vmatprep.subr.bf16.mxu0 0
  %4763 = vmatpush1.bf16.msra.mxu0 0
  %4764 = vmatprep.subr.bf16.mxu0 0
  %4765 = vmatpush1.bf16.msra.mxu0 0
  %4766 = vmatprep.subr.bf16.mxu0 0
  %4767 = vmatpush1.bf16.msra.mxu0 0
  %4768 = vmatprep.subr.bf16.mxu0 0
  %4769 = vmatpush1.bf16.msra.mxu0 0
  %4770 = vmatprep.subr.bf16.mxu0 0
  %4771 = vmatpush1.bf16.msra.mxu0 0
  %4772 = vmatprep.subr.bf16.mxu0 0
  %4773 = vmatpush1.bf16.msra.mxu0 0
  %4774 = vmatprep.mubr.bf16.mxu0 0
  %4775 = vmatmul.mubr.bf16.gmra.mrb[0].mxu0 %v4274
  %v4776 = vpop.f32.mrb[0].mxu0
  %v4777 = vadd.f32 %v4535, %v4776
  %v4778 = vpop.f32.mrb[0].mxu0
  %v4779 = vadd.f32 %v4537, %v4778
  %v4780 = vpop.f32.mrb[0].mxu0
  %v4781 = vpop.f32.mrb[0].mxu0
  %4782 = vdwg.mxu0
  %4783 = vmatprep.subr.bf16.mxu0 %v4681
  %4784 = vmatpush1.bf16.msra.mxu0 %v4680
  %4785 = vmatprep.subr.bf16.mxu0 %v4685
  %4786 = vmatpush1.bf16.msra.mxu0 %v4684
  %4787 = vmatprep.subr.bf16.mxu0 %v4689
  %4788 = vmatpush1.bf16.msra.mxu0 %v4688
  %4789 = vmatprep.subr.bf16.mxu0 %v4693
  %4790 = vmatpush1.bf16.msra.mxu0 %v4692
  %4791 = vmatprep.subr.bf16.mxu0 %v4697
  %4792 = vmatpush1.bf16.msra.mxu0 %v4696
  %4793 = vmatprep.subr.bf16.mxu0 %v4701
  %4794 = vmatpush1.bf16.msra.mxu0 %v4700
  %4795 = vmatprep.subr.bf16.mxu0 %v4705
  %4796 = vmatpush1.bf16.msra.mxu0 %v4704
  %4797 = vmatprep.subr.bf16.mxu0 %v4709
  %4798 = vmatpush1.bf16.msra.mxu0 %v4708
  %4799 = vmatprep.subr.bf16.mxu0 0
  %4800 = vmatpush1.bf16.msra.mxu0 0
  %4801 = vmatprep.subr.bf16.mxu0 0
  %4802 = vmatpush1.bf16.msra.mxu0 0
  %4803 = vmatprep.subr.bf16.mxu0 0
  %4804 = vmatpush1.bf16.msra.mxu0 0
  %4805 = vmatprep.subr.bf16.mxu0 0
  %4806 = vmatpush1.bf16.msra.mxu0 0
  %4807 = vmatprep.subr.bf16.mxu0 0
  %4808 = vmatpush1.bf16.msra.mxu0 0
  %4809 = vmatprep.subr.bf16.mxu0 0
  %4810 = vmatpush1.bf16.msra.mxu0 0
  %4811 = vmatprep.subr.bf16.mxu0 0
  %4812 = vmatpush1.bf16.msra.mxu0 0
  %4813 = vmatprep.subr.bf16.mxu0 0
  %4814 = vmatpush1.bf16.msra.mxu0 0
  %4815 = vmatprep.mubr.bf16.mxu0 0
  %4816 = vmatmul.mubr.bf16.gmra.mrb[0].mxu0 %v4274
  %v4817 = vpop.f32.mrb[0].mxu0
  %v4818 = vadd.f32 %v4576, %v4817
  %v4819 = vpop.f32.mrb[0].mxu0
  %v4820 = vadd.f32 %v4578, %v4819
  %v4821 = vpop.f32.mrb[0].mxu0
  %v4822 = vpop.f32.mrb[0].mxu0
  %4823 = vdwg.mxu0
  %v4824 = vld [vmem:[%s7] sm:$0xf]
  %v4826 = vlaneseq
  %v4827 = vshrl.u32 %v4826, 7
  %v4828 = vsub.s32 0, %v4827
  %v4829 = vrot.slane %v4824, %v4828
  %v4830 = vlaneseq
  %v4831 = vshrl.u32 %v4830, 7
  %v4832 = vsub.s32 1, %v4831
  %v4833 = vrot.slane %v4824, %v4832
  %v4834 = vlaneseq
  %v4835 = vshrl.u32 %v4834, 7
  %v4836 = vsub.s32 2, %v4835
  %v4837 = vrot.slane %v4824, %v4836
  %v4838 = vlaneseq
  %v4839 = vshrl.u32 %v4838, 7
  %v4840 = vsub.s32 3, %v4839
  %v4841 = vrot.slane %v4824, %v4840
  %v4846 = vadd.f32 %v4777, %v4829
  %v4847 = vadd.f32 %v4779, %v4833
  %v4848 = vadd.f32 %v4818, %v4837
  %v4849 = vadd.f32 %v4820, %v4841
  %v4850 = vxor.u32 %v4846, 2147483648
  %v4851 = vxor.u32 %v4847, 2147483648
  %v4852 = vxor.u32 %v4848, 2147483648
  %v4853 = vmul.f32 %v4850, 1.442695
  %v4854 = vpow.pop %v4853
  %v4855 = vmul.f32 %v4851, 1.442695
  %v4856 = vpow.pop %v4855
  %v4857 = vmul.f32 %v4852, 1.442695
  %v4858 = vpow.pop %v4857
  %v4859 = vadd.f32 %v4854, 1.0
  %v4860 = vadd.f32 %v4856, 1.0
  %v4861 = vadd.f32 %v4858, 1.0
  %v4862 = vrcp.pop %v4859
  %v4863 = vmul.f32 1.0, %v4862
  %v4864 = vrcp.pop %v4860
  %v4865 = vmul.f32 1.0, %v4864
  %v4866 = vrcp.pop %v4861
  %v4867 = vmul.f32 1.0, %v4866
  %v4868 = vtanh.pop %v4849
  %v4869 = vmul.f32 %v4865, %v3966
  %v4870 = vmul.f32 %v4863, %v4868
  %v4871 = vadd.f32 %v4869, %v4870
  %v4872 = vtanh.pop %v4871
  %v4873 = vmul.f32 %v4867, %v4872
  %4874 = vst [vmem:[#allocation2] sm:$0xff] %v4273
  %4875 = vst [vmem:[#allocation2 + $0x8] sm:$0xff] %v4271
  %4876 = vst [vmem:[#allocation2 + $0x10] sm:$0xff] %v4873
  %4877 = vst [vmem:[#allocation2 + $0x18] sm:$0xff] %v4871
  %4878 = vst [vmem:[#allocation4 + $0x20] sm:$0xff] %v4873
  %v4879 = vld [vmem:[#allocation2] sm:$0xff]
  %v4880 = vld [vmem:[#allocation2 + $0x8] sm:$0xff]
  %v4881 = vld [vmem:[#allocation2 + $0x10] sm:$0xff]
  %v4882 = vld [vmem:[#allocation2 + $0x18] sm:$0xff]
  %v4883 = vld [vmem:[#allocation3 + $0xa0] sm:$0xff]
  %v4884 = vld [vmem:[#allocation3 + $0xa8] sm:$0xff]
  %v4885 = vld [vmem:[#allocation3 + $0xb0] sm:$0xff]
  %v4886 = vld [vmem:[#allocation3 + $0xb8] sm:$0xff]
  %v4887 = vpack.c.bf16 %v4879, %v4879
  %v4888 = vld [vmem:[%s4] sm:$0xff]
  %v4889 = vld [vmem:[%s4 + $0x8] sm:$0xff]
  %v4890 = vld [vmem:[%s4 + $0x10] sm:$0xff]
  %v4891 = vld [vmem:[%s4 + $0x18] sm:$0xff]
  %v4892 = vld [vmem:[%s4 + $0x20] sm:$0xff]
  %v4893 = vld [vmem:[%s4 + $0x28] sm:$0xff]
  %v4894 = vld [vmem:[%s4 + $0x30] sm:$0xff]
  %v4895 = vld [vmem:[%s4 + $0x38] sm:$0xff]
  %v4896 = vld [vmem:[%s4 + $0x40] sm:$0xff]
  %v4897 = vld [vmem:[%s4 + $0x48] sm:$0xff]
  %v4898 = vld [vmem:[%s4 + $0x50] sm:$0xff]
  %v4899 = vld [vmem:[%s4 + $0x58] sm:$0xff]
  %v4900 = vld [vmem:[%s4 + $0x60] sm:$0xff]
  %v4901 = vld [vmem:[%s4 + $0x68] sm:$0xff]
  %v4902 = vld [vmem:[%s4 + $0x70] sm:$0xff]
  %v4903 = vld [vmem:[%s4 + $0x78] sm:$0xff]
  %v4904 = vld [vmem:[%s4 + $0x80] sm:$0xff]
  %v4905 = vld [vmem:[%s4 + $0x88] sm:$0xff]
  %v4906 = vld [vmem:[%s4 + $0x90] sm:$0xff]
  %v4907 = vld [vmem:[%s4 + $0x98] sm:$0xff]
  %v4908 = vld [vmem:[%s4 + $0xa0] sm:$0xff]
  %v4909 = vld [vmem:[%s4 + $0xa8] sm:$0xff]
  %v4910 = vld [vmem:[%s4 + $0xb0] sm:$0xff]
  %v4911 = vld [vmem:[%s4 + $0xb8] sm:$0xff]
  %v4912 = vld [vmem:[%s4 + $0xc0] sm:$0xff]
  %v4913 = vld [vmem:[%s4 + $0xc8] sm:$0xff]
  %v4914 = vld [vmem:[%s4 + $0xd0] sm:$0xff]
  %v4915 = vld [vmem:[%s4 + $0xd8] sm:$0xff]
  %v4916 = vld [vmem:[%s4 + $0xe0] sm:$0xff]
  %v4917 = vld [vmem:[%s4 + $0xe8] sm:$0xff]
  %v4918 = vld [vmem:[%s4 + $0xf0] sm:$0xff]
  %v4919 = vld [vmem:[%s4 + $0xf8] sm:$0xff]
  %v4952 = vunpack.c.l.b16 %v4888
  %v4953 = vunpack.c.h.b16 %v4888
  %v4954 = vunpack.c.l.b16 %v4889
  %v4955 = vunpack.c.h.b16 %v4889
  %v4956 = vunpack.c.l.b16 %v4890
  %v4957 = vunpack.c.h.b16 %v4890
  %v4958 = vunpack.c.l.b16 %v4891
  %v4959 = vunpack.c.h.b16 %v4891
  %v4960 = vunpack.c.l.b16 %v4892
  %v4961 = vunpack.c.h.b16 %v4892
  %v4962 = vunpack.c.l.b16 %v4893
  %v4963 = vunpack.c.h.b16 %v4893
  %v4964 = vunpack.c.l.b16 %v4894
  %v4965 = vunpack.c.h.b16 %v4894
  %v4966 = vunpack.c.l.b16 %v4895
  %v4967 = vunpack.c.h.b16 %v4895
  %v4968 = vunpack.c.l.b16 %v4896
  %v4969 = vunpack.c.h.b16 %v4896
  %v4970 = vunpack.c.l.b16 %v4897
  %v4971 = vunpack.c.h.b16 %v4897
  %v4972 = vunpack.c.l.b16 %v4898
  %v4973 = vunpack.c.h.b16 %v4898
  %v4974 = vunpack.c.l.b16 %v4899
  %v4975 = vunpack.c.h.b16 %v4899
  %v4976 = vunpack.c.l.b16 %v4900
  %v4977 = vunpack.c.h.b16 %v4900
  %v4978 = vunpack.c.l.b16 %v4901
  %v4979 = vunpack.c.h.b16 %v4901
  %v4980 = vunpack.c.l.b16 %v4902
  %v4981 = vunpack.c.h.b16 %v4902
  %v4982 = vunpack.c.l.b16 %v4903
  %v4983 = vunpack.c.h.b16 %v4903
  %v4984 = vunpack.c.l.b16 %v4904
  %v4985 = vunpack.c.h.b16 %v4904
  %v4986 = vunpack.c.l.b16 %v4905
  %v4987 = vunpack.c.h.b16 %v4905
  %v4988 = vunpack.c.l.b16 %v4906
  %v4989 = vunpack.c.h.b16 %v4906
  %v4990 = vunpack.c.l.b16 %v4907
  %v4991 = vunpack.c.h.b16 %v4907
  %v4992 = vunpack.c.l.b16 %v4908
  %v4993 = vunpack.c.h.b16 %v4908
  %v4994 = vunpack.c.l.b16 %v4909
  %v4995 = vunpack.c.h.b16 %v4909
  %v4996 = vunpack.c.l.b16 %v4910
  %v4997 = vunpack.c.h.b16 %v4910
  %v4998 = vunpack.c.l.b16 %v4911
  %v4999 = vunpack.c.h.b16 %v4911
  %v5000 = vunpack.c.l.b16 %v4912
  %v5001 = vunpack.c.h.b16 %v4912
  %v5002 = vunpack.c.l.b16 %v4913
  %v5003 = vunpack.c.h.b16 %v4913
  %v5004 = vunpack.c.l.b16 %v4914
  %v5005 = vunpack.c.h.b16 %v4914
  %v5006 = vunpack.c.l.b16 %v4915
  %v5007 = vunpack.c.h.b16 %v4915
  %v5008 = vunpack.c.l.b16 %v4916
  %v5009 = vunpack.c.h.b16 %v4916
  %v5010 = vunpack.c.l.b16 %v4917
  %v5011 = vunpack.c.h.b16 %v4917
  %v5012 = vunpack.c.l.b16 %v4918
  %v5013 = vunpack.c.h.b16 %v4918
  %v5014 = vunpack.c.l.b16 %v4919
  %v5015 = vunpack.c.h.b16 %v4919
  %v5016 = vpack.c.b16 %v4956, %v4952
  %v5017 = vpack.c.b16 %v4957, %v4953
  %v5018 = vpack.c.b16 %v4958, %v4954
  %v5019 = vpack.c.b16 %v4959, %v4955
  %v5020 = vpack.c.b16 %v4964, %v4960
  %v5021 = vpack.c.b16 %v4965, %v4961
  %v5022 = vpack.c.b16 %v4966, %v4962
  %v5023 = vpack.c.b16 %v4967, %v4963
  %v5024 = vpack.c.b16 %v4972, %v4968
  %v5025 = vpack.c.b16 %v4973, %v4969
  %v5026 = vpack.c.b16 %v4974, %v4970
  %v5027 = vpack.c.b16 %v4975, %v4971
  %v5028 = vpack.c.b16 %v4980, %v4976
  %v5029 = vpack.c.b16 %v4981, %v4977
  %v5030 = vpack.c.b16 %v4982, %v4978
  %v5031 = vpack.c.b16 %v4983, %v4979
  %v5032 = vpack.c.b16 %v4988, %v4984
  %v5033 = vpack.c.b16 %v4989, %v4985
  %v5034 = vpack.c.b16 %v4990, %v4986
  %v5035 = vpack.c.b16 %v4991, %v4987
  %v5036 = vpack.c.b16 %v4996, %v4992
  %v5037 = vpack.c.b16 %v4997, %v4993
  %v5038 = vpack.c.b16 %v4998, %v4994
  %v5039 = vpack.c.b16 %v4999, %v4995
  %v5040 = vpack.c.b16 %v5004, %v5000
  %v5041 = vpack.c.b16 %v5005, %v5001
  %v5042 = vpack.c.b16 %v5006, %v5002
  %v5043 = vpack.c.b16 %v5007, %v5003
  %v5044 = vpack.c.b16 %v5012, %v5008
  %v5045 = vpack.c.b16 %v5013, %v5009
  %v5046 = vpack.c.b16 %v5014, %v5010
  %v5047 = vpack.c.b16 %v5015, %v5011
  %5080 = vmatprep.subr.bf16.mxu0 %v5017
  %5081 = vmatpush1.bf16.msra.mxu0 %v5016
  %5082 = vmatprep.subr.bf16.mxu0 %v5021
  %5083 = vmatpush1.bf16.msra.mxu0 %v5020
  %5084 = vmatprep.subr.bf16.mxu0 %v5025
  %5085 = vmatpush1.bf16.msra.mxu0 %v5024
  %5086 = vmatprep.subr.bf16.mxu0 %v5029
  %5087 = vmatpush1.bf16.msra.mxu0 %v5028
  %5088 = vmatprep.subr.bf16.mxu0 %v5033
  %5089 = vmatpush1.bf16.msra.mxu0 %v5032
  %5090 = vmatprep.subr.bf16.mxu0 %v5037
  %5091 = vmatpush1.bf16.msra.mxu0 %v5036
  %5092 = vmatprep.subr.bf16.mxu0 %v5041
  %5093 = vmatpush1.bf16.msra.mxu0 %v5040
  %5094 = vmatprep.subr.bf16.mxu0 %v5045
  %5095 = vmatpush1.bf16.msra.mxu0 %v5044
  %5096 = vmatprep.subr.bf16.mxu0 0
  %5097 = vmatpush1.bf16.msra.mxu0 0
  %5098 = vmatprep.subr.bf16.mxu0 0
  %5099 = vmatpush1.bf16.msra.mxu0 0
  %5100 = vmatprep.subr.bf16.mxu0 0
  %5101 = vmatpush1.bf16.msra.mxu0 0
  %5102 = vmatprep.subr.bf16.mxu0 0
  %5103 = vmatpush1.bf16.msra.mxu0 0
  %5104 = vmatprep.subr.bf16.mxu0 0
  %5105 = vmatpush1.bf16.msra.mxu0 0
  %5106 = vmatprep.subr.bf16.mxu0 0
  %5107 = vmatpush1.bf16.msra.mxu0 0
  %5108 = vmatprep.subr.bf16.mxu0 0
  %5109 = vmatpush1.bf16.msra.mxu0 0
  %5110 = vmatprep.subr.bf16.mxu0 0
  %5111 = vmatpush1.bf16.msra.mxu0 0
  %5112 = vmatprep.mubr.bf16.mxu0 0
  %5113 = vmatmul.mubr.bf16.gmra.mrb[0].mxu0 %v4887
  %v5114 = vpop.f32.mrb[0].mxu0
  %v5115 = vadd.f32 0.0, %v5114
  %v5116 = vpop.f32.mrb[0].mxu0
  %v5117 = vadd.f32 0.0, %v5116
  %v5118 = vpop.f32.mrb[0].mxu0
  %v5119 = vpop.f32.mrb[0].mxu0
  %5120 = vdwg.mxu0
  %5121 = vmatprep.subr.bf16.mxu0 %v5019
  %5122 = vmatpush1.bf16.msra.mxu0 %v5018
  %5123 = vmatprep.subr.bf16.mxu0 %v5023
  %5124 = vmatpush1.bf16.msra.mxu0 %v5022
  %5125 = vmatprep.subr.bf16.mxu0 %v5027
  %5126 = vmatpush1.bf16.msra.mxu0 %v5026
  %5127 = vmatprep.subr.bf16.mxu0 %v5031
  %5128 = vmatpush1.bf16.msra.mxu0 %v5030
  %5129 = vmatprep.subr.bf16.mxu0 %v5035
  %5130 = vmatpush1.bf16.msra.mxu0 %v5034
  %5131 = vmatprep.subr.bf16.mxu0 %v5039
  %5132 = vmatpush1.bf16.msra.mxu0 %v5038
  %5133 = vmatprep.subr.bf16.mxu0 %v5043
  %5134 = vmatpush1.bf16.msra.mxu0 %v5042
  %5135 = vmatprep.subr.bf16.mxu0 %v5047
  %5136 = vmatpush1.bf16.msra.mxu0 %v5046
  %5137 = vmatprep.subr.bf16.mxu0 0
  %5138 = vmatpush1.bf16.msra.mxu0 0
  %5139 = vmatprep.subr.bf16.mxu0 0
  %5140 = vmatpush1.bf16.msra.mxu0 0
  %5141 = vmatprep.subr.bf16.mxu0 0
  %5142 = vmatpush1.bf16.msra.mxu0 0
  %5143 = vmatprep.subr.bf16.mxu0 0
  %5144 = vmatpush1.bf16.msra.mxu0 0
  %5145 = vmatprep.subr.bf16.mxu0 0
  %5146 = vmatpush1.bf16.msra.mxu0 0
  %5147 = vmatprep.subr.bf16.mxu0 0
  %5148 = vmatpush1.bf16.msra.mxu0 0
  %5149 = vmatprep.subr.bf16.mxu0 0
  %5150 = vmatpush1.bf16.msra.mxu0 0
  %5151 = vmatprep.subr.bf16.mxu0 0
  %5152 = vmatpush1.bf16.msra.mxu0 0
  %5153 = vmatprep.mubr.bf16.mxu0 0
  %5154 = vmatmul.mubr.bf16.gmra.mrb[0].mxu0 %v4887
  %v5155 = vpop.f32.mrb[0].mxu0
  %v5156 = vadd.f32 0.0, %v5155
  %v5157 = vpop.f32.mrb[0].mxu0
  %v5158 = vadd.f32 0.0, %v5157
  %v5159 = vpop.f32.mrb[0].mxu0
  %v5160 = vpop.f32.mrb[0].mxu0
  %5161 = vdwg.mxu0
  %v5162 = vadd.f32 %v4883, %v5115
  %v5163 = vadd.f32 %v4884, %v5117
  %v5164 = vadd.f32 %v4885, %v5156
  %v5165 = vadd.f32 %v4886, %v5158
  %v5166 = vxor.u32 %v5162, 2147483648
  %v5167 = vxor.u32 %v5163, 2147483648
  %v5168 = vxor.u32 %v5164, 2147483648
  %v5169 = vmul.f32 %v5166, 1.442695
  %v5170 = vpow.pop %v5169
  %v5171 = vmul.f32 %v5167, 1.442695
  %v5172 = vpow.pop %v5171
  %v5173 = vmul.f32 %v5168, 1.442695
  %v5174 = vpow.pop %v5173
  %v5175 = vadd.f32 %v5170, 1.0
  %v5176 = vadd.f32 %v5172, 1.0
  %v5177 = vadd.f32 %v5174, 1.0
  %v5178 = vrcp.pop %v5175
  %v5179 = vmul.f32 1.0, %v5178
  %v5180 = vrcp.pop %v5176
  %v5181 = vmul.f32 1.0, %v5180
  %v5182 = vrcp.pop %v5177
  %v5183 = vmul.f32 1.0, %v5182
  %v5184 = vtanh.pop %v5165
  %v5185 = vmul.f32 %v5181, %v4880
  %v5186 = vmul.f32 %v5179, %v5184
  %v5187 = vadd.f32 %v5185, %v5186
  %v5188 = vtanh.pop %v5187
  %v5189 = vmul.f32 %v5183, %v5188
  %v5190 = vpack.c.bf16 %v5189, %v5189
  %v5191 = vld [vmem:[%s5] sm:$0xff]
  %v5192 = vld [vmem:[%s5 + $0x8] sm:$0xff]
  %v5193 = vld [vmem:[%s5 + $0x10] sm:$0xff]
  %v5194 = vld [vmem:[%s5 + $0x18] sm:$0xff]
  %v5195 = vld [vmem:[%s5 + $0x20] sm:$0xff]
  %v5196 = vld [vmem:[%s5 + $0x28] sm:$0xff]
  %v5197 = vld [vmem:[%s5 + $0x30] sm:$0xff]
  %v5198 = vld [vmem:[%s5 + $0x38] sm:$0xff]
  %v5199 = vld [vmem:[%s5 + $0x40] sm:$0xff]
  %v5200 = vld [vmem:[%s5 + $0x48] sm:$0xff]
  %v5201 = vld [vmem:[%s5 + $0x50] sm:$0xff]
  %v5202 = vld [vmem:[%s5 + $0x58] sm:$0xff]
  %v5203 = vld [vmem:[%s5 + $0x60] sm:$0xff]
  %v5204 = vld [vmem:[%s5 + $0x68] sm:$0xff]
  %v5205 = vld [vmem:[%s5 + $0x70] sm:$0xff]
  %v5206 = vld [vmem:[%s5 + $0x78] sm:$0xff]
  %v5207 = vld [vmem:[%s5 + $0x80] sm:$0xff]
  %v5208 = vld [vmem:[%s5 + $0x88] sm:$0xff]
  %v5209 = vld [vmem:[%s5 + $0x90] sm:$0xff]
  %v5210 = vld [vmem:[%s5 + $0x98] sm:$0xff]
  %v5211 = vld [vmem:[%s5 + $0xa0] sm:$0xff]
  %v5212 = vld [vmem:[%s5 + $0xa8] sm:$0xff]
  %v5213 = vld [vmem:[%s5 + $0xb0] sm:$0xff]
  %v5214 = vld [vmem:[%s5 + $0xb8] sm:$0xff]
  %v5215 = vld [vmem:[%s5 + $0xc0] sm:$0xff]
  %v5216 = vld [vmem:[%s5 + $0xc8] sm:$0xff]
  %v5217 = vld [vmem:[%s5 + $0xd0] sm:$0xff]
  %v5218 = vld [vmem:[%s5 + $0xd8] sm:$0xff]
  %v5219 = vld [vmem:[%s5 + $0xe0] sm:$0xff]
  %v5220 = vld [vmem:[%s5 + $0xe8] sm:$0xff]
  %v5221 = vld [vmem:[%s5 + $0xf0] sm:$0xff]
  %v5222 = vld [vmem:[%s5 + $0xf8] sm:$0xff]
  %v5223 = vpack.c.bf16 %v4881, %v4881
  %v5224 = vld [vmem:[%s6] sm:$0xff]
  %v5225 = vld [vmem:[%s6 + $0x8] sm:$0xff]
  %v5226 = vld [vmem:[%s6 + $0x10] sm:$0xff]
  %v5227 = vld [vmem:[%s6 + $0x18] sm:$0xff]
  %v5228 = vld [vmem:[%s6 + $0x20] sm:$0xff]
  %v5229 = vld [vmem:[%s6 + $0x28] sm:$0xff]
  %v5230 = vld [vmem:[%s6 + $0x30] sm:$0xff]
  %v5231 = vld [vmem:[%s6 + $0x38] sm:$0xff]
  %v5232 = vld [vmem:[%s6 + $0x40] sm:$0xff]
  %v5233 = vld [vmem:[%s6 + $0x48] sm:$0xff]
  %v5234 = vld [vmem:[%s6 + $0x50] sm:$0xff]
  %v5235 = vld [vmem:[%s6 + $0x58] sm:$0xff]
  %v5236 = vld [vmem:[%s6 + $0x60] sm:$0xff]
  %v5237 = vld [vmem:[%s6 + $0x68] sm:$0xff]
  %v5238 = vld [vmem:[%s6 + $0x70] sm:$0xff]
  %v5239 = vld [vmem:[%s6 + $0x78] sm:$0xff]
  %v5240 = vld [vmem:[%s6 + $0x80] sm:$0xff]
  %v5241 = vld [vmem:[%s6 + $0x88] sm:$0xff]
  %v5242 = vld [vmem:[%s6 + $0x90] sm:$0xff]
  %v5243 = vld [vmem:[%s6 + $0x98] sm:$0xff]
  %v5244 = vld [vmem:[%s6 + $0xa0] sm:$0xff]
  %v5245 = vld [vmem:[%s6 + $0xa8] sm:$0xff]
  %v5246 = vld [vmem:[%s6 + $0xb0] sm:$0xff]
  %v5247 = vld [vmem:[%s6 + $0xb8] sm:$0xff]
  %v5248 = vld [vmem:[%s6 + $0xc0] sm:$0xff]
  %v5249 = vld [vmem:[%s6 + $0xc8] sm:$0xff]
  %v5250 = vld [vmem:[%s6 + $0xd0] sm:$0xff]
  %v5251 = vld [vmem:[%s6 + $0xd8] sm:$0xff]
  %v5252 = vld [vmem:[%s6 + $0xe0] sm:$0xff]
  %v5253 = vld [vmem:[%s6 + $0xe8] sm:$0xff]
  %v5254 = vld [vmem:[%s6 + $0xf0] sm:$0xff]
  %v5255 = vld [vmem:[%s6 + $0xf8] sm:$0xff]
  %v5288 = vunpack.c.l.b16 %v5224
  %v5289 = vunpack.c.h.b16 %v5224
  %v5290 = vunpack.c.l.b16 %v5225
  %v5291 = vunpack.c.h.b16 %v5225
  %v5292 = vunpack.c.l.b16 %v5226
  %v5293 = vunpack.c.h.b16 %v5226
  %v5294 = vunpack.c.l.b16 %v5227
  %v5295 = vunpack.c.h.b16 %v5227
  %v5296 = vunpack.c.l.b16 %v5228
  %v5297 = vunpack.c.h.b16 %v5228
  %v5298 = vunpack.c.l.b16 %v5229
  %v5299 = vunpack.c.h.b16 %v5229
  %v5300 = vunpack.c.l.b16 %v5230
  %v5301 = vunpack.c.h.b16 %v5230
  %v5302 = vunpack.c.l.b16 %v5231
  %v5303 = vunpack.c.h.b16 %v5231
  %v5304 = vunpack.c.l.b16 %v5232
  %v5305 = vunpack.c.h.b16 %v5232
  %v5306 = vunpack.c.l.b16 %v5233
  %v5307 = vunpack.c.h.b16 %v5233
  %v5308 = vunpack.c.l.b16 %v5234
  %v5309 = vunpack.c.h.b16 %v5234
  %v5310 = vunpack.c.l.b16 %v5235
  %v5311 = vunpack.c.h.b16 %v5235
  %v5312 = vunpack.c.l.b16 %v5236
  %v5313 = vunpack.c.h.b16 %v5236
  %v5314 = vunpack.c.l.b16 %v5237
  %v5315 = vunpack.c.h.b16 %v5237
  %v5316 = vunpack.c.l.b16 %v5238
  %v5317 = vunpack.c.h.b16 %v5238
  %v5318 = vunpack.c.l.b16 %v5239
  %v5319 = vunpack.c.h.b16 %v5239
  %v5320 = vunpack.c.l.b16 %v5240
  %v5321 = vunpack.c.h.b16 %v5240
  %v5322 = vunpack.c.l.b16 %v5241
  %v5323 = vunpack.c.h.b16 %v5241
  %v5324 = vunpack.c.l.b16 %v5242
  %v5325 = vunpack.c.h.b16 %v5242
  %v5326 = vunpack.c.l.b16 %v5243
  %v5327 = vunpack.c.h.b16 %v5243
  %v5328 = vunpack.c.l.b16 %v5244
  %v5329 = vunpack.c.h.b16 %v5244
  %v5330 = vunpack.c.l.b16 %v5245
  %v5331 = vunpack.c.h.b16 %v5245
  %v5332 = vunpack.c.l.b16 %v5246
  %v5333 = vunpack.c.h.b16 %v5246
  %v5334 = vunpack.c.l.b16 %v5247
  %v5335 = vunpack.c.h.b16 %v5247
  %v5336 = vunpack.c.l.b16 %v5248
  %v5337 = vunpack.c.h.b16 %v5248
  %v5338 = vunpack.c.l.b16 %v5249
  %v5339 = vunpack.c.h.b16 %v5249
  %v5340 = vunpack.c.l.b16 %v5250
  %v5341 = vunpack.c.h.b16 %v5250
  %v5342 = vunpack.c.l.b16 %v5251
  %v5343 = vunpack.c.h.b16 %v5251
  %v5344 = vunpack.c.l.b16 %v5252
  %v5345 = vunpack.c.h.b16 %v5252
  %v5346 = vunpack.c.l.b16 %v5253
  %v5347 = vunpack.c.h.b16 %v5253
  %v5348 = vunpack.c.l.b16 %v5254
  %v5349 = vunpack.c.h.b16 %v5254
  %v5350 = vunpack.c.l.b16 %v5255
  %v5351 = vunpack.c.h.b16 %v5255
  %v5352 = vpack.c.b16 %v5292, %v5288
  %v5353 = vpack.c.b16 %v5293, %v5289
  %v5354 = vpack.c.b16 %v5294, %v5290
  %v5355 = vpack.c.b16 %v5295, %v5291
  %v5356 = vpack.c.b16 %v5300, %v5296
  %v5357 = vpack.c.b16 %v5301, %v5297
  %v5358 = vpack.c.b16 %v5302, %v5298
  %v5359 = vpack.c.b16 %v5303, %v5299
  %v5360 = vpack.c.b16 %v5308, %v5304
  %v5361 = vpack.c.b16 %v5309, %v5305
  %v5362 = vpack.c.b16 %v5310, %v5306
  %v5363 = vpack.c.b16 %v5311, %v5307
  %v5364 = vpack.c.b16 %v5316, %v5312
  %v5365 = vpack.c.b16 %v5317, %v5313
  %v5366 = vpack.c.b16 %v5318, %v5314
  %v5367 = vpack.c.b16 %v5319, %v5315
  %v5368 = vpack.c.b16 %v5324, %v5320
  %v5369 = vpack.c.b16 %v5325, %v5321
  %v5370 = vpack.c.b16 %v5326, %v5322
  %v5371 = vpack.c.b16 %v5327, %v5323
  %v5372 = vpack.c.b16 %v5332, %v5328
  %v5373 = vpack.c.b16 %v5333, %v5329
  %v5374 = vpack.c.b16 %v5334, %v5330
  %v5375 = vpack.c.b16 %v5335, %v5331
  %v5376 = vpack.c.b16 %v5340, %v5336
  %v5377 = vpack.c.b16 %v5341, %v5337
  %v5378 = vpack.c.b16 %v5342, %v5338
  %v5379 = vpack.c.b16 %v5343, %v5339
  %v5380 = vpack.c.b16 %v5348, %v5344
  %v5381 = vpack.c.b16 %v5349, %v5345
  %v5382 = vpack.c.b16 %v5350, %v5346
  %v5383 = vpack.c.b16 %v5351, %v5347
  %5416 = vmatprep.subr.bf16.mxu0 %v5353
  %5417 = vmatpush1.bf16.msra.mxu0 %v5352
  %5418 = vmatprep.subr.bf16.mxu0 %v5357
  %5419 = vmatpush1.bf16.msra.mxu0 %v5356
  %5420 = vmatprep.subr.bf16.mxu0 %v5361
  %5421 = vmatpush1.bf16.msra.mxu0 %v5360
  %5422 = vmatprep.subr.bf16.mxu0 %v5365
  %5423 = vmatpush1.bf16.msra.mxu0 %v5364
  %5424 = vmatprep.subr.bf16.mxu0 %v5369
  %5425 = vmatpush1.bf16.msra.mxu0 %v5368
  %5426 = vmatprep.subr.bf16.mxu0 %v5373
  %5427 = vmatpush1.bf16.msra.mxu0 %v5372
  %5428 = vmatprep.subr.bf16.mxu0 %v5377
  %5429 = vmatpush1.bf16.msra.mxu0 %v5376
  %5430 = vmatprep.subr.bf16.mxu0 %v5381
  %5431 = vmatpush1.bf16.msra.mxu0 %v5380
  %5432 = vmatprep.subr.bf16.mxu0 0
  %5433 = vmatpush1.bf16.msra.mxu0 0
  %5434 = vmatprep.subr.bf16.mxu0 0
  %5435 = vmatpush1.bf16.msra.mxu0 0
  %5436 = vmatprep.subr.bf16.mxu0 0
  %5437 = vmatpush1.bf16.msra.mxu0 0
  %5438 = vmatprep.subr.bf16.mxu0 0
  %5439 = vmatpush1.bf16.msra.mxu0 0
  %5440 = vmatprep.subr.bf16.mxu0 0
  %5441 = vmatpush1.bf16.msra.mxu0 0
  %5442 = vmatprep.subr.bf16.mxu0 0
  %5443 = vmatpush1.bf16.msra.mxu0 0
  %5444 = vmatprep.subr.bf16.mxu0 0
  %5445 = vmatpush1.bf16.msra.mxu0 0
  %5446 = vmatprep.subr.bf16.mxu0 0
  %5447 = vmatpush1.bf16.msra.mxu0 0
  %5448 = vmatprep.mubr.bf16.mxu0 0
  %5449 = vmatmul.mubr.bf16.gmra.mrb[0].mxu0 %v5223
  %v5450 = vpop.f32.mrb[0].mxu0
  %v5451 = vadd.f32 0.0, %v5450
  %v5452 = vpop.f32.mrb[0].mxu0
  %v5453 = vadd.f32 0.0, %v5452
  %v5454 = vpop.f32.mrb[0].mxu0
  %v5455 = vpop.f32.mrb[0].mxu0
  %5456 = vdwg.mxu0
  %5457 = vmatprep.subr.bf16.mxu0 %v5355
  %5458 = vmatpush1.bf16.msra.mxu0 %v5354
  %5459 = vmatprep.subr.bf16.mxu0 %v5359
  %5460 = vmatpush1.bf16.msra.mxu0 %v5358
  %5461 = vmatprep.subr.bf16.mxu0 %v5363
  %5462 = vmatpush1.bf16.msra.mxu0 %v5362
  %5463 = vmatprep.subr.bf16.mxu0 %v5367
  %5464 = vmatpush1.bf16.msra.mxu0 %v5366
  %5465 = vmatprep.subr.bf16.mxu0 %v5371
  %5466 = vmatpush1.bf16.msra.mxu0 %v5370
  %5467 = vmatprep.subr.bf16.mxu0 %v5375
  %5468 = vmatpush1.bf16.msra.mxu0 %v5374
  %5469 = vmatprep.subr.bf16.mxu0 %v5379
  %5470 = vmatpush1.bf16.msra.mxu0 %v5378
  %5471 = vmatprep.subr.bf16.mxu0 %v5383
  %5472 = vmatpush1.bf16.msra.mxu0 %v5382
  %5473 = vmatprep.subr.bf16.mxu0 0
  %5474 = vmatpush1.bf16.msra.mxu0 0
  %5475 = vmatprep.subr.bf16.mxu0 0
  %5476 = vmatpush1.bf16.msra.mxu0 0
  %5477 = vmatprep.subr.bf16.mxu0 0
  %5478 = vmatpush1.bf16.msra.mxu0 0
  %5479 = vmatprep.subr.bf16.mxu0 0
  %5480 = vmatpush1.bf16.msra.mxu0 0
  %5481 = vmatprep.subr.bf16.mxu0 0
  %5482 = vmatpush1.bf16.msra.mxu0 0
  %5483 = vmatprep.subr.bf16.mxu0 0
  %5484 = vmatpush1.bf16.msra.mxu0 0
  %5485 = vmatprep.subr.bf16.mxu0 0
  %5486 = vmatpush1.bf16.msra.mxu0 0
  %5487 = vmatprep.subr.bf16.mxu0 0
  %5488 = vmatpush1.bf16.msra.mxu0 0
  %5489 = vmatprep.mubr.bf16.mxu0 0
  %5490 = vmatmul.mubr.bf16.gmra.mrb[0].mxu0 %v5223
  %v5491 = vpop.f32.mrb[0].mxu0
  %v5492 = vadd.f32 0.0, %v5491
  %v5493 = vpop.f32.mrb[0].mxu0
  %v5494 = vadd.f32 0.0, %v5493
  %v5495 = vpop.f32.mrb[0].mxu0
  %v5496 = vpop.f32.mrb[0].mxu0
  %5497 = vdwg.mxu0
  %v5530 = vunpack.c.l.b16 %v5191
  %v5531 = vunpack.c.h.b16 %v5191
  %v5532 = vunpack.c.l.b16 %v5192
  %v5533 = vunpack.c.h.b16 %v5192
  %v5534 = vunpack.c.l.b16 %v5193
  %v5535 = vunpack.c.h.b16 %v5193
  %v5536 = vunpack.c.l.b16 %v5194
  %v5537 = vunpack.c.h.b16 %v5194
  %v5538 = vunpack.c.l.b16 %v5195
  %v5539 = vunpack.c.h.b16 %v5195
  %v5540 = vunpack.c.l.b16 %v5196
  %v5541 = vunpack.c.h.b16 %v5196
  %v5542 = vunpack.c.l.b16 %v5197
  %v5543 = vunpack.c.h.b16 %v5197
  %v5544 = vunpack.c.l.b16 %v5198
  %v5545 = vunpack.c.h.b16 %v5198
  %v5546 = vunpack.c.l.b16 %v5199
  %v5547 = vunpack.c.h.b16 %v5199
  %v5548 = vunpack.c.l.b16 %v5200
  %v5549 = vunpack.c.h.b16 %v5200
  %v5550 = vunpack.c.l.b16 %v5201
  %v5551 = vunpack.c.h.b16 %v5201
  %v5552 = vunpack.c.l.b16 %v5202
  %v5553 = vunpack.c.h.b16 %v5202
  %v5554 = vunpack.c.l.b16 %v5203
  %v5555 = vunpack.c.h.b16 %v5203
  %v5556 = vunpack.c.l.b16 %v5204
  %v5557 = vunpack.c.h.b16 %v5204
  %v5558 = vunpack.c.l.b16 %v5205
  %v5559 = vunpack.c.h.b16 %v5205
  %v5560 = vunpack.c.l.b16 %v5206
  %v5561 = vunpack.c.h.b16 %v5206
  %v5562 = vunpack.c.l.b16 %v5207
  %v5563 = vunpack.c.h.b16 %v5207
  %v5564 = vunpack.c.l.b16 %v5208
  %v5565 = vunpack.c.h.b16 %v5208
  %v5566 = vunpack.c.l.b16 %v5209
  %v5567 = vunpack.c.h.b16 %v5209
  %v5568 = vunpack.c.l.b16 %v5210
  %v5569 = vunpack.c.h.b16 %v5210
  %v5570 = vunpack.c.l.b16 %v5211
  %v5571 = vunpack.c.h.b16 %v5211
  %v5572 = vunpack.c.l.b16 %v5212
  %v5573 = vunpack.c.h.b16 %v5212
  %v5574 = vunpack.c.l.b16 %v5213
  %v5575 = vunpack.c.h.b16 %v5213
  %v5576 = vunpack.c.l.b16 %v5214
  %v5577 = vunpack.c.h.b16 %v5214
  %v5578 = vunpack.c.l.b16 %v5215
  %v5579 = vunpack.c.h.b16 %v5215
  %v5580 = vunpack.c.l.b16 %v5216
  %v5581 = vunpack.c.h.b16 %v5216
  %v5582 = vunpack.c.l.b16 %v5217
  %v5583 = vunpack.c.h.b16 %v5217
  %v5584 = vunpack.c.l.b16 %v5218
  %v5585 = vunpack.c.h.b16 %v5218
  %v5586 = vunpack.c.l.b16 %v5219
  %v5587 = vunpack.c.h.b16 %v5219
  %v5588 = vunpack.c.l.b16 %v5220
  %v5589 = vunpack.c.h.b16 %v5220
  %v5590 = vunpack.c.l.b16 %v5221
  %v5591 = vunpack.c.h.b16 %v5221
  %v5592 = vunpack.c.l.b16 %v5222
  %v5593 = vunpack.c.h.b16 %v5222
  %v5594 = vpack.c.b16 %v5534, %v5530
  %v5595 = vpack.c.b16 %v5535, %v5531
  %v5596 = vpack.c.b16 %v5536, %v5532
  %v5597 = vpack.c.b16 %v5537, %v5533
  %v5598 = vpack.c.b16 %v5542, %v5538
  %v5599 = vpack.c.b16 %v5543, %v5539
  %v5600 = vpack.c.b16 %v5544, %v5540
  %v5601 = vpack.c.b16 %v5545, %v5541
  %v5602 = vpack.c.b16 %v5550, %v5546
  %v5603 = vpack.c.b16 %v5551, %v5547
  %v5604 = vpack.c.b16 %v5552, %v5548
  %v5605 = vpack.c.b16 %v5553, %v5549
  %v5606 = vpack.c.b16 %v5558, %v5554
  %v5607 = vpack.c.b16 %v5559, %v5555
  %v5608 = vpack.c.b16 %v5560, %v5556
  %v5609 = vpack.c.b16 %v5561, %v5557
  %v5610 = vpack.c.b16 %v5566, %v5562
  %v5611 = vpack.c.b16 %v5567, %v5563
  %v5612 = vpack.c.b16 %v5568, %v5564
  %v5613 = vpack.c.b16 %v5569, %v5565
  %v5614 = vpack.c.b16 %v5574, %v5570
  %v5615 = vpack.c.b16 %v5575, %v5571
  %v5616 = vpack.c.b16 %v5576, %v5572
  %v5617 = vpack.c.b16 %v5577, %v5573
  %v5618 = vpack.c.b16 %v5582, %v5578
  %v5619 = vpack.c.b16 %v5583, %v5579
  %v5620 = vpack.c.b16 %v5584, %v5580
  %v5621 = vpack.c.b16 %v5585, %v5581
  %v5622 = vpack.c.b16 %v5590, %v5586
  %v5623 = vpack.c.b16 %v5591, %v5587
  %v5624 = vpack.c.b16 %v5592, %v5588
  %v5625 = vpack.c.b16 %v5593, %v5589
  %5658 = vmatprep.subr.bf16.mxu0 %v5595
  %5659 = vmatpush1.bf16.msra.mxu0 %v5594
  %5660 = vmatprep.subr.bf16.mxu0 %v5599
  %5661 = vmatpush1.bf16.msra.mxu0 %v5598
  %5662 = vmatprep.subr.bf16.mxu0 %v5603
  %5663 = vmatpush1.bf16.msra.mxu0 %v5602
  %5664 = vmatprep.subr.bf16.mxu0 %v5607
  %5665 = vmatpush1.bf16.msra.mxu0 %v5606
  %5666 = vmatprep.subr.bf16.mxu0 %v5611
  %5667 = vmatpush1.bf16.msra.mxu0 %v5610
  %5668 = vmatprep.subr.bf16.mxu0 %v5615
  %5669 = vmatpush1.bf16.msra.mxu0 %v5614
  %5670 = vmatprep.subr.bf16.mxu0 %v5619
  %5671 = vmatpush1.bf16.msra.mxu0 %v5618
  %5672 = vmatprep.subr.bf16.mxu0 %v5623
  %5673 = vmatpush1.bf16.msra.mxu0 %v5622
  %5674 = vmatprep.subr.bf16.mxu0 0
  %5675 = vmatpush1.bf16.msra.mxu0 0
  %5676 = vmatprep.subr.bf16.mxu0 0
  %5677 = vmatpush1.bf16.msra.mxu0 0
  %5678 = vmatprep.subr.bf16.mxu0 0
  %5679 = vmatpush1.bf16.msra.mxu0 0
  %5680 = vmatprep.subr.bf16.mxu0 0
  %5681 = vmatpush1.bf16.msra.mxu0 0
  %5682 = vmatprep.subr.bf16.mxu0 0
  %5683 = vmatpush1.bf16.msra.mxu0 0
  %5684 = vmatprep.subr.bf16.mxu0 0
  %5685 = vmatpush1.bf16.msra.mxu0 0
  %5686 = vmatprep.subr.bf16.mxu0 0
  %5687 = vmatpush1.bf16.msra.mxu0 0
  %5688 = vmatprep.subr.bf16.mxu0 0
  %5689 = vmatpush1.bf16.msra.mxu0 0
  %5690 = vmatprep.mubr.bf16.mxu0 0
  %5691 = vmatmul.mubr.bf16.gmra.mrb[0].mxu0 %v5190
  %v5692 = vpop.f32.mrb[0].mxu0
  %v5693 = vadd.f32 %v5451, %v5692
  %v5694 = vpop.f32.mrb[0].mxu0
  %v5695 = vadd.f32 %v5453, %v5694
  %v5696 = vpop.f32.mrb[0].mxu0
  %v5697 = vpop.f32.mrb[0].mxu0
  %5698 = vdwg.mxu0
  %5699 = vmatprep.subr.bf16.mxu0 %v5597
  %5700 = vmatpush1.bf16.msra.mxu0 %v5596
  %5701 = vmatprep.subr.bf16.mxu0 %v5601
  %5702 = vmatpush1.bf16.msra.mxu0 %v5600
  %5703 = vmatprep.subr.bf16.mxu0 %v5605
  %5704 = vmatpush1.bf16.msra.mxu0 %v5604
  %5705 = vmatprep.subr.bf16.mxu0 %v5609
  %5706 = vmatpush1.bf16.msra.mxu0 %v5608
  %5707 = vmatprep.subr.bf16.mxu0 %v5613
  %5708 = vmatpush1.bf16.msra.mxu0 %v5612
  %5709 = vmatprep.subr.bf16.mxu0 %v5617
  %5710 = vmatpush1.bf16.msra.mxu0 %v5616
  %5711 = vmatprep.subr.bf16.mxu0 %v5621
  %5712 = vmatpush1.bf16.msra.mxu0 %v5620
  %5713 = vmatprep.subr.bf16.mxu0 %v5625
  %5714 = vmatpush1.bf16.msra.mxu0 %v5624
  %5715 = vmatprep.subr.bf16.mxu0 0
  %5716 = vmatpush1.bf16.msra.mxu0 0
  %5717 = vmatprep.subr.bf16.mxu0 0
  %5718 = vmatpush1.bf16.msra.mxu0 0
  %5719 = vmatprep.subr.bf16.mxu0 0
  %5720 = vmatpush1.bf16.msra.mxu0 0
  %5721 = vmatprep.subr.bf16.mxu0 0
  %5722 = vmatpush1.bf16.msra.mxu0 0
  %5723 = vmatprep.subr.bf16.mxu0 0
  %5724 = vmatpush1.bf16.msra.mxu0 0
  %5725 = vmatprep.subr.bf16.mxu0 0
  %5726 = vmatpush1.bf16.msra.mxu0 0
  %5727 = vmatprep.subr.bf16.mxu0 0
  %5728 = vmatpush1.bf16.msra.mxu0 0
  %5729 = vmatprep.subr.bf16.mxu0 0
  %5730 = vmatpush1.bf16.msra.mxu0 0
  %5731 = vmatprep.mubr.bf16.mxu0 0
  %5732 = vmatmul.mubr.bf16.gmra.mrb[0].mxu0 %v5190
  %v5733 = vpop.f32.mrb[0].mxu0
  %v5734 = vadd.f32 %v5492, %v5733
  %v5735 = vpop.f32.mrb[0].mxu0
  %v5736 = vadd.f32 %v5494, %v5735
  %v5737 = vpop.f32.mrb[0].mxu0
  %v5738 = vpop.f32.mrb[0].mxu0
  %5739 = vdwg.mxu0
  %v5740 = vld [vmem:[%s7] sm:$0xf]
  %v5742 = vlaneseq
  %v5743 = vshrl.u32 %v5742, 7
  %v5744 = vsub.s32 0, %v5743
  %v5745 = vrot.slane %v5740, %v5744
  %v5746 = vlaneseq
  %v5747 = vshrl.u32 %v5746, 7
  %v5748 = vsub.s32 1, %v5747
  %v5749 = vrot.slane %v5740, %v5748
  %v5750 = vlaneseq
  %v5751 = vshrl.u32 %v5750, 7
  %v5752 = vsub.s32 2, %v5751
  %v5753 = vrot.slane %v5740, %v5752
  %v5754 = vlaneseq
  %v5755 = vshrl.u32 %v5754, 7
  %v5756 = vsub.s32 3, %v5755
  %v5757 = vrot.slane %v5740, %v5756
  %v5762 = vadd.f32 %v5693, %v5745
  %v5763 = vadd.f32 %v5695, %v5749
  %v5764 = vadd.f32 %v5734, %v5753
  %v5765 = vadd.f32 %v5736, %v5757
  %v5766 = vxor.u32 %v5762, 2147483648
  %v5767 = vxor.u32 %v5763, 2147483648
  %v5768 = vxor.u32 %v5764, 2147483648
  %v5769 = vmul.f32 %v5766, 1.442695
  %v5770 = vpow.pop %v5769
  %v5771 = vmul.f32 %v5767, 1.442695
  %v5772 = vpow.pop %v5771
  %v5773 = vmul.f32 %v5768, 1.442695
  %v5774 = vpow.pop %v5773
  %v5775 = vadd.f32 %v5770, 1.0
  %v5776 = vadd.f32 %v5772, 1.0
  %v5777 = vadd.f32 %v5774, 1.0
  %v5778 = vrcp.pop %v5775
  %v5779 = vmul.f32 1.0, %v5778
  %v5780 = vrcp.pop %v5776
  %v5781 = vmul.f32 1.0, %v5780
  %v5782 = vrcp.pop %v5777
  %v5783 = vmul.f32 1.0, %v5782
  %v5784 = vtanh.pop %v5765
  %v5785 = vmul.f32 %v5781, %v4882
  %v5786 = vmul.f32 %v5779, %v5784
  %v5787 = vadd.f32 %v5785, %v5786
  %v5788 = vtanh.pop %v5787
  %v5789 = vmul.f32 %v5783, %v5788
  %5790 = vst [vmem:[#allocation2] sm:$0xff] %v5189
  %5791 = vst [vmem:[#allocation2 + $0x8] sm:$0xff] %v5187
  %5792 = vst [vmem:[#allocation2 + $0x10] sm:$0xff] %v5789
  %5793 = vst [vmem:[#allocation2 + $0x18] sm:$0xff] %v5787
  %5794 = vst [vmem:[#allocation4 + $0x28] sm:$0xff] %v5789
  %v5795 = vld [vmem:[#allocation2] sm:$0xff]
  %v5796 = vld [vmem:[#allocation2 + $0x8] sm:$0xff]
  %v5797 = vld [vmem:[#allocation2 + $0x10] sm:$0xff]
  %v5798 = vld [vmem:[#allocation2 + $0x18] sm:$0xff]
  %v5799 = vld [vmem:[#allocation3 + $0xc0] sm:$0xff]
  %v5800 = vld [vmem:[#allocation3 + $0xc8] sm:$0xff]
  %v5801 = vld [vmem:[#allocation3 + $0xd0] sm:$0xff]
  %v5802 = vld [vmem:[#allocation3 + $0xd8] sm:$0xff]
  %v5803 = vpack.c.bf16 %v5795, %v5795
  %v5804 = vld [vmem:[%s4] sm:$0xff]
  %v5805 = vld [vmem:[%s4 + $0x8] sm:$0xff]
  %v5806 = vld [vmem:[%s4 + $0x10] sm:$0xff]
  %v5807 = vld [vmem:[%s4 + $0x18] sm:$0xff]
  %v5808 = vld [vmem:[%s4 + $0x20] sm:$0xff]
  %v5809 = vld [vmem:[%s4 + $0x28] sm:$0xff]
  %v5810 = vld [vmem:[%s4 + $0x30] sm:$0xff]
  %v5811 = vld [vmem:[%s4 + $0x38] sm:$0xff]
  %v5812 = vld [vmem:[%s4 + $0x40] sm:$0xff]
  %v5813 = vld [vmem:[%s4 + $0x48] sm:$0xff]
  %v5814 = vld [vmem:[%s4 + $0x50] sm:$0xff]
  %v5815 = vld [vmem:[%s4 + $0x58] sm:$0xff]
  %v5816 = vld [vmem:[%s4 + $0x60] sm:$0xff]
  %v5817 = vld [vmem:[%s4 + $0x68] sm:$0xff]
  %v5818 = vld [vmem:[%s4 + $0x70] sm:$0xff]
  %v5819 = vld [vmem:[%s4 + $0x78] sm:$0xff]
  %v5820 = vld [vmem:[%s4 + $0x80] sm:$0xff]
  %v5821 = vld [vmem:[%s4 + $0x88] sm:$0xff]
  %v5822 = vld [vmem:[%s4 + $0x90] sm:$0xff]
  %v5823 = vld [vmem:[%s4 + $0x98] sm:$0xff]
  %v5824 = vld [vmem:[%s4 + $0xa0] sm:$0xff]
  %v5825 = vld [vmem:[%s4 + $0xa8] sm:$0xff]
  %v5826 = vld [vmem:[%s4 + $0xb0] sm:$0xff]
  %v5827 = vld [vmem:[%s4 + $0xb8] sm:$0xff]
  %v5828 = vld [vmem:[%s4 + $0xc0] sm:$0xff]
  %v5829 = vld [vmem:[%s4 + $0xc8] sm:$0xff]
  %v5830 = vld [vmem:[%s4 + $0xd0] sm:$0xff]
  %v5831 = vld [vmem:[%s4 + $0xd8] sm:$0xff]
  %v5832 = vld [vmem:[%s4 + $0xe0] sm:$0xff]
  %v5833 = vld [vmem:[%s4 + $0xe8] sm:$0xff]
  %v5834 = vld [vmem:[%s4 + $0xf0] sm:$0xff]
  %v5835 = vld [vmem:[%s4 + $0xf8] sm:$0xff]
  %v5868 = vunpack.c.l.b16 %v5804
  %v5869 = vunpack.c.h.b16 %v5804
  %v5870 = vunpack.c.l.b16 %v5805
  %v5871 = vunpack.c.h.b16 %v5805
  %v5872 = vunpack.c.l.b16 %v5806
  %v5873 = vunpack.c.h.b16 %v5806
  %v5874 = vunpack.c.l.b16 %v5807
  %v5875 = vunpack.c.h.b16 %v5807
  %v5876 = vunpack.c.l.b16 %v5808
  %v5877 = vunpack.c.h.b16 %v5808
  %v5878 = vunpack.c.l.b16 %v5809
  %v5879 = vunpack.c.h.b16 %v5809
  %v5880 = vunpack.c.l.b16 %v5810
  %v5881 = vunpack.c.h.b16 %v5810
  %v5882 = vunpack.c.l.b16 %v5811
  %v5883 = vunpack.c.h.b16 %v5811
  %v5884 = vunpack.c.l.b16 %v5812
  %v5885 = vunpack.c.h.b16 %v5812
  %v5886 = vunpack.c.l.b16 %v5813
  %v5887 = vunpack.c.h.b16 %v5813
  %v5888 = vunpack.c.l.b16 %v5814
  %v5889 = vunpack.c.h.b16 %v5814
  %v5890 = vunpack.c.l.b16 %v5815
  %v5891 = vunpack.c.h.b16 %v5815
  %v5892 = vunpack.c.l.b16 %v5816
  %v5893 = vunpack.c.h.b16 %v5816
  %v5894 = vunpack.c.l.b16 %v5817
  %v5895 = vunpack.c.h.b16 %v5817
  %v5896 = vunpack.c.l.b16 %v5818
  %v5897 = vunpack.c.h.b16 %v5818
  %v5898 = vunpack.c.l.b16 %v5819
  %v5899 = vunpack.c.h.b16 %v5819
  %v5900 = vunpack.c.l.b16 %v5820
  %v5901 = vunpack.c.h.b16 %v5820
  %v5902 = vunpack.c.l.b16 %v5821
  %v5903 = vunpack.c.h.b16 %v5821
  %v5904 = vunpack.c.l.b16 %v5822
  %v5905 = vunpack.c.h.b16 %v5822
  %v5906 = vunpack.c.l.b16 %v5823
  %v5907 = vunpack.c.h.b16 %v5823
  %v5908 = vunpack.c.l.b16 %v5824
  %v5909 = vunpack.c.h.b16 %v5824
  %v5910 = vunpack.c.l.b16 %v5825
  %v5911 = vunpack.c.h.b16 %v5825
  %v5912 = vunpack.c.l.b16 %v5826
  %v5913 = vunpack.c.h.b16 %v5826
  %v5914 = vunpack.c.l.b16 %v5827
  %v5915 = vunpack.c.h.b16 %v5827
  %v5916 = vunpack.c.l.b16 %v5828
  %v5917 = vunpack.c.h.b16 %v5828
  %v5918 = vunpack.c.l.b16 %v5829
  %v5919 = vunpack.c.h.b16 %v5829
  %v5920 = vunpack.c.l.b16 %v5830
  %v5921 = vunpack.c.h.b16 %v5830
  %v5922 = vunpack.c.l.b16 %v5831
  %v5923 = vunpack.c.h.b16 %v5831
  %v5924 = vunpack.c.l.b16 %v5832
  %v5925 = vunpack.c.h.b16 %v5832
  %v5926 = vunpack.c.l.b16 %v5833
  %v5927 = vunpack.c.h.b16 %v5833
  %v5928 = vunpack.c.l.b16 %v5834
  %v5929 = vunpack.c.h.b16 %v5834
  %v5930 = vunpack.c.l.b16 %v5835
  %v5931 = vunpack.c.h.b16 %v5835
  %v5932 = vpack.c.b16 %v5872, %v5868
  %v5933 = vpack.c.b16 %v5873, %v5869
  %v5934 = vpack.c.b16 %v5874, %v5870
  %v5935 = vpack.c.b16 %v5875, %v5871
  %v5936 = vpack.c.b16 %v5880, %v5876
  %v5937 = vpack.c.b16 %v5881, %v5877
  %v5938 = vpack.c.b16 %v5882, %v5878
  %v5939 = vpack.c.b16 %v5883, %v5879
  %v5940 = vpack.c.b16 %v5888, %v5884
  %v5941 = vpack.c.b16 %v5889, %v5885
  %v5942 = vpack.c.b16 %v5890, %v5886
  %v5943 = vpack.c.b16 %v5891, %v5887
  %v5944 = vpack.c.b16 %v5896, %v5892
  %v5945 = vpack.c.b16 %v5897, %v5893
  %v5946 = vpack.c.b16 %v5898, %v5894
  %v5947 = vpack.c.b16 %v5899, %v5895
  %v5948 = vpack.c.b16 %v5904, %v5900
  %v5949 = vpack.c.b16 %v5905, %v5901
  %v5950 = vpack.c.b16 %v5906, %v5902
  %v5951 = vpack.c.b16 %v5907, %v5903
  %v5952 = vpack.c.b16 %v5912, %v5908
  %v5953 = vpack.c.b16 %v5913, %v5909
  %v5954 = vpack.c.b16 %v5914, %v5910
  %v5955 = vpack.c.b16 %v5915, %v5911
  %v5956 = vpack.c.b16 %v5920, %v5916
  %v5957 = vpack.c.b16 %v5921, %v5917
  %v5958 = vpack.c.b16 %v5922, %v5918
  %v5959 = vpack.c.b16 %v5923, %v5919
  %v5960 = vpack.c.b16 %v5928, %v5924
  %v5961 = vpack.c.b16 %v5929, %v5925
  %v5962 = vpack.c.b16 %v5930, %v5926
  %v5963 = vpack.c.b16 %v5931, %v5927
  %5996 = vmatprep.subr.bf16.mxu0 %v5933
  %5997 = vmatpush1.bf16.msra.mxu0 %v5932
  %5998 = vmatprep.subr.bf16.mxu0 %v5937
  %5999 = vmatpush1.bf16.msra.mxu0 %v5936
  %6000 = vmatprep.subr.bf16.mxu0 %v5941
  %6001 = vmatpush1.bf16.msra.mxu0 %v5940
  %6002 = vmatprep.subr.bf16.mxu0 %v5945
  %6003 = vmatpush1.bf16.msra.mxu0 %v5944
  %6004 = vmatprep.subr.bf16.mxu0 %v5949
  %6005 = vmatpush1.bf16.msra.mxu0 %v5948
  %6006 = vmatprep.subr.bf16.mxu0 %v5953
  %6007 = vmatpush1.bf16.msra.mxu0 %v5952
  %6008 = vmatprep.subr.bf16.mxu0 %v5957
  %6009 = vmatpush1.bf16.msra.mxu0 %v5956
  %6010 = vmatprep.subr.bf16.mxu0 %v5961
  %6011 = vmatpush1.bf16.msra.mxu0 %v5960
  %6012 = vmatprep.subr.bf16.mxu0 0
  %6013 = vmatpush1.bf16.msra.mxu0 0
  %6014 = vmatprep.subr.bf16.mxu0 0
  %6015 = vmatpush1.bf16.msra.mxu0 0
  %6016 = vmatprep.subr.bf16.mxu0 0
  %6017 = vmatpush1.bf16.msra.mxu0 0
  %6018 = vmatprep.subr.bf16.mxu0 0
  %6019 = vmatpush1.bf16.msra.mxu0 0
  %6020 = vmatprep.subr.bf16.mxu0 0
  %6021 = vmatpush1.bf16.msra.mxu0 0
  %6022 = vmatprep.subr.bf16.mxu0 0
  %6023 = vmatpush1.bf16.msra.mxu0 0
  %6024 = vmatprep.subr.bf16.mxu0 0
  %6025 = vmatpush1.bf16.msra.mxu0 0
  %6026 = vmatprep.subr.bf16.mxu0 0
  %6027 = vmatpush1.bf16.msra.mxu0 0
  %6028 = vmatprep.mubr.bf16.mxu0 0
  %6029 = vmatmul.mubr.bf16.gmra.mrb[0].mxu0 %v5803
  %v6030 = vpop.f32.mrb[0].mxu0
  %v6031 = vadd.f32 0.0, %v6030
  %v6032 = vpop.f32.mrb[0].mxu0
  %v6033 = vadd.f32 0.0, %v6032
  %v6034 = vpop.f32.mrb[0].mxu0
  %v6035 = vpop.f32.mrb[0].mxu0
  %6036 = vdwg.mxu0
  %6037 = vmatprep.subr.bf16.mxu0 %v5935
  %6038 = vmatpush1.bf16.msra.mxu0 %v5934
  %6039 = vmatprep.subr.bf16.mxu0 %v5939
  %6040 = vmatpush1.bf16.msra.mxu0 %v5938
  %6041 = vmatprep.subr.bf16.mxu0 %v5943
  %6042 = vmatpush1.bf16.msra.mxu0 %v5942
  %6043 = vmatprep.subr.bf16.mxu0 %v5947
  %6044 = vmatpush1.bf16.msra.mxu0 %v5946
  %6045 = vmatprep.subr.bf16.mxu0 %v5951
  %6046 = vmatpush1.bf16.msra.mxu0 %v5950
  %6047 = vmatprep.subr.bf16.mxu0 %v5955
  %6048 = vmatpush1.bf16.msra.mxu0 %v5954
  %6049 = vmatprep.subr.bf16.mxu0 %v5959
  %6050 = vmatpush1.bf16.msra.mxu0 %v5958
  %6051 = vmatprep.subr.bf16.mxu0 %v5963
  %6052 = vmatpush1.bf16.msra.mxu0 %v5962
  %6053 = vmatprep.subr.bf16.mxu0 0
  %6054 = vmatpush1.bf16.msra.mxu0 0
  %6055 = vmatprep.subr.bf16.mxu0 0
  %6056 = vmatpush1.bf16.msra.mxu0 0
  %6057 = vmatprep.subr.bf16.mxu0 0
  %6058 = vmatpush1.bf16.msra.mxu0 0
  %6059 = vmatprep.subr.bf16.mxu0 0
  %6060 = vmatpush1.bf16.msra.mxu0 0
  %6061 = vmatprep.subr.bf16.mxu0 0
  %6062 = vmatpush1.bf16.msra.mxu0 0
  %6063 = vmatprep.subr.bf16.mxu0 0
  %6064 = vmatpush1.bf16.msra.mxu0 0
  %6065 = vmatprep.subr.bf16.mxu0 0
  %6066 = vmatpush1.bf16.msra.mxu0 0
  %6067 = vmatprep.subr.bf16.mxu0 0
  %6068 = vmatpush1.bf16.msra.mxu0 0
  %6069 = vmatprep.mubr.bf16.mxu0 0
  %6070 = vmatmul.mubr.bf16.gmra.mrb[0].mxu0 %v5803
  %v6071 = vpop.f32.mrb[0].mxu0
  %v6072 = vadd.f32 0.0, %v6071
  %v6073 = vpop.f32.mrb[0].mxu0
  %v6074 = vadd.f32 0.0, %v6073
  %v6075 = vpop.f32.mrb[0].mxu0
  %v6076 = vpop.f32.mrb[0].mxu0
  %6077 = vdwg.mxu0
  %v6078 = vadd.f32 %v5799, %v6031
  %v6079 = vadd.f32 %v5800, %v6033
  %v6080 = vadd.f32 %v5801, %v6072
  %v6081 = vadd.f32 %v5802, %v6074
  %v6082 = vxor.u32 %v6078, 2147483648
  %v6083 = vxor.u32 %v6079, 2147483648
  %v6084 = vxor.u32 %v6080, 2147483648
  %v6085 = vmul.f32 %v6082, 1.442695
  %v6086 = vpow.pop %v6085
  %v6087 = vmul.f32 %v6083, 1.442695
  %v6088 = vpow.pop %v6087
  %v6089 = vmul.f32 %v6084, 1.442695
  %v6090 = vpow.pop %v6089
  %v6091 = vadd.f32 %v6086, 1.0
  %v6092 = vadd.f32 %v6088, 1.0
  %v6093 = vadd.f32 %v6090, 1.0
  %v6094 = vrcp.pop %v6091
  %v6095 = vmul.f32 1.0, %v6094
  %v6096 = vrcp.pop %v6092
  %v6097 = vmul.f32 1.0, %v6096
  %v6098 = vrcp.pop %v6093
  %v6099 = vmul.f32 1.0, %v6098
  %v6100 = vtanh.pop %v6081
  %v6101 = vmul.f32 %v6097, %v5796
  %v6102 = vmul.f32 %v6095, %v6100
  %v6103 = vadd.f32 %v6101, %v6102
  %v6104 = vtanh.pop %v6103
  %v6105 = vmul.f32 %v6099, %v6104
  %v6106 = vpack.c.bf16 %v6105, %v6105
  %v6107 = vld [vmem:[%s5] sm:$0xff]
  %v6108 = vld [vmem:[%s5 + $0x8] sm:$0xff]
  %v6109 = vld [vmem:[%s5 + $0x10] sm:$0xff]
  %v6110 = vld [vmem:[%s5 + $0x18] sm:$0xff]
  %v6111 = vld [vmem:[%s5 + $0x20] sm:$0xff]
  %v6112 = vld [vmem:[%s5 + $0x28] sm:$0xff]
  %v6113 = vld [vmem:[%s5 + $0x30] sm:$0xff]
  %v6114 = vld [vmem:[%s5 + $0x38] sm:$0xff]
  %v6115 = vld [vmem:[%s5 + $0x40] sm:$0xff]
  %v6116 = vld [vmem:[%s5 + $0x48] sm:$0xff]
  %v6117 = vld [vmem:[%s5 + $0x50] sm:$0xff]
  %v6118 = vld [vmem:[%s5 + $0x58] sm:$0xff]
  %v6119 = vld [vmem:[%s5 + $0x60] sm:$0xff]
  %v6120 = vld [vmem:[%s5 + $0x68] sm:$0xff]
  %v6121 = vld [vmem:[%s5 + $0x70] sm:$0xff]
  %v6122 = vld [vmem:[%s5 + $0x78] sm:$0xff]
  %v6123 = vld [vmem:[%s5 + $0x80] sm:$0xff]
  %v6124 = vld [vmem:[%s5 + $0x88] sm:$0xff]
  %v6125 = vld [vmem:[%s5 + $0x90] sm:$0xff]
  %v6126 = vld [vmem:[%s5 + $0x98] sm:$0xff]
  %v6127 = vld [vmem:[%s5 + $0xa0] sm:$0xff]
  %v6128 = vld [vmem:[%s5 + $0xa8] sm:$0xff]
  %v6129 = vld [vmem:[%s5 + $0xb0] sm:$0xff]
  %v6130 = vld [vmem:[%s5 + $0xb8] sm:$0xff]
  %v6131 = vld [vmem:[%s5 + $0xc0] sm:$0xff]
  %v6132 = vld [vmem:[%s5 + $0xc8] sm:$0xff]
  %v6133 = vld [vmem:[%s5 + $0xd0] sm:$0xff]
  %v6134 = vld [vmem:[%s5 + $0xd8] sm:$0xff]
  %v6135 = vld [vmem:[%s5 + $0xe0] sm:$0xff]
  %v6136 = vld [vmem:[%s5 + $0xe8] sm:$0xff]
  %v6137 = vld [vmem:[%s5 + $0xf0] sm:$0xff]
  %v6138 = vld [vmem:[%s5 + $0xf8] sm:$0xff]
  %v6139 = vpack.c.bf16 %v5797, %v5797
  %v6140 = vld [vmem:[%s6] sm:$0xff]
  %v6141 = vld [vmem:[%s6 + $0x8] sm:$0xff]
  %v6142 = vld [vmem:[%s6 + $0x10] sm:$0xff]
  %v6143 = vld [vmem:[%s6 + $0x18] sm:$0xff]
  %v6144 = vld [vmem:[%s6 + $0x20] sm:$0xff]
  %v6145 = vld [vmem:[%s6 + $0x28] sm:$0xff]
  %v6146 = vld [vmem:[%s6 + $0x30] sm:$0xff]
  %v6147 = vld [vmem:[%s6 + $0x38] sm:$0xff]
  %v6148 = vld [vmem:[%s6 + $0x40] sm:$0xff]
  %v6149 = vld [vmem:[%s6 + $0x48] sm:$0xff]
  %v6150 = vld [vmem:[%s6 + $0x50] sm:$0xff]
  %v6151 = vld [vmem:[%s6 + $0x58] sm:$0xff]
  %v6152 = vld [vmem:[%s6 + $0x60] sm:$0xff]
  %v6153 = vld [vmem:[%s6 + $0x68] sm:$0xff]
  %v6154 = vld [vmem:[%s6 + $0x70] sm:$0xff]
  %v6155 = vld [vmem:[%s6 + $0x78] sm:$0xff]
  %v6156 = vld [vmem:[%s6 + $0x80] sm:$0xff]
  %v6157 = vld [vmem:[%s6 + $0x88] sm:$0xff]
  %v6158 = vld [vmem:[%s6 + $0x90] sm:$0xff]
  %v6159 = vld [vmem:[%s6 + $0x98] sm:$0xff]
  %v6160 = vld [vmem:[%s6 + $0xa0] sm:$0xff]
  %v6161 = vld [vmem:[%s6 + $0xa8] sm:$0xff]
  %v6162 = vld [vmem:[%s6 + $0xb0] sm:$0xff]
  %v6163 = vld [vmem:[%s6 + $0xb8] sm:$0xff]
  %v6164 = vld [vmem:[%s6 + $0xc0] sm:$0xff]
  %v6165 = vld [vmem:[%s6 + $0xc8] sm:$0xff]
  %v6166 = vld [vmem:[%s6 + $0xd0] sm:$0xff]
  %v6167 = vld [vmem:[%s6 + $0xd8] sm:$0xff]
  %v6168 = vld [vmem:[%s6 + $0xe0] sm:$0xff]
  %v6169 = vld [vmem:[%s6 + $0xe8] sm:$0xff]
  %v6170 = vld [vmem:[%s6 + $0xf0] sm:$0xff]
  %v6171 = vld [vmem:[%s6 + $0xf8] sm:$0xff]
  %v6204 = vunpack.c.l.b16 %v6140
  %v6205 = vunpack.c.h.b16 %v6140
  %v6206 = vunpack.c.l.b16 %v6141
  %v6207 = vunpack.c.h.b16 %v6141
  %v6208 = vunpack.c.l.b16 %v6142
  %v6209 = vunpack.c.h.b16 %v6142
  %v6210 = vunpack.c.l.b16 %v6143
  %v6211 = vunpack.c.h.b16 %v6143
  %v6212 = vunpack.c.l.b16 %v6144
  %v6213 = vunpack.c.h.b16 %v6144
  %v6214 = vunpack.c.l.b16 %v6145
  %v6215 = vunpack.c.h.b16 %v6145
  %v6216 = vunpack.c.l.b16 %v6146
  %v6217 = vunpack.c.h.b16 %v6146
  %v6218 = vunpack.c.l.b16 %v6147
  %v6219 = vunpack.c.h.b16 %v6147
  %v6220 = vunpack.c.l.b16 %v6148
  %v6221 = vunpack.c.h.b16 %v6148
  %v6222 = vunpack.c.l.b16 %v6149
  %v6223 = vunpack.c.h.b16 %v6149
  %v6224 = vunpack.c.l.b16 %v6150
  %v6225 = vunpack.c.h.b16 %v6150
  %v6226 = vunpack.c.l.b16 %v6151
  %v6227 = vunpack.c.h.b16 %v6151
  %v6228 = vunpack.c.l.b16 %v6152
  %v6229 = vunpack.c.h.b16 %v6152
  %v6230 = vunpack.c.l.b16 %v6153
  %v6231 = vunpack.c.h.b16 %v6153
  %v6232 = vunpack.c.l.b16 %v6154
  %v6233 = vunpack.c.h.b16 %v6154
  %v6234 = vunpack.c.l.b16 %v6155
  %v6235 = vunpack.c.h.b16 %v6155
  %v6236 = vunpack.c.l.b16 %v6156
  %v6237 = vunpack.c.h.b16 %v6156
  %v6238 = vunpack.c.l.b16 %v6157
  %v6239 = vunpack.c.h.b16 %v6157
  %v6240 = vunpack.c.l.b16 %v6158
  %v6241 = vunpack.c.h.b16 %v6158
  %v6242 = vunpack.c.l.b16 %v6159
  %v6243 = vunpack.c.h.b16 %v6159
  %v6244 = vunpack.c.l.b16 %v6160
  %v6245 = vunpack.c.h.b16 %v6160
  %v6246 = vunpack.c.l.b16 %v6161
  %v6247 = vunpack.c.h.b16 %v6161
  %v6248 = vunpack.c.l.b16 %v6162
  %v6249 = vunpack.c.h.b16 %v6162
  %v6250 = vunpack.c.l.b16 %v6163
  %v6251 = vunpack.c.h.b16 %v6163
  %v6252 = vunpack.c.l.b16 %v6164
  %v6253 = vunpack.c.h.b16 %v6164
  %v6254 = vunpack.c.l.b16 %v6165
  %v6255 = vunpack.c.h.b16 %v6165
  %v6256 = vunpack.c.l.b16 %v6166
  %v6257 = vunpack.c.h.b16 %v6166
  %v6258 = vunpack.c.l.b16 %v6167
  %v6259 = vunpack.c.h.b16 %v6167
  %v6260 = vunpack.c.l.b16 %v6168
  %v6261 = vunpack.c.h.b16 %v6168
  %v6262 = vunpack.c.l.b16 %v6169
  %v6263 = vunpack.c.h.b16 %v6169
  %v6264 = vunpack.c.l.b16 %v6170
  %v6265 = vunpack.c.h.b16 %v6170
  %v6266 = vunpack.c.l.b16 %v6171
  %v6267 = vunpack.c.h.b16 %v6171
  %v6268 = vpack.c.b16 %v6208, %v6204
  %v6269 = vpack.c.b16 %v6209, %v6205
  %v6270 = vpack.c.b16 %v6210, %v6206
  %v6271 = vpack.c.b16 %v6211, %v6207
  %v6272 = vpack.c.b16 %v6216, %v6212
  %v6273 = vpack.c.b16 %v6217, %v6213
  %v6274 = vpack.c.b16 %v6218, %v6214
  %v6275 = vpack.c.b16 %v6219, %v6215
  %v6276 = vpack.c.b16 %v6224, %v6220
  %v6277 = vpack.c.b16 %v6225, %v6221
  %v6278 = vpack.c.b16 %v6226, %v6222
  %v6279 = vpack.c.b16 %v6227, %v6223
  %v6280 = vpack.c.b16 %v6232, %v6228
  %v6281 = vpack.c.b16 %v6233, %v6229
  %v6282 = vpack.c.b16 %v6234, %v6230
  %v6283 = vpack.c.b16 %v6235, %v6231
  %v6284 = vpack.c.b16 %v6240, %v6236
  %v6285 = vpack.c.b16 %v6241, %v6237
  %v6286 = vpack.c.b16 %v6242, %v6238
  %v6287 = vpack.c.b16 %v6243, %v6239
  %v6288 = vpack.c.b16 %v6248, %v6244
  %v6289 = vpack.c.b16 %v6249, %v6245
  %v6290 = vpack.c.b16 %v6250, %v6246
  %v6291 = vpack.c.b16 %v6251, %v6247
  %v6292 = vpack.c.b16 %v6256, %v6252
  %v6293 = vpack.c.b16 %v6257, %v6253
  %v6294 = vpack.c.b16 %v6258, %v6254
  %v6295 = vpack.c.b16 %v6259, %v6255
  %v6296 = vpack.c.b16 %v6264, %v6260
  %v6297 = vpack.c.b16 %v6265, %v6261
  %v6298 = vpack.c.b16 %v6266, %v6262
  %v6299 = vpack.c.b16 %v6267, %v6263
  %6332 = vmatprep.subr.bf16.mxu0 %v6269
  %6333 = vmatpush1.bf16.msra.mxu0 %v6268
  %6334 = vmatprep.subr.bf16.mxu0 %v6273
  %6335 = vmatpush1.bf16.msra.mxu0 %v6272
  %6336 = vmatprep.subr.bf16.mxu0 %v6277
  %6337 = vmatpush1.bf16.msra.mxu0 %v6276
  %6338 = vmatprep.subr.bf16.mxu0 %v6281
  %6339 = vmatpush1.bf16.msra.mxu0 %v6280
  %6340 = vmatprep.subr.bf16.mxu0 %v6285
  %6341 = vmatpush1.bf16.msra.mxu0 %v6284
  %6342 = vmatprep.subr.bf16.mxu0 %v6289
  %6343 = vmatpush1.bf16.msra.mxu0 %v6288
  %6344 = vmatprep.subr.bf16.mxu0 %v6293
  %6345 = vmatpush1.bf16.msra.mxu0 %v6292
  %6346 = vmatprep.subr.bf16.mxu0 %v6297
  %6347 = vmatpush1.bf16.msra.mxu0 %v6296
  %6348 = vmatprep.subr.bf16.mxu0 0
  %6349 = vmatpush1.bf16.msra.mxu0 0
  %6350 = vmatprep.subr.bf16.mxu0 0
  %6351 = vmatpush1.bf16.msra.mxu0 0
  %6352 = vmatprep.subr.bf16.mxu0 0
  %6353 = vmatpush1.bf16.msra.mxu0 0
  %6354 = vmatprep.subr.bf16.mxu0 0
  %6355 = vmatpush1.bf16.msra.mxu0 0
  %6356 = vmatprep.subr.bf16.mxu0 0
  %6357 = vmatpush1.bf16.msra.mxu0 0
  %6358 = vmatprep.subr.bf16.mxu0 0
  %6359 = vmatpush1.bf16.msra.mxu0 0
  %6360 = vmatprep.subr.bf16.mxu0 0
  %6361 = vmatpush1.bf16.msra.mxu0 0
  %6362 = vmatprep.subr.bf16.mxu0 0
  %6363 = vmatpush1.bf16.msra.mxu0 0
  %6364 = vmatprep.mubr.bf16.mxu0 0
  %6365 = vmatmul.mubr.bf16.gmra.mrb[0].mxu0 %v6139
  %v6366 = vpop.f32.mrb[0].mxu0
  %v6367 = vadd.f32 0.0, %v6366
  %v6368 = vpop.f32.mrb[0].mxu0
  %v6369 = vadd.f32 0.0, %v6368
  %v6370 = vpop.f32.mrb[0].mxu0
  %v6371 = vpop.f32.mrb[0].mxu0
  %6372 = vdwg.mxu0
  %6373 = vmatprep.subr.bf16.mxu0 %v6271
  %6374 = vmatpush1.bf16.msra.mxu0 %v6270
  %6375 = vmatprep.subr.bf16.mxu0 %v6275
  %6376 = vmatpush1.bf16.msra.mxu0 %v6274
  %6377 = vmatprep.subr.bf16.mxu0 %v6279
  %6378 = vmatpush1.bf16.msra.mxu0 %v6278
  %6379 = vmatprep.subr.bf16.mxu0 %v6283
  %6380 = vmatpush1.bf16.msra.mxu0 %v6282
  %6381 = vmatprep.subr.bf16.mxu0 %v6287
  %6382 = vmatpush1.bf16.msra.mxu0 %v6286
  %6383 = vmatprep.subr.bf16.mxu0 %v6291
  %6384 = vmatpush1.bf16.msra.mxu0 %v6290
  %6385 = vmatprep.subr.bf16.mxu0 %v6295
  %6386 = vmatpush1.bf16.msra.mxu0 %v6294
  %6387 = vmatprep.subr.bf16.mxu0 %v6299
  %6388 = vmatpush1.bf16.msra.mxu0 %v6298
  %6389 = vmatprep.subr.bf16.mxu0 0
  %6390 = vmatpush1.bf16.msra.mxu0 0
  %6391 = vmatprep.subr.bf16.mxu0 0
  %6392 = vmatpush1.bf16.msra.mxu0 0
  %6393 = vmatprep.subr.bf16.mxu0 0
  %6394 = vmatpush1.bf16.msra.mxu0 0
  %6395 = vmatprep.subr.bf16.mxu0 0
  %6396 = vmatpush1.bf16.msra.mxu0 0
  %6397 = vmatprep.subr.bf16.mxu0 0
  %6398 = vmatpush1.bf16.msra.mxu0 0
  %6399 = vmatprep.subr.bf16.mxu0 0
  %6400 = vmatpush1.bf16.msra.mxu0 0
  %6401 = vmatprep.subr.bf16.mxu0 0
  %6402 = vmatpush1.bf16.msra.mxu0 0
  %6403 = vmatprep.subr.bf16.mxu0 0
  %6404 = vmatpush1.bf16.msra.mxu0 0
  %6405 = vmatprep.mubr.bf16.mxu0 0
  %6406 = vmatmul.mubr.bf16.gmra.mrb[0].mxu0 %v6139
  %v6407 = vpop.f32.mrb[0].mxu0
  %v6408 = vadd.f32 0.0, %v6407
  %v6409 = vpop.f32.mrb[0].mxu0
  %v6410 = vadd.f32 0.0, %v6409
  %v6411 = vpop.f32.mrb[0].mxu0
  %v6412 = vpop.f32.mrb[0].mxu0
  %6413 = vdwg.mxu0
  %v6446 = vunpack.c.l.b16 %v6107
  %v6447 = vunpack.c.h.b16 %v6107
  %v6448 = vunpack.c.l.b16 %v6108
  %v6449 = vunpack.c.h.b16 %v6108
  %v6450 = vunpack.c.l.b16 %v6109
  %v6451 = vunpack.c.h.b16 %v6109
  %v6452 = vunpack.c.l.b16 %v6110
  %v6453 = vunpack.c.h.b16 %v6110
  %v6454 = vunpack.c.l.b16 %v6111
  %v6455 = vunpack.c.h.b16 %v6111
  %v6456 = vunpack.c.l.b16 %v6112
  %v6457 = vunpack.c.h.b16 %v6112
  %v6458 = vunpack.c.l.b16 %v6113
  %v6459 = vunpack.c.h.b16 %v6113
  %v6460 = vunpack.c.l.b16 %v6114
  %v6461 = vunpack.c.h.b16 %v6114
  %v6462 = vunpack.c.l.b16 %v6115
  %v6463 = vunpack.c.h.b16 %v6115
  %v6464 = vunpack.c.l.b16 %v6116
  %v6465 = vunpack.c.h.b16 %v6116
  %v6466 = vunpack.c.l.b16 %v6117
  %v6467 = vunpack.c.h.b16 %v6117
  %v6468 = vunpack.c.l.b16 %v6118
  %v6469 = vunpack.c.h.b16 %v6118
  %v6470 = vunpack.c.l.b16 %v6119
  %v6471 = vunpack.c.h.b16 %v6119
  %v6472 = vunpack.c.l.b16 %v6120
  %v6473 = vunpack.c.h.b16 %v6120
  %v6474 = vunpack.c.l.b16 %v6121
  %v6475 = vunpack.c.h.b16 %v6121
  %v6476 = vunpack.c.l.b16 %v6122
  %v6477 = vunpack.c.h.b16 %v6122
  %v6478 = vunpack.c.l.b16 %v6123
  %v6479 = vunpack.c.h.b16 %v6123
  %v6480 = vunpack.c.l.b16 %v6124
  %v6481 = vunpack.c.h.b16 %v6124
  %v6482 = vunpack.c.l.b16 %v6125
  %v6483 = vunpack.c.h.b16 %v6125
  %v6484 = vunpack.c.l.b16 %v6126
  %v6485 = vunpack.c.h.b16 %v6126
  %v6486 = vunpack.c.l.b16 %v6127
  %v6487 = vunpack.c.h.b16 %v6127
  %v6488 = vunpack.c.l.b16 %v6128
  %v6489 = vunpack.c.h.b16 %v6128
  %v6490 = vunpack.c.l.b16 %v6129
  %v6491 = vunpack.c.h.b16 %v6129
  %v6492 = vunpack.c.l.b16 %v6130
  %v6493 = vunpack.c.h.b16 %v6130
  %v6494 = vunpack.c.l.b16 %v6131
  %v6495 = vunpack.c.h.b16 %v6131
  %v6496 = vunpack.c.l.b16 %v6132
  %v6497 = vunpack.c.h.b16 %v6132
  %v6498 = vunpack.c.l.b16 %v6133
  %v6499 = vunpack.c.h.b16 %v6133
  %v6500 = vunpack.c.l.b16 %v6134
  %v6501 = vunpack.c.h.b16 %v6134
  %v6502 = vunpack.c.l.b16 %v6135
  %v6503 = vunpack.c.h.b16 %v6135
  %v6504 = vunpack.c.l.b16 %v6136
  %v6505 = vunpack.c.h.b16 %v6136
  %v6506 = vunpack.c.l.b16 %v6137
  %v6507 = vunpack.c.h.b16 %v6137
  %v6508 = vunpack.c.l.b16 %v6138
  %v6509 = vunpack.c.h.b16 %v6138
  %v6510 = vpack.c.b16 %v6450, %v6446
  %v6511 = vpack.c.b16 %v6451, %v6447
  %v6512 = vpack.c.b16 %v6452, %v6448
  %v6513 = vpack.c.b16 %v6453, %v6449
  %v6514 = vpack.c.b16 %v6458, %v6454
  %v6515 = vpack.c.b16 %v6459, %v6455
  %v6516 = vpack.c.b16 %v6460, %v6456
  %v6517 = vpack.c.b16 %v6461, %v6457
  %v6518 = vpack.c.b16 %v6466, %v6462
  %v6519 = vpack.c.b16 %v6467, %v6463
  %v6520 = vpack.c.b16 %v6468, %v6464
  %v6521 = vpack.c.b16 %v6469, %v6465
  %v6522 = vpack.c.b16 %v6474, %v6470
  %v6523 = vpack.c.b16 %v6475, %v6471
  %v6524 = vpack.c.b16 %v6476, %v6472
  %v6525 = vpack.c.b16 %v6477, %v6473
  %v6526 = vpack.c.b16 %v6482, %v6478
  %v6527 = vpack.c.b16 %v6483, %v6479
  %v6528 = vpack.c.b16 %v6484, %v6480
  %v6529 = vpack.c.b16 %v6485, %v6481
  %v6530 = vpack.c.b16 %v6490, %v6486
  %v6531 = vpack.c.b16 %v6491, %v6487
  %v6532 = vpack.c.b16 %v6492, %v6488
  %v6533 = vpack.c.b16 %v6493, %v6489
  %v6534 = vpack.c.b16 %v6498, %v6494
  %v6535 = vpack.c.b16 %v6499, %v6495
  %v6536 = vpack.c.b16 %v6500, %v6496
  %v6537 = vpack.c.b16 %v6501, %v6497
  %v6538 = vpack.c.b16 %v6506, %v6502
  %v6539 = vpack.c.b16 %v6507, %v6503
  %v6540 = vpack.c.b16 %v6508, %v6504
  %v6541 = vpack.c.b16 %v6509, %v6505
  %6574 = vmatprep.subr.bf16.mxu0 %v6511
  %6575 = vmatpush1.bf16.msra.mxu0 %v6510
  %6576 = vmatprep.subr.bf16.mxu0 %v6515
  %6577 = vmatpush1.bf16.msra.mxu0 %v6514
  %6578 = vmatprep.subr.bf16.mxu0 %v6519
  %6579 = vmatpush1.bf16.msra.mxu0 %v6518
  %6580 = vmatprep.subr.bf16.mxu0 %v6523
  %6581 = vmatpush1.bf16.msra.mxu0 %v6522
  %6582 = vmatprep.subr.bf16.mxu0 %v6527
  %6583 = vmatpush1.bf16.msra.mxu0 %v6526
  %6584 = vmatprep.subr.bf16.mxu0 %v6531
  %6585 = vmatpush1.bf16.msra.mxu0 %v6530
  %6586 = vmatprep.subr.bf16.mxu0 %v6535
  %6587 = vmatpush1.bf16.msra.mxu0 %v6534
  %6588 = vmatprep.subr.bf16.mxu0 %v6539
  %6589 = vmatpush1.bf16.msra.mxu0 %v6538
  %6590 = vmatprep.subr.bf16.mxu0 0
  %6591 = vmatpush1.bf16.msra.mxu0 0
  %6592 = vmatprep.subr.bf16.mxu0 0
  %6593 = vmatpush1.bf16.msra.mxu0 0
  %6594 = vmatprep.subr.bf16.mxu0 0
  %6595 = vmatpush1.bf16.msra.mxu0 0
  %6596 = vmatprep.subr.bf16.mxu0 0
  %6597 = vmatpush1.bf16.msra.mxu0 0
  %6598 = vmatprep.subr.bf16.mxu0 0
  %6599 = vmatpush1.bf16.msra.mxu0 0
  %6600 = vmatprep.subr.bf16.mxu0 0
  %6601 = vmatpush1.bf16.msra.mxu0 0
  %6602 = vmatprep.subr.bf16.mxu0 0
  %6603 = vmatpush1.bf16.msra.mxu0 0
  %6604 = vmatprep.subr.bf16.mxu0 0
  %6605 = vmatpush1.bf16.msra.mxu0 0
  %6606 = vmatprep.mubr.bf16.mxu0 0
  %6607 = vmatmul.mubr.bf16.gmra.mrb[0].mxu0 %v6106
  %v6608 = vpop.f32.mrb[0].mxu0
  %v6609 = vadd.f32 %v6367, %v6608
  %v6610 = vpop.f32.mrb[0].mxu0
  %v6611 = vadd.f32 %v6369, %v6610
  %v6612 = vpop.f32.mrb[0].mxu0
  %v6613 = vpop.f32.mrb[0].mxu0
  %6614 = vdwg.mxu0
  %6615 = vmatprep.subr.bf16.mxu0 %v6513
  %6616 = vmatpush1.bf16.msra.mxu0 %v6512
  %6617 = vmatprep.subr.bf16.mxu0 %v6517
  %6618 = vmatpush1.bf16.msra.mxu0 %v6516
  %6619 = vmatprep.subr.bf16.mxu0 %v6521
  %6620 = vmatpush1.bf16.msra.mxu0 %v6520
  %6621 = vmatprep.subr.bf16.mxu0 %v6525
  %6622 = vmatpush1.bf16.msra.mxu0 %v6524
  %6623 = vmatprep.subr.bf16.mxu0 %v6529
  %6624 = vmatpush1.bf16.msra.mxu0 %v6528
  %6625 = vmatprep.subr.bf16.mxu0 %v6533
  %6626 = vmatpush1.bf16.msra.mxu0 %v6532
  %6627 = vmatprep.subr.bf16.mxu0 %v6537
  %6628 = vmatpush1.bf16.msra.mxu0 %v6536
  %6629 = vmatprep.subr.bf16.mxu0 %v6541
  %6630 = vmatpush1.bf16.msra.mxu0 %v6540
  %6631 = vmatprep.subr.bf16.mxu0 0
  %6632 = vmatpush1.bf16.msra.mxu0 0
  %6633 = vmatprep.subr.bf16.mxu0 0
  %6634 = vmatpush1.bf16.msra.mxu0 0
  %6635 = vmatprep.subr.bf16.mxu0 0
  %6636 = vmatpush1.bf16.msra.mxu0 0
  %6637 = vmatprep.subr.bf16.mxu0 0
  %6638 = vmatpush1.bf16.msra.mxu0 0
  %6639 = vmatprep.subr.bf16.mxu0 0
  %6640 = vmatpush1.bf16.msra.mxu0 0
  %6641 = vmatprep.subr.bf16.mxu0 0
  %6642 = vmatpush1.bf16.msra.mxu0 0
  %6643 = vmatprep.subr.bf16.mxu0 0
  %6644 = vmatpush1.bf16.msra.mxu0 0
  %6645 = vmatprep.subr.bf16.mxu0 0
  %6646 = vmatpush1.bf16.msra.mxu0 0
  %6647 = vmatprep.mubr.bf16.mxu0 0
  %6648 = vmatmul.mubr.bf16.gmra.mrb[0].mxu0 %v6106
  %v6649 = vpop.f32.mrb[0].mxu0
  %v6650 = vadd.f32 %v6408, %v6649
  %v6651 = vpop.f32.mrb[0].mxu0
  %v6652 = vadd.f32 %v6410, %v6651
  %v6653 = vpop.f32.mrb[0].mxu0
  %v6654 = vpop.f32.mrb[0].mxu0
  %6655 = vdwg.mxu0
  %v6656 = vld [vmem:[%s7] sm:$0xf]
  %v6658 = vlaneseq
  %v6659 = vshrl.u32 %v6658, 7
  %v6660 = vsub.s32 0, %v6659
  %v6661 = vrot.slane %v6656, %v6660
  %v6662 = vlaneseq
  %v6663 = vshrl.u32 %v6662, 7
  %v6664 = vsub.s32 1, %v6663
  %v6665 = vrot.slane %v6656, %v6664
  %v6666 = vlaneseq
  %v6667 = vshrl.u32 %v6666, 7
  %v6668 = vsub.s32 2, %v6667
  %v6669 = vrot.slane %v6656, %v6668
  %v6670 = vlaneseq
  %v6671 = vshrl.u32 %v6670, 7
  %v6672 = vsub.s32 3, %v6671
  %v6673 = vrot.slane %v6656, %v6672
  %v6678 = vadd.f32 %v6609, %v6661
  %v6679 = vadd.f32 %v6611, %v6665
  %v6680 = vadd.f32 %v6650, %v6669
  %v6681 = vadd.f32 %v6652, %v6673
  %v6682 = vxor.u32 %v6678, 2147483648
  %v6683 = vxor.u32 %v6679, 2147483648
  %v6684 = vxor.u32 %v6680, 2147483648
  %v6685 = vmul.f32 %v6682, 1.442695
  %v6686 = vpow.pop %v6685
  %v6687 = vmul.f32 %v6683, 1.442695
  %v6688 = vpow.pop %v6687
  %v6689 = vmul.f32 %v6684, 1.442695
  %v6690 = vpow.pop %v6689
  %v6691 = vadd.f32 %v6686, 1.0
  %v6692 = vadd.f32 %v6688, 1.0
  %v6693 = vadd.f32 %v6690, 1.0
  %v6694 = vrcp.pop %v6691
  %v6695 = vmul.f32 1.0, %v6694
  %v6696 = vrcp.pop %v6692
  %v6697 = vmul.f32 1.0, %v6696
  %v6698 = vrcp.pop %v6693
  %v6699 = vmul.f32 1.0, %v6698
  %v6700 = vtanh.pop %v6681
  %v6701 = vmul.f32 %v6697, %v5798
  %v6702 = vmul.f32 %v6695, %v6700
  %v6703 = vadd.f32 %v6701, %v6702
  %v6704 = vtanh.pop %v6703
  %v6705 = vmul.f32 %v6699, %v6704
  %6706 = vst [vmem:[#allocation2] sm:$0xff] %v6105
  %6707 = vst [vmem:[#allocation2 + $0x8] sm:$0xff] %v6103
  %6708 = vst [vmem:[#allocation2 + $0x10] sm:$0xff] %v6705
  %6709 = vst [vmem:[#allocation2 + $0x18] sm:$0xff] %v6703
  %6710 = vst [vmem:[#allocation4 + $0x30] sm:$0xff] %v6705
  %v6711 = vld [vmem:[#allocation2] sm:$0xff]
  %v6712 = vld [vmem:[#allocation2 + $0x8] sm:$0xff]
  %v6713 = vld [vmem:[#allocation2 + $0x10] sm:$0xff]
  %v6714 = vld [vmem:[#allocation2 + $0x18] sm:$0xff]
  %v6715 = vld [vmem:[#allocation3 + $0xe0] sm:$0xff]
  %v6716 = vld [vmem:[#allocation3 + $0xe8] sm:$0xff]
  %v6717 = vld [vmem:[#allocation3 + $0xf0] sm:$0xff]
  %v6718 = vld [vmem:[#allocation3 + $0xf8] sm:$0xff]
  %v6719 = vpack.c.bf16 %v6711, %v6711
  %v6720 = vld [vmem:[%s4] sm:$0xff]
  %v6721 = vld [vmem:[%s4 + $0x8] sm:$0xff]
  %v6722 = vld [vmem:[%s4 + $0x10] sm:$0xff]
  %v6723 = vld [vmem:[%s4 + $0x18] sm:$0xff]
  %v6724 = vld [vmem:[%s4 + $0x20] sm:$0xff]
  %v6725 = vld [vmem:[%s4 + $0x28] sm:$0xff]
  %v6726 = vld [vmem:[%s4 + $0x30] sm:$0xff]
  %v6727 = vld [vmem:[%s4 + $0x38] sm:$0xff]
  %v6728 = vld [vmem:[%s4 + $0x40] sm:$0xff]
  %v6729 = vld [vmem:[%s4 + $0x48] sm:$0xff]
  %v6730 = vld [vmem:[%s4 + $0x50] sm:$0xff]
  %v6731 = vld [vmem:[%s4 + $0x58] sm:$0xff]
  %v6732 = vld [vmem:[%s4 + $0x60] sm:$0xff]
  %v6733 = vld [vmem:[%s4 + $0x68] sm:$0xff]
  %v6734 = vld [vmem:[%s4 + $0x70] sm:$0xff]
  %v6735 = vld [vmem:[%s4 + $0x78] sm:$0xff]
  %v6736 = vld [vmem:[%s4 + $0x80] sm:$0xff]
  %v6737 = vld [vmem:[%s4 + $0x88] sm:$0xff]
  %v6738 = vld [vmem:[%s4 + $0x90] sm:$0xff]
  %v6739 = vld [vmem:[%s4 + $0x98] sm:$0xff]
  %v6740 = vld [vmem:[%s4 + $0xa0] sm:$0xff]
  %v6741 = vld [vmem:[%s4 + $0xa8] sm:$0xff]
  %v6742 = vld [vmem:[%s4 + $0xb0] sm:$0xff]
  %v6743 = vld [vmem:[%s4 + $0xb8] sm:$0xff]
  %v6744 = vld [vmem:[%s4 + $0xc0] sm:$0xff]
  %v6745 = vld [vmem:[%s4 + $0xc8] sm:$0xff]
  %v6746 = vld [vmem:[%s4 + $0xd0] sm:$0xff]
  %v6747 = vld [vmem:[%s4 + $0xd8] sm:$0xff]
  %v6748 = vld [vmem:[%s4 + $0xe0] sm:$0xff]
  %v6749 = vld [vmem:[%s4 + $0xe8] sm:$0xff]
  %v6750 = vld [vmem:[%s4 + $0xf0] sm:$0xff]
  %v6751 = vld [vmem:[%s4 + $0xf8] sm:$0xff]
  %v6784 = vunpack.c.l.b16 %v6720
  %v6785 = vunpack.c.h.b16 %v6720
  %v6786 = vunpack.c.l.b16 %v6721
  %v6787 = vunpack.c.h.b16 %v6721
  %v6788 = vunpack.c.l.b16 %v6722
  %v6789 = vunpack.c.h.b16 %v6722
  %v6790 = vunpack.c.l.b16 %v6723
  %v6791 = vunpack.c.h.b16 %v6723
  %v6792 = vunpack.c.l.b16 %v6724
  %v6793 = vunpack.c.h.b16 %v6724
  %v6794 = vunpack.c.l.b16 %v6725
  %v6795 = vunpack.c.h.b16 %v6725
  %v6796 = vunpack.c.l.b16 %v6726
  %v6797 = vunpack.c.h.b16 %v6726
  %v6798 = vunpack.c.l.b16 %v6727
  %v6799 = vunpack.c.h.b16 %v6727
  %v6800 = vunpack.c.l.b16 %v6728
  %v6801 = vunpack.c.h.b16 %v6728
  %v6802 = vunpack.c.l.b16 %v6729
  %v6803 = vunpack.c.h.b16 %v6729
  %v6804 = vunpack.c.l.b16 %v6730
  %v6805 = vunpack.c.h.b16 %v6730
  %v6806 = vunpack.c.l.b16 %v6731
  %v6807 = vunpack.c.h.b16 %v6731
  %v6808 = vunpack.c.l.b16 %v6732
  %v6809 = vunpack.c.h.b16 %v6732
  %v6810 = vunpack.c.l.b16 %v6733
  %v6811 = vunpack.c.h.b16 %v6733
  %v6812 = vunpack.c.l.b16 %v6734
  %v6813 = vunpack.c.h.b16 %v6734
  %v6814 = vunpack.c.l.b16 %v6735
  %v6815 = vunpack.c.h.b16 %v6735
  %v6816 = vunpack.c.l.b16 %v6736
  %v6817 = vunpack.c.h.b16 %v6736
  %v6818 = vunpack.c.l.b16 %v6737
  %v6819 = vunpack.c.h.b16 %v6737
  %v6820 = vunpack.c.l.b16 %v6738
  %v6821 = vunpack.c.h.b16 %v6738
  %v6822 = vunpack.c.l.b16 %v6739
  %v6823 = vunpack.c.h.b16 %v6739
  %v6824 = vunpack.c.l.b16 %v6740
  %v6825 = vunpack.c.h.b16 %v6740
  %v6826 = vunpack.c.l.b16 %v6741
  %v6827 = vunpack.c.h.b16 %v6741
  %v6828 = vunpack.c.l.b16 %v6742
  %v6829 = vunpack.c.h.b16 %v6742
  %v6830 = vunpack.c.l.b16 %v6743
  %v6831 = vunpack.c.h.b16 %v6743
  %v6832 = vunpack.c.l.b16 %v6744
  %v6833 = vunpack.c.h.b16 %v6744
  %v6834 = vunpack.c.l.b16 %v6745
  %v6835 = vunpack.c.h.b16 %v6745
  %v6836 = vunpack.c.l.b16 %v6746
  %v6837 = vunpack.c.h.b16 %v6746
  %v6838 = vunpack.c.l.b16 %v6747
  %v6839 = vunpack.c.h.b16 %v6747
  %v6840 = vunpack.c.l.b16 %v6748
  %v6841 = vunpack.c.h.b16 %v6748
  %v6842 = vunpack.c.l.b16 %v6749
  %v6843 = vunpack.c.h.b16 %v6749
  %v6844 = vunpack.c.l.b16 %v6750
  %v6845 = vunpack.c.h.b16 %v6750
  %v6846 = vunpack.c.l.b16 %v6751
  %v6847 = vunpack.c.h.b16 %v6751
  %v6848 = vpack.c.b16 %v6788, %v6784
  %v6849 = vpack.c.b16 %v6789, %v6785
  %v6850 = vpack.c.b16 %v6790, %v6786
  %v6851 = vpack.c.b16 %v6791, %v6787
  %v6852 = vpack.c.b16 %v6796, %v6792
  %v6853 = vpack.c.b16 %v6797, %v6793
  %v6854 = vpack.c.b16 %v6798, %v6794
  %v6855 = vpack.c.b16 %v6799, %v6795
  %v6856 = vpack.c.b16 %v6804, %v6800
  %v6857 = vpack.c.b16 %v6805, %v6801
  %v6858 = vpack.c.b16 %v6806, %v6802
  %v6859 = vpack.c.b16 %v6807, %v6803
  %v6860 = vpack.c.b16 %v6812, %v6808
  %v6861 = vpack.c.b16 %v6813, %v6809
  %v6862 = vpack.c.b16 %v6814, %v6810
  %v6863 = vpack.c.b16 %v6815, %v6811
  %v6864 = vpack.c.b16 %v6820, %v6816
  %v6865 = vpack.c.b16 %v6821, %v6817
  %v6866 = vpack.c.b16 %v6822, %v6818
  %v6867 = vpack.c.b16 %v6823, %v6819
  %v6868 = vpack.c.b16 %v6828, %v6824
  %v6869 = vpack.c.b16 %v6829, %v6825
  %v6870 = vpack.c.b16 %v6830, %v6826
  %v6871 = vpack.c.b16 %v6831, %v6827
  %v6872 = vpack.c.b16 %v6836, %v6832
  %v6873 = vpack.c.b16 %v6837, %v6833
  %v6874 = vpack.c.b16 %v6838, %v6834
  %v6875 = vpack.c.b16 %v6839, %v6835
  %v6876 = vpack.c.b16 %v6844, %v6840
  %v6877 = vpack.c.b16 %v6845, %v6841
  %v6878 = vpack.c.b16 %v6846, %v6842
  %v6879 = vpack.c.b16 %v6847, %v6843
  %6912 = vmatprep.subr.bf16.mxu0 %v6849
  %6913 = vmatpush1.bf16.msra.mxu0 %v6848
  %6914 = vmatprep.subr.bf16.mxu0 %v6853
  %6915 = vmatpush1.bf16.msra.mxu0 %v6852
  %6916 = vmatprep.subr.bf16.mxu0 %v6857
  %6917 = vmatpush1.bf16.msra.mxu0 %v6856
  %6918 = vmatprep.subr.bf16.mxu0 %v6861
  %6919 = vmatpush1.bf16.msra.mxu0 %v6860
  %6920 = vmatprep.subr.bf16.mxu0 %v6865
  %6921 = vmatpush1.bf16.msra.mxu0 %v6864
  %6922 = vmatprep.subr.bf16.mxu0 %v6869
  %6923 = vmatpush1.bf16.msra.mxu0 %v6868
  %6924 = vmatprep.subr.bf16.mxu0 %v6873
  %6925 = vmatpush1.bf16.msra.mxu0 %v6872
  %6926 = vmatprep.subr.bf16.mxu0 %v6877
  %6927 = vmatpush1.bf16.msra.mxu0 %v6876
  %6928 = vmatprep.subr.bf16.mxu0 0
  %6929 = vmatpush1.bf16.msra.mxu0 0
  %6930 = vmatprep.subr.bf16.mxu0 0
  %6931 = vmatpush1.bf16.msra.mxu0 0
  %6932 = vmatprep.subr.bf16.mxu0 0
  %6933 = vmatpush1.bf16.msra.mxu0 0
  %6934 = vmatprep.subr.bf16.mxu0 0
  %6935 = vmatpush1.bf16.msra.mxu0 0
  %6936 = vmatprep.subr.bf16.mxu0 0
  %6937 = vmatpush1.bf16.msra.mxu0 0
  %6938 = vmatprep.subr.bf16.mxu0 0
  %6939 = vmatpush1.bf16.msra.mxu0 0
  %6940 = vmatprep.subr.bf16.mxu0 0
  %6941 = vmatpush1.bf16.msra.mxu0 0
  %6942 = vmatprep.subr.bf16.mxu0 0
  %6943 = vmatpush1.bf16.msra.mxu0 0
  %6944 = vmatprep.mubr.bf16.mxu0 0
  %6945 = vmatmul.mubr.bf16.gmra.mrb[0].mxu0 %v6719
  %v6946 = vpop.f32.mrb[0].mxu0
  %v6947 = vadd.f32 0.0, %v6946
  %v6948 = vpop.f32.mrb[0].mxu0
  %v6949 = vadd.f32 0.0, %v6948
  %v6950 = vpop.f32.mrb[0].mxu0
  %v6951 = vpop.f32.mrb[0].mxu0
  %6952 = vdwg.mxu0
  %6953 = vmatprep.subr.bf16.mxu0 %v6851
  %6954 = vmatpush1.bf16.msra.mxu0 %v6850
  %6955 = vmatprep.subr.bf16.mxu0 %v6855
  %6956 = vmatpush1.bf16.msra.mxu0 %v6854
  %6957 = vmatprep.subr.bf16.mxu0 %v6859
  %6958 = vmatpush1.bf16.msra.mxu0 %v6858
  %6959 = vmatprep.subr.bf16.mxu0 %v6863
  %6960 = vmatpush1.bf16.msra.mxu0 %v6862
  %6961 = vmatprep.subr.bf16.mxu0 %v6867
  %6962 = vmatpush1.bf16.msra.mxu0 %v6866
  %6963 = vmatprep.subr.bf16.mxu0 %v6871
  %6964 = vmatpush1.bf16.msra.mxu0 %v6870
  %6965 = vmatprep.subr.bf16.mxu0 %v6875
  %6966 = vmatpush1.bf16.msra.mxu0 %v6874
  %6967 = vmatprep.subr.bf16.mxu0 %v6879
  %6968 = vmatpush1.bf16.msra.mxu0 %v6878
  %6969 = vmatprep.subr.bf16.mxu0 0
  %6970 = vmatpush1.bf16.msra.mxu0 0
  %6971 = vmatprep.subr.bf16.mxu0 0
  %6972 = vmatpush1.bf16.msra.mxu0 0
  %6973 = vmatprep.subr.bf16.mxu0 0
  %6974 = vmatpush1.bf16.msra.mxu0 0
  %6975 = vmatprep.subr.bf16.mxu0 0
  %6976 = vmatpush1.bf16.msra.mxu0 0
  %6977 = vmatprep.subr.bf16.mxu0 0
  %6978 = vmatpush1.bf16.msra.mxu0 0
  %6979 = vmatprep.subr.bf16.mxu0 0
  %6980 = vmatpush1.bf16.msra.mxu0 0
  %6981 = vmatprep.subr.bf16.mxu0 0
  %6982 = vmatpush1.bf16.msra.mxu0 0
  %6983 = vmatprep.subr.bf16.mxu0 0
  %6984 = vmatpush1.bf16.msra.mxu0 0
  %6985 = vmatprep.mubr.bf16.mxu0 0
  %6986 = vmatmul.mubr.bf16.gmra.mrb[0].mxu0 %v6719
  %v6987 = vpop.f32.mrb[0].mxu0
  %v6988 = vadd.f32 0.0, %v6987
  %v6989 = vpop.f32.mrb[0].mxu0
  %v6990 = vadd.f32 0.0, %v6989
  %v6991 = vpop.f32.mrb[0].mxu0
  %v6992 = vpop.f32.mrb[0].mxu0
  %6993 = vdwg.mxu0
  %v6994 = vadd.f32 %v6715, %v6947
  %v6995 = vadd.f32 %v6716, %v6949
  %v6996 = vadd.f32 %v6717, %v6988
  %v6997 = vadd.f32 %v6718, %v6990
  %v6998 = vxor.u32 %v6994, 2147483648
  %v6999 = vxor.u32 %v6995, 2147483648
  %v7000 = vxor.u32 %v6996, 2147483648
  %v7001 = vmul.f32 %v6998, 1.442695
  %v7002 = vpow.pop %v7001
  %v7003 = vmul.f32 %v6999, 1.442695
  %v7004 = vpow.pop %v7003
  %v7005 = vmul.f32 %v7000, 1.442695
  %v7006 = vpow.pop %v7005
  %v7007 = vadd.f32 %v7002, 1.0
  %v7008 = vadd.f32 %v7004, 1.0
  %v7009 = vadd.f32 %v7006, 1.0
  %v7010 = vrcp.pop %v7007
  %v7011 = vmul.f32 1.0, %v7010
  %v7012 = vrcp.pop %v7008
  %v7013 = vmul.f32 1.0, %v7012
  %v7014 = vrcp.pop %v7009
  %v7015 = vmul.f32 1.0, %v7014
  %v7016 = vtanh.pop %v6997
  %v7017 = vmul.f32 %v7013, %v6712
  %v7018 = vmul.f32 %v7011, %v7016
  %v7019 = vadd.f32 %v7017, %v7018
  %v7020 = vtanh.pop %v7019
  %v7021 = vmul.f32 %v7015, %v7020
  %v7022 = vpack.c.bf16 %v7021, %v7021
  %v7023 = vld [vmem:[%s5] sm:$0xff]
  %v7024 = vld [vmem:[%s5 + $0x8] sm:$0xff]
  %v7025 = vld [vmem:[%s5 + $0x10] sm:$0xff]
  %v7026 = vld [vmem:[%s5 + $0x18] sm:$0xff]
  %v7027 = vld [vmem:[%s5 + $0x20] sm:$0xff]
  %v7028 = vld [vmem:[%s5 + $0x28] sm:$0xff]
  %v7029 = vld [vmem:[%s5 + $0x30] sm:$0xff]
  %v7030 = vld [vmem:[%s5 + $0x38] sm:$0xff]
  %v7031 = vld [vmem:[%s5 + $0x40] sm:$0xff]
  %v7032 = vld [vmem:[%s5 + $0x48] sm:$0xff]
  %v7033 = vld [vmem:[%s5 + $0x50] sm:$0xff]
  %v7034 = vld [vmem:[%s5 + $0x58] sm:$0xff]
  %v7035 = vld [vmem:[%s5 + $0x60] sm:$0xff]
  %v7036 = vld [vmem:[%s5 + $0x68] sm:$0xff]
  %v7037 = vld [vmem:[%s5 + $0x70] sm:$0xff]
  %v7038 = vld [vmem:[%s5 + $0x78] sm:$0xff]
  %v7039 = vld [vmem:[%s5 + $0x80] sm:$0xff]
  %v7040 = vld [vmem:[%s5 + $0x88] sm:$0xff]
  %v7041 = vld [vmem:[%s5 + $0x90] sm:$0xff]
  %v7042 = vld [vmem:[%s5 + $0x98] sm:$0xff]
  %v7043 = vld [vmem:[%s5 + $0xa0] sm:$0xff]
  %v7044 = vld [vmem:[%s5 + $0xa8] sm:$0xff]
  %v7045 = vld [vmem:[%s5 + $0xb0] sm:$0xff]
  %v7046 = vld [vmem:[%s5 + $0xb8] sm:$0xff]
  %v7047 = vld [vmem:[%s5 + $0xc0] sm:$0xff]
  %v7048 = vld [vmem:[%s5 + $0xc8] sm:$0xff]
  %v7049 = vld [vmem:[%s5 + $0xd0] sm:$0xff]
  %v7050 = vld [vmem:[%s5 + $0xd8] sm:$0xff]
  %v7051 = vld [vmem:[%s5 + $0xe0] sm:$0xff]
  %v7052 = vld [vmem:[%s5 + $0xe8] sm:$0xff]
  %v7053 = vld [vmem:[%s5 + $0xf0] sm:$0xff]
  %v7054 = vld [vmem:[%s5 + $0xf8] sm:$0xff]
  %v7055 = vpack.c.bf16 %v6713, %v6713
  %v7056 = vld [vmem:[%s6] sm:$0xff]
  %v7057 = vld [vmem:[%s6 + $0x8] sm:$0xff]
  %v7058 = vld [vmem:[%s6 + $0x10] sm:$0xff]
  %v7059 = vld [vmem:[%s6 + $0x18] sm:$0xff]
  %v7060 = vld [vmem:[%s6 + $0x20] sm:$0xff]
  %v7061 = vld [vmem:[%s6 + $0x28] sm:$0xff]
  %v7062 = vld [vmem:[%s6 + $0x30] sm:$0xff]
  %v7063 = vld [vmem:[%s6 + $0x38] sm:$0xff]
  %v7064 = vld [vmem:[%s6 + $0x40] sm:$0xff]
  %v7065 = vld [vmem:[%s6 + $0x48] sm:$0xff]
  %v7066 = vld [vmem:[%s6 + $0x50] sm:$0xff]
  %v7067 = vld [vmem:[%s6 + $0x58] sm:$0xff]
  %v7068 = vld [vmem:[%s6 + $0x60] sm:$0xff]
  %v7069 = vld [vmem:[%s6 + $0x68] sm:$0xff]
  %v7070 = vld [vmem:[%s6 + $0x70] sm:$0xff]
  %v7071 = vld [vmem:[%s6 + $0x78] sm:$0xff]
  %v7072 = vld [vmem:[%s6 + $0x80] sm:$0xff]
  %v7073 = vld [vmem:[%s6 + $0x88] sm:$0xff]
  %v7074 = vld [vmem:[%s6 + $0x90] sm:$0xff]
  %v7075 = vld [vmem:[%s6 + $0x98] sm:$0xff]
  %v7076 = vld [vmem:[%s6 + $0xa0] sm:$0xff]
  %v7077 = vld [vmem:[%s6 + $0xa8] sm:$0xff]
  %v7078 = vld [vmem:[%s6 + $0xb0] sm:$0xff]
  %v7079 = vld [vmem:[%s6 + $0xb8] sm:$0xff]
  %v7080 = vld [vmem:[%s6 + $0xc0] sm:$0xff]
  %v7081 = vld [vmem:[%s6 + $0xc8] sm:$0xff]
  %v7082 = vld [vmem:[%s6 + $0xd0] sm:$0xff]
  %v7083 = vld [vmem:[%s6 + $0xd8] sm:$0xff]
  %v7084 = vld [vmem:[%s6 + $0xe0] sm:$0xff]
  %v7085 = vld [vmem:[%s6 + $0xe8] sm:$0xff]
  %v7086 = vld [vmem:[%s6 + $0xf0] sm:$0xff]
  %v7087 = vld [vmem:[%s6 + $0xf8] sm:$0xff]
  %v7120 = vunpack.c.l.b16 %v7056
  %v7121 = vunpack.c.h.b16 %v7056
  %v7122 = vunpack.c.l.b16 %v7057
  %v7123 = vunpack.c.h.b16 %v7057
  %v7124 = vunpack.c.l.b16 %v7058
  %v7125 = vunpack.c.h.b16 %v7058
  %v7126 = vunpack.c.l.b16 %v7059
  %v7127 = vunpack.c.h.b16 %v7059
  %v7128 = vunpack.c.l.b16 %v7060
  %v7129 = vunpack.c.h.b16 %v7060
  %v7130 = vunpack.c.l.b16 %v7061
  %v7131 = vunpack.c.h.b16 %v7061
  %v7132 = vunpack.c.l.b16 %v7062
  %v7133 = vunpack.c.h.b16 %v7062
  %v7134 = vunpack.c.l.b16 %v7063
  %v7135 = vunpack.c.h.b16 %v7063
  %v7136 = vunpack.c.l.b16 %v7064
  %v7137 = vunpack.c.h.b16 %v7064
  %v7138 = vunpack.c.l.b16 %v7065
  %v7139 = vunpack.c.h.b16 %v7065
  %v7140 = vunpack.c.l.b16 %v7066
  %v7141 = vunpack.c.h.b16 %v7066
  %v7142 = vunpack.c.l.b16 %v7067
  %v7143 = vunpack.c.h.b16 %v7067
  %v7144 = vunpack.c.l.b16 %v7068
  %v7145 = vunpack.c.h.b16 %v7068
  %v7146 = vunpack.c.l.b16 %v7069
  %v7147 = vunpack.c.h.b16 %v7069
  %v7148 = vunpack.c.l.b16 %v7070
  %v7149 = vunpack.c.h.b16 %v7070
  %v7150 = vunpack.c.l.b16 %v7071
  %v7151 = vunpack.c.h.b16 %v7071
  %v7152 = vunpack.c.l.b16 %v7072
  %v7153 = vunpack.c.h.b16 %v7072
  %v7154 = vunpack.c.l.b16 %v7073
  %v7155 = vunpack.c.h.b16 %v7073
  %v7156 = vunpack.c.l.b16 %v7074
  %v7157 = vunpack.c.h.b16 %v7074
  %v7158 = vunpack.c.l.b16 %v7075
  %v7159 = vunpack.c.h.b16 %v7075
  %v7160 = vunpack.c.l.b16 %v7076
  %v7161 = vunpack.c.h.b16 %v7076
  %v7162 = vunpack.c.l.b16 %v7077
  %v7163 = vunpack.c.h.b16 %v7077
  %v7164 = vunpack.c.l.b16 %v7078
  %v7165 = vunpack.c.h.b16 %v7078
  %v7166 = vunpack.c.l.b16 %v7079
  %v7167 = vunpack.c.h.b16 %v7079
  %v7168 = vunpack.c.l.b16 %v7080
  %v7169 = vunpack.c.h.b16 %v7080
  %v7170 = vunpack.c.l.b16 %v7081
  %v7171 = vunpack.c.h.b16 %v7081
  %v7172 = vunpack.c.l.b16 %v7082
  %v7173 = vunpack.c.h.b16 %v7082
  %v7174 = vunpack.c.l.b16 %v7083
  %v7175 = vunpack.c.h.b16 %v7083
  %v7176 = vunpack.c.l.b16 %v7084
  %v7177 = vunpack.c.h.b16 %v7084
  %v7178 = vunpack.c.l.b16 %v7085
  %v7179 = vunpack.c.h.b16 %v7085
  %v7180 = vunpack.c.l.b16 %v7086
  %v7181 = vunpack.c.h.b16 %v7086
  %v7182 = vunpack.c.l.b16 %v7087
  %v7183 = vunpack.c.h.b16 %v7087
  %v7184 = vpack.c.b16 %v7124, %v7120
  %v7185 = vpack.c.b16 %v7125, %v7121
  %v7186 = vpack.c.b16 %v7126, %v7122
  %v7187 = vpack.c.b16 %v7127, %v7123
  %v7188 = vpack.c.b16 %v7132, %v7128
  %v7189 = vpack.c.b16 %v7133, %v7129
  %v7190 = vpack.c.b16 %v7134, %v7130
  %v7191 = vpack.c.b16 %v7135, %v7131
  %v7192 = vpack.c.b16 %v7140, %v7136
  %v7193 = vpack.c.b16 %v7141, %v7137
  %v7194 = vpack.c.b16 %v7142, %v7138
  %v7195 = vpack.c.b16 %v7143, %v7139
  %v7196 = vpack.c.b16 %v7148, %v7144
  %v7197 = vpack.c.b16 %v7149, %v7145
  %v7198 = vpack.c.b16 %v7150, %v7146
  %v7199 = vpack.c.b16 %v7151, %v7147
  %v7200 = vpack.c.b16 %v7156, %v7152
  %v7201 = vpack.c.b16 %v7157, %v7153
  %v7202 = vpack.c.b16 %v7158, %v7154
  %v7203 = vpack.c.b16 %v7159, %v7155
  %v7204 = vpack.c.b16 %v7164, %v7160
  %v7205 = vpack.c.b16 %v7165, %v7161
  %v7206 = vpack.c.b16 %v7166, %v7162
  %v7207 = vpack.c.b16 %v7167, %v7163
  %v7208 = vpack.c.b16 %v7172, %v7168
  %v7209 = vpack.c.b16 %v7173, %v7169
  %v7210 = vpack.c.b16 %v7174, %v7170
  %v7211 = vpack.c.b16 %v7175, %v7171
  %v7212 = vpack.c.b16 %v7180, %v7176
  %v7213 = vpack.c.b16 %v7181, %v7177
  %v7214 = vpack.c.b16 %v7182, %v7178
  %v7215 = vpack.c.b16 %v7183, %v7179
  %7248 = vmatprep.subr.bf16.mxu0 %v7185
  %7249 = vmatpush1.bf16.msra.mxu0 %v7184
  %7250 = vmatprep.subr.bf16.mxu0 %v7189
  %7251 = vmatpush1.bf16.msra.mxu0 %v7188
  %7252 = vmatprep.subr.bf16.mxu0 %v7193
  %7253 = vmatpush1.bf16.msra.mxu0 %v7192
  %7254 = vmatprep.subr.bf16.mxu0 %v7197
  %7255 = vmatpush1.bf16.msra.mxu0 %v7196
  %7256 = vmatprep.subr.bf16.mxu0 %v7201
  %7257 = vmatpush1.bf16.msra.mxu0 %v7200
  %7258 = vmatprep.subr.bf16.mxu0 %v7205
  %7259 = vmatpush1.bf16.msra.mxu0 %v7204
  %7260 = vmatprep.subr.bf16.mxu0 %v7209
  %7261 = vmatpush1.bf16.msra.mxu0 %v7208
  %7262 = vmatprep.subr.bf16.mxu0 %v7213
  %7263 = vmatpush1.bf16.msra.mxu0 %v7212
  %7264 = vmatprep.subr.bf16.mxu0 0
  %7265 = vmatpush1.bf16.msra.mxu0 0
  %7266 = vmatprep.subr.bf16.mxu0 0
  %7267 = vmatpush1.bf16.msra.mxu0 0
  %7268 = vmatprep.subr.bf16.mxu0 0
  %7269 = vmatpush1.bf16.msra.mxu0 0
  %7270 = vmatprep.subr.bf16.mxu0 0
  %7271 = vmatpush1.bf16.msra.mxu0 0
  %7272 = vmatprep.subr.bf16.mxu0 0
  %7273 = vmatpush1.bf16.msra.mxu0 0
  %7274 = vmatprep.subr.bf16.mxu0 0
  %7275 = vmatpush1.bf16.msra.mxu0 0
  %7276 = vmatprep.subr.bf16.mxu0 0
  %7277 = vmatpush1.bf16.msra.mxu0 0
  %7278 = vmatprep.subr.bf16.mxu0 0
  %7279 = vmatpush1.bf16.msra.mxu0 0
  %7280 = vmatprep.mubr.bf16.mxu0 0
  %7281 = vmatmul.mubr.bf16.gmra.mrb[0].mxu0 %v7055
  %v7282 = vpop.f32.mrb[0].mxu0
  %v7283 = vadd.f32 0.0, %v7282
  %v7284 = vpop.f32.mrb[0].mxu0
  %v7285 = vadd.f32 0.0, %v7284
  %v7286 = vpop.f32.mrb[0].mxu0
  %v7287 = vpop.f32.mrb[0].mxu0
  %7288 = vdwg.mxu0
  %7289 = vmatprep.subr.bf16.mxu0 %v7187
  %7290 = vmatpush1.bf16.msra.mxu0 %v7186
  %7291 = vmatprep.subr.bf16.mxu0 %v7191
  %7292 = vmatpush1.bf16.msra.mxu0 %v7190
  %7293 = vmatprep.subr.bf16.mxu0 %v7195
  %7294 = vmatpush1.bf16.msra.mxu0 %v7194
  %7295 = vmatprep.subr.bf16.mxu0 %v7199
  %7296 = vmatpush1.bf16.msra.mxu0 %v7198
  %7297 = vmatprep.subr.bf16.mxu0 %v7203
  %7298 = vmatpush1.bf16.msra.mxu0 %v7202
  %7299 = vmatprep.subr.bf16.mxu0 %v7207
  %7300 = vmatpush1.bf16.msra.mxu0 %v7206
  %7301 = vmatprep.subr.bf16.mxu0 %v7211
  %7302 = vmatpush1.bf16.msra.mxu0 %v7210
  %7303 = vmatprep.subr.bf16.mxu0 %v7215
  %7304 = vmatpush1.bf16.msra.mxu0 %v7214
  %7305 = vmatprep.subr.bf16.mxu0 0
  %7306 = vmatpush1.bf16.msra.mxu0 0
  %7307 = vmatprep.subr.bf16.mxu0 0
  %7308 = vmatpush1.bf16.msra.mxu0 0
  %7309 = vmatprep.subr.bf16.mxu0 0
  %7310 = vmatpush1.bf16.msra.mxu0 0
  %7311 = vmatprep.subr.bf16.mxu0 0
  %7312 = vmatpush1.bf16.msra.mxu0 0
  %7313 = vmatprep.subr.bf16.mxu0 0
  %7314 = vmatpush1.bf16.msra.mxu0 0
  %7315 = vmatprep.subr.bf16.mxu0 0
  %7316 = vmatpush1.bf16.msra.mxu0 0
  %7317 = vmatprep.subr.bf16.mxu0 0
  %7318 = vmatpush1.bf16.msra.mxu0 0
  %7319 = vmatprep.subr.bf16.mxu0 0
  %7320 = vmatpush1.bf16.msra.mxu0 0
  %7321 = vmatprep.mubr.bf16.mxu0 0
  %7322 = vmatmul.mubr.bf16.gmra.mrb[0].mxu0 %v7055
  %v7323 = vpop.f32.mrb[0].mxu0
  %v7324 = vadd.f32 0.0, %v7323
  %v7325 = vpop.f32.mrb[0].mxu0
  %v7326 = vadd.f32 0.0, %v7325
  %v7327 = vpop.f32.mrb[0].mxu0
  %v7328 = vpop.f32.mrb[0].mxu0
  %7329 = vdwg.mxu0
  %v7362 = vunpack.c.l.b16 %v7023
  %v7363 = vunpack.c.h.b16 %v7023
  %v7364 = vunpack.c.l.b16 %v7024
  %v7365 = vunpack.c.h.b16 %v7024
  %v7366 = vunpack.c.l.b16 %v7025
  %v7367 = vunpack.c.h.b16 %v7025
  %v7368 = vunpack.c.l.b16 %v7026
  %v7369 = vunpack.c.h.b16 %v7026
  %v7370 = vunpack.c.l.b16 %v7027
  %v7371 = vunpack.c.h.b16 %v7027
  %v7372 = vunpack.c.l.b16 %v7028
  %v7373 = vunpack.c.h.b16 %v7028
  %v7374 = vunpack.c.l.b16 %v7029
  %v7375 = vunpack.c.h.b16 %v7029
  %v7376 = vunpack.c.l.b16 %v7030
  %v7377 = vunpack.c.h.b16 %v7030
  %v7378 = vunpack.c.l.b16 %v7031
  %v7379 = vunpack.c.h.b16 %v7031
  %v7380 = vunpack.c.l.b16 %v7032
  %v7381 = vunpack.c.h.b16 %v7032
  %v7382 = vunpack.c.l.b16 %v7033
  %v7383 = vunpack.c.h.b16 %v7033
  %v7384 = vunpack.c.l.b16 %v7034
  %v7385 = vunpack.c.h.b16 %v7034
  %v7386 = vunpack.c.l.b16 %v7035
  %v7387 = vunpack.c.h.b16 %v7035
  %v7388 = vunpack.c.l.b16 %v7036
  %v7389 = vunpack.c.h.b16 %v7036
  %v7390 = vunpack.c.l.b16 %v7037
  %v7391 = vunpack.c.h.b16 %v7037
  %v7392 = vunpack.c.l.b16 %v7038
  %v7393 = vunpack.c.h.b16 %v7038
  %v7394 = vunpack.c.l.b16 %v7039
  %v7395 = vunpack.c.h.b16 %v7039
  %v7396 = vunpack.c.l.b16 %v7040
  %v7397 = vunpack.c.h.b16 %v7040
  %v7398 = vunpack.c.l.b16 %v7041
  %v7399 = vunpack.c.h.b16 %v7041
  %v7400 = vunpack.c.l.b16 %v7042
  %v7401 = vunpack.c.h.b16 %v7042
  %v7402 = vunpack.c.l.b16 %v7043
  %v7403 = vunpack.c.h.b16 %v7043
  %v7404 = vunpack.c.l.b16 %v7044
  %v7405 = vunpack.c.h.b16 %v7044
  %v7406 = vunpack.c.l.b16 %v7045
  %v7407 = vunpack.c.h.b16 %v7045
  %v7408 = vunpack.c.l.b16 %v7046
  %v7409 = vunpack.c.h.b16 %v7046
  %v7410 = vunpack.c.l.b16 %v7047
  %v7411 = vunpack.c.h.b16 %v7047
  %v7412 = vunpack.c.l.b16 %v7048
  %v7413 = vunpack.c.h.b16 %v7048
  %v7414 = vunpack.c.l.b16 %v7049
  %v7415 = vunpack.c.h.b16 %v7049
  %v7416 = vunpack.c.l.b16 %v7050
  %v7417 = vunpack.c.h.b16 %v7050
  %v7418 = vunpack.c.l.b16 %v7051
  %v7419 = vunpack.c.h.b16 %v7051
  %v7420 = vunpack.c.l.b16 %v7052
  %v7421 = vunpack.c.h.b16 %v7052
  %v7422 = vunpack.c.l.b16 %v7053
  %v7423 = vunpack.c.h.b16 %v7053
  %v7424 = vunpack.c.l.b16 %v7054
  %v7425 = vunpack.c.h.b16 %v7054
  %v7426 = vpack.c.b16 %v7366, %v7362
  %v7427 = vpack.c.b16 %v7367, %v7363
  %v7428 = vpack.c.b16 %v7368, %v7364
  %v7429 = vpack.c.b16 %v7369, %v7365
  %v7430 = vpack.c.b16 %v7374, %v7370
  %v7431 = vpack.c.b16 %v7375, %v7371
  %v7432 = vpack.c.b16 %v7376, %v7372
  %v7433 = vpack.c.b16 %v7377, %v7373
  %v7434 = vpack.c.b16 %v7382, %v7378
  %v7435 = vpack.c.b16 %v7383, %v7379
  %v7436 = vpack.c.b16 %v7384, %v7380
  %v7437 = vpack.c.b16 %v7385, %v7381
  %v7438 = vpack.c.b16 %v7390, %v7386
  %v7439 = vpack.c.b16 %v7391, %v7387
  %v7440 = vpack.c.b16 %v7392, %v7388
  %v7441 = vpack.c.b16 %v7393, %v7389
  %v7442 = vpack.c.b16 %v7398, %v7394
  %v7443 = vpack.c.b16 %v7399, %v7395
  %v7444 = vpack.c.b16 %v7400, %v7396
  %v7445 = vpack.c.b16 %v7401, %v7397
  %v7446 = vpack.c.b16 %v7406, %v7402
  %v7447 = vpack.c.b16 %v7407, %v7403
  %v7448 = vpack.c.b16 %v7408, %v7404
  %v7449 = vpack.c.b16 %v7409, %v7405
  %v7450 = vpack.c.b16 %v7414, %v7410
  %v7451 = vpack.c.b16 %v7415, %v7411
  %v7452 = vpack.c.b16 %v7416, %v7412
  %v7453 = vpack.c.b16 %v7417, %v7413
  %v7454 = vpack.c.b16 %v7422, %v7418
  %v7455 = vpack.c.b16 %v7423, %v7419
  %v7456 = vpack.c.b16 %v7424, %v7420
  %v7457 = vpack.c.b16 %v7425, %v7421
  %7490 = vmatprep.subr.bf16.mxu0 %v7427
  %7491 = vmatpush1.bf16.msra.mxu0 %v7426
  %7492 = vmatprep.subr.bf16.mxu0 %v7431
  %7493 = vmatpush1.bf16.msra.mxu0 %v7430
  %7494 = vmatprep.subr.bf16.mxu0 %v7435
  %7495 = vmatpush1.bf16.msra.mxu0 %v7434
  %7496 = vmatprep.subr.bf16.mxu0 %v7439
  %7497 = vmatpush1.bf16.msra.mxu0 %v7438
  %7498 = vmatprep.subr.bf16.mxu0 %v7443
  %7499 = vmatpush1.bf16.msra.mxu0 %v7442
  %7500 = vmatprep.subr.bf16.mxu0 %v7447
  %7501 = vmatpush1.bf16.msra.mxu0 %v7446
  %7502 = vmatprep.subr.bf16.mxu0 %v7451
  %7503 = vmatpush1.bf16.msra.mxu0 %v7450
  %7504 = vmatprep.subr.bf16.mxu0 %v7455
  %7505 = vmatpush1.bf16.msra.mxu0 %v7454
  %7506 = vmatprep.subr.bf16.mxu0 0
  %7507 = vmatpush1.bf16.msra.mxu0 0
  %7508 = vmatprep.subr.bf16.mxu0 0
  %7509 = vmatpush1.bf16.msra.mxu0 0
  %7510 = vmatprep.subr.bf16.mxu0 0
  %7511 = vmatpush1.bf16.msra.mxu0 0
  %7512 = vmatprep.subr.bf16.mxu0 0
  %7513 = vmatpush1.bf16.msra.mxu0 0
  %7514 = vmatprep.subr.bf16.mxu0 0
  %7515 = vmatpush1.bf16.msra.mxu0 0
  %7516 = vmatprep.subr.bf16.mxu0 0
  %7517 = vmatpush1.bf16.msra.mxu0 0
  %7518 = vmatprep.subr.bf16.mxu0 0
  %7519 = vmatpush1.bf16.msra.mxu0 0
  %7520 = vmatprep.subr.bf16.mxu0 0
  %7521 = vmatpush1.bf16.msra.mxu0 0
  %7522 = vmatprep.mubr.bf16.mxu0 0
  %7523 = vmatmul.mubr.bf16.gmra.mrb[0].mxu0 %v7022
  %v7524 = vpop.f32.mrb[0].mxu0
  %v7525 = vadd.f32 %v7283, %v7524
  %v7526 = vpop.f32.mrb[0].mxu0
  %v7527 = vadd.f32 %v7285, %v7526
  %v7528 = vpop.f32.mrb[0].mxu0
  %v7529 = vpop.f32.mrb[0].mxu0
  %7530 = vdwg.mxu0
  %7531 = vmatprep.subr.bf16.mxu0 %v7429
  %7532 = vmatpush1.bf16.msra.mxu0 %v7428
  %7533 = vmatprep.subr.bf16.mxu0 %v7433
  %7534 = vmatpush1.bf16.msra.mxu0 %v7432
  %7535 = vmatprep.subr.bf16.mxu0 %v7437
  %7536 = vmatpush1.bf16.msra.mxu0 %v7436
  %7537 = vmatprep.subr.bf16.mxu0 %v7441
  %7538 = vmatpush1.bf16.msra.mxu0 %v7440
  %7539 = vmatprep.subr.bf16.mxu0 %v7445
  %7540 = vmatpush1.bf16.msra.mxu0 %v7444
  %7541 = vmatprep.subr.bf16.mxu0 %v7449
  %7542 = vmatpush1.bf16.msra.mxu0 %v7448
  %7543 = vmatprep.subr.bf16.mxu0 %v7453
  %7544 = vmatpush1.bf16.msra.mxu0 %v7452
  %7545 = vmatprep.subr.bf16.mxu0 %v7457
  %7546 = vmatpush1.bf16.msra.mxu0 %v7456
  %7547 = vmatprep.subr.bf16.mxu0 0
  %7548 = vmatpush1.bf16.msra.mxu0 0
  %7549 = vmatprep.subr.bf16.mxu0 0
  %7550 = vmatpush1.bf16.msra.mxu0 0
  %7551 = vmatprep.subr.bf16.mxu0 0
  %7552 = vmatpush1.bf16.msra.mxu0 0
  %7553 = vmatprep.subr.bf16.mxu0 0
  %7554 = vmatpush1.bf16.msra.mxu0 0
  %7555 = vmatprep.subr.bf16.mxu0 0
  %7556 = vmatpush1.bf16.msra.mxu0 0
  %7557 = vmatprep.subr.bf16.mxu0 0
  %7558 = vmatpush1.bf16.msra.mxu0 0
  %7559 = vmatprep.subr.bf16.mxu0 0
  %7560 = vmatpush1.bf16.msra.mxu0 0
  %7561 = vmatprep.subr.bf16.mxu0 0
  %7562 = vmatpush1.bf16.msra.mxu0 0
  %7563 = vmatprep.mubr.bf16.mxu0 0
  %7564 = vmatmul.mubr.bf16.gmra.mrb[0].mxu0 %v7022
  %v7565 = vpop.f32.mrb[0].mxu0
  %v7566 = vadd.f32 %v7324, %v7565
  %v7567 = vpop.f32.mrb[0].mxu0
  %v7568 = vadd.f32 %v7326, %v7567
  %v7569 = vpop.f32.mrb[0].mxu0
  %v7570 = vpop.f32.mrb[0].mxu0
  %7571 = vdwg.mxu0
  %v7572 = vld [vmem:[%s7] sm:$0xf]
  %v7574 = vlaneseq
  %v7575 = vshrl.u32 %v7574, 7
  %v7576 = vsub.s32 0, %v7575
  %v7577 = vrot.slane %v7572, %v7576
  %v7578 = vlaneseq
  %v7579 = vshrl.u32 %v7578, 7
  %v7580 = vsub.s32 1, %v7579
  %v7581 = vrot.slane %v7572, %v7580
  %v7582 = vlaneseq
  %v7583 = vshrl.u32 %v7582, 7
  %v7584 = vsub.s32 2, %v7583
  %v7585 = vrot.slane %v7572, %v7584
  %v7586 = vlaneseq
  %v7587 = vshrl.u32 %v7586, 7
  %v7588 = vsub.s32 3, %v7587
  %v7589 = vrot.slane %v7572, %v7588
  %v7594 = vadd.f32 %v7525, %v7577
  %v7595 = vadd.f32 %v7527, %v7581
  %v7596 = vadd.f32 %v7566, %v7585
  %v7597 = vadd.f32 %v7568, %v7589
  %v7598 = vxor.u32 %v7594, 2147483648
  %v7599 = vxor.u32 %v7595, 2147483648
  %v7600 = vxor.u32 %v7596, 2147483648
  %v7601 = vmul.f32 %v7598, 1.442695
  %v7602 = vpow.pop %v7601
  %v7603 = vmul.f32 %v7599, 1.442695
  %v7604 = vpow.pop %v7603
  %v7605 = vmul.f32 %v7600, 1.442695
  %v7606 = vpow.pop %v7605
  %v7607 = vadd.f32 %v7602, 1.0
  %v7608 = vadd.f32 %v7604, 1.0
  %v7609 = vadd.f32 %v7606, 1.0
  %v7610 = vrcp.pop %v7607
  %v7611 = vmul.f32 1.0, %v7610
  %v7612 = vrcp.pop %v7608
  %v7613 = vmul.f32 1.0, %v7612
  %v7614 = vrcp.pop %v7609
  %v7615 = vmul.f32 1.0, %v7614
  %v7616 = vtanh.pop %v7597
  %v7617 = vmul.f32 %v7613, %v6714
  %v7618 = vmul.f32 %v7611, %v7616
  %v7619 = vadd.f32 %v7617, %v7618
  %v7620 = vtanh.pop %v7619
  %v7621 = vmul.f32 %v7615, %v7620
  %7622 = vst [vmem:[#allocation2] sm:$0xff] %v7021
  %7623 = vst [vmem:[#allocation2 + $0x8] sm:$0xff] %v7019
  %7624 = vst [vmem:[#allocation2 + $0x10] sm:$0xff] %v7621
  %7625 = vst [vmem:[#allocation2 + $0x18] sm:$0xff] %v7619
  %7626 = vst [vmem:[#allocation4 + $0x38] sm:$0xff] %v7621
  %v7627 = vld [vmem:[#allocation4] sm:$0xff]
  %v7628 = vld [vmem:[#allocation4 + $0x8] sm:$0xff]
  %v7629 = vld [vmem:[#allocation4 + $0x10] sm:$0xff]
  %v7630 = vld [vmem:[#allocation4 + $0x18] sm:$0xff]
  %v7631 = vld [vmem:[#allocation4 + $0x20] sm:$0xff]
  %v7632 = vld [vmem:[#allocation4 + $0x28] sm:$0xff]
  %v7633 = vld [vmem:[#allocation4 + $0x30] sm:$0xff]
  %v7634 = vld [vmem:[#allocation4 + $0x38] sm:$0xff]
  %v7635 = vpack.c.bf16 %v7628, %v7627
  %v7636 = vpack.c.bf16 %v7630, %v7629
  %v7637 = vpack.c.bf16 %v7632, %v7631
  %v7638 = vpack.c.bf16 %v7634, %v7633
  %v7639 = vld [vmem:[%s8] sm:$0xf]
  %v7640 = vld [vmem:[%s8 + $0x4] sm:$0xf]
  %v7641 = vld [vmem:[%s8 + $0x8] sm:$0xf]
  %v7642 = vld [vmem:[%s8 + $0xc] sm:$0xf]
  %v7643 = vld [vmem:[%s8 + $0x10] sm:$0xf]
  %v7644 = vld [vmem:[%s8 + $0x14] sm:$0xf]
  %v7645 = vld [vmem:[%s8 + $0x18] sm:$0xf]
  %v7646 = vld [vmem:[%s8 + $0x1c] sm:$0xf]
  %v7647 = vld [vmem:[%s8 + $0x20] sm:$0xf]
  %v7648 = vld [vmem:[%s8 + $0x24] sm:$0xf]
  %v7649 = vld [vmem:[%s8 + $0x28] sm:$0xf]
  %v7650 = vld [vmem:[%s8 + $0x2c] sm:$0xf]
  %v7651 = vld [vmem:[%s8 + $0x30] sm:$0xf]
  %v7652 = vld [vmem:[%s8 + $0x34] sm:$0xf]
  %v7653 = vld [vmem:[%s8 + $0x38] sm:$0xf]
  %v7654 = vld [vmem:[%s8 + $0x3c] sm:$0xf]
  %v7655 = vld [vmem:[%s9] sm:$0x1]
  %v7657 = vlaneseq
  %v7658 = vshrl.u32 %v7657, 7
  %v7659 = vsub.s32 0, %v7658
  %v7660 = vrot.slane %v7655, %v7659
  %v7678 = vunpack.c.l.b16 %v7639
  %v7679 = vunpack.c.l.b16 %v7640
  %v7680 = vunpack.c.l.b16 %v7641
  %v7681 = vunpack.c.l.b16 %v7642
  %v7682 = vunpack.c.l.b16 %v7643
  %v7683 = vunpack.c.l.b16 %v7644
  %v7684 = vunpack.c.l.b16 %v7645
  %v7685 = vunpack.c.l.b16 %v7646
  %v7686 = vunpack.c.l.b16 %v7647
  %v7687 = vunpack.c.l.b16 %v7648
  %v7688 = vunpack.c.l.b16 %v7649
  %v7689 = vunpack.c.l.b16 %v7650
  %v7690 = vunpack.c.l.b16 %v7651
  %v7691 = vunpack.c.l.b16 %v7652
  %v7692 = vunpack.c.l.b16 %v7653
  %v7693 = vunpack.c.l.b16 %v7654
  %v7694 = vpack.c.b16 %v7679, %v7678
  %v7695 = vpack.c.b16 %v7681, %v7680
  %v7696 = vpack.c.b16 %v7683, %v7682
  %v7697 = vpack.c.b16 %v7685, %v7684
  %v7698 = vpack.c.b16 %v7687, %v7686
  %v7699 = vpack.c.b16 %v7689, %v7688
  %v7700 = vpack.c.b16 %v7691, %v7690
  %v7701 = vpack.c.b16 %v7693, %v7692
  %7710 = vmatprep.subr.bf16.mxu0 0
  %7711 = vmatpush1.bf16.msra.mxu0 %v7694
  %7712 = vmatprep.subr.bf16.mxu0 0
  %7713 = vmatpush1.bf16.msra.mxu0 %v7695
  %7714 = vmatprep.subr.bf16.mxu0 0
  %7715 = vmatpush1.bf16.msra.mxu0 %v7696
  %7716 = vmatprep.subr.bf16.mxu0 0
  %7717 = vmatpush1.bf16.msra.mxu0 %v7697
  %7718 = vmatprep.subr.bf16.mxu0 0
  %7719 = vmatpush1.bf16.msra.mxu0 %v7698
  %7720 = vmatprep.subr.bf16.mxu0 0
  %7721 = vmatpush1.bf16.msra.mxu0 %v7699
  %7722 = vmatprep.subr.bf16.mxu0 0
  %7723 = vmatpush1.bf16.msra.mxu0 %v7700
  %7724 = vmatprep.subr.bf16.mxu0 0
  %7725 = vmatpush1.bf16.msra.mxu0 %v7701
  %7726 = vmatprep.subr.bf16.mxu0 0
  %7727 = vmatpush1.bf16.msra.mxu0 0
  %7728 = vmatprep.subr.bf16.mxu0 0
  %7729 = vmatpush1.bf16.msra.mxu0 0
  %7730 = vmatprep.subr.bf16.mxu0 0
  %7731 = vmatpush1.bf16.msra.mxu0 0
  %7732 = vmatprep.subr.bf16.mxu0 0
  %7733 = vmatpush1.bf16.msra.mxu0 0
  %7734 = vmatprep.subr.bf16.mxu0 0
  %7735 = vmatpush1.bf16.msra.mxu0 0
  %7736 = vmatprep.subr.bf16.mxu0 0
  %7737 = vmatpush1.bf16.msra.mxu0 0
  %7738 = vmatprep.subr.bf16.mxu0 0
  %7739 = vmatpush1.bf16.msra.mxu0 0
  %7740 = vmatprep.subr.bf16.mxu0 0
  %7741 = vmatpush1.bf16.msra.mxu0 0
  %7742 = vmatprep.mubr.bf16.mxu0 0
  %7743 = vmatmul.mubr.bf16.gmra.mrb[0].mxu0 %v7635
  %v7744 = vpop.f32.mrb[0].mxu0
  %v7745 = vadd.f32 %v7660, %v7744
  %v7746 = vpop.f32.mrb[0].mxu0
  %v7747 = vpop.f32.mrb[0].mxu0
  %v7748 = vadd.f32 %v7660, %v7747
  %v7749 = vpop.f32.mrb[0].mxu0
  %7750 = vmatprep.mubr.bf16.mxu0 0
  %7751 = vmatmul.mubr.bf16.gmra.mrb[0].mxu0 %v7636
  %v7752 = vpop.f32.mrb[0].mxu0
  %v7753 = vadd.f32 %v7660, %v7752
  %v7754 = vpop.f32.mrb[0].mxu0
  %v7755 = vpop.f32.mrb[0].mxu0
  %v7756 = vadd.f32 %v7660, %v7755
  %v7757 = vpop.f32.mrb[0].mxu0
  %7758 = vmatprep.mubr.bf16.mxu0 0
  %7759 = vmatmul.mubr.bf16.gmra.mrb[0].mxu0 %v7637
  %v7760 = vpop.f32.mrb[0].mxu0
  %v7761 = vadd.f32 %v7660, %v7760
  %v7762 = vpop.f32.mrb[0].mxu0
  %v7763 = vpop.f32.mrb[0].mxu0
  %v7764 = vadd.f32 %v7660, %v7763
  %v7765 = vpop.f32.mrb[0].mxu0
  %7766 = vmatprep.mubr.bf16.mxu0 0
  %7767 = vmatmul.mubr.bf16.gmra.mrb[0].mxu0 %v7638
  %v7768 = vpop.f32.mrb[0].mxu0
  %v7769 = vadd.f32 %v7660, %v7768
  %v7770 = vpop.f32.mrb[0].mxu0
  %v7771 = vpop.f32.mrb[0].mxu0
  %v7772 = vadd.f32 %v7660, %v7771
  %v7773 = vpop.f32.mrb[0].mxu0
  %7774 = vdwg.mxu0
  %7775 = vst [vmem:[%s10] sm:$0xff] %v7745
  %7776 = vst [vmem:[%s10 + $0x8] sm:$0xff] %v7748
  %7777 = vst [vmem:[%s10 + $0x10] sm:$0xff] %v7753
  %7778 = vst [vmem:[%s10 + $0x18] sm:$0xff] %v7756
  %7779 = vst [vmem:[%s10 + $0x20] sm:$0xff] %v7761
  %7780 = vst [vmem:[%s10 + $0x28] sm:$0xff] %v7764
  %7781 = vst [vmem:[%s10 + $0x30] sm:$0xff] %v7769
  %7782 = vst [vmem:[%s10 + $0x38] sm:$0xff] %v7772
  // Predicated region
  $region46: #{rnn_forward.1} parent=0 // pred_check
    %p7783 = pneg %p38
  $region47: #{rnn_forward.1} parent=0 // pred_check_branch
    %7785 = sbr.rel (%p7783) target = $region49
  $region48: #{rnn_forward.1} parent=0 // pred_region
    %v7786 = vld [vmem:[#allocation2] sm:$0xff]
    %v7787 = vld [vmem:[#allocation2 + $0x8] sm:$0xff]
    %v7788 = vld [vmem:[#allocation2 + $0x10] sm:$0xff]
    %v7789 = vld [vmem:[#allocation2 + $0x18] sm:$0xff]
    %7790 = vst [vmem:[%s11] sm:$0xff] %v7786
    %7791 = vst [vmem:[%s11 + $0x8] sm:$0xff] %v7787
    %7792 = vst [vmem:[%s11 + $0x10] sm:$0xff] %v7788
    %7793 = vst [vmem:[%s11 + $0x18] sm:$0xff] %v7789
  $region49: #{rnn_forward.1} parent=0 // pred_fallthru
    _
  // Predicated region
  $region50: #{rnn_forward.1} parent=0 // pred_check
    _
  $region51: #{rnn_forward.1} parent=0 // pred_check_branch
    %7795 = sbr.rel (0) target = $region53
  $region52: #{rnn_forward.1} parent=0 // pred_region
    _
  $region53: #{rnn_forward.1} parent=0 // pred_fallthru
    _
  // Predicated region
  $region54: #{rnn_forward.1} parent=0 // pred_check
    _
  $region55: #{rnn_forward.1} parent=0 // pred_check_branch
    %7797 = sbr.rel (0) target = $region57
  $region56: #{rnn_forward.1} parent=0 // pred_region
    _
  $region57: #{rnn_forward.1} parent=0 // pred_fallthru
    _
  // Predicated region
  $region58: #{rnn_forward.1} parent=0 // pred_check
    _
  $region59: #{rnn_forward.1} parent=0 // pred_check_branch
    %7799 = sbr.rel (0) target = $region61
  $region60: #{rnn_forward.1} parent=0 // pred_region
    _
  $region61: #{rnn_forward.1} parent=0 // pred_fallthru
    _
  // Predicated region
  $region62: #{rnn_forward.1} parent=0 // pred_check
    _
  $region63: #{rnn_forward.1} parent=0 // pred_check_branch
    %7801 = sbr.rel (0) target = $region65
  $region64: #{rnn_forward.1} parent=0 // pred_region
    _
  $region65: #{rnn_forward.1} parent=0 // pred_fallthru
    _

</llo_original>
